<compile_context>
chip_gen: v5e
topology: v5e:2x2
jax: 0.10.0
libtpu: 0.0.40
codegen_flags: <defaults>
</compile_context>

<pallas_src>
import functools

import jax
import jax.numpy as jnp
from jax.experimental import pallas as pl
from jax.experimental.pallas import tpu as pltpu

# ----------------------------- model config (small, consistent with module) ---
B_EX, S_EX = 2, 8          # batch, sequence length
H = 48                     # bert hidden size (divisible by 12 heads)
NHEADS = 12                # both BERT attention and nn.MultiheadAttention heads
DH = H // NHEADS
NLAYERS = 2                # small BERT encoder depth
INTER = 96                 # BERT FFN intermediate size
VOCAB = 64
MAXPOS = 32
LN_EPS = 1e-12
BN_EPS = 1e-5


# ----------------------------- pallas_call plumbing ----------------------------
def _full_spec(a):
    nd = a.ndim
    return pl.BlockSpec(a.shape, lambda *_, _n=nd: (0,) * _n)


def _fused_call(kernel, args, out_shape):
    """Single-grid-step pallas_call with whole-array VMEM blocks."""
    return pl.pallas_call(
        kernel,
        out_shape=out_shape,
        grid=(1,),
        in_specs=[_full_spec(a) for a in args],
        out_specs=pl.BlockSpec(out_shape.shape,
                               lambda *_, _n=len(out_shape.shape): (0,) * _n),
        compiler_params=pltpu.CompilerParams(dimension_semantics=("arbitrary",)),
    )(*args)


# ----------------------------- in-kernel building blocks -----------------------
def _ln(x, g, b, eps):
    mu = jnp.mean(x, axis=-1, keepdims=True)
    var = jnp.mean(jnp.square(x - mu), axis=-1, keepdims=True)
    return (x - mu) * jax.lax.rsqrt(var + eps) * g + b


def _gelu_tanh(x):
    # TODO(synk): HF BERT uses exact erf-GELU; lax.erf has no Mosaic lowering,
    # so the tanh approximation is used in-kernel (|diff| ~1e-3).
    c = 0.7978845608028654  # sqrt(2/pi)
    return 0.5 * x * (1.0 + jnp.tanh(c * (x + 0.044715 * x * x * x)))


def _multihead_attention(x2d, wqkv, bqkv, wo, bo, batch, seq, nheads, dh,
                         bias=None):
    """All-heads self-attention on a [B*S, H] activation, fully in-register."""
    hsize = x2d.shape[1]
    scale = 1.0 / float(dh) ** 0.5
    qkv = jnp.dot(x2d, wqkv, preferred_element_type=jnp.float32) + bqkv
    qkv3 = qkv.reshape(batch, seq, 3 * hsize)
    ctx_heads = []
    for h in range(nheads):
        lo = h * dh
        qh = qkv3[:, :, lo:lo + dh]
        kh = qkv3[:, :, hsize + lo:hsize + lo + dh]
        vh = qkv3[:, :, 2 * hsize + lo:2 * hsize + lo + dh]
        s = jnp.einsum("bid,bjd->bij", qh, kh,
                       preferred_element_type=jnp.float32) * scale
        if bias is not None:
            s = s + bias                       # [B,1,S] broadcast over queries
        s = s - jnp.max(s, axis=-1, keepdims=True)
        p = jnp.exp(s)
        p = p / jnp.sum(p, axis=-1, keepdims=True)
        ctx_heads.append(jnp.einsum("bij,bjd->bid", p, vh,
                                    preferred_element_type=jnp.float32))
    ctx = jnp.concatenate(ctx_heads, axis=-1).reshape(batch * seq, hsize)
    return jnp.dot(ctx, wo, preferred_element_type=jnp.float32) + bo


# ----------------------------- kernels ------------------------------------------
def _layernorm_kernel(x_ref, g_ref, b_ref, o_ref, *, eps):
    o_ref[...] = _ln(x_ref[...], g_ref[...], b_ref[...], eps)


def _bert_layer_kernel(x_ref, bias_ref, wqkv_ref, bqkv_ref, wo_ref, bo_ref,
                       ln1g_ref, ln1b_ref, wff1_ref, bff1_ref,
                       wff2_ref, bff2_ref, ln2g_ref, ln2b_ref, o_ref,
                       *, batch, seq, nheads, dh, eps):
    """One full BERT encoder layer: attention + residual/LN + FFN + residual/LN."""
    x = x_ref[...]                                              # [B*S, H]
    attn = _multihead_attention(x, wqkv_ref[...], bqkv_ref[...], wo_ref[...],
                                bo_ref[...], batch, seq, nheads, dh,
                                bias=bias_ref[...])
    x1 = _ln(x + attn, ln1g_ref[...], ln1b_ref[...], eps)
    ff = jnp.dot(x1, wff1_ref[...],
                 preferred_element_type=jnp.float32) + bff1_ref[...]
    ff = _gelu_tanh(ff)
    ff = jnp.dot(ff, wff2_ref[...],
                 preferred_element_type=jnp.float32) + bff2_ref[...]
    o_ref[...] = _ln(x1 + ff, ln2g_ref[...], ln2b_ref[...], eps)


def _epilogue_head_kernel(x_ref, cls_sel_ref, mean_sel_ref,
                          pool_w_ref, pool_b_ref,
                          mha_w_ref, mha_b_ref, mho_w_ref, mho_b_ref,
                          w1_ref, b1_ref, s1_ref, t1_ref,
                          w2_ref, b2_ref, s2_ref, t2_ref,
                          w3_ref, b3_ref, s3_ref, t3_ref,
                          w4_ref, b4_ref, o_ref,
                          *, batch, seq, nheads, dh):
    """Pooler + nn.MultiheadAttention branch + mean/concat + fused MLP heads."""
    x = x_ref[...]                                              # [B*S, H]

    # BERT pooler on the CLS token of each example (CLS pick done as a matmul).
    cls_tok = jnp.dot(cls_sel_ref[...], x, preferred_element_type=jnp.float32)
    pooled = jnp.tanh(
        jnp.dot(cls_tok, pool_w_ref[...], preferred_element_type=jnp.float32)
        + pool_b_ref[...])                                      # [B, H]

    # nn.MultiheadAttention self-attention (no mask; eval-mode dropout = id).
    attn = _multihead_attention(x, mha_w_ref[...], mha_b_ref[...],
                                mho_w_ref[...], mho_b_ref[...],
                                batch, seq, nheads, dh, bias=None)
    attn_mean = jnp.dot(mean_sel_ref[...], attn,
                        preferred_element_type=jnp.float32)     # [B, H]

    combined = jnp.concatenate([attn_mean, pooled], axis=-1)    # [B, 2H]

    def lrelu(t):  # nn.LeakyReLU(0.1)
        return jnp.where(t > 0, t, 0.1 * t)

    # residual1 | dense1 fused -> [B, 1024]; BN folded to scale/shift.
    h1 = jnp.dot(combined, w1_ref[...],
                 preferred_element_type=jnp.float32) + b1_ref[...]
    h1 = lrelu(h1[:, 512:] * s1_ref[...] + t1_ref[...] + h1[:, :512])
    # residual2 | dense2 fused -> [B, 512].
    h2 = jnp.dot(h1, w2_ref[...],
                 preferred_element_type=jnp.float32) + b2_ref[...]
    h2 = lrelu(h2[:, 256:] * s2_ref[...] + t2_ref[...] + h2[:, :256])
    # regressor/classifier first linears + BN + LeakyReLU fused -> [B, 128].
    h3 = jnp.dot(h2, w3_ref[...],
                 preferred_element_type=jnp.float32) + b3_ref[...]
    h3 = lrelu(h3 * s3_ref[...] + t3_ref[...])
    # block-diagonal final matmul: col 0 = regressor, cols 1:3 = classifier.
    out = jnp.dot(h3, w4_ref[...],
                  preferred_element_type=jnp.float32) + b4_ref[...]
    score = 9.0 / (1.0 + jnp.exp(-out[:, 0:1])) + 1.0           # sigmoid*9+1
    o_ref[...] = jnp.concatenate([score, out[:, 1:3]], axis=-1)


# ----------------------------- wrappers -----------------------------------------
def layernorm(x, g, b):
    return _fused_call(functools.partial(_layernorm_kernel, eps=LN_EPS),
                       (x, g, b), jax.ShapeDtypeStruct(x.shape, jnp.float32))


def bert_layer(x, mask_bias, lp, batch, seq):
    args = (x, mask_bias, lp["wqkv"], lp["bqkv"], lp["o_w"], lp["o_b"],
            lp["ln1_g"], lp["ln1_b"], lp["ff1_w"], lp["ff1_b"],
            lp["ff2_w"], lp["ff2_b"], lp["ln2_g"], lp["ln2_b"])
    return _fused_call(
        functools.partial(_bert_layer_kernel, batch=batch, seq=seq,
                          nheads=NHEADS, dh=DH, eps=LN_EPS),
        args, jax.ShapeDtypeStruct(x.shape, jnp.float32))


def epilogue_head(x, cls_sel, mean_sel, p, batch, seq):
    args = (x, cls_sel, mean_sel,
            p["pool_w"], p["pool_b"],
            p["mha_in_w"], p["mha_in_b"], p["mha_out_w"], p["mha_out_b"],
            p["head_w1"], p["head_b1"], p["head_s1"], p["head_t1"],
            p["head_w2"], p["head_b2"], p["head_s2"], p["head_t2"],
            p["head_w3"], p["head_b3"], p["head_s3"], p["head_t3"],
            p["head_w4"], p["head_b4"])
    return _fused_call(
        functools.partial(_epilogue_head_kernel, batch=batch, seq=seq,
                          nheads=NHEADS, dh=DH),
        args, jax.ShapeDtypeStruct((batch, 3), jnp.float32))


# ----------------------------- forward ------------------------------------------
def forward(params, input_ids, attention_mask):
    b, s = input_ids.shape

    # BERT embeddings (gathers are XLA glue) + LayerNorm kernel.
    pos = jnp.arange(s)
    emb = (params["word_emb"][input_ids]
           + params["pos_emb"][pos][None, :, :]
           + params["type_emb"][0][None, None, :])
    x = layernorm(emb.reshape(b * s, H), params["emb_ln_g"], params["emb_ln_b"])

    # Additive attention-mask bias, passed once as [B, 1, S]; broadcast in-kernel.
    mask_bias = ((1.0 - attention_mask.astype(jnp.float32)) * -1e9).reshape(b, 1, s)

    for lp in params["layers"]:
        x = bert_layer(x, mask_bias, lp, b, s)

    # TODO(synk): the reference forward also runs a 2-layer BiLSTM over
    # sequence_output, but its output is never consumed (dead code); omitted.

    # CLS-token pick and per-batch sequence mean expressed as tiny matmuls so
    # the whole epilogue lives inside one kernel.
    rows = jnp.arange(b, dtype=jnp.int32)[:, None]
    cols = jnp.arange(b * s, dtype=jnp.int32)[None, :]
    cls_sel = (cols == rows * s).astype(jnp.float32)                       # [B, B*S]
    mean_sel = (((cols >= rows * s) & (cols < (rows + 1) * s))
                .astype(jnp.float32) / s)                                  # [B, B*S]

    out3 = epilogue_head(x, cls_sel, mean_sel, params, b, s)
    return {"score": out3[:, 0], "logits": out3[:, 1:3]}


# ----------------------------- parameters ---------------------------------------
def init_params(key):
    keys = iter(jax.random.split(key, 128))
    nxt = lambda: next(keys)

    def dense(fan_in, fan_out):
        w = jax.random.normal(nxt(), (fan_in, fan_out), jnp.float32) * 0.02
        b = jax.random.normal(nxt(), (fan_out,), jnp.float32) * 0.02
        return w, b

    def bn(n):
        return {"gamma": jnp.ones((n,), jnp.float32),
                "beta": jnp.zeros((n,), jnp.float32),
                "mean": jnp.zeros((n,), jnp.float32),
                "var": jnp.ones((n,), jnp.float32)}

    p = {}
    p["word_emb"] = jax.random.normal(nxt(), (VOCAB, H), jnp.float32) * 0.02
    p["pos_emb"] = jax.random.normal(nxt(), (MAXPOS, H), jnp.float32) * 0.02
    p["type_emb"] = jax.random.normal(nxt(), (2, H), jnp.float32) * 0.02
    p["emb_ln_g"] = jnp.ones((H,), jnp.float32)
    p["emb_ln_b"] = jnp.zeros((H,), jnp.float32)

    layers = []
    for _ in range(NLAYERS):
        lp = {}
        lp["q_w"], lp["q_b"] = dense(H, H)
        lp["k_w"], lp["k_b"] = dense(H, H)
        lp["v_w"], lp["v_b"] = dense(H, H)
        lp["o_w"], lp["o_b"] = dense(H, H)
        lp["ln1_g"] = jnp.ones((H,), jnp.float32)
        lp["ln1_b"] = jnp.zeros((H,), jnp.float32)
        lp["ff1_w"], lp["ff1_b"] = dense(H, INTER)
        lp["ff2_w"], lp["ff2_b"] = dense(INTER, H)
        lp["ln2_g"] = jnp.ones((H,), jnp.float32)
        lp["ln2_b"] = jnp.zeros((H,), jnp.float32)
        layers.append(lp)
    p["layers"] = layers

    p["pool_w"], p["pool_b"] = dense(H, H)
    p["mha_in_w"], p["mha_in_b"] = dense(H, 3 * H)      # nn.MultiheadAttention in_proj
    p["mha_out_w"], p["mha_out_b"] = dense(H, H)        # out_proj

    p["res1_w"], p["res1_b"] = dense(2 * H, 512)
    p["d1_w"], p["d1_b"] = dense(2 * H, 512)
    p["bn1"] = bn(512)
    p["res2_w"], p["res2_b"] = dense(512, 256)
    p["d2_w"], p["d2_b"] = dense(512, 256)
    p["bn2"] = bn(256)
    p["reg1_w"], p["reg1_b"] = dense(256, 64)
    p["bn_reg"] = bn(64)
    p["reg2_w"], p["reg2_b"] = dense(64, 1)
    p["cls1_w"], p["cls1_b"] = dense(256, 64)
    p["bn_cls"] = bn(64)
    p["cls2_w"], p["cls2_b"] = dense(64, 2)
    return p


def prepare_params(p):
    """One-time fusion/fold of parameters into the kernel-ready layout."""
    r1 = lambda v: v.reshape(1, -1)

    def fold_bn(bn):  # eval-mode BatchNorm -> per-feature affine scale/shift
        scale = bn["gamma"] / jnp.sqrt(bn["var"] + BN_EPS)
        shift = bn["beta"] - bn["mean"] * scale
        return r1(scale), r1(shift)

    q = {"word_emb": p["word_emb"], "pos_emb": p["pos_emb"],
         "type_emb": p["type_emb"],
         "emb_ln_g": r1(p["emb_ln_g"]), "emb_ln_b": r1(p["emb_ln_b"])}

    layers = []
    for lp in p["layers"]:
        layers.append({
            "wqkv": jnp.concatenate([lp["q_w"], lp["k_w"], lp["v_w"]], axis=1),
            "bqkv": r1(jnp.concatenate([lp["q_b"], lp["k_b"], lp["v_b"]])),
            "o_w": lp["o_w"], "o_b": r1(lp["o_b"]),
            "ln1_g": r1(lp["ln1_g"]), "ln1_b": r1(lp["ln1_b"]),
            "ff1_w": lp["ff1_w"], "ff1_b": r1(lp["ff1_b"]),
            "ff2_w": lp["ff2_w"], "ff2_b": r1(lp["ff2_b"]),
            "ln2_g": r1(lp["ln2_g"]), "ln2_b": r1(lp["ln2_b"]),
        })
    q["layers"] = layers

    q["pool_w"], q["pool_b"] = p["pool_w"], r1(p["pool_b"])
    q["mha_in_w"], q["mha_in_b"] = p["mha_in_w"], r1(p["mha_in_b"])
    q["mha_out_w"], q["mha_out_b"] = p["mha_out_w"], r1(p["mha_out_b"])

    bn1s, bn1t = fold_bn(p["bn1"])
    bn2s, bn2t = fold_bn(p["bn2"])
    rgs, rgt = fold_bn(p["bn_reg"])
    cls_s, cls_t = fold_bn(p["bn_cls"])

    q["head_w1"] = jnp.concatenate([p["res1_w"], p["d1_w"]], axis=1)   # [96, 1024]
    q["head_b1"] = r1(jnp.concatenate([p["res1_b"], p["d1_b"]]))
    q["head_s1"], q["head_t1"] = bn1s, bn1t
    q["head_w2"] = jnp.concatenate([p["res2_w"], p["d2_w"]], axis=1)   # [512, 512]
    q["head_b2"] = r1(jnp.concatenate([p["res2_b"], p["d2_b"]]))
    q["head_s2"], q["head_t2"] = bn2s, bn2t
    q["head_w3"] = jnp.concatenate([p["reg1_w"], p["cls1_w"]], axis=1) # [256, 128]
    q["head_b3"] = r1(jnp.concatenate([p["reg1_b"], p["cls1_b"]]))
    q["head_s3"] = jnp.concatenate([rgs, cls_s], axis=1)
    q["head_t3"] = jnp.concatenate([rgt, cls_t], axis=1)
    w4 = jnp.zeros((128, 3), jnp.float32)                              # block-diag
    w4 = w4.at[:64, 0:1].set(p["reg2_w"])
    w4 = w4.at[64:, 1:3].set(p["cls2_w"])
    q["head_w4"] = w4
    q["head_b4"] = r1(jnp.concatenate([p["reg2_b"], p["cls2_b"]]))
    return q


# TODO(synk): pretrained BERT weights / parameter freezing are training-time
# concerns with no forward-pass equivalent; weights are synthetic here.

if __name__ == "__main__":
    key = jax.random.PRNGKey(0)
    params = prepare_params(init_params(key))

    kid = jax.random.fold_in(key, 123)
    input_ids = jax.random.randint(kid, (B_EX, S_EX), 0, VOCAB)
    attention_mask = jnp.ones((B_EX, S_EX), jnp.float32)

    fwd = jax.jit(forward)
    out = fwd(params, input_ids, attention_mask)
    jax.block_until_ready(out)
    assert out["score"].shape == (B_EX,)
    assert out["logits"].shape == (B_EX, 2)
    print("KERNEL_OK")
</pallas_src>

<mosaic_0001>
module attributes {stable_mosaic.version = 11 : i64} {
  func.func @_layernorm_kernel(%arg0: i32, %arg1: memref<16x48xf32, #tpu.memory_space<vmem>>, %arg2: memref<1x48xf32, #tpu.memory_space<vmem>>, %arg3: memref<1x48xf32, #tpu.memory_space<vmem>>, %arg4: memref<16x48xf32, #tpu.memory_space<vmem>>) attributes {dimension_semantics = [#tpu.dimension_semantics<arbitrary>], iteration_bounds = array<i64: 1>, scalar_prefetch = 0 : i64, scratch_operands = 0 : i64, tpu.core_type = #tpu.core_type<tc>, window_params = [{pipeline_mode = #tpu.pipeline_mode<synchronous>, transform_indices = @transform_0, window_bounds = array<i64: 16, 48>}, {pipeline_mode = #tpu.pipeline_mode<synchronous>, transform_indices = @transform_1, window_bounds = array<i64: 1, 48>}, {pipeline_mode = #tpu.pipeline_mode<synchronous>, transform_indices = @transform_2, window_bounds = array<i64: 1, 48>}, {pipeline_mode = #tpu.pipeline_mode<synchronous>, transform_indices = @transform_3, window_bounds = array<i64: 16, 48>}]} {
    %c0 = arith.constant 0 : index
    %c0_0 = arith.constant 0 : index
    %0 = vector.load %arg1[%c0, %c0_0] : memref<16x48xf32, #tpu.memory_space<vmem>>, vector<16x48xf32>
    %c0_1 = arith.constant 0 : index
    %c0_2 = arith.constant 0 : index
    %1 = vector.load %arg2[%c0_1, %c0_2] : memref<1x48xf32, #tpu.memory_space<vmem>>, vector<1x48xf32>
    %c0_3 = arith.constant 0 : index
    %c0_4 = arith.constant 0 : index
    %2 = vector.load %arg3[%c0_3, %c0_4] : memref<1x48xf32, #tpu.memory_space<vmem>>, vector<1x48xf32>
    %cst = arith.constant dense<0.000000e+00> : vector<16xf32>
    %3 = vector.multi_reduction <add>, %0, %cst [1] : vector<16x48xf32> to vector<16xf32>
    %4 = vector.shape_cast %3 : vector<16xf32> to vector<16x1xf32>
    %cst_5 = arith.constant 4.800000e+01 : f32
    %5 = vector.broadcast %cst_5 : f32 to vector<16x1xf32>
    %6 = arith.divf %4, %5 : vector<16x1xf32>
    %7 = vector.broadcast %6 : vector<16x1xf32> to vector<16x48xf32>
    %8 = arith.subf %0, %7 : vector<16x48xf32>
    %9 = arith.mulf %8, %8 : vector<16x48xf32>
    %cst_6 = arith.constant dense<0.000000e+00> : vector<16xf32>
    %10 = vector.multi_reduction <add>, %9, %cst_6 [1] : vector<16x48xf32> to vector<16xf32>
    %11 = vector.shape_cast %10 : vector<16xf32> to vector<16x1xf32>
    %cst_7 = arith.constant 4.800000e+01 : f32
    %12 = vector.broadcast %cst_7 : f32 to vector<16x1xf32>
    %13 = arith.divf %11, %12 : vector<16x1xf32>
    %14 = vector.broadcast %6 : vector<16x1xf32> to vector<16x48xf32>
    %15 = arith.subf %0, %14 : vector<16x48xf32>
    %cst_8 = arith.constant 9.99999996E-13 : f32
    %16 = vector.broadcast %cst_8 : f32 to vector<16x1xf32>
    %17 = arith.addf %13, %16 : vector<16x1xf32>
    %18 = math.rsqrt %17 : vector<16x1xf32>
    %19 = vector.broadcast %18 : vector<16x1xf32> to vector<16x48xf32>
    %20 = arith.mulf %15, %19 : vector<16x48xf32>
    %21 = vector.broadcast %1 : vector<1x48xf32> to vector<16x48xf32>
    %22 = arith.mulf %20, %21 : vector<16x48xf32>
    %23 = vector.broadcast %2 : vector<1x48xf32> to vector<16x48xf32>
    %24 = arith.addf %22, %23 : vector<16x48xf32>
    %c0_9 = arith.constant 0 : index
    %c0_10 = arith.constant 0 : index
    %25 = vector.load %arg4[%c0_9, %c0_10] : memref<16x48xf32, #tpu.memory_space<vmem>>, vector<16x48xf32>
    tpu.vector_store %arg4[%c0_9, %c0_10], %24 {strides = array<i32>} : memref<16x48xf32, #tpu.memory_space<vmem>>, vector<16x48xf32>,
    return
  }
  func.func @transform_0(%arg0: i32) -> (i32, i32) {
    %c0_i32 = arith.constant 0 : i32
    %c0_i32_0 = arith.constant 0 : i32
    %c0_i32_1 = arith.constant 0 : i32
    return %c0_i32, %c0_i32_0 : i32, i32
  }
  func.func @transform_1(%arg0: i32) -> (i32, i32) {
    %c0_i32 = arith.constant 0 : i32
    %c0_i32_0 = arith.constant 0 : i32
    %c0_i32_1 = arith.constant 0 : i32
    return %c0_i32, %c0_i32_0 : i32, i32
  }
  func.func @transform_2(%arg0: i32) -> (i32, i32) {
    %c0_i32 = arith.constant 0 : i32
    %c0_i32_0 = arith.constant 0 : i32
    %c0_i32_1 = arith.constant 0 : i32
    return %c0_i32, %c0_i32_0 : i32, i32
  }
  func.func @transform_3(%arg0: i32) -> (i32, i32) {
    %c0_i32 = arith.constant 0 : i32
    %c0_i32_0 = arith.constant 0 : i32
    %c0_i32_1 = arith.constant 0 : i32
    return %c0_i32, %c0_i32_0 : i32, i32
  }
}

module attributes {stable_mosaic.version = 11 : i64} {
  func.func @_epilogue_head_kernel(%arg0: i32, %arg1: memref<16x48xf32, #tpu.memory_space<vmem>>, %arg2: memref<2x16xf32, #tpu.memory_space<vmem>>, %arg3: memref<2x16xf32, #tpu.memory_space<vmem>>, %arg4: memref<48x48xf32, #tpu.memory_space<vmem>>, %arg5: memref<1x48xf32, #tpu.memory_space<vmem>>, %arg6: memref<48x144xf32, #tpu.memory_space<vmem>>, %arg7: memref<1x144xf32, #tpu.memory_space<vmem>>, %arg8: memref<48x48xf32, #tpu.memory_space<vmem>>, %arg9: memref<1x48xf32, #tpu.memory_space<vmem>>, %arg10: memref<96x1024xf32, #tpu.memory_space<vmem>>, %arg11: memref<1x1024xf32, #tpu.memory_space<vmem>>, %arg12: memref<1x512xf32, #tpu.memory_space<vmem>>, %arg13: memref<1x512xf32, #tpu.memory_space<vmem>>, %arg14: memref<512x512xf32, #tpu.memory_space<vmem>>, %arg15: memref<1x512xf32, #tpu.memory_space<vmem>>, %arg16: memref<1x256xf32, #tpu.memory_space<vmem>>, %arg17: memref<1x256xf32, #tpu.memory_space<vmem>>, %arg18: memref<256x128xf32, #tpu.memory_space<vmem>>, %arg19: memref<1x128xf32, #tpu.memory_space<vmem>>, %arg20: memref<1x128xf32, #tpu.memory_space<vmem>>, %arg21: memref<1x128xf32, #tpu.memory_space<vmem>>, %arg22: memref<128x3xf32, #tpu.memory_space<vmem>>, %arg23: memref<1x3xf32, #tpu.memory_space<vmem>>, %arg24: memref<2x3xf32, #tpu.memory_space<vmem>>) attributes {dimension_semantics = [#tpu.dimension_semantics<arbitrary>], iteration_bounds = array<i64: 1>, scalar_prefetch = 0 : i64, scratch_operands = 0 : i64, tpu.core_type = #tpu.core_type<tc>, window_params = [{pipeline_mode = #tpu.pipeline_mode<synchronous>, transform_indices = @transform_0, window_bounds = array<i64: 16, 48>}, {pipeline_mode = #tpu.pipeline_mode<synchronous>, transform_indices = @transform_1, window_bounds = array<i64: 2, 16>}, {pipeline_mode = #tpu.pipeline_mode<synchronous>, transform_indices = @transform_2, window_bounds = array<i64: 2, 16>}, {pipeline_mode = #tpu.pipeline_mode<synchronous>, transform_indices = @transform_3, window_bounds = array<i64: 48, 48>}, {pipeline_mode = #tpu.pipeline_mode<synchronous>, transform_indices = @transform_4, window_bounds = array<i64: 1, 48>}, {pipeline_mode = #tpu.pipeline_mode<synchronous>, transform_indices = @transform_5, window_bounds = array<i64: 48, 144>}, {pipeline_mode = #tpu.pipeline_mode<synchronous>, transform_indices = @transform_6, window_bounds = array<i64: 1, 144>}, {pipeline_mode = #tpu.pipeline_mode<synchronous>, transform_indices = @transform_7, window_bounds = array<i64: 48, 48>}, {pipeline_mode = #tpu.pipeline_mode<synchronous>, transform_indices = @transform_8, window_bounds = array<i64: 1, 48>}, {pipeline_mode = #tpu.pipeline_mode<synchronous>, transform_indices = @transform_9, window_bounds = array<i64: 96, 1024>}, {pipeline_mode = #tpu.pipeline_mode<synchronous>, transform_indices = @transform_10, window_bounds = array<i64: 1, 1024>}, {pipeline_mode = #tpu.pipeline_mode<synchronous>, transform_indices = @transform_11, window_bounds = array<i64: 1, 512>}, {pipeline_mode = #tpu.pipeline_mode<synchronous>, transform_indices = @transform_12, window_bounds = array<i64: 1, 512>}, {pipeline_mode = #tpu.pipeline_mode<synchronous>, transform_indices = @transform_13, window_bounds = array<i64: 512, 512>}, {pipeline_mode = #tpu.pipeline_mode<synchronous>, transform_indices = @transform_14, window_bounds = array<i64: 1, 512>}, {pipeline_mode = #tpu.pipeline_mode<synchronous>, transform_indices = @transform_15, window_bounds = array<i64: 1, 256>}, {pipeline_mode = #tpu.pipeline_mode<synchronous>, transform_indices = @transform_16, window_bounds = array<i64: 1, 256>}, {pipeline_mode = #tpu.pipeline_mode<synchronous>, transform_indices = @transform_17, window_bounds = array<i64: 256, 128>}, {pipeline_mode = #tpu.pipeline_mode<synchronous>, transform_indices = @transform_18, window_bounds = array<i64: 1, 128>}, {pipeline_mode = #tpu.pipeline_mode<synchronous>, transform_indices = @transform_19, window_bounds = array<i64: 1, 128>}, {pipeline_mode = #tpu.pipeline_mode<synchronous>, transform_indices = @transform_20, window_bounds = array<i64: 1, 128>}, {pipeline_mode = #tpu.pipeline_mode<synchronous>, transform_indices = @transform_21, window_bounds = array<i64: 128, 3>}, {pipeline_mode = #tpu.pipeline_mode<synchronous>, transform_indices = @transform_22, window_bounds = array<i64: 1, 3>}, {pipeline_mode = #tpu.pipeline_mode<synchronous>, transform_indices = @transform_23, window_bounds = array<i64: 2, 3>}]} {
    %c0 = arith.constant 0 : index
    %c0_0 = arith.constant 0 : index
    %0 = vector.load %arg1[%c0, %c0_0] : memref<16x48xf32, #tpu.memory_space<vmem>>, vector<16x48xf32>
    %c0_1 = arith.constant 0 : index
    %c0_2 = arith.constant 0 : index
    %1 = vector.load %arg2[%c0_1, %c0_2] : memref<2x16xf32, #tpu.memory_space<vmem>>, vector<2x16xf32>
    %cst = arith.constant dense<0.000000e+00> : vector<2x48xf32>
    %2 = tpu.matmul %1, %0, %cst {dimension_numbers = #tpu.dot_dimension_numbers<[1], [0], [0], [1], [0, 0, 1, 1], [], []>} : vector<2x16xf32>, vector<16x48xf32>, vector<2x48xf32> -> vector<2x48xf32>
    %c0_3 = arith.constant 0 : index
    %c0_4 = arith.constant 0 : index
    %3 = vector.load %arg4[%c0_3, %c0_4] : memref<48x48xf32, #tpu.memory_space<vmem>>, vector<48x48xf32>
    %cst_5 = arith.constant dense<0.000000e+00> : vector<2x48xf32>
    %4 = tpu.matmul %2, %3, %cst_5 {dimension_numbers = #tpu.dot_dimension_numbers<[1], [0], [0], [1], [0, 0, 1, 1], [], []>} : vector<2x48xf32>, vector<48x48xf32>, vector<2x48xf32> -> vector<2x48xf32>
    %c0_6 = arith.constant 0 : index
    %c0_7 = arith.constant 0 : index
    %5 = vector.load %arg5[%c0_6, %c0_7] : memref<1x48xf32, #tpu.memory_space<vmem>>, vector<1x48xf32>
    %6 = vector.broadcast %5 : vector<1x48xf32> to vector<2x48xf32>
    %7 = arith.addf %4, %6 : vector<2x48xf32>
    %8 = math.tanh %7 : vector<2x48xf32>
    %c0_8 = arith.constant 0 : index
    %c0_9 = arith.constant 0 : index
    %9 = vector.load %arg6[%c0_8, %c0_9] : memref<48x144xf32, #tpu.memory_space<vmem>>, vector<48x144xf32>
    %c0_10 = arith.constant 0 : index
    %c0_11 = arith.constant 0 : index
    %10 = vector.load %arg7[%c0_10, %c0_11] : memref<1x144xf32, #tpu.memory_space<vmem>>, vector<1x144xf32>
    %c0_12 = arith.constant 0 : index
    %c0_13 = arith.constant 0 : index
    %11 = vector.load %arg8[%c0_12, %c0_13] : memref<48x48xf32, #tpu.memory_space<vmem>>, vector<48x48xf32>
    %c0_14 = arith.constant 0 : index
    %c0_15 = arith.constant 0 : index
    %12 = vector.load %arg9[%c0_14, %c0_15] : memref<1x48xf32, #tpu.memory_space<vmem>>, vector<1x48xf32>
    %cst_16 = arith.constant dense<0.000000e+00> : vector<16x144xf32>
    %13 = tpu.matmul %0, %9, %cst_16 {dimension_numbers = #tpu.dot_dimension_numbers<[1], [0], [0], [1], [0, 0, 1, 1], [], []>} : vector<16x48xf32>, vector<48x144xf32>, vector<16x144xf32> -> vector<16x144xf32>
    %14 = vector.broadcast %10 : vector<1x144xf32> to vector<16x144xf32>
    %15 = arith.addf %13, %14 : vector<16x144xf32>
    %16 = vector.shape_cast %15 : vector<16x144xf32> to vector<2x8x144xf32>
    %17 = vector.extract_strided_slice %16 {offsets = [0, 0, 0], sizes = [2, 8, 4], strides = [1, 1, 1]} : vector<2x8x144xf32> to vector<2x8x4xf32>
    %18 = vector.extract_strided_slice %16 {offsets = [0, 0, 48], sizes = [2, 8, 4], strides = [1, 1, 1]} : vector<2x8x144xf32> to vector<2x8x4xf32>
    %19 = vector.extract_strided_slice %16 {offsets = [0, 0, 96], sizes = [2, 8, 4], strides = [1, 1, 1]} : vector<2x8x144xf32> to vector<2x8x4xf32>
    "tpu.trace_start"() <{level = 10 : i32, message = "bid,bjd->bij"}> : () -> ()
    %cst_17 = arith.constant dense<0.000000e+00> : vector<2x8x8xf32>
    %20 = tpu.matmul %17, %18, %cst_17 {dimension_numbers = #tpu.dot_dimension_numbers<[2], [2], [1], [1], [0, 0, 0, 1, 1, 1], [0], [0]>} : vector<2x8x4xf32>, vector<2x8x4xf32>, vector<2x8x8xf32> -> vector<2x8x8xf32>
    "tpu.trace_stop"() : () -> ()
    %cst_18 = arith.constant 5.000000e-01 : f32
    %21 = vector.broadcast %cst_18 : f32 to vector<2x8x8xf32>
    %22 = arith.mulf %20, %21 : vector<2x8x8xf32>
    %cst_19 = arith.constant dense<0xFF800000> : vector<2x8xf32>
    %23 = vector.multi_reduction <maximumf>, %22, %cst_19 [2] : vector<2x8x8xf32> to vector<2x8xf32>
    %24 = vector.shape_cast %23 : vector<2x8xf32> to vector<2x8x1xf32>
    %25 = vector.broadcast %24 : vector<2x8x1xf32> to vector<2x8x8xf32>
    %26 = arith.subf %22, %25 : vector<2x8x8xf32>
    %27 = math.exp %26 : vector<2x8x8xf32>
    %cst_20 = arith.constant dense<0.000000e+00> : vector<2x8xf32>
    %28 = vector.multi_reduction <add>, %27, %cst_20 [2] : vector<2x8x8xf32> to vector<2x8xf32>
    %29 = vector.shape_cast %28 : vector<2x8xf32> to vector<2x8x1xf32>
    %30 = vector.broadcast %29 : vector<2x8x1xf32> to vector<2x8x8xf32>
    %31 = arith.divf %27, %30 : vector<2x8x8xf32>
    "tpu.trace_start"() <{level = 10 : i32, message = "bij,bjd->bid"}> : () -> ()
    %cst_21 = arith.constant dense<0.000000e+00> : vector<2x8x4xf32>
    %32 = tpu.matmul %31, %19, %cst_21 {dimension_numbers = #tpu.dot_dimension_numbers<[2], [1], [1], [2], [0, 0, 0, 1, 1, 2], [0], [0]>} : vector<2x8x8xf32>, vector<2x8x4xf32>, vector<2x8x4xf32> -> vector<2x8x4xf32>
    "tpu.trace_stop"() : () -> ()
    %33 = vector.extract_strided_slice %16 {offsets = [0, 0, 4], sizes = [2, 8, 4], strides = [1, 1, 1]} : vector<2x8x144xf32> to vector<2x8x4xf32>
    %34 = vector.extract_strided_slice %16 {offsets = [0, 0, 52], sizes = [2, 8, 4], strides = [1, 1, 1]} : vector<2x8x144xf32> to vector<2x8x4xf32>
    %35 = vector.extract_strided_slice %16 {offsets = [0, 0, 100], sizes = [2, 8, 4], strides = [1, 1, 1]} : vector<2x8x144xf32> to vector<2x8x4xf32>
    "tpu.trace_start"() <{level = 10 : i32, message = "bid,bjd->bij"}> : () -> ()
    %cst_22 = arith.constant dense<0.000000e+00> : vector<2x8x8xf32>
    %36 = tpu.matmul %33, %34, %cst_22 {dimension_numbers = #tpu.dot_dimension_numbers<[2], [2], [1], [1], [0, 0, 0, 1, 1, 1], [0], [0]>} : vector<2x8x4xf32>, vector<2x8x4xf32>, vector<2x8x8xf32> -> vector<2x8x8xf32>
    "tpu.trace_stop"() : () -> ()
    %cst_23 = arith.constant 5.000000e-01 : f32
    %37 = vector.broadcast %cst_23 : f32 to vector<2x8x8xf32>
    %38 = arith.mulf %36, %37 : vector<2x8x8xf32>
    %cst_24 = arith.constant dense<0xFF800000> : vector<2x8xf32>
    %39 = vector.multi_reduction <maximumf>, %38, %cst_24 [2] : vector<2x8x8xf32> to vector<2x8xf32>
    %40 = vector.shape_cast %39 : vector<2x8xf32> to vector<2x8x1xf32>
    %41 = vector.broadcast %40 : vector<2x8x1xf32> to vector<2x8x8xf32>
    %42 = arith.subf %38, %41 : vector<2x8x8xf32>
    %43 = math.exp %42 : vector<2x8x8xf32>
    %cst_25 = arith.constant dense<0.000000e+00> : vector<2x8xf32>
    %44 = vector.multi_reduction <add>, %43, %cst_25 [2] : vector<2x8x8xf32> to vector<2x8xf32>
    %45 = vector.shape_cast %44 : vector<2x8xf32> to vector<2x8x1xf32>
    %46 = vector.broadcast %45 : vector<2x8x1xf32> to vector<2x8x8xf32>
    %47 = arith.divf %43, %46 : vector<2x8x8xf32>
    "tpu.trace_start"() <{level = 10 : i32, message = "bij,bjd->bid"}> : () -> ()
    %cst_26 = arith.constant dense<0.000000e+00> : vector<2x8x4xf32>
    %48 = tpu.matmul %47, %35, %cst_26 {dimension_numbers = #tpu.dot_dimension_numbers<[2], [1], [1], [2], [0, 0, 0, 1, 1, 2], [0], [0]>} : vector<2x8x8xf32>, vector<2x8x4xf32>, vector<2x8x4xf32> -> vector<2x8x4xf32>
    "tpu.trace_stop"() : () -> ()
    %49 = vector.extract_strided_slice %16 {offsets = [0, 0, 8], sizes = [2, 8, 4], strides = [1, 1, 1]} : vector<2x8x144xf32> to vector<2x8x4xf32>
    %50 = vector.extract_strided_slice %16 {offsets = [0, 0, 56], sizes = [2, 8, 4], strides = [1, 1, 1]} : vector<2x8x144xf32> to vector<2x8x4xf32>
    %51 = vector.extract_strided_slice %16 {offsets = [0, 0, 104], sizes = [2, 8, 4], strides = [1, 1, 1]} : vector<2x8x144xf32> to vector<2x8x4xf32>
    "tpu.trace_start"() <{level = 10 : i32, message = "bid,bjd->bij"}> : () -> ()
    %cst_27 = arith.constant dense<0.000000e+00> : vector<2x8x8xf32>
    %52 = tpu.matmul %49, %50, %cst_27 {dimension_numbers = #tpu.dot_dimension_numbers<[2], [2], [1], [1], [0, 0, 0, 1, 1, 1], [0], [0]>} : vector<2x8x4xf32>, vector<2x8x4xf32>, vector<2x8x8xf32> -> vector<2x8x8xf32>
    "tpu.trace_stop"() : () -> ()
    %cst_28 = arith.constant 5.000000e-01 : f32
    %53 = vector.broadcast %cst_28 : f32 to vector<2x8x8xf32>
    %54 = arith.mulf %52, %53 : vector<2x8x8xf32>
    %cst_29 = arith.constant dense<0xFF800000> : vector<2x8xf32>
    %55 = vector.multi_reduction <maximumf>, %54, %cst_29 [2] : vector<2x8x8xf32> to vector<2x8xf32>
    %56 = vector.shape_cast %55 : vector<2x8xf32> to vector<2x8x1xf32>
    %57 = vector.broadcast %56 : vector<2x8x1xf32> to vector<2x8x8xf32>
    %58 = arith.subf %54, %57 : vector<2x8x8xf32>
    %59 = math.exp %58 : vector<2x8x8xf32>
    %cst_30 = arith.constant dense<0.000000e+00> : vector<2x8xf32>
    %60 = vector.multi_reduction <add>, %59, %cst_30 [2] : vector<2x8x8xf32> to vector<2x8xf32>
    %61 = vector.shape_cast %60 : vector<2x8xf32> to vector<2x8x1xf32>
    %62 = vector.broadcast %61 : vector<2x8x1xf32> to vector<2x8x8xf32>
    %63 = arith.divf %59, %62 : vector<2x8x8xf32>
    "tpu.trace_start"() <{level = 10 : i32, message = "bij,bjd->bid"}> : () -> ()
    %cst_31 = arith.constant dense<0.000000e+00> : vector<2x8x4xf32>
    %64 = tpu.matmul %63, %51, %cst_31 {dimension_numbers = #tpu.dot_dimension_numbers<[2], [1], [1], [2], [0, 0, 0, 1, 1, 2], [0], [0]>} : vector<2x8x8xf32>, vector<2x8x4xf32>, vector<2x8x4xf32> -> vector<2x8x4xf32>
    "tpu.trace_stop"() : () -> ()
    %65 = vector.extract_strided_slice %16 {offsets = [0, 0, 12], sizes = [2, 8, 4], strides = [1, 1, 1]} : vector<2x8x144xf32> to vector<2x8x4xf32>
    %66 = vector.extract_strided_slice %16 {offsets = [0, 0, 60], sizes = [2, 8, 4], strides = [1, 1, 1]} : vector<2x8x144xf32> to vector<2x8x4xf32>
    %67 = vector.extract_strided_slice %16 {offsets = [0, 0, 108], sizes = [2, 8, 4], strides = [1, 1, 1]} : vector<2x8x144xf32> to vector<2x8x4xf32>
    "tpu.trace_start"() <{level = 10 : i32, message = "bid,bjd->bij"}> : () -> ()
    %cst_32 = arith.constant dense<0.000000e+00> : vector<2x8x8xf32>
    %68 = tpu.matmul %65, %66, %cst_32 {dimension_numbers = #tpu.dot_dimension_numbers<[2], [2], [1], [1], [0, 0, 0, 1, 1, 1], [0], [0]>} : vector<2x8x4xf32>, vector<2x8x4xf32>, vector<2x8x8xf32> -> vector<2x8x8xf32>
    "tpu.trace_stop"() : () -> ()
    %cst_33 = arith.constant 5.000000e-01 : f32
    %69 = vector.broadcast %cst_33 : f32 to vector<2x8x8xf32>
    %70 = arith.mulf %68, %69 : vector<2x8x8xf32>
    %cst_34 = arith.constant dense<0xFF800000> : vector<2x8xf32>
    %71 = vector.multi_reduction <maximumf>, %70, %cst_34 [2] : vector<2x8x8xf32> to vector<2x8xf32>
    %72 = vector.shape_cast %71 : vector<2x8xf32> to vector<2x8x1xf32>
    %73 = vector.broadcast %72 : vector<2x8x1xf32> to vector<2x8x8xf32>
    %74 = arith.subf %70, %73 : vector<2x8x8xf32>
    %75 = math.exp %74 : vector<2x8x8xf32>
    %cst_35 = arith.constant dense<0.000000e+00> : vector<2x8xf32>
    %76 = vector.multi_reduction <add>, %75, %cst_35 [2] : vector<2x8x8xf32> to vector<2x8xf32>
    %77 = vector.shape_cast %76 : vector<2x8xf32> to vector<2x8x1xf32>
    %78 = vector.broadcast %77 : vector<2x8x1xf32> to vector<2x8x8xf32>
    %79 = arith.divf %75, %78 : vector<2x8x8xf32>
    "tpu.trace_start"() <{level = 10 : i32, message = "bij,bjd->bid"}> : () -> ()
    %cst_36 = arith.constant dense<0.000000e+00> : vector<2x8x4xf32>
    %80 = tpu.matmul %79, %67, %cst_36 {dimension_numbers = #tpu.dot_dimension_numbers<[2], [1], [1], [2], [0, 0, 0, 1, 1, 2], [0], [0]>} : vector<2x8x8xf32>, vector<2x8x4xf32>, vector<2x8x4xf32> -> vector<2x8x4xf32>
    "tpu.trace_stop"() : () -> ()
    %81 = vector.extract_strided_slice %16 {offsets = [0, 0, 16], sizes = [2, 8, 4], strides = [1, 1, 1]} : vector<2x8x144xf32> to vector<2x8x4xf32>
    %82 = vector.extract_strided_slice %16 {offsets = [0, 0, 64], sizes = [2, 8, 4], strides = [1, 1, 1]} : vector<2x8x144xf32> to vector<2x8x4xf32>
    %83 = vector.extract_strided_slice %16 {offsets = [0, 0, 112], sizes = [2, 8, 4], strides = [1, 1, 1]} : vector<2x8x144xf32> to vector<2x8x4xf32>
    "tpu.trace_start"() <{level = 10 : i32, message = "bid,bjd->bij"}> : () -> ()
    %cst_37 = arith.constant dense<0.000000e+00> : vector<2x8x8xf32>
    %84 = tpu.matmul %81, %82, %cst_37 {dimension_numbers = #tpu.dot_dimension_numbers<[2], [2], [1], [1], [0, 0, 0, 1, 1, 1], [0], [0]>} : vector<2x8x4xf32>, vector<2x8x4xf32>, vector<2x8x8xf32> -> vector<2x8x8xf32>
    "tpu.trace_stop"() : () -> ()
    %cst_38 = arith.constant 5.000000e-01 : f32
    %85 = vector.broadcast %cst_38 : f32 to vector<2x8x8xf32>
    %86 = arith.mulf %84, %85 : vector<2x8x8xf32>
    %cst_39 = arith.constant dense<0xFF800000> : vector<2x8xf32>
    %87 = vector.multi_reduction <maximumf>, %86, %cst_39 [2] : vector<2x8x8xf32> to vector<2x8xf32>
    %88 = vector.shape_cast %87 : vector<2x8xf32> to vector<2x8x1xf32>
    %89 = vector.broadcast %88 : vector<2x8x1xf32> to vector<2x8x8xf32>
    %90 = arith.subf %86, %89 : vector<2x8x8xf32>
    %91 = math.exp %90 : vector<2x8x8xf32>
    %cst_40 = arith.constant dense<0.000000e+00> : vector<2x8xf32>
    %92 = vector.multi_reduction <add>, %91, %cst_40 [2] : vector<2x8x8xf32> to vector<2x8xf32>
    %93 = vector.shape_cast %92 : vector<2x8xf32> to vector<2x8x1xf32>
    %94 = vector.broadcast %93 : vector<2x8x1xf32> to vector<2x8x8xf32>
    %95 = arith.divf %91, %94 : vector<2x8x8xf32>
    "tpu.trace_start"() <{level = 10 : i32, message = "bij,bjd->bid"}> : () -> ()
    %cst_41 = arith.constant dense<0.000000e+00> : vector<2x8x4xf32>
    %96 = tpu.matmul %95, %83, %cst_41 {dimension_numbers = #tpu.dot_dimension_numbers<[2], [1], [1], [2], [0, 0, 0, 1, 1, 2], [0], [0]>} : vector<2x8x8xf32>, vector<2x8x4xf32>, vector<2x8x4xf32> -> vector<2x8x4xf32>
    "tpu.trace_stop"() : () -> ()
    %97 = vector.extract_strided_slice %16 {offsets = [0, 0, 20], sizes = [2, 8, 4], strides = [1, 1, 1]} : vector<2x8x144xf32> to vector<2x8x4xf32>
    %98 = vector.extract_strided_slice %16 {offsets = [0, 0, 68], sizes = [2, 8, 4], strides = [1, 1, 1]} : vector<2x8x144xf32> to vector<2x8x4xf32>
    %99 = vector.extract_strided_slice %16 {offsets = [0, 0, 116], sizes = [2, 8, 4], strides = [1, 1, 1]} : vector<2x8x144xf32> to vector<2x8x4xf32>
    "tpu.trace_start"() <{level = 10 : i32, message = "bid,bjd->bij"}> : () -> ()
    %cst_42 = arith.constant dense<0.000000e+00> : vector<2x8x8xf32>
    %100 = tpu.matmul %97, %98, %cst_42 {dimension_numbers = #tpu.dot_dimension_numbers<[2], [2], [1], [1], [0, 0, 0, 1, 1, 1], [0], [0]>} : vector<2x8x4xf32>, vector<2x8x4xf32>, vector<2x8x8xf32> -> vector<2x8x8xf32>
    "tpu.trace_stop"() : () -> ()
    %cst_43 = arith.constant 5.000000e-01 : f32
    %101 = vector.broadcast %cst_43 : f32 to vector<2x8x8xf32>
    %102 = arith.mulf %100, %101 : vector<2x8x8xf32>
    %cst_44 = arith.constant dense<0xFF800000> : vector<2x8xf32>
    %103 = vector.multi_reduction <maximumf>, %102, %cst_44 [2] : vector<2x8x8xf32> to vector<2x8xf32>
    %104 = vector.shape_cast %103 : vector<2x8xf32> to vector<2x8x1xf32>
    %105 = vector.broadcast %104 : vector<2x8x1xf32> to vector<2x8x8xf32>
    %106 = arith.subf %102, %105 : vector<2x8x8xf32>
    %107 = math.exp %106 : vector<2x8x8xf32>
    %cst_45 = arith.constant dense<0.000000e+00> : vector<2x8xf32>
    %108 = vector.multi_reduction <add>, %107, %cst_45 [2] : vector<2x8x8xf32> to vector<2x8xf32>
    %109 = vector.shape_cast %108 : vector<2x8xf32> to vector<2x8x1xf32>
    %110 = vector.broadcast %109 : vector<2x8x1xf32> to vector<2x8x8xf32>
    %111 = arith.divf %107, %110 : vector<2x8x8xf32>
    "tpu.trace_start"() <{level = 10 : i32, message = "bij,bjd->bid"}> : () -> ()
    %cst_46 = arith.constant dense<0.000000e+00> : vector<2x8x4xf32>
    %112 = tpu.matmul %111, %99, %cst_46 {dimension_numbers = #tpu.dot_dimension_numbers<[2], [1], [1], [2], [0, 0, 0, 1, 1, 2], [0], [0]>} : vector<2x8x8xf32>, vector<2x8x4xf32>, vector<2x8x4xf32> -> vector<2x8x4xf32>
    "tpu.trace_stop"() : () -> ()
    %113 = vector.extract_strided_slice %16 {offsets = [0, 0, 24], sizes = [2, 8, 4], strides = [1, 1, 1]} : vector<2x8x144xf32> to vector<2x8x4xf32>
    %114 = vector.extract_strided_slice %16 {offsets = [0, 0, 72], sizes = [2, 8, 4], strides = [1, 1, 1]} : vector<2x8x144xf32> to vector<2x8x4xf32>
    %115 = vector.extract_strided_slice %16 {offsets = [0, 0, 120], sizes = [2, 8, 4], strides = [1, 1, 1]} : vector<2x8x144xf32> to vector<2x8x4xf32>
    "tpu.trace_start"() <{level = 10 : i32, message = "bid,bjd->bij"}> : () -> ()
    %cst_47 = arith.constant dense<0.000000e+00> : vector<2x8x8xf32>
    %116 = tpu.matmul %113, %114, %cst_47 {dimension_numbers = #tpu.dot_dimension_numbers<[2], [2], [1], [1], [0, 0, 0, 1, 1, 1], [0], [0]>} : vector<2x8x4xf32>, vector<2x8x4xf32>, vector<2x8x8xf32> -> vector<2x8x8xf32>
    "tpu.trace_stop"() : () -> ()
    %cst_48 = arith.constant 5.000000e-01 : f32
    %117 = vector.broadcast %cst_48 : f32 to vector<2x8x8xf32>
    %118 = arith.mulf %116, %117 : vector<2x8x8xf32>
    %cst_49 = arith.constant dense<0xFF800000> : vector<2x8xf32>
    %119 = vector.multi_reduction <maximumf>, %118, %cst_49 [2] : vector<2x8x8xf32> to vector<2x8xf32>
    %120 = vector.shape_cast %119 : vector<2x8xf32> to vector<2x8x1xf32>
    %121 = vector.broadcast %120 : vector<2x8x1xf32> to vector<2x8x8xf32>
    %122 = arith.subf %118, %121 : vector<2x8x8xf32>
    %123 = math.exp %122 : vector<2x8x8xf32>
    %cst_50 = arith.constant dense<0.000000e+00> : vector<2x8xf32>
    %124 = vector.multi_reduction <add>, %123, %cst_50 [2] : vector<2x8x8xf32> to vector<2x8xf32>
    %125 = vector.shape_cast %124 : vector<2x8xf32> to vector<2x8x1xf32>
    %126 = vector.broadcast %125 : vector<2x8x1xf32> to vector<2x8x8xf32>
    %127 = arith.divf %123, %126 : vector<2x8x8xf32>
    "tpu.trace_start"() <{level = 10 : i32, message = "bij,bjd->bid"}> : () -> ()
    %cst_51 = arith.constant dense<0.000000e+00> : vector<2x8x4xf32>
    %128 = tpu.matmul %127, %115, %cst_51 {dimension_numbers = #tpu.dot_dimension_numbers<[2], [1], [1], [2], [0, 0, 0, 1, 1, 2], [0], [0]>} : vector<2x8x8xf32>, vector<2x8x4xf32>, vector<2x8x4xf32> -> vector<2x8x4xf32>
    "tpu.trace_stop"() : () -> ()
    %129 = vector.extract_strided_slice %16 {offsets = [0, 0, 28], sizes = [2, 8, 4], strides = [1, 1, 1]} : vector<2x8x144xf32> to vector<2x8x4xf32>
    %130 = vector.extract_strided_slice %16 {offsets = [0, 0, 76], sizes = [2, 8, 4], strides = [1, 1, 1]} : vector<2x8x144xf32> to vector<2x8x4xf32>
    %131 = vector.extract_strided_slice %16 {offsets = [0, 0, 124], sizes = [2, 8, 4], strides = [1, 1, 1]} : vector<2x8x144xf32> to vector<2x8x4xf32>
    "tpu.trace_start"() <{level = 10 : i32, message = "bid,bjd->bij"}> : () -> ()
    %cst_52 = arith.constant dense<0.000000e+00> : vector<2x8x8xf32>
    %132 = tpu.matmul %129, %130, %cst_52 {dimension_numbers = #tpu.dot_dimension_numbers<[2], [2], [1], [1], [0, 0, 0, 1, 1, 1], [0], [0]>} : vector<2x8x4xf32>, vector<2x8x4xf32>, vector<2x8x8xf32> -> vector<2x8x8xf32>
    "tpu.trace_stop"() : () -> ()
    %cst_53 = arith.constant 5.000000e-01 : f32
    %133 = vector.broadcast %cst_53 : f32 to vector<2x8x8xf32>
    %134 = arith.mulf %132, %133 : vector<2x8x8xf32>
    %cst_54 = arith.constant dense<0xFF800000> : vector<2x8xf32>
    %135 = vector.multi_reduction <maximumf>, %134, %cst_54 [2] : vector<2x8x8xf32> to vector<2x8xf32>
    %136 = vector.shape_cast %135 : vector<2x8xf32> to vector<2x8x1xf32>
    %137 = vector.broadcast %136 : vector<2x8x1xf32> to vector<2x8x8xf32>
    %138 = arith.subf %134, %137 : vector<2x8x8xf32>
    %139 = math.exp %138 : vector<2x8x8xf32>
    %cst_55 = arith.constant dense<0.000000e+00> : vector<2x8xf32>
    %140 = vector.multi_reduction <add>, %139, %cst_55 [2] : vector<2x8x8xf32> to vector<2x8xf32>
    %141 = vector.shape_cast %140 : vector<2x8xf32> to vector<2x8x1xf32>
    %142 = vector.broadcast %141 : vector<2x8x1xf32> to vector<2x8x8xf32>
    %143 = arith.divf %139, %142 : vector<2x8x8xf32>
    "tpu.trace_start"() <{level = 10 : i32, message = "bij,bjd->bid"}> : () -> ()
    %cst_56 = arith.constant dense<0.000000e+00> : vector<2x8x4xf32>
    %144 = tpu.matmul %143, %131, %cst_56 {dimension_numbers = #tpu.dot_dimension_numbers<[2], [1], [1], [2], [0, 0, 0, 1, 1, 2], [0], [0]>} : vector<2x8x8xf32>, vector<2x8x4xf32>, vector<2x8x4xf32> -> vector<2x8x4xf32>
    "tpu.trace_stop"() : () -> ()
    %145 = vector.extract_strided_slice %16 {offsets = [0, 0, 32], sizes = [2, 8, 4], strides = [1, 1, 1]} : vector<2x8x144xf32> to vector<2x8x4xf32>
    %146 = vector.extract_strided_slice %16 {offsets = [0, 0, 80], sizes = [2, 8, 4], strides = [1, 1, 1]} : vector<2x8x144xf32> to vector<2x8x4xf32>
    %147 = vector.extract_strided_slice %16 {offsets = [0, 0, 128], sizes = [2, 8, 4], strides = [1, 1, 1]} : vector<2x8x144xf32> to vector<2x8x4xf32>
    "tpu.trace_start"() <{level = 10 : i32, message = "bid,bjd->bij"}> : () -> ()
    %cst_57 = arith.constant dense<0.000000e+00> : vector<2x8x8xf32>
    %148 = tpu.matmul %145, %146, %cst_57 {dimension_numbers = #tpu.dot_dimension_numbers<[2], [2], [1], [1], [0, 0, 0, 1, 1, 1], [0], [0]>} : vector<2x8x4xf32>, vector<2x8x4xf32>, vector<2x8x8xf32> -> vector<2x8x8xf32>
    "tpu.trace_stop"() : () -> ()
    %cst_58 = arith.constant 5.000000e-01 : f32
    %149 = vector.broadcast %cst_58 : f32 to vector<2x8x8xf32>
    %150 = arith.mulf %148, %149 : vector<2x8x8xf32>
    %cst_59 = arith.constant dense<0xFF800000> : vector<2x8xf32>
    %151 = vector.multi_reduction <maximumf>, %150, %cst_59 [2] : vector<2x8x8xf32> to vector<2x8xf32>
    %152 = vector.shape_cast %151 : vector<2x8xf32> to vector<2x8x1xf32>
    %153 = vector.broadcast %152 : vector<2x8x1xf32> to vector<2x8x8xf32>
    %154 = arith.subf %150, %153 : vector<2x8x8xf32>
    %155 = math.exp %154 : vector<2x8x8xf32>
    %cst_60 = arith.constant dense<0.000000e+00> : vector<2x8xf32>
    %156 = vector.multi_reduction <add>, %155, %cst_60 [2] : vector<2x8x8xf32> to vector<2x8xf32>
    %157 = vector.shape_cast %156 : vector<2x8xf32> to vector<2x8x1xf32>
    %158 = vector.broadcast %157 : vector<2x8x1xf32> to vector<2x8x8xf32>
    %159 = arith.divf %155, %158 : vector<2x8x8xf32>
    "tpu.trace_start"() <{level = 10 : i32, message = "bij,bjd->bid"}> : () -> ()
    %cst_61 = arith.constant dense<0.000000e+00> : vector<2x8x4xf32>
    %160 = tpu.matmul %159, %147, %cst_61 {dimension_numbers = #tpu.dot_dimension_numbers<[2], [1], [1], [2], [0, 0, 0, 1, 1, 2], [0], [0]>} : vector<2x8x8xf32>, vector<2x8x4xf32>, vector<2x8x4xf32> -> vector<2x8x4xf32>
    "tpu.trace_stop"() : () -> ()
    %161 = vector.extract_strided_slice %16 {offsets = [0, 0, 36], sizes = [2, 8, 4], strides = [1, 1, 1]} : vector<2x8x144xf32> to vector<2x8x4xf32>
    %162 = vector.extract_strided_slice %16 {offsets = [0, 0, 84], sizes = [2, 8, 4], strides = [1, 1, 1]} : vector<2x8x144xf32> to vector<2x8x4xf32>
    %163 = vector.extract_strided_slice %16 {offsets = [0, 0, 132], sizes = [2, 8, 4], strides = [1, 1, 1]} : vector<2x8x144xf32> to vector<2x8x4xf32>
    "tpu.trace_start"() <{level = 10 : i32, message = "bid,bjd->bij"}> : () -> ()
    %cst_62 = arith.constant dense<0.000000e+00> : vector<2x8x8xf32>
    %164 = tpu.matmul %161, %162, %cst_62 {dimension_numbers = #tpu.dot_dimension_numbers<[2], [2], [1], [1], [0, 0, 0, 1, 1, 1], [0], [0]>} : vector<2x8x4xf32>, vector<2x8x4xf32>, vector<2x8x8xf32> -> vector<2x8x8xf32>
    "tpu.trace_stop"() : () -> ()
    %cst_63 = arith.constant 5.000000e-01 : f32
    %165 = vector.broadcast %cst_63 : f32 to vector<2x8x8xf32>
    %166 = arith.mulf %164, %165 : vector<2x8x8xf32>
    %cst_64 = arith.constant dense<0xFF800000> : vector<2x8xf32>
    %167 = vector.multi_reduction <maximumf>, %166, %cst_64 [2] : vector<2x8x8xf32> to vector<2x8xf32>
    %168 = vector.shape_cast %167 : vector<2x8xf32> to vector<2x8x1xf32>
    %169 = vector.broadcast %168 : vector<2x8x1xf32> to vector<2x8x8xf32>
    %170 = arith.subf %166, %169 : vector<2x8x8xf32>
    %171 = math.exp %170 : vector<2x8x8xf32>
    %cst_65 = arith.constant dense<0.000000e+00> : vector<2x8xf32>
    %172 = vector.multi_reduction <add>, %171, %cst_65 [2] : vector<2x8x8xf32> to vector<2x8xf32>
    %173 = vector.shape_cast %172 : vector<2x8xf32> to vector<2x8x1xf32>
    %174 = vector.broadcast %173 : vector<2x8x1xf32> to vector<2x8x8xf32>
    %175 = arith.divf %171, %174 : vector<2x8x8xf32>
    "tpu.trace_start"() <{level = 10 : i32, message = "bij,bjd->bid"}> : () -> ()
    %cst_66 = arith.constant dense<0.000000e+00> : vector<2x8x4xf32>
    %176 = tpu.matmul %175, %163, %cst_66 {dimension_numbers = #tpu.dot_dimension_numbers<[2], [1], [1], [2], [0, 0, 0, 1, 1, 2], [0], [0]>} : vector<2x8x8xf32>, vector<2x8x4xf32>, vector<2x8x4xf32> -> vector<2x8x4xf32>
    "tpu.trace_stop"() : () -> ()
    %177 = vector.extract_strided_slice %16 {offsets = [0, 0, 40], sizes = [2, 8, 4], strides = [1, 1, 1]} : vector<2x8x144xf32> to vector<2x8x4xf32>
    %178 = vector.extract_strided_slice %16 {offsets = [0, 0, 88], sizes = [2, 8, 4], strides = [1, 1, 1]} : vector<2x8x144xf32> to vector<2x8x4xf32>
    %179 = vector.extract_strided_slice %16 {offsets = [0, 0, 136], sizes = [2, 8, 4], strides = [1, 1, 1]} : vector<2x8x144xf32> to vector<2x8x4xf32>
    "tpu.trace_start"() <{level = 10 : i32, message = "bid,bjd->bij"}> : () -> ()
    %cst_67 = arith.constant dense<0.000000e+00> : vector<2x8x8xf32>
    %180 = tpu.matmul %177, %178, %cst_67 {dimension_numbers = #tpu.dot_dimension_numbers<[2], [2], [1], [1], [0, 0, 0, 1, 1, 1], [0], [0]>} : vector<2x8x4xf32>, vector<2x8x4xf32>, vector<2x8x8xf32> -> vector<2x8x8xf32>
    "tpu.trace_stop"() : () -> ()
    %cst_68 = arith.constant 5.000000e-01 : f32
    %181 = vector.broadcast %cst_68 : f32 to vector<2x8x8xf32>
    %182 = arith.mulf %180, %181 : vector<2x8x8xf32>
    %cst_69 = arith.constant dense<0xFF800000> : vector<2x8xf32>
    %183 = vector.multi_reduction <maximumf>, %182, %cst_69 [2] : vector<2x8x8xf32> to vector<2x8xf32>
    %184 = vector.shape_cast %183 : vector<2x8xf32> to vector<2x8x1xf32>
    %185 = vector.broadcast %184 : vector<2x8x1xf32> to vector<2x8x8xf32>
    %186 = arith.subf %182, %185 : vector<2x8x8xf32>
    %187 = math.exp %186 : vector<2x8x8xf32>
    %cst_70 = arith.constant dense<0.000000e+00> : vector<2x8xf32>
    %188 = vector.multi_reduction <add>, %187, %cst_70 [2] : vector<2x8x8xf32> to vector<2x8xf32>
    %189 = vector.shape_cast %188 : vector<2x8xf32> to vector<2x8x1xf32>
    %190 = vector.broadcast %189 : vector<2x8x1xf32> to vector<2x8x8xf32>
    %191 = arith.divf %187, %190 : vector<2x8x8xf32>
    "tpu.trace_start"() <{level = 10 : i32, message = "bij,bjd->bid"}> : () -> ()
    %cst_71 = arith.constant dense<0.000000e+00> : vector<2x8x4xf32>
    %192 = tpu.matmul %191, %179, %cst_71 {dimension_numbers = #tpu.dot_dimension_numbers<[2], [1], [1], [2], [0, 0, 0, 1, 1, 2], [0], [0]>} : vector<2x8x8xf32>, vector<2x8x4xf32>, vector<2x8x4xf32> -> vector<2x8x4xf32>
    "tpu.trace_stop"() : () -> ()
    %193 = vector.extract_strided_slice %16 {offsets = [0, 0, 44], sizes = [2, 8, 4], strides = [1, 1, 1]} : vector<2x8x144xf32> to vector<2x8x4xf32>
    %194 = vector.extract_strided_slice %16 {offsets = [0, 0, 92], sizes = [2, 8, 4], strides = [1, 1, 1]} : vector<2x8x144xf32> to vector<2x8x4xf32>
    %195 = vector.extract_strided_slice %16 {offsets = [0, 0, 140], sizes = [2, 8, 4], strides = [1, 1, 1]} : vector<2x8x144xf32> to vector<2x8x4xf32>
    "tpu.trace_start"() <{level = 10 : i32, message = "bid,bjd->bij"}> : () -> ()
    %cst_72 = arith.constant dense<0.000000e+00> : vector<2x8x8xf32>
    %196 = tpu.matmul %193, %194, %cst_72 {dimension_numbers = #tpu.dot_dimension_numbers<[2], [2], [1], [1], [0, 0, 0, 1, 1, 1], [0], [0]>} : vector<2x8x4xf32>, vector<2x8x4xf32>, vector<2x8x8xf32> -> vector<2x8x8xf32>
    "tpu.trace_stop"() : () -> ()
    %cst_73 = arith.constant 5.000000e-01 : f32
    %197 = vector.broadcast %cst_73 : f32 to vector<2x8x8xf32>
    %198 = arith.mulf %196, %197 : vector<2x8x8xf32>
    %cst_74 = arith.constant dense<0xFF800000> : vector<2x8xf32>
    %199 = vector.multi_reduction <maximumf>, %198, %cst_74 [2] : vector<2x8x8xf32> to vector<2x8xf32>
    %200 = vector.shape_cast %199 : vector<2x8xf32> to vector<2x8x1xf32>
    %201 = vector.broadcast %200 : vector<2x8x1xf32> to vector<2x8x8xf32>
    %202 = arith.subf %198, %201 : vector<2x8x8xf32>
    %203 = math.exp %202 : vector<2x8x8xf32>
    %cst_75 = arith.constant dense<0.000000e+00> : vector<2x8xf32>
    %204 = vector.multi_reduction <add>, %203, %cst_75 [2] : vector<2x8x8xf32> to vector<2x8xf32>
    %205 = vector.shape_cast %204 : vector<2x8xf32> to vector<2x8x1xf32>
    %206 = vector.broadcast %205 : vector<2x8x1xf32> to vector<2x8x8xf32>
    %207 = arith.divf %203, %206 : vector<2x8x8xf32>
    "tpu.trace_start"() <{level = 10 : i32, message = "bij,bjd->bid"}> : () -> ()
    %cst_76 = arith.constant dense<0.000000e+00> : vector<2x8x4xf32>
    %208 = tpu.matmul %207, %195, %cst_76 {dimension_numbers = #tpu.dot_dimension_numbers<[2], [1], [1], [2], [0, 0, 0, 1, 1, 2], [0], [0]>} : vector<2x8x8xf32>, vector<2x8x4xf32>, vector<2x8x4xf32> -> vector<2x8x4xf32>
    "tpu.trace_stop"() : () -> ()
    %209 = tpu.concatenate %32, %48, %64, %80, %96, %112, %128, %144, %160, %176, %192, %208 in 2 : vector<2x8x4xf32>, vector<2x8x4xf32>, vector<2x8x4xf32>, vector<2x8x4xf32>, vector<2x8x4xf32>, vector<2x8x4xf32>, vector<2x8x4xf32>, vector<2x8x4xf32>, vector<2x8x4xf32>, vector<2x8x4xf32>, vector<2x8x4xf32>, vector<2x8x4xf32> -> vector<2x8x48xf32>
    %210 = vector.shape_cast %209 : vector<2x8x48xf32> to vector<16x48xf32>
    %cst_77 = arith.constant dense<0.000000e+00> : vector<16x48xf32>
    %211 = tpu.matmul %210, %11, %cst_77 {dimension_numbers = #tpu.dot_dimension_numbers<[1], [0], [0], [1], [0, 0, 1, 1], [], []>} : vector<16x48xf32>, vector<48x48xf32>, vector<16x48xf32> -> vector<16x48xf32>
    %212 = vector.broadcast %12 : vector<1x48xf32> to vector<16x48xf32>
    %213 = arith.addf %211, %212 : vector<16x48xf32>
    %c0_78 = arith.constant 0 : index
    %c0_79 = arith.constant 0 : index
    %214 = vector.load %arg3[%c0_78, %c0_79] : memref<2x16xf32, #tpu.memory_space<vmem>>, vector<2x16xf32>
    %cst_80 = arith.constant dense<0.000000e+00> : vector<2x48xf32>
    %215 = tpu.matmul %214, %213, %cst_80 {dimension_numbers = #tpu.dot_dimension_numbers<[1], [0], [0], [1], [0, 0, 1, 1], [], []>} : vector<2x16xf32>, vector<16x48xf32>, vector<2x48xf32> -> vector<2x48xf32>
    %216 = tpu.concatenate %215, %8 in 1 : vector<2x48xf32>, vector<2x48xf32> -> vector<2x96xf32>
    %c0_81 = arith.constant 0 : index
    %c0_82 = arith.constant 0 : index
    %217 = vector.load %arg10[%c0_81, %c0_82] : memref<96x1024xf32, #tpu.memory_space<vmem>>, vector<96x1024xf32>
    %cst_83 = arith.constant dense<0.000000e+00> : vector<2x1024xf32>
    %218 = tpu.matmul %216, %217, %cst_83 {dimension_numbers = #tpu.dot_dimension_numbers<[1], [0], [0], [1], [0, 0, 1, 1], [], []>} : vector<2x96xf32>, vector<96x1024xf32>, vector<2x1024xf32> -> vector<2x1024xf32>
    %c0_84 = arith.constant 0 : index
    %c0_85 = arith.constant 0 : index
    %219 = vector.load %arg11[%c0_84, %c0_85] : memref<1x1024xf32, #tpu.memory_space<vmem>>, vector<1x1024xf32>
    %220 = vector.broadcast %219 : vector<1x1024xf32> to vector<2x1024xf32>
    %221 = arith.addf %218, %220 : vector<2x1024xf32>
    %222 = vector.extract_strided_slice %221 {offsets = [0, 512], sizes = [2, 512], strides = [1, 1]} : vector<2x1024xf32> to vector<2x512xf32>
    %c0_86 = arith.constant 0 : index
    %c0_87 = arith.constant 0 : index
    %223 = vector.load %arg12[%c0_86, %c0_87] : memref<1x512xf32, #tpu.memory_space<vmem>>, vector<1x512xf32>
    %224 = vector.broadcast %223 : vector<1x512xf32> to vector<2x512xf32>
    %225 = arith.mulf %222, %224 : vector<2x512xf32>
    %c0_88 = arith.constant 0 : index
    %c0_89 = arith.constant 0 : index
    %226 = vector.load %arg13[%c0_88, %c0_89] : memref<1x512xf32, #tpu.memory_space<vmem>>, vector<1x512xf32>
    %227 = vector.broadcast %226 : vector<1x512xf32> to vector<2x512xf32>
    %228 = arith.addf %225, %227 : vector<2x512xf32>
    %229 = vector.extract_strided_slice %221 {offsets = [0, 0], sizes = [2, 512], strides = [1, 1]} : vector<2x1024xf32> to vector<2x512xf32>
    %230 = arith.addf %228, %229 : vector<2x512xf32>
    %cst_90 = arith.constant 0.000000e+00 : f32
    %231 = vector.broadcast %cst_90 : f32 to vector<2x512xf32>
    %232 = arith.cmpf ogt, %230, %231 : vector<2x512xf32>
    %cst_91 = arith.constant 1.000000e-01 : f32
    %233 = vector.broadcast %cst_91 : f32 to vector<2x512xf32>
    %234 = arith.mulf %233, %230 : vector<2x512xf32>
    %235 = arith.select %232, %230, %234 : vector<2x512xi1>, vector<2x512xf32>
    %c0_92 = arith.constant 0 : index
    %c0_93 = arith.constant 0 : index
    %236 = vector.load %arg14[%c0_92, %c0_93] : memref<512x512xf32, #tpu.memory_space<vmem>>, vector<512x512xf32>
    %cst_94 = arith.constant dense<0.000000e+00> : vector<2x512xf32>
    %237 = tpu.matmul %235, %236, %cst_94 {dimension_numbers = #tpu.dot_dimension_numbers<[1], [0], [0], [1], [0, 0, 1, 1], [], []>} : vector<2x512xf32>, vector<512x512xf32>, vector<2x512xf32> -> vector<2x512xf32>
    %c0_95 = arith.constant 0 : index
    %c0_96 = arith.constant 0 : index
    %238 = vector.load %arg15[%c0_95, %c0_96] : memref<1x512xf32, #tpu.memory_space<vmem>>, vector<1x512xf32>
    %239 = vector.broadcast %238 : vector<1x512xf32> to vector<2x512xf32>
    %240 = arith.addf %237, %239 : vector<2x512xf32>
    %241 = vector.extract_strided_slice %240 {offsets = [0, 256], sizes = [2, 256], strides = [1, 1]} : vector<2x512xf32> to vector<2x256xf32>
    %c0_97 = arith.constant 0 : index
    %c0_98 = arith.constant 0 : index
    %242 = vector.load %arg16[%c0_97, %c0_98] : memref<1x256xf32, #tpu.memory_space<vmem>>, vector<1x256xf32>
    %243 = vector.broadcast %242 : vector<1x256xf32> to vector<2x256xf32>
    %244 = arith.mulf %241, %243 : vector<2x256xf32>
    %c0_99 = arith.constant 0 : index
    %c0_100 = arith.constant 0 : index
    %245 = vector.load %arg17[%c0_99, %c0_100] : memref<1x256xf32, #tpu.memory_space<vmem>>, vector<1x256xf32>
    %246 = vector.broadcast %245 : vector<1x256xf32> to vector<2x256xf32>
    %247 = arith.addf %244, %246 : vector<2x256xf32>
    %248 = vector.extract_strided_slice %240 {offsets = [0, 0], sizes = [2, 256], strides = [1, 1]} : vector<2x512xf32> to vector<2x256xf32>
    %249 = arith.addf %247, %248 : vector<2x256xf32>
    %cst_101 = arith.constant 0.000000e+00 : f32
    %250 = vector.broadcast %cst_101 : f32 to vector<2x256xf32>
    %251 = arith.cmpf ogt, %249, %250 : vector<2x256xf32>
    %cst_102 = arith.constant 1.000000e-01 : f32
    %252 = vector.broadcast %cst_102 : f32 to vector<2x256xf32>
    %253 = arith.mulf %252, %249 : vector<2x256xf32>
    %254 = arith.select %251, %249, %253 : vector<2x256xi1>, vector<2x256xf32>
    %c0_103 = arith.constant 0 : index
    %c0_104 = arith.constant 0 : index
    %255 = vector.load %arg18[%c0_103, %c0_104] : memref<256x128xf32, #tpu.memory_space<vmem>>, vector<256x128xf32>
    %cst_105 = arith.constant dense<0.000000e+00> : vector<2x128xf32>
    %256 = tpu.matmul %254, %255, %cst_105 {dimension_numbers = #tpu.dot_dimension_numbers<[1], [0], [0], [1], [0, 0, 1, 1], [], []>} : vector<2x256xf32>, vector<256x128xf32>, vector<2x128xf32> -> vector<2x128xf32>
    %c0_106 = arith.constant 0 : index
    %c0_107 = arith.constant 0 : index
    %257 = vector.load %arg19[%c0_106, %c0_107] : memref<1x128xf32, #tpu.memory_space<vmem>>, vector<1x128xf32>
    %258 = vector.broadcast %257 : vector<1x128xf32> to vector<2x128xf32>
    %259 = arith.addf %256, %258 : vector<2x128xf32>
    %c0_108 = arith.constant 0 : index
    %c0_109 = arith.constant 0 : index
    %260 = vector.load %arg20[%c0_108, %c0_109] : memref<1x128xf32, #tpu.memory_space<vmem>>, vector<1x128xf32>
    %261 = vector.broadcast %260 : vector<1x128xf32> to vector<2x128xf32>
    %262 = arith.mulf %259, %261 : vector<2x128xf32>
    %c0_110 = arith.constant 0 : index
    %c0_111 = arith.constant 0 : index
    %263 = vector.load %arg21[%c0_110, %c0_111] : memref<1x128xf32, #tpu.memory_space<vmem>>, vector<1x128xf32>
    %264 = vector.broadcast %263 : vector<1x128xf32> to vector<2x128xf32>
    %265 = arith.addf %262, %264 : vector<2x128xf32>
    %cst_112 = arith.constant 0.000000e+00 : f32
    %266 = vector.broadcast %cst_112 : f32 to vector<2x128xf32>
    %267 = arith.cmpf ogt, %265, %266 : vector<2x128xf32>
    %cst_113 = arith.constant 1.000000e-01 : f32
    %268 = vector.broadcast %cst_113 : f32 to vector<2x128xf32>
    %269 = arith.mulf %268, %265 : vector<2x128xf32>
    %270 = arith.select %267, %265, %269 : vector<2x128xi1>, vector<2x128xf32>
    %c0_114 = arith.constant 0 : index
    %c0_115 = arith.constant 0 : index
    %271 = vector.load %arg22[%c0_114, %c0_115] : memref<128x3xf32, #tpu.memory_space<vmem>>, vector<128x3xf32>
    %cst_116 = arith.constant dense<0.000000e+00> : vector<2x3xf32>
    %272 = tpu.matmul %270, %271, %cst_116 {dimension_numbers = #tpu.dot_dimension_numbers<[1], [0], [0], [1], [0, 0, 1, 1], [], []>} : vector<2x128xf32>, vector<128x3xf32>, vector<2x3xf32> -> vector<2x3xf32>
    %c0_117 = arith.constant 0 : index
    %c0_118 = arith.constant 0 : index
    %273 = vector.load %arg23[%c0_117, %c0_118] : memref<1x3xf32, #tpu.memory_space<vmem>>, vector<1x3xf32>
    %274 = vector.broadcast %273 : vector<1x3xf32> to vector<2x3xf32>
    %275 = arith.addf %272, %274 : vector<2x3xf32>
    %276 = vector.extract_strided_slice %275 {offsets = [0, 0], sizes = [2, 1], strides = [1, 1]} : vector<2x3xf32> to vector<2x1xf32>
    %cst_119 = arith.constant 0.000000e+00 : f32
    %277 = vector.broadcast %cst_119 : f32 to vector<2x1xf32>
    %278 = arith.subf %277, %276 : vector<2x1xf32>
    %279 = math.exp %278 : vector<2x1xf32>
    %cst_120 = arith.constant 1.000000e+00 : f32
    %280 = vector.broadcast %cst_120 : f32 to vector<2x1xf32>
    %281 = arith.addf %280, %279 : vector<2x1xf32>
    %cst_121 = arith.constant 9.000000e+00 : f32
    %282 = vector.broadcast %cst_121 : f32 to vector<2x1xf32>
    %283 = arith.divf %282, %281 : vector<2x1xf32>
    %cst_122 = arith.constant 1.000000e+00 : f32
    %284 = vector.broadcast %cst_122 : f32 to vector<2x1xf32>
    %285 = arith.addf %283, %284 : vector<2x1xf32>
    %286 = vector.extract_strided_slice %275 {offsets = [0, 1], sizes = [2, 2], strides = [1, 1]} : vector<2x3xf32> to vector<2x2xf32>
    %287 = tpu.concatenate %285, %286 in 1 : vector<2x1xf32>, vector<2x2xf32> -> vector<2x3xf32>
    %c0_123 = arith.constant 0 : index
    %c0_124 = arith.constant 0 : index
    %288 = vector.load %arg24[%c0_123, %c0_124] : memref<2x3xf32, #tpu.memory_space<vmem>>, vector<2x3xf32>
    tpu.vector_store %arg24[%c0_123, %c0_124], %287 {strides = array<i32>} : memref<2x3xf32, #tpu.memory_space<vmem>>, vector<2x3xf32>,
    return
  }
  func.func @transform_0(%arg0: i32) -> (i32, i32) {
    %c0_i32 = arith.constant 0 : i32
    %c0_i32_0 = arith.constant 0 : i32
    %c0_i32_1 = arith.constant 0 : i32
    return %c0_i32, %c0_i32_0 : i32, i32
  }
  func.func @transform_1(%arg0: i32) -> (i32, i32) {
    %c0_i32 = arith.constant 0 : i32
    %c0_i32_0 = arith.constant 0 : i32
    %c0_i32_1 = arith.constant 0 : i32
    return %c0_i32, %c0_i32_0 : i32, i32
  }
  func.func @transform_2(%arg0: i32) -> (i32, i32) {
    %c0_i32 = arith.constant 0 : i32
    %c0_i32_0 = arith.constant 0 : i32
    %c0_i32_1 = arith.constant 0 : i32
    return %c0_i32, %c0_i32_0 : i32, i32
  }
  func.func @transform_3(%arg0: i32) -> (i32, i32) {
    %c0_i32 = arith.constant 0 : i32
    %c0_i32_0 = arith.constant 0 : i32
    %c0_i32_1 = arith.constant 0 : i32
    return %c0_i32, %c0_i32_0 : i32, i32
  }
  func.func @transform_4(%arg0: i32) -> (i32, i32) {
    %c0_i32 = arith.constant 0 : i32
    %c0_i32_0 = arith.constant 0 : i32
    %c0_i32_1 = arith.constant 0 : i32
    return %c0_i32, %c0_i32_0 : i32, i32
  }
  func.func @transform_5(%arg0: i32) -> (i32, i32) {
    %c0_i32 = arith.constant 0 : i32
    %c0_i32_0 = arith.constant 0 : i32
    %c0_i32_1 = arith.constant 0 : i32
    return %c0_i32, %c0_i32_0 : i32, i32
  }
  func.func @transform_6(%arg0: i32) -> (i32, i32) {
    %c0_i32 = arith.constant 0 : i32
    %c0_i32_0 = arith.constant 0 : i32
    %c0_i32_1 = arith.constant 0 : i32
    return %c0_i32, %c0_i32_0 : i32, i32
  }
  func.func @transform_7(%arg0: i32) -> (i32, i32) {
    %c0_i32 = arith.constant 0 : i32
    %c0_i32_0 = arith.constant 0 : i32
    %c0_i32_1 = arith.constant 0 : i32
    return %c0_i32, %c0_i32_0 : i32, i32
  }
  func.func @transform_8(%arg0: i32) -> (i32, i32) {
    %c0_i32 = arith.constant 0 : i32
    %c0_i32_0 = arith.constant 0 : i32
    %c0_i32_1 = arith.constant 0 : i32
    return %c0_i32, %c0_i32_0 : i32, i32
  }
  func.func @transform_9(%arg0: i32) -> (i32, i32) {
    %c0_i32 = arith.constant 0 : i32
    %c0_i32_0 = arith.constant 0 : i32
    %c0_i32_1 = arith.constant 0 : i32
    return %c0_i32, %c0_i32_0 : i32, i32
  }
  func.func @transform_10(%arg0: i32) -> (i32, i32) {
    %c0_i32 = arith.constant 0 : i32
    %c0_i32_0 = arith.constant 0 : i32
    %c0_i32_1 = arith.constant 0 : i32
    return %c0_i32, %c0_i32_0 : i32, i32
  }
  func.func @transform_11(%arg0: i32) -> (i32, i32) {
    %c0_i32 = arith.constant 0 : i32
    %c0_i32_0 = arith.constant 0 : i32
    %c0_i32_1 = arith.constant 0 : i32
    return %c0_i32, %c0_i32_0 : i32, i32
  }
  func.func @transform_12(%arg0: i32) -> (i32, i32) {
    %c0_i32 = arith.constant 0 : i32
    %c0_i32_0 = arith.constant 0 : i32
    %c0_i32_1 = arith.constant 0 : i32
    return %c0_i32, %c0_i32_0 : i32, i32
  }
  func.func @transform_13(%arg0: i32) -> (i32, i32) {
    %c0_i32 = arith.constant 0 : i32
    %c0_i32_0 = arith.constant 0 : i32
    %c0_i32_1 = arith.constant 0 : i32
    return %c0_i32, %c0_i32_0 : i32, i32
  }
  func.func @transform_14(%arg0: i32) -> (i32, i32) {
    %c0_i32 = arith.constant 0 : i32
    %c0_i32_0 = arith.constant 0 : i32
    %c0_i32_1 = arith.constant 0 : i32
    return %c0_i32, %c0_i32_0 : i32, i32
  }
  func.func @transform_15(%arg0: i32) -> (i32, i32) {
    %c0_i32 = arith.constant 0 : i32
    %c0_i32_0 = arith.constant 0 : i32
    %c0_i32_1 = arith.constant 0 : i32
    return %c0_i32, %c0_i32_0 : i32, i32
  }
  func.func @transform_16(%arg0: i32) -> (i32, i32) {
    %c0_i32 = arith.constant 0 : i32
    %c0_i32_0 = arith.constant 0 : i32
    %c0_i32_1 = arith.constant 0 : i32
    return %c0_i32, %c0_i32_0 : i32, i32
  }
  func.func @transform_17(%arg0: i32) -> (i32, i32) {
    %c0_i32 = arith.constant 0 : i32
    %c0_i32_0 = arith.constant 0 : i32
    %c0_i32_1 = arith.constant 0 : i32
    return %c0_i32, %c0_i32_0 : i32, i32
  }
  func.func @transform_18(%arg0: i32) -> (i32, i32) {
    %c0_i32 = arith.constant 0 : i32
    %c0_i32_0 = arith.constant 0 : i32
    %c0_i32_1 = arith.constant 0 : i32
    return %c0_i32, %c0_i32_0 : i32, i32
  }
  func.func @transform_19(%arg0: i32) -> (i32, i32) {
    %c0_i32 = arith.constant 0 : i32
    %c0_i32_0 = arith.constant 0 : i32
    %c0_i32_1 = arith.constant 0 : i32
    return %c0_i32, %c0_i32_0 : i32, i32
  }
  func.func @transform_20(%arg0: i32) -> (i32, i32) {
    %c0_i32 = arith.constant 0 : i32
    %c0_i32_0 = arith.constant 0 : i32
    %c0_i32_1 = arith.constant 0 : i32
    return %c0_i32, %c0_i32_0 : i32, i32
  }
  func.func @transform_21(%arg0: i32) -> (i32, i32) {
    %c0_i32 = arith.constant 0 : i32
    %c0_i32_0 = arith.constant 0 : i32
    %c0_i32_1 = arith.constant 0 : i32
    return %c0_i32, %c0_i32_0 : i32, i32
  }
  func.func @transform_22(%arg0: i32) -> (i32, i32) {
    %c0_i32 = arith.constant 0 : i32
    %c0_i32_0 = arith.constant 0 : i32
    %c0_i32_1 = arith.constant 0 : i32
    return %c0_i32, %c0_i32_0 : i32, i32
  }
  func.func @transform_23(%arg0: i32) -> (i32, i32) {
    %c0_i32 = arith.constant 0 : i32
    %c0_i32_0 = arith.constant 0 : i32
    %c0_i32_1 = arith.constant 0 : i32
    return %c0_i32, %c0_i32_0 : i32, i32
  }
}

module attributes {stable_mosaic.version = 11 : i64} {
  func.func @_bert_layer_kernel(%arg0: i32, %arg1: memref<16x48xf32, #tpu.memory_space<vmem>>, %arg2: memref<2x1x8xf32, #tpu.memory_space<vmem>>, %arg3: memref<48x144xf32, #tpu.memory_space<vmem>>, %arg4: memref<1x144xf32, #tpu.memory_space<vmem>>, %arg5: memref<48x48xf32, #tpu.memory_space<vmem>>, %arg6: memref<1x48xf32, #tpu.memory_space<vmem>>, %arg7: memref<1x48xf32, #tpu.memory_space<vmem>>, %arg8: memref<1x48xf32, #tpu.memory_space<vmem>>, %arg9: memref<48x96xf32, #tpu.memory_space<vmem>>, %arg10: memref<1x96xf32, #tpu.memory_space<vmem>>, %arg11: memref<96x48xf32, #tpu.memory_space<vmem>>, %arg12: memref<1x48xf32, #tpu.memory_space<vmem>>, %arg13: memref<1x48xf32, #tpu.memory_space<vmem>>, %arg14: memref<1x48xf32, #tpu.memory_space<vmem>>, %arg15: memref<16x48xf32, #tpu.memory_space<vmem>>) attributes {dimension_semantics = [#tpu.dimension_semantics<arbitrary>], iteration_bounds = array<i64: 1>, scalar_prefetch = 0 : i64, scratch_operands = 0 : i64, tpu.core_type = #tpu.core_type<tc>, window_params = [{pipeline_mode = #tpu.pipeline_mode<synchronous>, transform_indices = @transform_0, window_bounds = array<i64: 16, 48>}, {pipeline_mode = #tpu.pipeline_mode<synchronous>, transform_indices = @transform_1, window_bounds = array<i64: 2, 1, 8>}, {pipeline_mode = #tpu.pipeline_mode<synchronous>, transform_indices = @transform_2, window_bounds = array<i64: 48, 144>}, {pipeline_mode = #tpu.pipeline_mode<synchronous>, transform_indices = @transform_3, window_bounds = array<i64: 1, 144>}, {pipeline_mode = #tpu.pipeline_mode<synchronous>, transform_indices = @transform_4, window_bounds = array<i64: 48, 48>}, {pipeline_mode = #tpu.pipeline_mode<synchronous>, transform_indices = @transform_5, window_bounds = array<i64: 1, 48>}, {pipeline_mode = #tpu.pipeline_mode<synchronous>, transform_indices = @transform_6, window_bounds = array<i64: 1, 48>}, {pipeline_mode = #tpu.pipeline_mode<synchronous>, transform_indices = @transform_7, window_bounds = array<i64: 1, 48>}, {pipeline_mode = #tpu.pipeline_mode<synchronous>, transform_indices = @transform_8, window_bounds = array<i64: 48, 96>}, {pipeline_mode = #tpu.pipeline_mode<synchronous>, transform_indices = @transform_9, window_bounds = array<i64: 1, 96>}, {pipeline_mode = #tpu.pipeline_mode<synchronous>, transform_indices = @transform_10, window_bounds = array<i64: 96, 48>}, {pipeline_mode = #tpu.pipeline_mode<synchronous>, transform_indices = @transform_11, window_bounds = array<i64: 1, 48>}, {pipeline_mode = #tpu.pipeline_mode<synchronous>, transform_indices = @transform_12, window_bounds = array<i64: 1, 48>}, {pipeline_mode = #tpu.pipeline_mode<synchronous>, transform_indices = @transform_13, window_bounds = array<i64: 1, 48>}, {pipeline_mode = #tpu.pipeline_mode<synchronous>, transform_indices = @transform_14, window_bounds = array<i64: 16, 48>}]} {
    %c0 = arith.constant 0 : index
    %c0_0 = arith.constant 0 : index
    %0 = vector.load %arg1[%c0, %c0_0] : memref<16x48xf32, #tpu.memory_space<vmem>>, vector<16x48xf32>
    %c0_1 = arith.constant 0 : index
    %c0_2 = arith.constant 0 : index
    %1 = vector.load %arg3[%c0_1, %c0_2] : memref<48x144xf32, #tpu.memory_space<vmem>>, vector<48x144xf32>
    %c0_3 = arith.constant 0 : index
    %c0_4 = arith.constant 0 : index
    %2 = vector.load %arg4[%c0_3, %c0_4] : memref<1x144xf32, #tpu.memory_space<vmem>>, vector<1x144xf32>
    %c0_5 = arith.constant 0 : index
    %c0_6 = arith.constant 0 : index
    %3 = vector.load %arg5[%c0_5, %c0_6] : memref<48x48xf32, #tpu.memory_space<vmem>>, vector<48x48xf32>
    %c0_7 = arith.constant 0 : index
    %c0_8 = arith.constant 0 : index
    %4 = vector.load %arg6[%c0_7, %c0_8] : memref<1x48xf32, #tpu.memory_space<vmem>>, vector<1x48xf32>
    %c0_9 = arith.constant 0 : index
    %c0_10 = arith.constant 0 : index
    %c0_11 = arith.constant 0 : index
    %5 = vector.load %arg2[%c0_9, %c0_10, %c0_11] : memref<2x1x8xf32, #tpu.memory_space<vmem>>, vector<2x1x8xf32>
    %cst = arith.constant dense<0.000000e+00> : vector<16x144xf32>
    %6 = tpu.matmul %0, %1, %cst {dimension_numbers = #tpu.dot_dimension_numbers<[1], [0], [0], [1], [0, 0, 1, 1], [], []>} : vector<16x48xf32>, vector<48x144xf32>, vector<16x144xf32> -> vector<16x144xf32>
    %7 = vector.broadcast %2 : vector<1x144xf32> to vector<16x144xf32>
    %8 = arith.addf %6, %7 : vector<16x144xf32>
    %9 = vector.shape_cast %8 : vector<16x144xf32> to vector<2x8x144xf32>
    %10 = vector.extract_strided_slice %9 {offsets = [0, 0, 0], sizes = [2, 8, 4], strides = [1, 1, 1]} : vector<2x8x144xf32> to vector<2x8x4xf32>
    %11 = vector.extract_strided_slice %9 {offsets = [0, 0, 48], sizes = [2, 8, 4], strides = [1, 1, 1]} : vector<2x8x144xf32> to vector<2x8x4xf32>
    %12 = vector.extract_strided_slice %9 {offsets = [0, 0, 96], sizes = [2, 8, 4], strides = [1, 1, 1]} : vector<2x8x144xf32> to vector<2x8x4xf32>
    "tpu.trace_start"() <{level = 10 : i32, message = "bid,bjd->bij"}> : () -> ()
    %cst_12 = arith.constant dense<0.000000e+00> : vector<2x8x8xf32>
    %13 = tpu.matmul %10, %11, %cst_12 {dimension_numbers = #tpu.dot_dimension_numbers<[2], [2], [1], [1], [0, 0, 0, 1, 1, 1], [0], [0]>} : vector<2x8x4xf32>, vector<2x8x4xf32>, vector<2x8x8xf32> -> vector<2x8x8xf32>
    "tpu.trace_stop"() : () -> ()
    %cst_13 = arith.constant 5.000000e-01 : f32
    %14 = vector.broadcast %cst_13 : f32 to vector<2x8x8xf32>
    %15 = arith.mulf %13, %14 : vector<2x8x8xf32>
    %16 = vector.broadcast %5 : vector<2x1x8xf32> to vector<2x8x8xf32>
    %17 = arith.addf %15, %16 : vector<2x8x8xf32>
    %cst_14 = arith.constant dense<0xFF800000> : vector<2x8xf32>
    %18 = vector.multi_reduction <maximumf>, %17, %cst_14 [2] : vector<2x8x8xf32> to vector<2x8xf32>
    %19 = vector.shape_cast %18 : vector<2x8xf32> to vector<2x8x1xf32>
    %20 = vector.broadcast %19 : vector<2x8x1xf32> to vector<2x8x8xf32>
    %21 = arith.subf %17, %20 : vector<2x8x8xf32>
    %22 = math.exp %21 : vector<2x8x8xf32>
    %cst_15 = arith.constant dense<0.000000e+00> : vector<2x8xf32>
    %23 = vector.multi_reduction <add>, %22, %cst_15 [2] : vector<2x8x8xf32> to vector<2x8xf32>
    %24 = vector.shape_cast %23 : vector<2x8xf32> to vector<2x8x1xf32>
    %25 = vector.broadcast %24 : vector<2x8x1xf32> to vector<2x8x8xf32>
    %26 = arith.divf %22, %25 : vector<2x8x8xf32>
    "tpu.trace_start"() <{level = 10 : i32, message = "bij,bjd->bid"}> : () -> ()
    %cst_16 = arith.constant dense<0.000000e+00> : vector<2x8x4xf32>
    %27 = tpu.matmul %26, %12, %cst_16 {dimension_numbers = #tpu.dot_dimension_numbers<[2], [1], [1], [2], [0, 0, 0, 1, 1, 2], [0], [0]>} : vector<2x8x8xf32>, vector<2x8x4xf32>, vector<2x8x4xf32> -> vector<2x8x4xf32>
    "tpu.trace_stop"() : () -> ()
    %28 = vector.extract_strided_slice %9 {offsets = [0, 0, 4], sizes = [2, 8, 4], strides = [1, 1, 1]} : vector<2x8x144xf32> to vector<2x8x4xf32>
    %29 = vector.extract_strided_slice %9 {offsets = [0, 0, 52], sizes = [2, 8, 4], strides = [1, 1, 1]} : vector<2x8x144xf32> to vector<2x8x4xf32>
    %30 = vector.extract_strided_slice %9 {offsets = [0, 0, 100], sizes = [2, 8, 4], strides = [1, 1, 1]} : vector<2x8x144xf32> to vector<2x8x4xf32>
    "tpu.trace_start"() <{level = 10 : i32, message = "bid,bjd->bij"}> : () -> ()
    %cst_17 = arith.constant dense<0.000000e+00> : vector<2x8x8xf32>
    %31 = tpu.matmul %28, %29, %cst_17 {dimension_numbers = #tpu.dot_dimension_numbers<[2], [2], [1], [1], [0, 0, 0, 1, 1, 1], [0], [0]>} : vector<2x8x4xf32>, vector<2x8x4xf32>, vector<2x8x8xf32> -> vector<2x8x8xf32>
    "tpu.trace_stop"() : () -> ()
    %cst_18 = arith.constant 5.000000e-01 : f32
    %32 = vector.broadcast %cst_18 : f32 to vector<2x8x8xf32>
    %33 = arith.mulf %31, %32 : vector<2x8x8xf32>
    %34 = vector.broadcast %5 : vector<2x1x8xf32> to vector<2x8x8xf32>
    %35 = arith.addf %33, %34 : vector<2x8x8xf32>
    %cst_19 = arith.constant dense<0xFF800000> : vector<2x8xf32>
    %36 = vector.multi_reduction <maximumf>, %35, %cst_19 [2] : vector<2x8x8xf32> to vector<2x8xf32>
    %37 = vector.shape_cast %36 : vector<2x8xf32> to vector<2x8x1xf32>
    %38 = vector.broadcast %37 : vector<2x8x1xf32> to vector<2x8x8xf32>
    %39 = arith.subf %35, %38 : vector<2x8x8xf32>
    %40 = math.exp %39 : vector<2x8x8xf32>
    %cst_20 = arith.constant dense<0.000000e+00> : vector<2x8xf32>
    %41 = vector.multi_reduction <add>, %40, %cst_20 [2] : vector<2x8x8xf32> to vector<2x8xf32>
    %42 = vector.shape_cast %41 : vector<2x8xf32> to vector<2x8x1xf32>
    %43 = vector.broadcast %42 : vector<2x8x1xf32> to vector<2x8x8xf32>
    %44 = arith.divf %40, %43 : vector<2x8x8xf32>
    "tpu.trace_start"() <{level = 10 : i32, message = "bij,bjd->bid"}> : () -> ()
    %cst_21 = arith.constant dense<0.000000e+00> : vector<2x8x4xf32>
    %45 = tpu.matmul %44, %30, %cst_21 {dimension_numbers = #tpu.dot_dimension_numbers<[2], [1], [1], [2], [0, 0, 0, 1, 1, 2], [0], [0]>} : vector<2x8x8xf32>, vector<2x8x4xf32>, vector<2x8x4xf32> -> vector<2x8x4xf32>
    "tpu.trace_stop"() : () -> ()
    %46 = vector.extract_strided_slice %9 {offsets = [0, 0, 8], sizes = [2, 8, 4], strides = [1, 1, 1]} : vector<2x8x144xf32> to vector<2x8x4xf32>
    %47 = vector.extract_strided_slice %9 {offsets = [0, 0, 56], sizes = [2, 8, 4], strides = [1, 1, 1]} : vector<2x8x144xf32> to vector<2x8x4xf32>
    %48 = vector.extract_strided_slice %9 {offsets = [0, 0, 104], sizes = [2, 8, 4], strides = [1, 1, 1]} : vector<2x8x144xf32> to vector<2x8x4xf32>
    "tpu.trace_start"() <{level = 10 : i32, message = "bid,bjd->bij"}> : () -> ()
    %cst_22 = arith.constant dense<0.000000e+00> : vector<2x8x8xf32>
    %49 = tpu.matmul %46, %47, %cst_22 {dimension_numbers = #tpu.dot_dimension_numbers<[2], [2], [1], [1], [0, 0, 0, 1, 1, 1], [0], [0]>} : vector<2x8x4xf32>, vector<2x8x4xf32>, vector<2x8x8xf32> -> vector<2x8x8xf32>
    "tpu.trace_stop"() : () -> ()
    %cst_23 = arith.constant 5.000000e-01 : f32
    %50 = vector.broadcast %cst_23 : f32 to vector<2x8x8xf32>
    %51 = arith.mulf %49, %50 : vector<2x8x8xf32>
    %52 = vector.broadcast %5 : vector<2x1x8xf32> to vector<2x8x8xf32>
    %53 = arith.addf %51, %52 : vector<2x8x8xf32>
    %cst_24 = arith.constant dense<0xFF800000> : vector<2x8xf32>
    %54 = vector.multi_reduction <maximumf>, %53, %cst_24 [2] : vector<2x8x8xf32> to vector<2x8xf32>
    %55 = vector.shape_cast %54 : vector<2x8xf32> to vector<2x8x1xf32>
    %56 = vector.broadcast %55 : vector<2x8x1xf32> to vector<2x8x8xf32>
    %57 = arith.subf %53, %56 : vector<2x8x8xf32>
    %58 = math.exp %57 : vector<2x8x8xf32>
    %cst_25 = arith.constant dense<0.000000e+00> : vector<2x8xf32>
    %59 = vector.multi_reduction <add>, %58, %cst_25 [2] : vector<2x8x8xf32> to vector<2x8xf32>
    %60 = vector.shape_cast %59 : vector<2x8xf32> to vector<2x8x1xf32>
    %61 = vector.broadcast %60 : vector<2x8x1xf32> to vector<2x8x8xf32>
    %62 = arith.divf %58, %61 : vector<2x8x8xf32>
    "tpu.trace_start"() <{level = 10 : i32, message = "bij,bjd->bid"}> : () -> ()
    %cst_26 = arith.constant dense<0.000000e+00> : vector<2x8x4xf32>
    %63 = tpu.matmul %62, %48, %cst_26 {dimension_numbers = #tpu.dot_dimension_numbers<[2], [1], [1], [2], [0, 0, 0, 1, 1, 2], [0], [0]>} : vector<2x8x8xf32>, vector<2x8x4xf32>, vector<2x8x4xf32> -> vector<2x8x4xf32>
    "tpu.trace_stop"() : () -> ()
    %64 = vector.extract_strided_slice %9 {offsets = [0, 0, 12], sizes = [2, 8, 4], strides = [1, 1, 1]} : vector<2x8x144xf32> to vector<2x8x4xf32>
    %65 = vector.extract_strided_slice %9 {offsets = [0, 0, 60], sizes = [2, 8, 4], strides = [1, 1, 1]} : vector<2x8x144xf32> to vector<2x8x4xf32>
    %66 = vector.extract_strided_slice %9 {offsets = [0, 0, 108], sizes = [2, 8, 4], strides = [1, 1, 1]} : vector<2x8x144xf32> to vector<2x8x4xf32>
    "tpu.trace_start"() <{level = 10 : i32, message = "bid,bjd->bij"}> : () -> ()
    %cst_27 = arith.constant dense<0.000000e+00> : vector<2x8x8xf32>
    %67 = tpu.matmul %64, %65, %cst_27 {dimension_numbers = #tpu.dot_dimension_numbers<[2], [2], [1], [1], [0, 0, 0, 1, 1, 1], [0], [0]>} : vector<2x8x4xf32>, vector<2x8x4xf32>, vector<2x8x8xf32> -> vector<2x8x8xf32>
    "tpu.trace_stop"() : () -> ()
    %cst_28 = arith.constant 5.000000e-01 : f32
    %68 = vector.broadcast %cst_28 : f32 to vector<2x8x8xf32>
    %69 = arith.mulf %67, %68 : vector<2x8x8xf32>
    %70 = vector.broadcast %5 : vector<2x1x8xf32> to vector<2x8x8xf32>
    %71 = arith.addf %69, %70 : vector<2x8x8xf32>
    %cst_29 = arith.constant dense<0xFF800000> : vector<2x8xf32>
    %72 = vector.multi_reduction <maximumf>, %71, %cst_29 [2] : vector<2x8x8xf32> to vector<2x8xf32>
    %73 = vector.shape_cast %72 : vector<2x8xf32> to vector<2x8x1xf32>
    %74 = vector.broadcast %73 : vector<2x8x1xf32> to vector<2x8x8xf32>
    %75 = arith.subf %71, %74 : vector<2x8x8xf32>
    %76 = math.exp %75 : vector<2x8x8xf32>
    %cst_30 = arith.constant dense<0.000000e+00> : vector<2x8xf32>
    %77 = vector.multi_reduction <add>, %76, %cst_30 [2] : vector<2x8x8xf32> to vector<2x8xf32>
    %78 = vector.shape_cast %77 : vector<2x8xf32> to vector<2x8x1xf32>
    %79 = vector.broadcast %78 : vector<2x8x1xf32> to vector<2x8x8xf32>
    %80 = arith.divf %76, %79 : vector<2x8x8xf32>
    "tpu.trace_start"() <{level = 10 : i32, message = "bij,bjd->bid"}> : () -> ()
    %cst_31 = arith.constant dense<0.000000e+00> : vector<2x8x4xf32>
    %81 = tpu.matmul %80, %66, %cst_31 {dimension_numbers = #tpu.dot_dimension_numbers<[2], [1], [1], [2], [0, 0, 0, 1, 1, 2], [0], [0]>} : vector<2x8x8xf32>, vector<2x8x4xf32>, vector<2x8x4xf32> -> vector<2x8x4xf32>
    "tpu.trace_stop"() : () -> ()
    %82 = vector.extract_strided_slice %9 {offsets = [0, 0, 16], sizes = [2, 8, 4], strides = [1, 1, 1]} : vector<2x8x144xf32> to vector<2x8x4xf32>
    %83 = vector.extract_strided_slice %9 {offsets = [0, 0, 64], sizes = [2, 8, 4], strides = [1, 1, 1]} : vector<2x8x144xf32> to vector<2x8x4xf32>
    %84 = vector.extract_strided_slice %9 {offsets = [0, 0, 112], sizes = [2, 8, 4], strides = [1, 1, 1]} : vector<2x8x144xf32> to vector<2x8x4xf32>
    "tpu.trace_start"() <{level = 10 : i32, message = "bid,bjd->bij"}> : () -> ()
    %cst_32 = arith.constant dense<0.000000e+00> : vector<2x8x8xf32>
    %85 = tpu.matmul %82, %83, %cst_32 {dimension_numbers = #tpu.dot_dimension_numbers<[2], [2], [1], [1], [0, 0, 0, 1, 1, 1], [0], [0]>} : vector<2x8x4xf32>, vector<2x8x4xf32>, vector<2x8x8xf32> -> vector<2x8x8xf32>
    "tpu.trace_stop"() : () -> ()
    %cst_33 = arith.constant 5.000000e-01 : f32
    %86 = vector.broadcast %cst_33 : f32 to vector<2x8x8xf32>
    %87 = arith.mulf %85, %86 : vector<2x8x8xf32>
    %88 = vector.broadcast %5 : vector<2x1x8xf32> to vector<2x8x8xf32>
    %89 = arith.addf %87, %88 : vector<2x8x8xf32>
    %cst_34 = arith.constant dense<0xFF800000> : vector<2x8xf32>
    %90 = vector.multi_reduction <maximumf>, %89, %cst_34 [2] : vector<2x8x8xf32> to vector<2x8xf32>
    %91 = vector.shape_cast %90 : vector<2x8xf32> to vector<2x8x1xf32>
    %92 = vector.broadcast %91 : vector<2x8x1xf32> to vector<2x8x8xf32>
    %93 = arith.subf %89, %92 : vector<2x8x8xf32>
    %94 = math.exp %93 : vector<2x8x8xf32>
    %cst_35 = arith.constant dense<0.000000e+00> : vector<2x8xf32>
    %95 = vector.multi_reduction <add>, %94, %cst_35 [2] : vector<2x8x8xf32> to vector<2x8xf32>
    %96 = vector.shape_cast %95 : vector<2x8xf32> to vector<2x8x1xf32>
    %97 = vector.broadcast %96 : vector<2x8x1xf32> to vector<2x8x8xf32>
    %98 = arith.divf %94, %97 : vector<2x8x8xf32>
    "tpu.trace_start"() <{level = 10 : i32, message = "bij,bjd->bid"}> : () -> ()
    %cst_36 = arith.constant dense<0.000000e+00> : vector<2x8x4xf32>
    %99 = tpu.matmul %98, %84, %cst_36 {dimension_numbers = #tpu.dot_dimension_numbers<[2], [1], [1], [2], [0, 0, 0, 1, 1, 2], [0], [0]>} : vector<2x8x8xf32>, vector<2x8x4xf32>, vector<2x8x4xf32> -> vector<2x8x4xf32>
    "tpu.trace_stop"() : () -> ()
    %100 = vector.extract_strided_slice %9 {offsets = [0, 0, 20], sizes = [2, 8, 4], strides = [1, 1, 1]} : vector<2x8x144xf32> to vector<2x8x4xf32>
    %101 = vector.extract_strided_slice %9 {offsets = [0, 0, 68], sizes = [2, 8, 4], strides = [1, 1, 1]} : vector<2x8x144xf32> to vector<2x8x4xf32>
    %102 = vector.extract_strided_slice %9 {offsets = [0, 0, 116], sizes = [2, 8, 4], strides = [1, 1, 1]} : vector<2x8x144xf32> to vector<2x8x4xf32>
    "tpu.trace_start"() <{level = 10 : i32, message = "bid,bjd->bij"}> : () -> ()
    %cst_37 = arith.constant dense<0.000000e+00> : vector<2x8x8xf32>
    %103 = tpu.matmul %100, %101, %cst_37 {dimension_numbers = #tpu.dot_dimension_numbers<[2], [2], [1], [1], [0, 0, 0, 1, 1, 1], [0], [0]>} : vector<2x8x4xf32>, vector<2x8x4xf32>, vector<2x8x8xf32> -> vector<2x8x8xf32>
    "tpu.trace_stop"() : () -> ()
    %cst_38 = arith.constant 5.000000e-01 : f32
    %104 = vector.broadcast %cst_38 : f32 to vector<2x8x8xf32>
    %105 = arith.mulf %103, %104 : vector<2x8x8xf32>
    %106 = vector.broadcast %5 : vector<2x1x8xf32> to vector<2x8x8xf32>
    %107 = arith.addf %105, %106 : vector<2x8x8xf32>
    %cst_39 = arith.constant dense<0xFF800000> : vector<2x8xf32>
    %108 = vector.multi_reduction <maximumf>, %107, %cst_39 [2] : vector<2x8x8xf32> to vector<2x8xf32>
    %109 = vector.shape_cast %108 : vector<2x8xf32> to vector<2x8x1xf32>
    %110 = vector.broadcast %109 : vector<2x8x1xf32> to vector<2x8x8xf32>
    %111 = arith.subf %107, %110 : vector<2x8x8xf32>
    %112 = math.exp %111 : vector<2x8x8xf32>
    %cst_40 = arith.constant dense<0.000000e+00> : vector<2x8xf32>
    %113 = vector.multi_reduction <add>, %112, %cst_40 [2] : vector<2x8x8xf32> to vector<2x8xf32>
    %114 = vector.shape_cast %113 : vector<2x8xf32> to vector<2x8x1xf32>
    %115 = vector.broadcast %114 : vector<2x8x1xf32> to vector<2x8x8xf32>
    %116 = arith.divf %112, %115 : vector<2x8x8xf32>
    "tpu.trace_start"() <{level = 10 : i32, message = "bij,bjd->bid"}> : () -> ()
    %cst_41 = arith.constant dense<0.000000e+00> : vector<2x8x4xf32>
    %117 = tpu.matmul %116, %102, %cst_41 {dimension_numbers = #tpu.dot_dimension_numbers<[2], [1], [1], [2], [0, 0, 0, 1, 1, 2], [0], [0]>} : vector<2x8x8xf32>, vector<2x8x4xf32>, vector<2x8x4xf32> -> vector<2x8x4xf32>
    "tpu.trace_stop"() : () -> ()
    %118 = vector.extract_strided_slice %9 {offsets = [0, 0, 24], sizes = [2, 8, 4], strides = [1, 1, 1]} : vector<2x8x144xf32> to vector<2x8x4xf32>
    %119 = vector.extract_strided_slice %9 {offsets = [0, 0, 72], sizes = [2, 8, 4], strides = [1, 1, 1]} : vector<2x8x144xf32> to vector<2x8x4xf32>
    %120 = vector.extract_strided_slice %9 {offsets = [0, 0, 120], sizes = [2, 8, 4], strides = [1, 1, 1]} : vector<2x8x144xf32> to vector<2x8x4xf32>
    "tpu.trace_start"() <{level = 10 : i32, message = "bid,bjd->bij"}> : () -> ()
    %cst_42 = arith.constant dense<0.000000e+00> : vector<2x8x8xf32>
    %121 = tpu.matmul %118, %119, %cst_42 {dimension_numbers = #tpu.dot_dimension_numbers<[2], [2], [1], [1], [0, 0, 0, 1, 1, 1], [0], [0]>} : vector<2x8x4xf32>, vector<2x8x4xf32>, vector<2x8x8xf32> -> vector<2x8x8xf32>
    "tpu.trace_stop"() : () -> ()
    %cst_43 = arith.constant 5.000000e-01 : f32
    %122 = vector.broadcast %cst_43 : f32 to vector<2x8x8xf32>
    %123 = arith.mulf %121, %122 : vector<2x8x8xf32>
    %124 = vector.broadcast %5 : vector<2x1x8xf32> to vector<2x8x8xf32>
    %125 = arith.addf %123, %124 : vector<2x8x8xf32>
    %cst_44 = arith.constant dense<0xFF800000> : vector<2x8xf32>
    %126 = vector.multi_reduction <maximumf>, %125, %cst_44 [2] : vector<2x8x8xf32> to vector<2x8xf32>
    %127 = vector.shape_cast %126 : vector<2x8xf32> to vector<2x8x1xf32>
    %128 = vector.broadcast %127 : vector<2x8x1xf32> to vector<2x8x8xf32>
    %129 = arith.subf %125, %128 : vector<2x8x8xf32>
    %130 = math.exp %129 : vector<2x8x8xf32>
    %cst_45 = arith.constant dense<0.000000e+00> : vector<2x8xf32>
    %131 = vector.multi_reduction <add>, %130, %cst_45 [2] : vector<2x8x8xf32> to vector<2x8xf32>
    %132 = vector.shape_cast %131 : vector<2x8xf32> to vector<2x8x1xf32>
    %133 = vector.broadcast %132 : vector<2x8x1xf32> to vector<2x8x8xf32>
    %134 = arith.divf %130, %133 : vector<2x8x8xf32>
    "tpu.trace_start"() <{level = 10 : i32, message = "bij,bjd->bid"}> : () -> ()
    %cst_46 = arith.constant dense<0.000000e+00> : vector<2x8x4xf32>
    %135 = tpu.matmul %134, %120, %cst_46 {dimension_numbers = #tpu.dot_dimension_numbers<[2], [1], [1], [2], [0, 0, 0, 1, 1, 2], [0], [0]>} : vector<2x8x8xf32>, vector<2x8x4xf32>, vector<2x8x4xf32> -> vector<2x8x4xf32>
    "tpu.trace_stop"() : () -> ()
    %136 = vector.extract_strided_slice %9 {offsets = [0, 0, 28], sizes = [2, 8, 4], strides = [1, 1, 1]} : vector<2x8x144xf32> to vector<2x8x4xf32>
    %137 = vector.extract_strided_slice %9 {offsets = [0, 0, 76], sizes = [2, 8, 4], strides = [1, 1, 1]} : vector<2x8x144xf32> to vector<2x8x4xf32>
    %138 = vector.extract_strided_slice %9 {offsets = [0, 0, 124], sizes = [2, 8, 4], strides = [1, 1, 1]} : vector<2x8x144xf32> to vector<2x8x4xf32>
    "tpu.trace_start"() <{level = 10 : i32, message = "bid,bjd->bij"}> : () -> ()
    %cst_47 = arith.constant dense<0.000000e+00> : vector<2x8x8xf32>
    %139 = tpu.matmul %136, %137, %cst_47 {dimension_numbers = #tpu.dot_dimension_numbers<[2], [2], [1], [1], [0, 0, 0, 1, 1, 1], [0], [0]>} : vector<2x8x4xf32>, vector<2x8x4xf32>, vector<2x8x8xf32> -> vector<2x8x8xf32>
    "tpu.trace_stop"() : () -> ()
    %cst_48 = arith.constant 5.000000e-01 : f32
    %140 = vector.broadcast %cst_48 : f32 to vector<2x8x8xf32>
    %141 = arith.mulf %139, %140 : vector<2x8x8xf32>
    %142 = vector.broadcast %5 : vector<2x1x8xf32> to vector<2x8x8xf32>
    %143 = arith.addf %141, %142 : vector<2x8x8xf32>
    %cst_49 = arith.constant dense<0xFF800000> : vector<2x8xf32>
    %144 = vector.multi_reduction <maximumf>, %143, %cst_49 [2] : vector<2x8x8xf32> to vector<2x8xf32>
    %145 = vector.shape_cast %144 : vector<2x8xf32> to vector<2x8x1xf32>
    %146 = vector.broadcast %145 : vector<2x8x1xf32> to vector<2x8x8xf32>
    %147 = arith.subf %143, %146 : vector<2x8x8xf32>
    %148 = math.exp %147 : vector<2x8x8xf32>
    %cst_50 = arith.constant dense<0.000000e+00> : vector<2x8xf32>
    %149 = vector.multi_reduction <add>, %148, %cst_50 [2] : vector<2x8x8xf32> to vector<2x8xf32>
    %150 = vector.shape_cast %149 : vector<2x8xf32> to vector<2x8x1xf32>
    %151 = vector.broadcast %150 : vector<2x8x1xf32> to vector<2x8x8xf32>
    %152 = arith.divf %148, %151 : vector<2x8x8xf32>
    "tpu.trace_start"() <{level = 10 : i32, message = "bij,bjd->bid"}> : () -> ()
    %cst_51 = arith.constant dense<0.000000e+00> : vector<2x8x4xf32>
    %153 = tpu.matmul %152, %138, %cst_51 {dimension_numbers = #tpu.dot_dimension_numbers<[2], [1], [1], [2], [0, 0, 0, 1, 1, 2], [0], [0]>} : vector<2x8x8xf32>, vector<2x8x4xf32>, vector<2x8x4xf32> -> vector<2x8x4xf32>
    "tpu.trace_stop"() : () -> ()
    %154 = vector.extract_strided_slice %9 {offsets = [0, 0, 32], sizes = [2, 8, 4], strides = [1, 1, 1]} : vector<2x8x144xf32> to vector<2x8x4xf32>
    %155 = vector.extract_strided_slice %9 {offsets = [0, 0, 80], sizes = [2, 8, 4], strides = [1, 1, 1]} : vector<2x8x144xf32> to vector<2x8x4xf32>
    %156 = vector.extract_strided_slice %9 {offsets = [0, 0, 128], sizes = [2, 8, 4], strides = [1, 1, 1]} : vector<2x8x144xf32> to vector<2x8x4xf32>
    "tpu.trace_start"() <{level = 10 : i32, message = "bid,bjd->bij"}> : () -> ()
    %cst_52 = arith.constant dense<0.000000e+00> : vector<2x8x8xf32>
    %157 = tpu.matmul %154, %155, %cst_52 {dimension_numbers = #tpu.dot_dimension_numbers<[2], [2], [1], [1], [0, 0, 0, 1, 1, 1], [0], [0]>} : vector<2x8x4xf32>, vector<2x8x4xf32>, vector<2x8x8xf32> -> vector<2x8x8xf32>
    "tpu.trace_stop"() : () -> ()
    %cst_53 = arith.constant 5.000000e-01 : f32
    %158 = vector.broadcast %cst_53 : f32 to vector<2x8x8xf32>
    %159 = arith.mulf %157, %158 : vector<2x8x8xf32>
    %160 = vector.broadcast %5 : vector<2x1x8xf32> to vector<2x8x8xf32>
    %161 = arith.addf %159, %160 : vector<2x8x8xf32>
    %cst_54 = arith.constant dense<0xFF800000> : vector<2x8xf32>
    %162 = vector.multi_reduction <maximumf>, %161, %cst_54 [2] : vector<2x8x8xf32> to vector<2x8xf32>
    %163 = vector.shape_cast %162 : vector<2x8xf32> to vector<2x8x1xf32>
    %164 = vector.broadcast %163 : vector<2x8x1xf32> to vector<2x8x8xf32>
    %165 = arith.subf %161, %164 : vector<2x8x8xf32>
    %166 = math.exp %165 : vector<2x8x8xf32>
    %cst_55 = arith.constant dense<0.000000e+00> : vector<2x8xf32>
    %167 = vector.multi_reduction <add>, %166, %cst_55 [2] : vector<2x8x8xf32> to vector<2x8xf32>
    %168 = vector.shape_cast %167 : vector<2x8xf32> to vector<2x8x1xf32>
    %169 = vector.broadcast %168 : vector<2x8x1xf32> to vector<2x8x8xf32>
    %170 = arith.divf %166, %169 : vector<2x8x8xf32>
    "tpu.trace_start"() <{level = 10 : i32, message = "bij,bjd->bid"}> : () -> ()
    %cst_56 = arith.constant dense<0.000000e+00> : vector<2x8x4xf32>
    %171 = tpu.matmul %170, %156, %cst_56 {dimension_numbers = #tpu.dot_dimension_numbers<[2], [1], [1], [2], [0, 0, 0, 1, 1, 2], [0], [0]>} : vector<2x8x8xf32>, vector<2x8x4xf32>, vector<2x8x4xf32> -> vector<2x8x4xf32>
    "tpu.trace_stop"() : () -> ()
    %172 = vector.extract_strided_slice %9 {offsets = [0, 0, 36], sizes = [2, 8, 4], strides = [1, 1, 1]} : vector<2x8x144xf32> to vector<2x8x4xf32>
    %173 = vector.extract_strided_slice %9 {offsets = [0, 0, 84], sizes = [2, 8, 4], strides = [1, 1, 1]} : vector<2x8x144xf32> to vector<2x8x4xf32>
    %174 = vector.extract_strided_slice %9 {offsets = [0, 0, 132], sizes = [2, 8, 4], strides = [1, 1, 1]} : vector<2x8x144xf32> to vector<2x8x4xf32>
    "tpu.trace_start"() <{level = 10 : i32, message = "bid,bjd->bij"}> : () -> ()
    %cst_57 = arith.constant dense<0.000000e+00> : vector<2x8x8xf32>
    %175 = tpu.matmul %172, %173, %cst_57 {dimension_numbers = #tpu.dot_dimension_numbers<[2], [2], [1], [1], [0, 0, 0, 1, 1, 1], [0], [0]>} : vector<2x8x4xf32>, vector<2x8x4xf32>, vector<2x8x8xf32> -> vector<2x8x8xf32>
    "tpu.trace_stop"() : () -> ()
    %cst_58 = arith.constant 5.000000e-01 : f32
    %176 = vector.broadcast %cst_58 : f32 to vector<2x8x8xf32>
    %177 = arith.mulf %175, %176 : vector<2x8x8xf32>
    %178 = vector.broadcast %5 : vector<2x1x8xf32> to vector<2x8x8xf32>
    %179 = arith.addf %177, %178 : vector<2x8x8xf32>
    %cst_59 = arith.constant dense<0xFF800000> : vector<2x8xf32>
    %180 = vector.multi_reduction <maximumf>, %179, %cst_59 [2] : vector<2x8x8xf32> to vector<2x8xf32>
    %181 = vector.shape_cast %180 : vector<2x8xf32> to vector<2x8x1xf32>
    %182 = vector.broadcast %181 : vector<2x8x1xf32> to vector<2x8x8xf32>
    %183 = arith.subf %179, %182 : vector<2x8x8xf32>
    %184 = math.exp %183 : vector<2x8x8xf32>
    %cst_60 = arith.constant dense<0.000000e+00> : vector<2x8xf32>
    %185 = vector.multi_reduction <add>, %184, %cst_60 [2] : vector<2x8x8xf32> to vector<2x8xf32>
    %186 = vector.shape_cast %185 : vector<2x8xf32> to vector<2x8x1xf32>
    %187 = vector.broadcast %186 : vector<2x8x1xf32> to vector<2x8x8xf32>
    %188 = arith.divf %184, %187 : vector<2x8x8xf32>
    "tpu.trace_start"() <{level = 10 : i32, message = "bij,bjd->bid"}> : () -> ()
    %cst_61 = arith.constant dense<0.000000e+00> : vector<2x8x4xf32>
    %189 = tpu.matmul %188, %174, %cst_61 {dimension_numbers = #tpu.dot_dimension_numbers<[2], [1], [1], [2], [0, 0, 0, 1, 1, 2], [0], [0]>} : vector<2x8x8xf32>, vector<2x8x4xf32>, vector<2x8x4xf32> -> vector<2x8x4xf32>
    "tpu.trace_stop"() : () -> ()
    %190 = vector.extract_strided_slice %9 {offsets = [0, 0, 40], sizes = [2, 8, 4], strides = [1, 1, 1]} : vector<2x8x144xf32> to vector<2x8x4xf32>
    %191 = vector.extract_strided_slice %9 {offsets = [0, 0, 88], sizes = [2, 8, 4], strides = [1, 1, 1]} : vector<2x8x144xf32> to vector<2x8x4xf32>
    %192 = vector.extract_strided_slice %9 {offsets = [0, 0, 136], sizes = [2, 8, 4], strides = [1, 1, 1]} : vector<2x8x144xf32> to vector<2x8x4xf32>
    "tpu.trace_start"() <{level = 10 : i32, message = "bid,bjd->bij"}> : () -> ()
    %cst_62 = arith.constant dense<0.000000e+00> : vector<2x8x8xf32>
    %193 = tpu.matmul %190, %191, %cst_62 {dimension_numbers = #tpu.dot_dimension_numbers<[2], [2], [1], [1], [0, 0, 0, 1, 1, 1], [0], [0]>} : vector<2x8x4xf32>, vector<2x8x4xf32>, vector<2x8x8xf32> -> vector<2x8x8xf32>
    "tpu.trace_stop"() : () -> ()
    %cst_63 = arith.constant 5.000000e-01 : f32
    %194 = vector.broadcast %cst_63 : f32 to vector<2x8x8xf32>
    %195 = arith.mulf %193, %194 : vector<2x8x8xf32>
    %196 = vector.broadcast %5 : vector<2x1x8xf32> to vector<2x8x8xf32>
    %197 = arith.addf %195, %196 : vector<2x8x8xf32>
    %cst_64 = arith.constant dense<0xFF800000> : vector<2x8xf32>
    %198 = vector.multi_reduction <maximumf>, %197, %cst_64 [2] : vector<2x8x8xf32> to vector<2x8xf32>
    %199 = vector.shape_cast %198 : vector<2x8xf32> to vector<2x8x1xf32>
    %200 = vector.broadcast %199 : vector<2x8x1xf32> to vector<2x8x8xf32>
    %201 = arith.subf %197, %200 : vector<2x8x8xf32>
    %202 = math.exp %201 : vector<2x8x8xf32>
    %cst_65 = arith.constant dense<0.000000e+00> : vector<2x8xf32>
    %203 = vector.multi_reduction <add>, %202, %cst_65 [2] : vector<2x8x8xf32> to vector<2x8xf32>
    %204 = vector.shape_cast %203 : vector<2x8xf32> to vector<2x8x1xf32>
    %205 = vector.broadcast %204 : vector<2x8x1xf32> to vector<2x8x8xf32>
    %206 = arith.divf %202, %205 : vector<2x8x8xf32>
    "tpu.trace_start"() <{level = 10 : i32, message = "bij,bjd->bid"}> : () -> ()
    %cst_66 = arith.constant dense<0.000000e+00> : vector<2x8x4xf32>
    %207 = tpu.matmul %206, %192, %cst_66 {dimension_numbers = #tpu.dot_dimension_numbers<[2], [1], [1], [2], [0, 0, 0, 1, 1, 2], [0], [0]>} : vector<2x8x8xf32>, vector<2x8x4xf32>, vector<2x8x4xf32> -> vector<2x8x4xf32>
    "tpu.trace_stop"() : () -> ()
    %208 = vector.extract_strided_slice %9 {offsets = [0, 0, 44], sizes = [2, 8, 4], strides = [1, 1, 1]} : vector<2x8x144xf32> to vector<2x8x4xf32>
    %209 = vector.extract_strided_slice %9 {offsets = [0, 0, 92], sizes = [2, 8, 4], strides = [1, 1, 1]} : vector<2x8x144xf32> to vector<2x8x4xf32>
    %210 = vector.extract_strided_slice %9 {offsets = [0, 0, 140], sizes = [2, 8, 4], strides = [1, 1, 1]} : vector<2x8x144xf32> to vector<2x8x4xf32>
    "tpu.trace_start"() <{level = 10 : i32, message = "bid,bjd->bij"}> : () -> ()
    %cst_67 = arith.constant dense<0.000000e+00> : vector<2x8x8xf32>
    %211 = tpu.matmul %208, %209, %cst_67 {dimension_numbers = #tpu.dot_dimension_numbers<[2], [2], [1], [1], [0, 0, 0, 1, 1, 1], [0], [0]>} : vector<2x8x4xf32>, vector<2x8x4xf32>, vector<2x8x8xf32> -> vector<2x8x8xf32>
    "tpu.trace_stop"() : () -> ()
    %cst_68 = arith.constant 5.000000e-01 : f32
    %212 = vector.broadcast %cst_68 : f32 to vector<2x8x8xf32>
    %213 = arith.mulf %211, %212 : vector<2x8x8xf32>
    %214 = vector.broadcast %5 : vector<2x1x8xf32> to vector<2x8x8xf32>
    %215 = arith.addf %213, %214 : vector<2x8x8xf32>
    %cst_69 = arith.constant dense<0xFF800000> : vector<2x8xf32>
    %216 = vector.multi_reduction <maximumf>, %215, %cst_69 [2] : vector<2x8x8xf32> to vector<2x8xf32>
    %217 = vector.shape_cast %216 : vector<2x8xf32> to vector<2x8x1xf32>
    %218 = vector.broadcast %217 : vector<2x8x1xf32> to vector<2x8x8xf32>
    %219 = arith.subf %215, %218 : vector<2x8x8xf32>
    %220 = math.exp %219 : vector<2x8x8xf32>
    %cst_70 = arith.constant dense<0.000000e+00> : vector<2x8xf32>
    %221 = vector.multi_reduction <add>, %220, %cst_70 [2] : vector<2x8x8xf32> to vector<2x8xf32>
    %222 = vector.shape_cast %221 : vector<2x8xf32> to vector<2x8x1xf32>
    %223 = vector.broadcast %222 : vector<2x8x1xf32> to vector<2x8x8xf32>
    %224 = arith.divf %220, %223 : vector<2x8x8xf32>
    "tpu.trace_start"() <{level = 10 : i32, message = "bij,bjd->bid"}> : () -> ()
    %cst_71 = arith.constant dense<0.000000e+00> : vector<2x8x4xf32>
    %225 = tpu.matmul %224, %210, %cst_71 {dimension_numbers = #tpu.dot_dimension_numbers<[2], [1], [1], [2], [0, 0, 0, 1, 1, 2], [0], [0]>} : vector<2x8x8xf32>, vector<2x8x4xf32>, vector<2x8x4xf32> -> vector<2x8x4xf32>
    "tpu.trace_stop"() : () -> ()
    %226 = tpu.concatenate %27, %45, %63, %81, %99, %117, %135, %153, %171, %189, %207, %225 in 2 : vector<2x8x4xf32>, vector<2x8x4xf32>, vector<2x8x4xf32>, vector<2x8x4xf32>, vector<2x8x4xf32>, vector<2x8x4xf32>, vector<2x8x4xf32>, vector<2x8x4xf32>, vector<2x8x4xf32>, vector<2x8x4xf32>, vector<2x8x4xf32>, vector<2x8x4xf32> -> vector<2x8x48xf32>
    %227 = vector.shape_cast %226 : vector<2x8x48xf32> to vector<16x48xf32>
    %cst_72 = arith.constant dense<0.000000e+00> : vector<16x48xf32>
    %228 = tpu.matmul %227, %3, %cst_72 {dimension_numbers = #tpu.dot_dimension_numbers<[1], [0], [0], [1], [0, 0, 1, 1], [], []>} : vector<16x48xf32>, vector<48x48xf32>, vector<16x48xf32> -> vector<16x48xf32>
    %229 = vector.broadcast %4 : vector<1x48xf32> to vector<16x48xf32>
    %230 = arith.addf %228, %229 : vector<16x48xf32>
    %231 = arith.addf %0, %230 : vector<16x48xf32>
    %c0_73 = arith.constant 0 : index
    %c0_74 = arith.constant 0 : index
    %232 = vector.load %arg7[%c0_73, %c0_74] : memref<1x48xf32, #tpu.memory_space<vmem>>, vector<1x48xf32>
    %c0_75 = arith.constant 0 : index
    %c0_76 = arith.constant 0 : index
    %233 = vector.load %arg8[%c0_75, %c0_76] : memref<1x48xf32, #tpu.memory_space<vmem>>, vector<1x48xf32>
    %cst_77 = arith.constant dense<0.000000e+00> : vector<16xf32>
    %234 = vector.multi_reduction <add>, %231, %cst_77 [1] : vector<16x48xf32> to vector<16xf32>
    %235 = vector.shape_cast %234 : vector<16xf32> to vector<16x1xf32>
    %cst_78 = arith.constant 4.800000e+01 : f32
    %236 = vector.broadcast %cst_78 : f32 to vector<16x1xf32>
    %237 = arith.divf %235, %236 : vector<16x1xf32>
    %238 = vector.broadcast %237 : vector<16x1xf32> to vector<16x48xf32>
    %239 = arith.subf %231, %238 : vector<16x48xf32>
    %240 = arith.mulf %239, %239 : vector<16x48xf32>
    %cst_79 = arith.constant dense<0.000000e+00> : vector<16xf32>
    %241 = vector.multi_reduction <add>, %240, %cst_79 [1] : vector<16x48xf32> to vector<16xf32>
    %242 = vector.shape_cast %241 : vector<16xf32> to vector<16x1xf32>
    %cst_80 = arith.constant 4.800000e+01 : f32
    %243 = vector.broadcast %cst_80 : f32 to vector<16x1xf32>
    %244 = arith.divf %242, %243 : vector<16x1xf32>
    %245 = vector.broadcast %237 : vector<16x1xf32> to vector<16x48xf32>
    %246 = arith.subf %231, %245 : vector<16x48xf32>
    %cst_81 = arith.constant 9.99999996E-13 : f32
    %247 = vector.broadcast %cst_81 : f32 to vector<16x1xf32>
    %248 = arith.addf %244, %247 : vector<16x1xf32>
    %249 = math.rsqrt %248 : vector<16x1xf32>
    %250 = vector.broadcast %249 : vector<16x1xf32> to vector<16x48xf32>
    %251 = arith.mulf %246, %250 : vector<16x48xf32>
    %252 = vector.broadcast %232 : vector<1x48xf32> to vector<16x48xf32>
    %253 = arith.mulf %251, %252 : vector<16x48xf32>
    %254 = vector.broadcast %233 : vector<1x48xf32> to vector<16x48xf32>
    %255 = arith.addf %253, %254 : vector<16x48xf32>
    %c0_82 = arith.constant 0 : index
    %c0_83 = arith.constant 0 : index
    %256 = vector.load %arg9[%c0_82, %c0_83] : memref<48x96xf32, #tpu.memory_space<vmem>>, vector<48x96xf32>
    %cst_84 = arith.constant dense<0.000000e+00> : vector<16x96xf32>
    %257 = tpu.matmul %255, %256, %cst_84 {dimension_numbers = #tpu.dot_dimension_numbers<[1], [0], [0], [1], [0, 0, 1, 1], [], []>} : vector<16x48xf32>, vector<48x96xf32>, vector<16x96xf32> -> vector<16x96xf32>
    %c0_85 = arith.constant 0 : index
    %c0_86 = arith.constant 0 : index
    %258 = vector.load %arg10[%c0_85, %c0_86] : memref<1x96xf32, #tpu.memory_space<vmem>>, vector<1x96xf32>
    %259 = vector.broadcast %258 : vector<1x96xf32> to vector<16x96xf32>
    %260 = arith.addf %257, %259 : vector<16x96xf32>
    %cst_87 = arith.constant 5.000000e-01 : f32
    %261 = vector.broadcast %cst_87 : f32 to vector<16x96xf32>
    %262 = arith.mulf %261, %260 : vector<16x96xf32>
    %cst_88 = arith.constant 4.471500e-02 : f32
    %263 = vector.broadcast %cst_88 : f32 to vector<16x96xf32>
    %264 = arith.mulf %263, %260 : vector<16x96xf32>
    %265 = arith.mulf %264, %260 : vector<16x96xf32>
    %266 = arith.mulf %265, %260 : vector<16x96xf32>
    %267 = arith.addf %260, %266 : vector<16x96xf32>
    %cst_89 = arith.constant 0.797884583 : f32
    %268 = vector.broadcast %cst_89 : f32 to vector<16x96xf32>
    %269 = arith.mulf %268, %267 : vector<16x96xf32>
    %270 = math.tanh %269 : vector<16x96xf32>
    %cst_90 = arith.constant 1.000000e+00 : f32
    %271 = vector.broadcast %cst_90 : f32 to vector<16x96xf32>
    %272 = arith.addf %271, %270 : vector<16x96xf32>
    %273 = arith.mulf %262, %272 : vector<16x96xf32>
    %c0_91 = arith.constant 0 : index
    %c0_92 = arith.constant 0 : index
    %274 = vector.load %arg11[%c0_91, %c0_92] : memref<96x48xf32, #tpu.memory_space<vmem>>, vector<96x48xf32>
    %cst_93 = arith.constant dense<0.000000e+00> : vector<16x48xf32>
    %275 = tpu.matmul %273, %274, %cst_93 {dimension_numbers = #tpu.dot_dimension_numbers<[1], [0], [0], [1], [0, 0, 1, 1], [], []>} : vector<16x96xf32>, vector<96x48xf32>, vector<16x48xf32> -> vector<16x48xf32>
    %c0_94 = arith.constant 0 : index
    %c0_95 = arith.constant 0 : index
    %276 = vector.load %arg12[%c0_94, %c0_95] : memref<1x48xf32, #tpu.memory_space<vmem>>, vector<1x48xf32>
    %277 = vector.broadcast %276 : vector<1x48xf32> to vector<16x48xf32>
    %278 = arith.addf %275, %277 : vector<16x48xf32>
    %279 = arith.addf %255, %278 : vector<16x48xf32>
    %c0_96 = arith.constant 0 : index
    %c0_97 = arith.constant 0 : index
    %280 = vector.load %arg13[%c0_96, %c0_97] : memref<1x48xf32, #tpu.memory_space<vmem>>, vector<1x48xf32>
    %c0_98 = arith.constant 0 : index
    %c0_99 = arith.constant 0 : index
    %281 = vector.load %arg14[%c0_98, %c0_99] : memref<1x48xf32, #tpu.memory_space<vmem>>, vector<1x48xf32>
    %cst_100 = arith.constant dense<0.000000e+00> : vector<16xf32>
    %282 = vector.multi_reduction <add>, %279, %cst_100 [1] : vector<16x48xf32> to vector<16xf32>
    %283 = vector.shape_cast %282 : vector<16xf32> to vector<16x1xf32>
    %cst_101 = arith.constant 4.800000e+01 : f32
    %284 = vector.broadcast %cst_101 : f32 to vector<16x1xf32>
    %285 = arith.divf %283, %284 : vector<16x1xf32>
    %286 = vector.broadcast %285 : vector<16x1xf32> to vector<16x48xf32>
    %287 = arith.subf %279, %286 : vector<16x48xf32>
    %288 = arith.mulf %287, %287 : vector<16x48xf32>
    %cst_102 = arith.constant dense<0.000000e+00> : vector<16xf32>
    %289 = vector.multi_reduction <add>, %288, %cst_102 [1] : vector<16x48xf32> to vector<16xf32>
    %290 = vector.shape_cast %289 : vector<16xf32> to vector<16x1xf32>
    %cst_103 = arith.constant 4.800000e+01 : f32
    %291 = vector.broadcast %cst_103 : f32 to vector<16x1xf32>
    %292 = arith.divf %290, %291 : vector<16x1xf32>
    %293 = vector.broadcast %285 : vector<16x1xf32> to vector<16x48xf32>
    %294 = arith.subf %279, %293 : vector<16x48xf32>
    %cst_104 = arith.constant 9.99999996E-13 : f32
    %295 = vector.broadcast %cst_104 : f32 to vector<16x1xf32>
    %296 = arith.addf %292, %295 : vector<16x1xf32>
    %297 = math.rsqrt %296 : vector<16x1xf32>
    %298 = vector.broadcast %297 : vector<16x1xf32> to vector<16x48xf32>
    %299 = arith.mulf %294, %298 : vector<16x48xf32>
    %300 = vector.broadcast %280 : vector<1x48xf32> to vector<16x48xf32>
    %301 = arith.mulf %299, %300 : vector<16x48xf32>
    %302 = vector.broadcast %281 : vector<1x48xf32> to vector<16x48xf32>
    %303 = arith.addf %301, %302 : vector<16x48xf32>
    %c0_105 = arith.constant 0 : index
    %c0_106 = arith.constant 0 : index
    %304 = vector.load %arg15[%c0_105, %c0_106] : memref<16x48xf32, #tpu.memory_space<vmem>>, vector<16x48xf32>
    tpu.vector_store %arg15[%c0_105, %c0_106], %303 {strides = array<i32>} : memref<16x48xf32, #tpu.memory_space<vmem>>, vector<16x48xf32>,
    return
  }
  func.func @transform_0(%arg0: i32) -> (i32, i32) {
    %c0_i32 = arith.constant 0 : i32
    %c0_i32_0 = arith.constant 0 : i32
    %c0_i32_1 = arith.constant 0 : i32
    return %c0_i32, %c0_i32_0 : i32, i32
  }
  func.func @transform_1(%arg0: i32) -> (i32, i32, i32) {
    %c0_i32 = arith.constant 0 : i32
    %c0_i32_0 = arith.constant 0 : i32
    %c0_i32_1 = arith.constant 0 : i32
    %c0_i32_2 = arith.constant 0 : i32
    return %c0_i32, %c0_i32_0, %c0_i32_1 : i32, i32, i32
  }
  func.func @transform_2(%arg0: i32) -> (i32, i32) {
    %c0_i32 = arith.constant 0 : i32
    %c0_i32_0 = arith.constant 0 : i32
    %c0_i32_1 = arith.constant 0 : i32
    return %c0_i32, %c0_i32_0 : i32, i32
  }
  func.func @transform_3(%arg0: i32) -> (i32, i32) {
    %c0_i32 = arith.constant 0 : i32
    %c0_i32_0 = arith.constant 0 : i32
    %c0_i32_1 = arith.constant 0 : i32
    return %c0_i32, %c0_i32_0 : i32, i32
  }
  func.func @transform_4(%arg0: i32) -> (i32, i32) {
    %c0_i32 = arith.constant 0 : i32
    %c0_i32_0 = arith.constant 0 : i32
    %c0_i32_1 = arith.constant 0 : i32
    return %c0_i32, %c0_i32_0 : i32, i32
  }
  func.func @transform_5(%arg0: i32) -> (i32, i32) {
    %c0_i32 = arith.constant 0 : i32
    %c0_i32_0 = arith.constant 0 : i32
    %c0_i32_1 = arith.constant 0 : i32
    return %c0_i32, %c0_i32_0 : i32, i32
  }
  func.func @transform_6(%arg0: i32) -> (i32, i32) {
    %c0_i32 = arith.constant 0 : i32
    %c0_i32_0 = arith.constant 0 : i32
    %c0_i32_1 = arith.constant 0 : i32
    return %c0_i32, %c0_i32_0 : i32, i32
  }
  func.func @transform_7(%arg0: i32) -> (i32, i32) {
    %c0_i32 = arith.constant 0 : i32
    %c0_i32_0 = arith.constant 0 : i32
    %c0_i32_1 = arith.constant 0 : i32
    return %c0_i32, %c0_i32_0 : i32, i32
  }
  func.func @transform_8(%arg0: i32) -> (i32, i32) {
    %c0_i32 = arith.constant 0 : i32
    %c0_i32_0 = arith.constant 0 : i32
    %c0_i32_1 = arith.constant 0 : i32
    return %c0_i32, %c0_i32_0 : i32, i32
  }
  func.func @transform_9(%arg0: i32) -> (i32, i32) {
    %c0_i32 = arith.constant 0 : i32
    %c0_i32_0 = arith.constant 0 : i32
    %c0_i32_1 = arith.constant 0 : i32
    return %c0_i32, %c0_i32_0 : i32, i32
  }
  func.func @transform_10(%arg0: i32) -> (i32, i32) {
    %c0_i32 = arith.constant 0 : i32
    %c0_i32_0 = arith.constant 0 : i32
    %c0_i32_1 = arith.constant 0 : i32
    return %c0_i32, %c0_i32_0 : i32, i32
  }
  func.func @transform_11(%arg0: i32) -> (i32, i32) {
    %c0_i32 = arith.constant 0 : i32
    %c0_i32_0 = arith.constant 0 : i32
    %c0_i32_1 = arith.constant 0 : i32
    return %c0_i32, %c0_i32_0 : i32, i32
  }
  func.func @transform_12(%arg0: i32) -> (i32, i32) {
    %c0_i32 = arith.constant 0 : i32
    %c0_i32_0 = arith.constant 0 : i32
    %c0_i32_1 = arith.constant 0 : i32
    return %c0_i32, %c0_i32_0 : i32, i32
  }
  func.func @transform_13(%arg0: i32) -> (i32, i32) {
    %c0_i32 = arith.constant 0 : i32
    %c0_i32_0 = arith.constant 0 : i32
    %c0_i32_1 = arith.constant 0 : i32
    return %c0_i32, %c0_i32_0 : i32, i32
  }
  func.func @transform_14(%arg0: i32) -> (i32, i32) {
    %c0_i32 = arith.constant 0 : i32
    %c0_i32_0 = arith.constant 0 : i32
    %c0_i32_1 = arith.constant 0 : i32
    return %c0_i32, %c0_i32_0 : i32, i32
  }
}

module attributes {stable_mosaic.version = 11 : i64} {
  func.func @_bert_layer_kernel(%arg0: i32, %arg1: memref<16x48xf32, #tpu.memory_space<vmem>>, %arg2: memref<2x1x8xf32, #tpu.memory_space<vmem>>, %arg3: memref<48x144xf32, #tpu.memory_space<vmem>>, %arg4: memref<1x144xf32, #tpu.memory_space<vmem>>, %arg5: memref<48x48xf32, #tpu.memory_space<vmem>>, %arg6: memref<1x48xf32, #tpu.memory_space<vmem>>, %arg7: memref<1x48xf32, #tpu.memory_space<vmem>>, %arg8: memref<1x48xf32, #tpu.memory_space<vmem>>, %arg9: memref<48x96xf32, #tpu.memory_space<vmem>>, %arg10: memref<1x96xf32, #tpu.memory_space<vmem>>, %arg11: memref<96x48xf32, #tpu.memory_space<vmem>>, %arg12: memref<1x48xf32, #tpu.memory_space<vmem>>, %arg13: memref<1x48xf32, #tpu.memory_space<vmem>>, %arg14: memref<1x48xf32, #tpu.memory_space<vmem>>, %arg15: memref<16x48xf32, #tpu.memory_space<vmem>>) attributes {dimension_semantics = [#tpu.dimension_semantics<arbitrary>], iteration_bounds = array<i64: 1>, scalar_prefetch = 0 : i64, scratch_operands = 0 : i64, tpu.core_type = #tpu.core_type<tc>, window_params = [{pipeline_mode = #tpu.pipeline_mode<synchronous>, transform_indices = @transform_0, window_bounds = array<i64: 16, 48>}, {pipeline_mode = #tpu.pipeline_mode<synchronous>, transform_indices = @transform_1, window_bounds = array<i64: 2, 1, 8>}, {pipeline_mode = #tpu.pipeline_mode<synchronous>, transform_indices = @transform_2, window_bounds = array<i64: 48, 144>}, {pipeline_mode = #tpu.pipeline_mode<synchronous>, transform_indices = @transform_3, window_bounds = array<i64: 1, 144>}, {pipeline_mode = #tpu.pipeline_mode<synchronous>, transform_indices = @transform_4, window_bounds = array<i64: 48, 48>}, {pipeline_mode = #tpu.pipeline_mode<synchronous>, transform_indices = @transform_5, window_bounds = array<i64: 1, 48>}, {pipeline_mode = #tpu.pipeline_mode<synchronous>, transform_indices = @transform_6, window_bounds = array<i64: 1, 48>}, {pipeline_mode = #tpu.pipeline_mode<synchronous>, transform_indices = @transform_7, window_bounds = array<i64: 1, 48>}, {pipeline_mode = #tpu.pipeline_mode<synchronous>, transform_indices = @transform_8, window_bounds = array<i64: 48, 96>}, {pipeline_mode = #tpu.pipeline_mode<synchronous>, transform_indices = @transform_9, window_bounds = array<i64: 1, 96>}, {pipeline_mode = #tpu.pipeline_mode<synchronous>, transform_indices = @transform_10, window_bounds = array<i64: 96, 48>}, {pipeline_mode = #tpu.pipeline_mode<synchronous>, transform_indices = @transform_11, window_bounds = array<i64: 1, 48>}, {pipeline_mode = #tpu.pipeline_mode<synchronous>, transform_indices = @transform_12, window_bounds = array<i64: 1, 48>}, {pipeline_mode = #tpu.pipeline_mode<synchronous>, transform_indices = @transform_13, window_bounds = array<i64: 1, 48>}, {pipeline_mode = #tpu.pipeline_mode<synchronous>, transform_indices = @transform_14, window_bounds = array<i64: 16, 48>}]} {
    %c0 = arith.constant 0 : index
    %c0_0 = arith.constant 0 : index
    %0 = vector.load %arg1[%c0, %c0_0] : memref<16x48xf32, #tpu.memory_space<vmem>>, vector<16x48xf32>
    %c0_1 = arith.constant 0 : index
    %c0_2 = arith.constant 0 : index
    %1 = vector.load %arg3[%c0_1, %c0_2] : memref<48x144xf32, #tpu.memory_space<vmem>>, vector<48x144xf32>
    %c0_3 = arith.constant 0 : index
    %c0_4 = arith.constant 0 : index
    %2 = vector.load %arg4[%c0_3, %c0_4] : memref<1x144xf32, #tpu.memory_space<vmem>>, vector<1x144xf32>
    %c0_5 = arith.constant 0 : index
    %c0_6 = arith.constant 0 : index
    %3 = vector.load %arg5[%c0_5, %c0_6] : memref<48x48xf32, #tpu.memory_space<vmem>>, vector<48x48xf32>
    %c0_7 = arith.constant 0 : index
    %c0_8 = arith.constant 0 : index
    %4 = vector.load %arg6[%c0_7, %c0_8] : memref<1x48xf32, #tpu.memory_space<vmem>>, vector<1x48xf32>
    %c0_9 = arith.constant 0 : index
    %c0_10 = arith.constant 0 : index
    %c0_11 = arith.constant 0 : index
    %5 = vector.load %arg2[%c0_9, %c0_10, %c0_11] : memref<2x1x8xf32, #tpu.memory_space<vmem>>, vector<2x1x8xf32>
    %cst = arith.constant dense<0.000000e+00> : vector<16x144xf32>
    %6 = tpu.matmul %0, %1, %cst {dimension_numbers = #tpu.dot_dimension_numbers<[1], [0], [0], [1], [0, 0, 1, 1], [], []>} : vector<16x48xf32>, vector<48x144xf32>, vector<16x144xf32> -> vector<16x144xf32>
    %7 = vector.broadcast %2 : vector<1x144xf32> to vector<16x144xf32>
    %8 = arith.addf %6, %7 : vector<16x144xf32>
    %9 = vector.shape_cast %8 : vector<16x144xf32> to vector<2x8x144xf32>
    %10 = vector.extract_strided_slice %9 {offsets = [0, 0, 0], sizes = [2, 8, 4], strides = [1, 1, 1]} : vector<2x8x144xf32> to vector<2x8x4xf32>
    %11 = vector.extract_strided_slice %9 {offsets = [0, 0, 48], sizes = [2, 8, 4], strides = [1, 1, 1]} : vector<2x8x144xf32> to vector<2x8x4xf32>
    %12 = vector.extract_strided_slice %9 {offsets = [0, 0, 96], sizes = [2, 8, 4], strides = [1, 1, 1]} : vector<2x8x144xf32> to vector<2x8x4xf32>
    "tpu.trace_start"() <{level = 10 : i32, message = "bid,bjd->bij"}> : () -> ()
    %cst_12 = arith.constant dense<0.000000e+00> : vector<2x8x8xf32>
    %13 = tpu.matmul %10, %11, %cst_12 {dimension_numbers = #tpu.dot_dimension_numbers<[2], [2], [1], [1], [0, 0, 0, 1, 1, 1], [0], [0]>} : vector<2x8x4xf32>, vector<2x8x4xf32>, vector<2x8x8xf32> -> vector<2x8x8xf32>
    "tpu.trace_stop"() : () -> ()
    %cst_13 = arith.constant 5.000000e-01 : f32
    %14 = vector.broadcast %cst_13 : f32 to vector<2x8x8xf32>
    %15 = arith.mulf %13, %14 : vector<2x8x8xf32>
    %16 = vector.broadcast %5 : vector<2x1x8xf32> to vector<2x8x8xf32>
    %17 = arith.addf %15, %16 : vector<2x8x8xf32>
    %cst_14 = arith.constant dense<0xFF800000> : vector<2x8xf32>
    %18 = vector.multi_reduction <maximumf>, %17, %cst_14 [2] : vector<2x8x8xf32> to vector<2x8xf32>
    %19 = vector.shape_cast %18 : vector<2x8xf32> to vector<2x8x1xf32>
    %20 = vector.broadcast %19 : vector<2x8x1xf32> to vector<2x8x8xf32>
    %21 = arith.subf %17, %20 : vector<2x8x8xf32>
    %22 = math.exp %21 : vector<2x8x8xf32>
    %cst_15 = arith.constant dense<0.000000e+00> : vector<2x8xf32>
    %23 = vector.multi_reduction <add>, %22, %cst_15 [2] : vector<2x8x8xf32> to vector<2x8xf32>
    %24 = vector.shape_cast %23 : vector<2x8xf32> to vector<2x8x1xf32>
    %25 = vector.broadcast %24 : vector<2x8x1xf32> to vector<2x8x8xf32>
    %26 = arith.divf %22, %25 : vector<2x8x8xf32>
    "tpu.trace_start"() <{level = 10 : i32, message = "bij,bjd->bid"}> : () -> ()
    %cst_16 = arith.constant dense<0.000000e+00> : vector<2x8x4xf32>
    %27 = tpu.matmul %26, %12, %cst_16 {dimension_numbers = #tpu.dot_dimension_numbers<[2], [1], [1], [2], [0, 0, 0, 1, 1, 2], [0], [0]>} : vector<2x8x8xf32>, vector<2x8x4xf32>, vector<2x8x4xf32> -> vector<2x8x4xf32>
    "tpu.trace_stop"() : () -> ()
    %28 = vector.extract_strided_slice %9 {offsets = [0, 0, 4], sizes = [2, 8, 4], strides = [1, 1, 1]} : vector<2x8x144xf32> to vector<2x8x4xf32>
    %29 = vector.extract_strided_slice %9 {offsets = [0, 0, 52], sizes = [2, 8, 4], strides = [1, 1, 1]} : vector<2x8x144xf32> to vector<2x8x4xf32>
    %30 = vector.extract_strided_slice %9 {offsets = [0, 0, 100], sizes = [2, 8, 4], strides = [1, 1, 1]} : vector<2x8x144xf32> to vector<2x8x4xf32>
    "tpu.trace_start"() <{level = 10 : i32, message = "bid,bjd->bij"}> : () -> ()
    %cst_17 = arith.constant dense<0.000000e+00> : vector<2x8x8xf32>
    %31 = tpu.matmul %28, %29, %cst_17 {dimension_numbers = #tpu.dot_dimension_numbers<[2], [2], [1], [1], [0, 0, 0, 1, 1, 1], [0], [0]>} : vector<2x8x4xf32>, vector<2x8x4xf32>, vector<2x8x8xf32> -> vector<2x8x8xf32>
    "tpu.trace_stop"() : () -> ()
    %cst_18 = arith.constant 5.000000e-01 : f32
    %32 = vector.broadcast %cst_18 : f32 to vector<2x8x8xf32>
    %33 = arith.mulf %31, %32 : vector<2x8x8xf32>
    %34 = vector.broadcast %5 : vector<2x1x8xf32> to vector<2x8x8xf32>
    %35 = arith.addf %33, %34 : vector<2x8x8xf32>
    %cst_19 = arith.constant dense<0xFF800000> : vector<2x8xf32>
    %36 = vector.multi_reduction <maximumf>, %35, %cst_19 [2] : vector<2x8x8xf32> to vector<2x8xf32>
    %37 = vector.shape_cast %36 : vector<2x8xf32> to vector<2x8x1xf32>
    %38 = vector.broadcast %37 : vector<2x8x1xf32> to vector<2x8x8xf32>
    %39 = arith.subf %35, %38 : vector<2x8x8xf32>
    %40 = math.exp %39 : vector<2x8x8xf32>
    %cst_20 = arith.constant dense<0.000000e+00> : vector<2x8xf32>
    %41 = vector.multi_reduction <add>, %40, %cst_20 [2] : vector<2x8x8xf32> to vector<2x8xf32>
    %42 = vector.shape_cast %41 : vector<2x8xf32> to vector<2x8x1xf32>
    %43 = vector.broadcast %42 : vector<2x8x1xf32> to vector<2x8x8xf32>
    %44 = arith.divf %40, %43 : vector<2x8x8xf32>
    "tpu.trace_start"() <{level = 10 : i32, message = "bij,bjd->bid"}> : () -> ()
    %cst_21 = arith.constant dense<0.000000e+00> : vector<2x8x4xf32>
    %45 = tpu.matmul %44, %30, %cst_21 {dimension_numbers = #tpu.dot_dimension_numbers<[2], [1], [1], [2], [0, 0, 0, 1, 1, 2], [0], [0]>} : vector<2x8x8xf32>, vector<2x8x4xf32>, vector<2x8x4xf32> -> vector<2x8x4xf32>
    "tpu.trace_stop"() : () -> ()
    %46 = vector.extract_strided_slice %9 {offsets = [0, 0, 8], sizes = [2, 8, 4], strides = [1, 1, 1]} : vector<2x8x144xf32> to vector<2x8x4xf32>
    %47 = vector.extract_strided_slice %9 {offsets = [0, 0, 56], sizes = [2, 8, 4], strides = [1, 1, 1]} : vector<2x8x144xf32> to vector<2x8x4xf32>
    %48 = vector.extract_strided_slice %9 {offsets = [0, 0, 104], sizes = [2, 8, 4], strides = [1, 1, 1]} : vector<2x8x144xf32> to vector<2x8x4xf32>
    "tpu.trace_start"() <{level = 10 : i32, message = "bid,bjd->bij"}> : () -> ()
    %cst_22 = arith.constant dense<0.000000e+00> : vector<2x8x8xf32>
    %49 = tpu.matmul %46, %47, %cst_22 {dimension_numbers = #tpu.dot_dimension_numbers<[2], [2], [1], [1], [0, 0, 0, 1, 1, 1], [0], [0]>} : vector<2x8x4xf32>, vector<2x8x4xf32>, vector<2x8x8xf32> -> vector<2x8x8xf32>
    "tpu.trace_stop"() : () -> ()
    %cst_23 = arith.constant 5.000000e-01 : f32
    %50 = vector.broadcast %cst_23 : f32 to vector<2x8x8xf32>
    %51 = arith.mulf %49, %50 : vector<2x8x8xf32>
    %52 = vector.broadcast %5 : vector<2x1x8xf32> to vector<2x8x8xf32>
    %53 = arith.addf %51, %52 : vector<2x8x8xf32>
    %cst_24 = arith.constant dense<0xFF800000> : vector<2x8xf32>
    %54 = vector.multi_reduction <maximumf>, %53, %cst_24 [2] : vector<2x8x8xf32> to vector<2x8xf32>
    %55 = vector.shape_cast %54 : vector<2x8xf32> to vector<2x8x1xf32>
    %56 = vector.broadcast %55 : vector<2x8x1xf32> to vector<2x8x8xf32>
    %57 = arith.subf %53, %56 : vector<2x8x8xf32>
    %58 = math.exp %57 : vector<2x8x8xf32>
    %cst_25 = arith.constant dense<0.000000e+00> : vector<2x8xf32>
    %59 = vector.multi_reduction <add>, %58, %cst_25 [2] : vector<2x8x8xf32> to vector<2x8xf32>
    %60 = vector.shape_cast %59 : vector<2x8xf32> to vector<2x8x1xf32>
    %61 = vector.broadcast %60 : vector<2x8x1xf32> to vector<2x8x8xf32>
    %62 = arith.divf %58, %61 : vector<2x8x8xf32>
    "tpu.trace_start"() <{level = 10 : i32, message = "bij,bjd->bid"}> : () -> ()
    %cst_26 = arith.constant dense<0.000000e+00> : vector<2x8x4xf32>
    %63 = tpu.matmul %62, %48, %cst_26 {dimension_numbers = #tpu.dot_dimension_numbers<[2], [1], [1], [2], [0, 0, 0, 1, 1, 2], [0], [0]>} : vector<2x8x8xf32>, vector<2x8x4xf32>, vector<2x8x4xf32> -> vector<2x8x4xf32>
    "tpu.trace_stop"() : () -> ()
    %64 = vector.extract_strided_slice %9 {offsets = [0, 0, 12], sizes = [2, 8, 4], strides = [1, 1, 1]} : vector<2x8x144xf32> to vector<2x8x4xf32>
    %65 = vector.extract_strided_slice %9 {offsets = [0, 0, 60], sizes = [2, 8, 4], strides = [1, 1, 1]} : vector<2x8x144xf32> to vector<2x8x4xf32>
    %66 = vector.extract_strided_slice %9 {offsets = [0, 0, 108], sizes = [2, 8, 4], strides = [1, 1, 1]} : vector<2x8x144xf32> to vector<2x8x4xf32>
    "tpu.trace_start"() <{level = 10 : i32, message = "bid,bjd->bij"}> : () -> ()
    %cst_27 = arith.constant dense<0.000000e+00> : vector<2x8x8xf32>
    %67 = tpu.matmul %64, %65, %cst_27 {dimension_numbers = #tpu.dot_dimension_numbers<[2], [2], [1], [1], [0, 0, 0, 1, 1, 1], [0], [0]>} : vector<2x8x4xf32>, vector<2x8x4xf32>, vector<2x8x8xf32> -> vector<2x8x8xf32>
    "tpu.trace_stop"() : () -> ()
    %cst_28 = arith.constant 5.000000e-01 : f32
    %68 = vector.broadcast %cst_28 : f32 to vector<2x8x8xf32>
    %69 = arith.mulf %67, %68 : vector<2x8x8xf32>
    %70 = vector.broadcast %5 : vector<2x1x8xf32> to vector<2x8x8xf32>
    %71 = arith.addf %69, %70 : vector<2x8x8xf32>
    %cst_29 = arith.constant dense<0xFF800000> : vector<2x8xf32>
    %72 = vector.multi_reduction <maximumf>, %71, %cst_29 [2] : vector<2x8x8xf32> to vector<2x8xf32>
    %73 = vector.shape_cast %72 : vector<2x8xf32> to vector<2x8x1xf32>
    %74 = vector.broadcast %73 : vector<2x8x1xf32> to vector<2x8x8xf32>
    %75 = arith.subf %71, %74 : vector<2x8x8xf32>
    %76 = math.exp %75 : vector<2x8x8xf32>
    %cst_30 = arith.constant dense<0.000000e+00> : vector<2x8xf32>
    %77 = vector.multi_reduction <add>, %76, %cst_30 [2] : vector<2x8x8xf32> to vector<2x8xf32>
    %78 = vector.shape_cast %77 : vector<2x8xf32> to vector<2x8x1xf32>
    %79 = vector.broadcast %78 : vector<2x8x1xf32> to vector<2x8x8xf32>
    %80 = arith.divf %76, %79 : vector<2x8x8xf32>
    "tpu.trace_start"() <{level = 10 : i32, message = "bij,bjd->bid"}> : () -> ()
    %cst_31 = arith.constant dense<0.000000e+00> : vector<2x8x4xf32>
    %81 = tpu.matmul %80, %66, %cst_31 {dimension_numbers = #tpu.dot_dimension_numbers<[2], [1], [1], [2], [0, 0, 0, 1, 1, 2], [0], [0]>} : vector<2x8x8xf32>, vector<2x8x4xf32>, vector<2x8x4xf32> -> vector<2x8x4xf32>
    "tpu.trace_stop"() : () -> ()
    %82 = vector.extract_strided_slice %9 {offsets = [0, 0, 16], sizes = [2, 8, 4], strides = [1, 1, 1]} : vector<2x8x144xf32> to vector<2x8x4xf32>
    %83 = vector.extract_strided_slice %9 {offsets = [0, 0, 64], sizes = [2, 8, 4], strides = [1, 1, 1]} : vector<2x8x144xf32> to vector<2x8x4xf32>
    %84 = vector.extract_strided_slice %9 {offsets = [0, 0, 112], sizes = [2, 8, 4], strides = [1, 1, 1]} : vector<2x8x144xf32> to vector<2x8x4xf32>
    "tpu.trace_start"() <{level = 10 : i32, message = "bid,bjd->bij"}> : () -> ()
    %cst_32 = arith.constant dense<0.000000e+00> : vector<2x8x8xf32>
    %85 = tpu.matmul %82, %83, %cst_32 {dimension_numbers = #tpu.dot_dimension_numbers<[2], [2], [1], [1], [0, 0, 0, 1, 1, 1], [0], [0]>} : vector<2x8x4xf32>, vector<2x8x4xf32>, vector<2x8x8xf32> -> vector<2x8x8xf32>
    "tpu.trace_stop"() : () -> ()
    %cst_33 = arith.constant 5.000000e-01 : f32
    %86 = vector.broadcast %cst_33 : f32 to vector<2x8x8xf32>
    %87 = arith.mulf %85, %86 : vector<2x8x8xf32>
    %88 = vector.broadcast %5 : vector<2x1x8xf32> to vector<2x8x8xf32>
    %89 = arith.addf %87, %88 : vector<2x8x8xf32>
    %cst_34 = arith.constant dense<0xFF800000> : vector<2x8xf32>
    %90 = vector.multi_reduction <maximumf>, %89, %cst_34 [2] : vector<2x8x8xf32> to vector<2x8xf32>
    %91 = vector.shape_cast %90 : vector<2x8xf32> to vector<2x8x1xf32>
    %92 = vector.broadcast %91 : vector<2x8x1xf32> to vector<2x8x8xf32>
    %93 = arith.subf %89, %92 : vector<2x8x8xf32>
    %94 = math.exp %93 : vector<2x8x8xf32>
    %cst_35 = arith.constant dense<0.000000e+00> : vector<2x8xf32>
    %95 = vector.multi_reduction <add>, %94, %cst_35 [2] : vector<2x8x8xf32> to vector<2x8xf32>
    %96 = vector.shape_cast %95 : vector<2x8xf32> to vector<2x8x1xf32>
    %97 = vector.broadcast %96 : vector<2x8x1xf32> to vector<2x8x8xf32>
    %98 = arith.divf %94, %97 : vector<2x8x8xf32>
    "tpu.trace_start"() <{level = 10 : i32, message = "bij,bjd->bid"}> : () -> ()
    %cst_36 = arith.constant dense<0.000000e+00> : vector<2x8x4xf32>
    %99 = tpu.matmul %98, %84, %cst_36 {dimension_numbers = #tpu.dot_dimension_numbers<[2], [1], [1], [2], [0, 0, 0, 1, 1, 2], [0], [0]>} : vector<2x8x8xf32>, vector<2x8x4xf32>, vector<2x8x4xf32> -> vector<2x8x4xf32>
    "tpu.trace_stop"() : () -> ()
    %100 = vector.extract_strided_slice %9 {offsets = [0, 0, 20], sizes = [2, 8, 4], strides = [1, 1, 1]} : vector<2x8x144xf32> to vector<2x8x4xf32>
    %101 = vector.extract_strided_slice %9 {offsets = [0, 0, 68], sizes = [2, 8, 4], strides = [1, 1, 1]} : vector<2x8x144xf32> to vector<2x8x4xf32>
    %102 = vector.extract_strided_slice %9 {offsets = [0, 0, 116], sizes = [2, 8, 4], strides = [1, 1, 1]} : vector<2x8x144xf32> to vector<2x8x4xf32>
    "tpu.trace_start"() <{level = 10 : i32, message = "bid,bjd->bij"}> : () -> ()
    %cst_37 = arith.constant dense<0.000000e+00> : vector<2x8x8xf32>
    %103 = tpu.matmul %100, %101, %cst_37 {dimension_numbers = #tpu.dot_dimension_numbers<[2], [2], [1], [1], [0, 0, 0, 1, 1, 1], [0], [0]>} : vector<2x8x4xf32>, vector<2x8x4xf32>, vector<2x8x8xf32> -> vector<2x8x8xf32>
    "tpu.trace_stop"() : () -> ()
    %cst_38 = arith.constant 5.000000e-01 : f32
    %104 = vector.broadcast %cst_38 : f32 to vector<2x8x8xf32>
    %105 = arith.mulf %103, %104 : vector<2x8x8xf32>
    %106 = vector.broadcast %5 : vector<2x1x8xf32> to vector<2x8x8xf32>
    %107 = arith.addf %105, %106 : vector<2x8x8xf32>
    %cst_39 = arith.constant dense<0xFF800000> : vector<2x8xf32>
    %108 = vector.multi_reduction <maximumf>, %107, %cst_39 [2] : vector<2x8x8xf32> to vector<2x8xf32>
    %109 = vector.shape_cast %108 : vector<2x8xf32> to vector<2x8x1xf32>
    %110 = vector.broadcast %109 : vector<2x8x1xf32> to vector<2x8x8xf32>
    %111 = arith.subf %107, %110 : vector<2x8x8xf32>
    %112 = math.exp %111 : vector<2x8x8xf32>
    %cst_40 = arith.constant dense<0.000000e+00> : vector<2x8xf32>
    %113 = vector.multi_reduction <add>, %112, %cst_40 [2] : vector<2x8x8xf32> to vector<2x8xf32>
    %114 = vector.shape_cast %113 : vector<2x8xf32> to vector<2x8x1xf32>
    %115 = vector.broadcast %114 : vector<2x8x1xf32> to vector<2x8x8xf32>
    %116 = arith.divf %112, %115 : vector<2x8x8xf32>
    "tpu.trace_start"() <{level = 10 : i32, message = "bij,bjd->bid"}> : () -> ()
    %cst_41 = arith.constant dense<0.000000e+00> : vector<2x8x4xf32>
    %117 = tpu.matmul %116, %102, %cst_41 {dimension_numbers = #tpu.dot_dimension_numbers<[2], [1], [1], [2], [0, 0, 0, 1, 1, 2], [0], [0]>} : vector<2x8x8xf32>, vector<2x8x4xf32>, vector<2x8x4xf32> -> vector<2x8x4xf32>
    "tpu.trace_stop"() : () -> ()
    %118 = vector.extract_strided_slice %9 {offsets = [0, 0, 24], sizes = [2, 8, 4], strides = [1, 1, 1]} : vector<2x8x144xf32> to vector<2x8x4xf32>
    %119 = vector.extract_strided_slice %9 {offsets = [0, 0, 72], sizes = [2, 8, 4], strides = [1, 1, 1]} : vector<2x8x144xf32> to vector<2x8x4xf32>
    %120 = vector.extract_strided_slice %9 {offsets = [0, 0, 120], sizes = [2, 8, 4], strides = [1, 1, 1]} : vector<2x8x144xf32> to vector<2x8x4xf32>
    "tpu.trace_start"() <{level = 10 : i32, message = "bid,bjd->bij"}> : () -> ()
    %cst_42 = arith.constant dense<0.000000e+00> : vector<2x8x8xf32>
    %121 = tpu.matmul %118, %119, %cst_42 {dimension_numbers = #tpu.dot_dimension_numbers<[2], [2], [1], [1], [0, 0, 0, 1, 1, 1], [0], [0]>} : vector<2x8x4xf32>, vector<2x8x4xf32>, vector<2x8x8xf32> -> vector<2x8x8xf32>
    "tpu.trace_stop"() : () -> ()
    %cst_43 = arith.constant 5.000000e-01 : f32
    %122 = vector.broadcast %cst_43 : f32 to vector<2x8x8xf32>
    %123 = arith.mulf %121, %122 : vector<2x8x8xf32>
    %124 = vector.broadcast %5 : vector<2x1x8xf32> to vector<2x8x8xf32>
    %125 = arith.addf %123, %124 : vector<2x8x8xf32>
    %cst_44 = arith.constant dense<0xFF800000> : vector<2x8xf32>
    %126 = vector.multi_reduction <maximumf>, %125, %cst_44 [2] : vector<2x8x8xf32> to vector<2x8xf32>
    %127 = vector.shape_cast %126 : vector<2x8xf32> to vector<2x8x1xf32>
    %128 = vector.broadcast %127 : vector<2x8x1xf32> to vector<2x8x8xf32>
    %129 = arith.subf %125, %128 : vector<2x8x8xf32>
    %130 = math.exp %129 : vector<2x8x8xf32>
    %cst_45 = arith.constant dense<0.000000e+00> : vector<2x8xf32>
    %131 = vector.multi_reduction <add>, %130, %cst_45 [2] : vector<2x8x8xf32> to vector<2x8xf32>
    %132 = vector.shape_cast %131 : vector<2x8xf32> to vector<2x8x1xf32>
    %133 = vector.broadcast %132 : vector<2x8x1xf32> to vector<2x8x8xf32>
    %134 = arith.divf %130, %133 : vector<2x8x8xf32>
    "tpu.trace_start"() <{level = 10 : i32, message = "bij,bjd->bid"}> : () -> ()
    %cst_46 = arith.constant dense<0.000000e+00> : vector<2x8x4xf32>
    %135 = tpu.matmul %134, %120, %cst_46 {dimension_numbers = #tpu.dot_dimension_numbers<[2], [1], [1], [2], [0, 0, 0, 1, 1, 2], [0], [0]>} : vector<2x8x8xf32>, vector<2x8x4xf32>, vector<2x8x4xf32> -> vector<2x8x4xf32>
    "tpu.trace_stop"() : () -> ()
    %136 = vector.extract_strided_slice %9 {offsets = [0, 0, 28], sizes = [2, 8, 4], strides = [1, 1, 1]} : vector<2x8x144xf32> to vector<2x8x4xf32>
    %137 = vector.extract_strided_slice %9 {offsets = [0, 0, 76], sizes = [2, 8, 4], strides = [1, 1, 1]} : vector<2x8x144xf32> to vector<2x8x4xf32>
    %138 = vector.extract_strided_slice %9 {offsets = [0, 0, 124], sizes = [2, 8, 4], strides = [1, 1, 1]} : vector<2x8x144xf32> to vector<2x8x4xf32>
    "tpu.trace_start"() <{level = 10 : i32, message = "bid,bjd->bij"}> : () -> ()
    %cst_47 = arith.constant dense<0.000000e+00> : vector<2x8x8xf32>
    %139 = tpu.matmul %136, %137, %cst_47 {dimension_numbers = #tpu.dot_dimension_numbers<[2], [2], [1], [1], [0, 0, 0, 1, 1, 1], [0], [0]>} : vector<2x8x4xf32>, vector<2x8x4xf32>, vector<2x8x8xf32> -> vector<2x8x8xf32>
    "tpu.trace_stop"() : () -> ()
    %cst_48 = arith.constant 5.000000e-01 : f32
    %140 = vector.broadcast %cst_48 : f32 to vector<2x8x8xf32>
    %141 = arith.mulf %139, %140 : vector<2x8x8xf32>
    %142 = vector.broadcast %5 : vector<2x1x8xf32> to vector<2x8x8xf32>
    %143 = arith.addf %141, %142 : vector<2x8x8xf32>
    %cst_49 = arith.constant dense<0xFF800000> : vector<2x8xf32>
    %144 = vector.multi_reduction <maximumf>, %143, %cst_49 [2] : vector<2x8x8xf32> to vector<2x8xf32>
    %145 = vector.shape_cast %144 : vector<2x8xf32> to vector<2x8x1xf32>
    %146 = vector.broadcast %145 : vector<2x8x1xf32> to vector<2x8x8xf32>
    %147 = arith.subf %143, %146 : vector<2x8x8xf32>
    %148 = math.exp %147 : vector<2x8x8xf32>
    %cst_50 = arith.constant dense<0.000000e+00> : vector<2x8xf32>
    %149 = vector.multi_reduction <add>, %148, %cst_50 [2] : vector<2x8x8xf32> to vector<2x8xf32>
    %150 = vector.shape_cast %149 : vector<2x8xf32> to vector<2x8x1xf32>
    %151 = vector.broadcast %150 : vector<2x8x1xf32> to vector<2x8x8xf32>
    %152 = arith.divf %148, %151 : vector<2x8x8xf32>
    "tpu.trace_start"() <{level = 10 : i32, message = "bij,bjd->bid"}> : () -> ()
    %cst_51 = arith.constant dense<0.000000e+00> : vector<2x8x4xf32>
    %153 = tpu.matmul %152, %138, %cst_51 {dimension_numbers = #tpu.dot_dimension_numbers<[2], [1], [1], [2], [0, 0, 0, 1, 1, 2], [0], [0]>} : vector<2x8x8xf32>, vector<2x8x4xf32>, vector<2x8x4xf32> -> vector<2x8x4xf32>
    "tpu.trace_stop"() : () -> ()
    %154 = vector.extract_strided_slice %9 {offsets = [0, 0, 32], sizes = [2, 8, 4], strides = [1, 1, 1]} : vector<2x8x144xf32> to vector<2x8x4xf32>
    %155 = vector.extract_strided_slice %9 {offsets = [0, 0, 80], sizes = [2, 8, 4], strides = [1, 1, 1]} : vector<2x8x144xf32> to vector<2x8x4xf32>
    %156 = vector.extract_strided_slice %9 {offsets = [0, 0, 128], sizes = [2, 8, 4], strides = [1, 1, 1]} : vector<2x8x144xf32> to vector<2x8x4xf32>
    "tpu.trace_start"() <{level = 10 : i32, message = "bid,bjd->bij"}> : () -> ()
    %cst_52 = arith.constant dense<0.000000e+00> : vector<2x8x8xf32>
    %157 = tpu.matmul %154, %155, %cst_52 {dimension_numbers = #tpu.dot_dimension_numbers<[2], [2], [1], [1], [0, 0, 0, 1, 1, 1], [0], [0]>} : vector<2x8x4xf32>, vector<2x8x4xf32>, vector<2x8x8xf32> -> vector<2x8x8xf32>
    "tpu.trace_stop"() : () -> ()
    %cst_53 = arith.constant 5.000000e-01 : f32
    %158 = vector.broadcast %cst_53 : f32 to vector<2x8x8xf32>
    %159 = arith.mulf %157, %158 : vector<2x8x8xf32>
    %160 = vector.broadcast %5 : vector<2x1x8xf32> to vector<2x8x8xf32>
    %161 = arith.addf %159, %160 : vector<2x8x8xf32>
    %cst_54 = arith.constant dense<0xFF800000> : vector<2x8xf32>
    %162 = vector.multi_reduction <maximumf>, %161, %cst_54 [2] : vector<2x8x8xf32> to vector<2x8xf32>
    %163 = vector.shape_cast %162 : vector<2x8xf32> to vector<2x8x1xf32>
    %164 = vector.broadcast %163 : vector<2x8x1xf32> to vector<2x8x8xf32>
    %165 = arith.subf %161, %164 : vector<2x8x8xf32>
    %166 = math.exp %165 : vector<2x8x8xf32>
    %cst_55 = arith.constant dense<0.000000e+00> : vector<2x8xf32>
    %167 = vector.multi_reduction <add>, %166, %cst_55 [2] : vector<2x8x8xf32> to vector<2x8xf32>
    %168 = vector.shape_cast %167 : vector<2x8xf32> to vector<2x8x1xf32>
    %169 = vector.broadcast %168 : vector<2x8x1xf32> to vector<2x8x8xf32>
    %170 = arith.divf %166, %169 : vector<2x8x8xf32>
    "tpu.trace_start"() <{level = 10 : i32, message = "bij,bjd->bid"}> : () -> ()
    %cst_56 = arith.constant dense<0.000000e+00> : vector<2x8x4xf32>
    %171 = tpu.matmul %170, %156, %cst_56 {dimension_numbers = #tpu.dot_dimension_numbers<[2], [1], [1], [2], [0, 0, 0, 1, 1, 2], [0], [0]>} : vector<2x8x8xf32>, vector<2x8x4xf32>, vector<2x8x4xf32> -> vector<2x8x4xf32>
    "tpu.trace_stop"() : () -> ()
    %172 = vector.extract_strided_slice %9 {offsets = [0, 0, 36], sizes = [2, 8, 4], strides = [1, 1, 1]} : vector<2x8x144xf32> to vector<2x8x4xf32>
    %173 = vector.extract_strided_slice %9 {offsets = [0, 0, 84], sizes = [2, 8, 4], strides = [1, 1, 1]} : vector<2x8x144xf32> to vector<2x8x4xf32>
    %174 = vector.extract_strided_slice %9 {offsets = [0, 0, 132], sizes = [2, 8, 4], strides = [1, 1, 1]} : vector<2x8x144xf32> to vector<2x8x4xf32>
    "tpu.trace_start"() <{level = 10 : i32, message = "bid,bjd->bij"}> : () -> ()
    %cst_57 = arith.constant dense<0.000000e+00> : vector<2x8x8xf32>
    %175 = tpu.matmul %172, %173, %cst_57 {dimension_numbers = #tpu.dot_dimension_numbers<[2], [2], [1], [1], [0, 0, 0, 1, 1, 1], [0], [0]>} : vector<2x8x4xf32>, vector<2x8x4xf32>, vector<2x8x8xf32> -> vector<2x8x8xf32>
    "tpu.trace_stop"() : () -> ()
    %cst_58 = arith.constant 5.000000e-01 : f32
    %176 = vector.broadcast %cst_58 : f32 to vector<2x8x8xf32>
    %177 = arith.mulf %175, %176 : vector<2x8x8xf32>
    %178 = vector.broadcast %5 : vector<2x1x8xf32> to vector<2x8x8xf32>
    %179 = arith.addf %177, %178 : vector<2x8x8xf32>
    %cst_59 = arith.constant dense<0xFF800000> : vector<2x8xf32>
    %180 = vector.multi_reduction <maximumf>, %179, %cst_59 [2] : vector<2x8x8xf32> to vector<2x8xf32>
    %181 = vector.shape_cast %180 : vector<2x8xf32> to vector<2x8x1xf32>
    %182 = vector.broadcast %181 : vector<2x8x1xf32> to vector<2x8x8xf32>
    %183 = arith.subf %179, %182 : vector<2x8x8xf32>
    %184 = math.exp %183 : vector<2x8x8xf32>
    %cst_60 = arith.constant dense<0.000000e+00> : vector<2x8xf32>
    %185 = vector.multi_reduction <add>, %184, %cst_60 [2] : vector<2x8x8xf32> to vector<2x8xf32>
    %186 = vector.shape_cast %185 : vector<2x8xf32> to vector<2x8x1xf32>
    %187 = vector.broadcast %186 : vector<2x8x1xf32> to vector<2x8x8xf32>
    %188 = arith.divf %184, %187 : vector<2x8x8xf32>
    "tpu.trace_start"() <{level = 10 : i32, message = "bij,bjd->bid"}> : () -> ()
    %cst_61 = arith.constant dense<0.000000e+00> : vector<2x8x4xf32>
    %189 = tpu.matmul %188, %174, %cst_61 {dimension_numbers = #tpu.dot_dimension_numbers<[2], [1], [1], [2], [0, 0, 0, 1, 1, 2], [0], [0]>} : vector<2x8x8xf32>, vector<2x8x4xf32>, vector<2x8x4xf32> -> vector<2x8x4xf32>
    "tpu.trace_stop"() : () -> ()
    %190 = vector.extract_strided_slice %9 {offsets = [0, 0, 40], sizes = [2, 8, 4], strides = [1, 1, 1]} : vector<2x8x144xf32> to vector<2x8x4xf32>
    %191 = vector.extract_strided_slice %9 {offsets = [0, 0, 88], sizes = [2, 8, 4], strides = [1, 1, 1]} : vector<2x8x144xf32> to vector<2x8x4xf32>
    %192 = vector.extract_strided_slice %9 {offsets = [0, 0, 136], sizes = [2, 8, 4], strides = [1, 1, 1]} : vector<2x8x144xf32> to vector<2x8x4xf32>
    "tpu.trace_start"() <{level = 10 : i32, message = "bid,bjd->bij"}> : () -> ()
    %cst_62 = arith.constant dense<0.000000e+00> : vector<2x8x8xf32>
    %193 = tpu.matmul %190, %191, %cst_62 {dimension_numbers = #tpu.dot_dimension_numbers<[2], [2], [1], [1], [0, 0, 0, 1, 1, 1], [0], [0]>} : vector<2x8x4xf32>, vector<2x8x4xf32>, vector<2x8x8xf32> -> vector<2x8x8xf32>
    "tpu.trace_stop"() : () -> ()
    %cst_63 = arith.constant 5.000000e-01 : f32
    %194 = vector.broadcast %cst_63 : f32 to vector<2x8x8xf32>
    %195 = arith.mulf %193, %194 : vector<2x8x8xf32>
    %196 = vector.broadcast %5 : vector<2x1x8xf32> to vector<2x8x8xf32>
    %197 = arith.addf %195, %196 : vector<2x8x8xf32>
    %cst_64 = arith.constant dense<0xFF800000> : vector<2x8xf32>
    %198 = vector.multi_reduction <maximumf>, %197, %cst_64 [2] : vector<2x8x8xf32> to vector<2x8xf32>
    %199 = vector.shape_cast %198 : vector<2x8xf32> to vector<2x8x1xf32>
    %200 = vector.broadcast %199 : vector<2x8x1xf32> to vector<2x8x8xf32>
    %201 = arith.subf %197, %200 : vector<2x8x8xf32>
    %202 = math.exp %201 : vector<2x8x8xf32>
    %cst_65 = arith.constant dense<0.000000e+00> : vector<2x8xf32>
    %203 = vector.multi_reduction <add>, %202, %cst_65 [2] : vector<2x8x8xf32> to vector<2x8xf32>
    %204 = vector.shape_cast %203 : vector<2x8xf32> to vector<2x8x1xf32>
    %205 = vector.broadcast %204 : vector<2x8x1xf32> to vector<2x8x8xf32>
    %206 = arith.divf %202, %205 : vector<2x8x8xf32>
    "tpu.trace_start"() <{level = 10 : i32, message = "bij,bjd->bid"}> : () -> ()
    %cst_66 = arith.constant dense<0.000000e+00> : vector<2x8x4xf32>
    %207 = tpu.matmul %206, %192, %cst_66 {dimension_numbers = #tpu.dot_dimension_numbers<[2], [1], [1], [2], [0, 0, 0, 1, 1, 2], [0], [0]>} : vector<2x8x8xf32>, vector<2x8x4xf32>, vector<2x8x4xf32> -> vector<2x8x4xf32>
    "tpu.trace_stop"() : () -> ()
    %208 = vector.extract_strided_slice %9 {offsets = [0, 0, 44], sizes = [2, 8, 4], strides = [1, 1, 1]} : vector<2x8x144xf32> to vector<2x8x4xf32>
    %209 = vector.extract_strided_slice %9 {offsets = [0, 0, 92], sizes = [2, 8, 4], strides = [1, 1, 1]} : vector<2x8x144xf32> to vector<2x8x4xf32>
    %210 = vector.extract_strided_slice %9 {offsets = [0, 0, 140], sizes = [2, 8, 4], strides = [1, 1, 1]} : vector<2x8x144xf32> to vector<2x8x4xf32>
    "tpu.trace_start"() <{level = 10 : i32, message = "bid,bjd->bij"}> : () -> ()
    %cst_67 = arith.constant dense<0.000000e+00> : vector<2x8x8xf32>
    %211 = tpu.matmul %208, %209, %cst_67 {dimension_numbers = #tpu.dot_dimension_numbers<[2], [2], [1], [1], [0, 0, 0, 1, 1, 1], [0], [0]>} : vector<2x8x4xf32>, vector<2x8x4xf32>, vector<2x8x8xf32> -> vector<2x8x8xf32>
    "tpu.trace_stop"() : () -> ()
    %cst_68 = arith.constant 5.000000e-01 : f32
    %212 = vector.broadcast %cst_68 : f32 to vector<2x8x8xf32>
    %213 = arith.mulf %211, %212 : vector<2x8x8xf32>
    %214 = vector.broadcast %5 : vector<2x1x8xf32> to vector<2x8x8xf32>
    %215 = arith.addf %213, %214 : vector<2x8x8xf32>
    %cst_69 = arith.constant dense<0xFF800000> : vector<2x8xf32>
    %216 = vector.multi_reduction <maximumf>, %215, %cst_69 [2] : vector<2x8x8xf32> to vector<2x8xf32>
    %217 = vector.shape_cast %216 : vector<2x8xf32> to vector<2x8x1xf32>
    %218 = vector.broadcast %217 : vector<2x8x1xf32> to vector<2x8x8xf32>
    %219 = arith.subf %215, %218 : vector<2x8x8xf32>
    %220 = math.exp %219 : vector<2x8x8xf32>
    %cst_70 = arith.constant dense<0.000000e+00> : vector<2x8xf32>
    %221 = vector.multi_reduction <add>, %220, %cst_70 [2] : vector<2x8x8xf32> to vector<2x8xf32>
    %222 = vector.shape_cast %221 : vector<2x8xf32> to vector<2x8x1xf32>
    %223 = vector.broadcast %222 : vector<2x8x1xf32> to vector<2x8x8xf32>
    %224 = arith.divf %220, %223 : vector<2x8x8xf32>
    "tpu.trace_start"() <{level = 10 : i32, message = "bij,bjd->bid"}> : () -> ()
    %cst_71 = arith.constant dense<0.000000e+00> : vector<2x8x4xf32>
    %225 = tpu.matmul %224, %210, %cst_71 {dimension_numbers = #tpu.dot_dimension_numbers<[2], [1], [1], [2], [0, 0, 0, 1, 1, 2], [0], [0]>} : vector<2x8x8xf32>, vector<2x8x4xf32>, vector<2x8x4xf32> -> vector<2x8x4xf32>
    "tpu.trace_stop"() : () -> ()
    %226 = tpu.concatenate %27, %45, %63, %81, %99, %117, %135, %153, %171, %189, %207, %225 in 2 : vector<2x8x4xf32>, vector<2x8x4xf32>, vector<2x8x4xf32>, vector<2x8x4xf32>, vector<2x8x4xf32>, vector<2x8x4xf32>, vector<2x8x4xf32>, vector<2x8x4xf32>, vector<2x8x4xf32>, vector<2x8x4xf32>, vector<2x8x4xf32>, vector<2x8x4xf32> -> vector<2x8x48xf32>
    %227 = vector.shape_cast %226 : vector<2x8x48xf32> to vector<16x48xf32>
    %cst_72 = arith.constant dense<0.000000e+00> : vector<16x48xf32>
    %228 = tpu.matmul %227, %3, %cst_72 {dimension_numbers = #tpu.dot_dimension_numbers<[1], [0], [0], [1], [0, 0, 1, 1], [], []>} : vector<16x48xf32>, vector<48x48xf32>, vector<16x48xf32> -> vector<16x48xf32>
    %229 = vector.broadcast %4 : vector<1x48xf32> to vector<16x48xf32>
    %230 = arith.addf %228, %229 : vector<16x48xf32>
    %231 = arith.addf %0, %230 : vector<16x48xf32>
    %c0_73 = arith.constant 0 : index
    %c0_74 = arith.constant 0 : index
    %232 = vector.load %arg7[%c0_73, %c0_74] : memref<1x48xf32, #tpu.memory_space<vmem>>, vector<1x48xf32>
    %c0_75 = arith.constant 0 : index
    %c0_76 = arith.constant 0 : index
    %233 = vector.load %arg8[%c0_75, %c0_76] : memref<1x48xf32, #tpu.memory_space<vmem>>, vector<1x48xf32>
    %cst_77 = arith.constant dense<0.000000e+00> : vector<16xf32>
    %234 = vector.multi_reduction <add>, %231, %cst_77 [1] : vector<16x48xf32> to vector<16xf32>
    %235 = vector.shape_cast %234 : vector<16xf32> to vector<16x1xf32>
    %cst_78 = arith.constant 4.800000e+01 : f32
    %236 = vector.broadcast %cst_78 : f32 to vector<16x1xf32>
    %237 = arith.divf %235, %236 : vector<16x1xf32>
    %238 = vector.broadcast %237 : vector<16x1xf32> to vector<16x48xf32>
    %239 = arith.subf %231, %238 : vector<16x48xf32>
    %240 = arith.mulf %239, %239 : vector<16x48xf32>
    %cst_79 = arith.constant dense<0.000000e+00> : vector<16xf32>
    %241 = vector.multi_reduction <add>, %240, %cst_79 [1] : vector<16x48xf32> to vector<16xf32>
    %242 = vector.shape_cast %241 : vector<16xf32> to vector<16x1xf32>
    %cst_80 = arith.constant 4.800000e+01 : f32
    %243 = vector.broadcast %cst_80 : f32 to vector<16x1xf32>
    %244 = arith.divf %242, %243 : vector<16x1xf32>
    %245 = vector.broadcast %237 : vector<16x1xf32> to vector<16x48xf32>
    %246 = arith.subf %231, %245 : vector<16x48xf32>
    %cst_81 = arith.constant 9.99999996E-13 : f32
    %247 = vector.broadcast %cst_81 : f32 to vector<16x1xf32>
    %248 = arith.addf %244, %247 : vector<16x1xf32>
    %249 = math.rsqrt %248 : vector<16x1xf32>
    %250 = vector.broadcast %249 : vector<16x1xf32> to vector<16x48xf32>
    %251 = arith.mulf %246, %250 : vector<16x48xf32>
    %252 = vector.broadcast %232 : vector<1x48xf32> to vector<16x48xf32>
    %253 = arith.mulf %251, %252 : vector<16x48xf32>
    %254 = vector.broadcast %233 : vector<1x48xf32> to vector<16x48xf32>
    %255 = arith.addf %253, %254 : vector<16x48xf32>
    %c0_82 = arith.constant 0 : index
    %c0_83 = arith.constant 0 : index
    %256 = vector.load %arg9[%c0_82, %c0_83] : memref<48x96xf32, #tpu.memory_space<vmem>>, vector<48x96xf32>
    %cst_84 = arith.constant dense<0.000000e+00> : vector<16x96xf32>
    %257 = tpu.matmul %255, %256, %cst_84 {dimension_numbers = #tpu.dot_dimension_numbers<[1], [0], [0], [1], [0, 0, 1, 1], [], []>} : vector<16x48xf32>, vector<48x96xf32>, vector<16x96xf32> -> vector<16x96xf32>
    %c0_85 = arith.constant 0 : index
    %c0_86 = arith.constant 0 : index
    %258 = vector.load %arg10[%c0_85, %c0_86] : memref<1x96xf32, #tpu.memory_space<vmem>>, vector<1x96xf32>
    %259 = vector.broadcast %258 : vector<1x96xf32> to vector<16x96xf32>
    %260 = arith.addf %257, %259 : vector<16x96xf32>
    %cst_87 = arith.constant 5.000000e-01 : f32
    %261 = vector.broadcast %cst_87 : f32 to vector<16x96xf32>
    %262 = arith.mulf %261, %260 : vector<16x96xf32>
    %cst_88 = arith.constant 4.471500e-02 : f32
    %263 = vector.broadcast %cst_88 : f32 to vector<16x96xf32>
    %264 = arith.mulf %263, %260 : vector<16x96xf32>
    %265 = arith.mulf %264, %260 : vector<16x96xf32>
    %266 = arith.mulf %265, %260 : vector<16x96xf32>
    %267 = arith.addf %260, %266 : vector<16x96xf32>
    %cst_89 = arith.constant 0.797884583 : f32
    %268 = vector.broadcast %cst_89 : f32 to vector<16x96xf32>
    %269 = arith.mulf %268, %267 : vector<16x96xf32>
    %270 = math.tanh %269 : vector<16x96xf32>
    %cst_90 = arith.constant 1.000000e+00 : f32
    %271 = vector.broadcast %cst_90 : f32 to vector<16x96xf32>
    %272 = arith.addf %271, %270 : vector<16x96xf32>
    %273 = arith.mulf %262, %272 : vector<16x96xf32>
    %c0_91 = arith.constant 0 : index
    %c0_92 = arith.constant 0 : index
    %274 = vector.load %arg11[%c0_91, %c0_92] : memref<96x48xf32, #tpu.memory_space<vmem>>, vector<96x48xf32>
    %cst_93 = arith.constant dense<0.000000e+00> : vector<16x48xf32>
    %275 = tpu.matmul %273, %274, %cst_93 {dimension_numbers = #tpu.dot_dimension_numbers<[1], [0], [0], [1], [0, 0, 1, 1], [], []>} : vector<16x96xf32>, vector<96x48xf32>, vector<16x48xf32> -> vector<16x48xf32>
    %c0_94 = arith.constant 0 : index
    %c0_95 = arith.constant 0 : index
    %276 = vector.load %arg12[%c0_94, %c0_95] : memref<1x48xf32, #tpu.memory_space<vmem>>, vector<1x48xf32>
    %277 = vector.broadcast %276 : vector<1x48xf32> to vector<16x48xf32>
    %278 = arith.addf %275, %277 : vector<16x48xf32>
    %279 = arith.addf %255, %278 : vector<16x48xf32>
    %c0_96 = arith.constant 0 : index
    %c0_97 = arith.constant 0 : index
    %280 = vector.load %arg13[%c0_96, %c0_97] : memref<1x48xf32, #tpu.memory_space<vmem>>, vector<1x48xf32>
    %c0_98 = arith.constant 0 : index
    %c0_99 = arith.constant 0 : index
    %281 = vector.load %arg14[%c0_98, %c0_99] : memref<1x48xf32, #tpu.memory_space<vmem>>, vector<1x48xf32>
    %cst_100 = arith.constant dense<0.000000e+00> : vector<16xf32>
    %282 = vector.multi_reduction <add>, %279, %cst_100 [1] : vector<16x48xf32> to vector<16xf32>
    %283 = vector.shape_cast %282 : vector<16xf32> to vector<16x1xf32>
    %cst_101 = arith.constant 4.800000e+01 : f32
    %284 = vector.broadcast %cst_101 : f32 to vector<16x1xf32>
    %285 = arith.divf %283, %284 : vector<16x1xf32>
    %286 = vector.broadcast %285 : vector<16x1xf32> to vector<16x48xf32>
    %287 = arith.subf %279, %286 : vector<16x48xf32>
    %288 = arith.mulf %287, %287 : vector<16x48xf32>
    %cst_102 = arith.constant dense<0.000000e+00> : vector<16xf32>
    %289 = vector.multi_reduction <add>, %288, %cst_102 [1] : vector<16x48xf32> to vector<16xf32>
    %290 = vector.shape_cast %289 : vector<16xf32> to vector<16x1xf32>
    %cst_103 = arith.constant 4.800000e+01 : f32
    %291 = vector.broadcast %cst_103 : f32 to vector<16x1xf32>
    %292 = arith.divf %290, %291 : vector<16x1xf32>
    %293 = vector.broadcast %285 : vector<16x1xf32> to vector<16x48xf32>
    %294 = arith.subf %279, %293 : vector<16x48xf32>
    %cst_104 = arith.constant 9.99999996E-13 : f32
    %295 = vector.broadcast %cst_104 : f32 to vector<16x1xf32>
    %296 = arith.addf %292, %295 : vector<16x1xf32>
    %297 = math.rsqrt %296 : vector<16x1xf32>
    %298 = vector.broadcast %297 : vector<16x1xf32> to vector<16x48xf32>
    %299 = arith.mulf %294, %298 : vector<16x48xf32>
    %300 = vector.broadcast %280 : vector<1x48xf32> to vector<16x48xf32>
    %301 = arith.mulf %299, %300 : vector<16x48xf32>
    %302 = vector.broadcast %281 : vector<1x48xf32> to vector<16x48xf32>
    %303 = arith.addf %301, %302 : vector<16x48xf32>
    %c0_105 = arith.constant 0 : index
    %c0_106 = arith.constant 0 : index
    %304 = vector.load %arg15[%c0_105, %c0_106] : memref<16x48xf32, #tpu.memory_space<vmem>>, vector<16x48xf32>
    tpu.vector_store %arg15[%c0_105, %c0_106], %303 {strides = array<i32>} : memref<16x48xf32, #tpu.memory_space<vmem>>, vector<16x48xf32>,
    return
  }
  func.func @transform_0(%arg0: i32) -> (i32, i32) {
    %c0_i32 = arith.constant 0 : i32
    %c0_i32_0 = arith.constant 0 : i32
    %c0_i32_1 = arith.constant 0 : i32
    return %c0_i32, %c0_i32_0 : i32, i32
  }
  func.func @transform_1(%arg0: i32) -> (i32, i32, i32) {
    %c0_i32 = arith.constant 0 : i32
    %c0_i32_0 = arith.constant 0 : i32
    %c0_i32_1 = arith.constant 0 : i32
    %c0_i32_2 = arith.constant 0 : i32
    return %c0_i32, %c0_i32_0, %c0_i32_1 : i32, i32, i32
  }
  func.func @transform_2(%arg0: i32) -> (i32, i32) {
    %c0_i32 = arith.constant 0 : i32
    %c0_i32_0 = arith.constant 0 : i32
    %c0_i32_1 = arith.constant 0 : i32
    return %c0_i32, %c0_i32_0 : i32, i32
  }
  func.func @transform_3(%arg0: i32) -> (i32, i32) {
    %c0_i32 = arith.constant 0 : i32
    %c0_i32_0 = arith.constant 0 : i32
    %c0_i32_1 = arith.constant 0 : i32
    return %c0_i32, %c0_i32_0 : i32, i32
  }
  func.func @transform_4(%arg0: i32) -> (i32, i32) {
    %c0_i32 = arith.constant 0 : i32
    %c0_i32_0 = arith.constant 0 : i32
    %c0_i32_1 = arith.constant 0 : i32
    return %c0_i32, %c0_i32_0 : i32, i32
  }
  func.func @transform_5(%arg0: i32) -> (i32, i32) {
    %c0_i32 = arith.constant 0 : i32
    %c0_i32_0 = arith.constant 0 : i32
    %c0_i32_1 = arith.constant 0 : i32
    return %c0_i32, %c0_i32_0 : i32, i32
  }
  func.func @transform_6(%arg0: i32) -> (i32, i32) {
    %c0_i32 = arith.constant 0 : i32
    %c0_i32_0 = arith.constant 0 : i32
    %c0_i32_1 = arith.constant 0 : i32
    return %c0_i32, %c0_i32_0 : i32, i32
  }
  func.func @transform_7(%arg0: i32) -> (i32, i32) {
    %c0_i32 = arith.constant 0 : i32
    %c0_i32_0 = arith.constant 0 : i32
    %c0_i32_1 = arith.constant 0 : i32
    return %c0_i32, %c0_i32_0 : i32, i32
  }
  func.func @transform_8(%arg0: i32) -> (i32, i32) {
    %c0_i32 = arith.constant 0 : i32
    %c0_i32_0 = arith.constant 0 : i32
    %c0_i32_1 = arith.constant 0 : i32
    return %c0_i32, %c0_i32_0 : i32, i32
  }
  func.func @transform_9(%arg0: i32) -> (i32, i32) {
    %c0_i32 = arith.constant 0 : i32
    %c0_i32_0 = arith.constant 0 : i32
    %c0_i32_1 = arith.constant 0 : i32
    return %c0_i32, %c0_i32_0 : i32, i32
  }
  func.func @transform_10(%arg0: i32) -> (i32, i32) {
    %c0_i32 = arith.constant 0 : i32
    %c0_i32_0 = arith.constant 0 : i32
    %c0_i32_1 = arith.constant 0 : i32
    return %c0_i32, %c0_i32_0 : i32, i32
  }
  func.func @transform_11(%arg0: i32) -> (i32, i32) {
    %c0_i32 = arith.constant 0 : i32
    %c0_i32_0 = arith.constant 0 : i32
    %c0_i32_1 = arith.constant 0 : i32
    return %c0_i32, %c0_i32_0 : i32, i32
  }
  func.func @transform_12(%arg0: i32) -> (i32, i32) {
    %c0_i32 = arith.constant 0 : i32
    %c0_i32_0 = arith.constant 0 : i32
    %c0_i32_1 = arith.constant 0 : i32
    return %c0_i32, %c0_i32_0 : i32, i32
  }
  func.func @transform_13(%arg0: i32) -> (i32, i32) {
    %c0_i32 = arith.constant 0 : i32
    %c0_i32_0 = arith.constant 0 : i32
    %c0_i32_1 = arith.constant 0 : i32
    return %c0_i32, %c0_i32_0 : i32, i32
  }
  func.func @transform_14(%arg0: i32) -> (i32, i32) {
    %c0_i32 = arith.constant 0 : i32
    %c0_i32_0 = arith.constant 0 : i32
    %c0_i32_1 = arith.constant 0 : i32
    return %c0_i32, %c0_i32_0 : i32, i32
  }
}

</mosaic_0001>

<llo_original>
// kernel: forward.4
$region0: #{forward.4}
  #allocation0 [shape = 'u32[]', space=smem, size = 0x4, offset = 0x4, fixed_abs, tag = 'smem constant byte address 0x4 - core index']
  #allocation1 [shape = 'u32[72,128]{1,0:T(1,128)}', space=vmem, size = 0x9000, scoped, tag = 'internal scratch']
  %s0 = inlined_call_operand.vmem [shape: f32[16,48], index: 0, kind: input, shape index: {}]
  %s1 = inlined_call_operand.vmem [shape: f32[1,48], index: 1, kind: input, shape index: {}]
  %s2 = inlined_call_operand.vmem [shape: f32[1,48], index: 2, kind: input, shape index: {}]
  %s3 = inlined_call_operand.vmem [shape: f32[16,48], index: 3, kind: output, shape index: {}]
  %s4 = sld [smem:[#allocation0]]
  $region22: #{forward.4} parent=0
    _
  %s6 = ssub.s32 1, %s4
  %s7 = scalar_select 0, %s6, %s4
  // Predicated region
  $region2: #{forward.4} parent=0 // pred_check
    _
  $region3: #{forward.4} parent=0 // pred_check_branch
    %9 = sbr.rel (0) target = $region5
  $region4: #{forward.4} parent=0 // pred_region
    _
  $region5: #{forward.4} parent=0 // pred_fallthru
    _
  // Predicated region
  $region6: #{forward.4} parent=0 // pred_check
    _
  $region7: #{forward.4} parent=0 // pred_check_branch
    %11 = sbr.rel (0) target = $region9
  $region8: #{forward.4} parent=0 // pred_region
    _
  $region9: #{forward.4} parent=0 // pred_fallthru
    _
  // Predicated region
  $region10: #{forward.4} parent=0 // pred_check
    _
  $region11: #{forward.4} parent=0 // pred_check_branch
    %13 = sbr.rel (0) target = $region13
  $region12: #{forward.4} parent=0 // pred_region
    _
  $region13: #{forward.4} parent=0 // pred_fallthru
    _
  %v14 = vld [vmem:[%s0] sm:$0xff]
  %v15 = vld [vmem:[%s0 + $0x8] sm:$0xff]
  %v16 = vld [vmem:[%s1] sm:$0x1]
  %v17 = vld [vmem:[%s2] sm:$0x1]
  %vm18 = vcmask 392192
  %v19 = vsel %vm18, %v14, 0.0
  %20 = vadd.xlane.f32.xlu0 %v19
  %v21 = vpop.xlane.xlu0 %20
  %v22 = vsel %vm18, %v15, 0.0
  %23 = vadd.xlane.f32.xlu0 %v22
  %v24 = vpop.xlane.xlu0 %23
  %v25 = vrcp.pop 48.0
  %v26 = vmul.f32 48.0, %v25
  %v27 = vsub.f32 1.0, %v26
  %v28 = vmul.f32 %v25, %v27
  %v29 = vadd.f32 %v25, %v28
  %vm30 = vweird.f32 %v25
  %v31 = vsel %vm30, %v25, %v29
  %v32 = vmul.f32 %v21, %v31
  %v33 = vmul.f32 %v24, %v31
  %v34 = vsub.f32 %v14, %v32
  %v35 = vsub.f32 %v15, %v33
  %v36 = vmul.f32 %v34, %v34
  %v37 = vmul.f32 %v35, %v35
  %v38 = vsel %vm18, %v36, 0.0
  %39 = vadd.xlane.f32.xlu0 %v38
  %v40 = vpop.xlane.xlu0 %39
  %v41 = vsel %vm18, %v37, 0.0
  %42 = vadd.xlane.f32.xlu0 %v41
  %v43 = vpop.xlane.xlu0 %42
  %v44 = vmul.f32 %v40, %v31
  %v45 = vmul.f32 %v43, %v31
  %v46 = vadd.f32 %v44, 1e-12
  %v47 = vadd.f32 %v45, 1e-12
  %v48 = vrsqrt.pop %v46
  %v49 = vmul.f32 %v48, %v46
  %v50 = vmul.f32 %v49, %v48
  %v51 = vmul.f32 0.5, %v50
  %v52 = vsub.f32 1.5, %v51
  %v53 = vmul.f32 %v48, %v52
  %vm54 = vweird.f32 %v46
  %vm55 = vweird.f32 %v48
  %vm56 = vmor %vm54, %vm55
  %v57 = vsel %vm56, %v48, %v53
  %v58 = vrsqrt.pop %v47
  %v59 = vmul.f32 %v58, %v47
  %v60 = vmul.f32 %v59, %v58
  %v61 = vmul.f32 0.5, %v60
  %v62 = vsub.f32 1.5, %v61
  %v63 = vmul.f32 %v58, %v62
  %vm64 = vweird.f32 %v47
  %vm65 = vweird.f32 %v58
  %vm66 = vmor %vm64, %vm65
  %v67 = vsel %vm66, %v58, %v63
  %v68 = vmul.f32 %v34, %v57
  %v69 = vmul.f32 %v35, %v67
  %v71 = vperm.slane %v16, 0
  %v73 = vmul.f32 %v68, %v71
  %v74 = vmul.f32 %v69, %v71
  %v76 = vperm.slane %v17, 0
  %v78 = vadd.f32 %v73, %v76
  %v79 = vadd.f32 %v74, %v76
  %80 = vst.msk [vmem:[%s3] sm:$0xff] %vm18, %v78
  %81 = vst.msk [vmem:[%s3 + $0x8] sm:$0xff] %vm18, %v79
  // Predicated region
  $region14: #{forward.4} parent=0 // pred_check
    _
  $region15: #{forward.4} parent=0 // pred_check_branch
    %83 = sbr.rel (0) target = $region17
  $region16: #{forward.4} parent=0 // pred_region
    _
  $region17: #{forward.4} parent=0 // pred_fallthru
    _
  // Predicated region
  $region18: #{forward.4} parent=0 // pred_check
    _
  $region19: #{forward.4} parent=0 // pred_check_branch
    %85 = sbr.rel (0) target = $region21
  $region20: #{forward.4} parent=0 // pred_region
    _
  $region21: #{forward.4} parent=0 // pred_fallthru
    _

// kernel: forward.5
$region0: #{forward.5}
  #allocation0 [shape = 'u32[]', space=smem, size = 0x4, offset = 0x4, fixed_abs, tag = 'smem constant byte address 0x4 - core index']
  #allocation1 [shape = 'u32[72,128]{1,0:T(1,128)}', space=vmem, size = 0x9000, scoped, tag = 'internal scratch']
  %s0 = inlined_call_operand.vmem [shape: f32[16,48], index: 0, kind: input, shape index: {}]
  %s1 = inlined_call_operand.vmem [shape: f32[2,1,8], index: 1, kind: input, shape index: {}]
  %s2 = inlined_call_operand.vmem [shape: f32[48,144], index: 2, kind: input, shape index: {}]
  %s3 = inlined_call_operand.vmem [shape: f32[1,144], index: 3, kind: input, shape index: {}]
  %s4 = inlined_call_operand.hbm [shape: f32[48,48], index: 4, kind: input, shape index: {}]
  %s5 = inlined_call_operand.vmem [shape: f32[1,48], index: 5, kind: input, shape index: {}]
  %s6 = inlined_call_operand.vmem [shape: f32[1,48], index: 6, kind: input, shape index: {}]
  %s7 = inlined_call_operand.vmem [shape: f32[1,48], index: 7, kind: input, shape index: {}]
  %s8 = inlined_call_operand.hbm [shape: f32[48,96], index: 8, kind: input, shape index: {}]
  %s9 = inlined_call_operand.vmem [shape: f32[1,96], index: 9, kind: input, shape index: {}]
  %s10 = inlined_call_operand.vmem [shape: f32[96,48], index: 10, kind: input, shape index: {}]
  %s11 = inlined_call_operand.vmem [shape: f32[1,48], index: 11, kind: input, shape index: {}]
  %s12 = inlined_call_operand.vmem [shape: f32[1,48], index: 12, kind: input, shape index: {}]
  %s13 = inlined_call_operand.vmem [shape: f32[1,48], index: 13, kind: input, shape index: {}]
  %s14 = inlined_call_operand.vmem [shape: f32[16,48], index: 14, kind: output, shape index: {}]
  %s15 = sld [smem:[#allocation0]]
  $region74: #{forward.5} parent=0
    _
  %s17 = ssub.s32 1, %s15
  %s18 = scalar_select 0, %s17, %s15
  $region1: #{forward.5} parent=0
    #allocation2 [shape = 'u8[24576]{0}', space=vmem, size = 0x6000, scoped, tag = 'input window, operand 4, single buffered']
    #allocation3 [shape = 's32[1]{0}', space=sflag, size = 0x4, scoped, tag = 'scoped memory for forward.5']
    #allocation4 [shape = 'u8[24576]{0}', space=vmem, size = 0x6000, scoped, tag = 'input window, operand 8, single buffered']
    #allocation5 [shape = 's32[1]{0}', space=sflag, size = 0x4, scoped, tag = 'scoped memory for forward.5']
    %19 = vsyncpa [#allocation3], 0
    %20 = vsyncpa [#allocation5], 0
    // Predicated region
    $region2: #{forward.5} parent=1 // pred_check
      _
    $region3: #{forward.5} parent=1 // pred_check_branch
      %22 = sbr.rel (0) target = $region5
    $region4: #{forward.5} parent=1 // pred_region
      _
    $region5: #{forward.5} parent=1 // pred_fallthru
      _
    // Predicated region
    $region6: #{forward.5} parent=1 // pred_check
      _
    $region7: #{forward.5} parent=1 // pred_check_branch
      %24 = sbr.rel (0) target = $region9
    $region8: #{forward.5} parent=1 // pred_region
      _
    $region9: #{forward.5} parent=1 // pred_fallthru
      _
    // Predicated region
    $region10: #{forward.5} parent=1 // pred_check
      _
    $region11: #{forward.5} parent=1 // pred_check_branch
      %26 = sbr.rel (0) target = $region13
    $region12: #{forward.5} parent=1 // pred_region
      _
    $region13: #{forward.5} parent=1 // pred_fallthru
      _
    // Predicated region
    $region14: #{forward.5} parent=1 // pred_check
      _
    $region15: #{forward.5} parent=1 // pred_check_branch
      %28 = sbr.rel (0) target = $region17
    $region16: #{forward.5} parent=1 // pred_region
      _
    $region17: #{forward.5} parent=1 // pred_fallthru
      _
    // Predicated region
    $region18: #{forward.5} parent=1 // pred_check
      _
    $region19: #{forward.5} parent=1 // pred_check_branch
      %30 = sbr.rel (0) target = $region21
    $region20: #{forward.5} parent=1 // pred_region
      %32 = vsyncadd [#allocation3], 0
      %s33 = sshll.u32 %s4, 4
      %s34 = int_to_ptr.hbm [resolvable:$true] %s33
      %s35 = sshll.u32 [#allocation2], 4
      %s36 = int_to_ptr.vmem [resolvable:$true] %s35
      %41 = dma.hbm_to_vmem [thread:$0]  %s34, 768, %s36, [#allocation3], 128, 128, 8
    $region21: #{forward.5} parent=1 // pred_fallthru
      _
    // Predicated region
    $region22: #{forward.5} parent=1 // pred_check
      _
    $region23: #{forward.5} parent=1 // pred_check_branch
      %43 = sbr.rel (0) target = $region25
    $region24: #{forward.5} parent=1 // pred_region
      _
    $region25: #{forward.5} parent=1 // pred_fallthru
      _
    // Predicated region
    $region26: #{forward.5} parent=1 // pred_check
      _
    $region27: #{forward.5} parent=1 // pred_check_branch
      %45 = sbr.rel (0) target = $region29
    $region28: #{forward.5} parent=1 // pred_region
      _
    $region29: #{forward.5} parent=1 // pred_fallthru
      _
    // Predicated region
    $region30: #{forward.5} parent=1 // pred_check
      _
    $region31: #{forward.5} parent=1 // pred_check_branch
      %47 = sbr.rel (0) target = $region33
    $region32: #{forward.5} parent=1 // pred_region
      _
    $region33: #{forward.5} parent=1 // pred_fallthru
      _
    // Predicated region
    $region34: #{forward.5} parent=1 // pred_check
      _
    $region35: #{forward.5} parent=1 // pred_check_branch
      %49 = sbr.rel (0) target = $region37
    $region36: #{forward.5} parent=1 // pred_region
      %51 = vsyncadd [#allocation5], 0
      %s52 = sshll.u32 %s8, 4
      %s53 = int_to_ptr.hbm [resolvable:$true] %s52
      %s54 = sshll.u32 [#allocation4], 4
      %s55 = int_to_ptr.vmem [resolvable:$true] %s54
      %60 = dma.hbm_to_vmem [thread:$0]  %s53, 768, %s55, [#allocation5], 128, 128, 8
    $region37: #{forward.5} parent=1 // pred_fallthru
      _
    // Predicated region
    $region38: #{forward.5} parent=1 // pred_check
      _
    $region39: #{forward.5} parent=1 // pred_check_branch
      %62 = sbr.rel (0) target = $region41
    $region40: #{forward.5} parent=1 // pred_region
      _
    $region41: #{forward.5} parent=1 // pred_fallthru
      _
    // Predicated region
    $region42: #{forward.5} parent=1 // pred_check
      _
    $region43: #{forward.5} parent=1 // pred_check_branch
      %64 = sbr.rel (0) target = $region45
    $region44: #{forward.5} parent=1 // pred_region
      _
    $region45: #{forward.5} parent=1 // pred_fallthru
      _
    // Predicated region
    $region46: #{forward.5} parent=1 // pred_check
      _
    $region47: #{forward.5} parent=1 // pred_check_branch
      %66 = sbr.rel (0) target = $region49
    $region48: #{forward.5} parent=1 // pred_region
      _
    $region49: #{forward.5} parent=1 // pred_fallthru
      _
    // Predicated region
    $region50: #{forward.5} parent=1 // pred_check
      _
    $region51: #{forward.5} parent=1 // pred_check_branch
      %68 = sbr.rel (0) target = $region53
    $region52: #{forward.5} parent=1 // pred_region
      _
    $region53: #{forward.5} parent=1 // pred_fallthru
      _
    // Predicated region
    $region54: #{forward.5} parent=1 // pred_check
      _
    $region55: #{forward.5} parent=1 // pred_check_branch
      %70 = sbr.rel (0) target = $region57
    $region56: #{forward.5} parent=1 // pred_region
      _
    $region57: #{forward.5} parent=1 // pred_fallthru
      _
    // Predicated region
    $region58: #{forward.5} parent=1 // pred_check
      _
    $region59: #{forward.5} parent=1 // pred_check_branch
      %72 = sbr.rel (0) target = $region61
    $region60: #{forward.5} parent=1 // pred_region
      %74 = dma.done [#allocation3], 768
    $region61: #{forward.5} parent=1 // pred_fallthru
      _
    // Predicated region
    $region62: #{forward.5} parent=1 // pred_check
      _
    $region63: #{forward.5} parent=1 // pred_check_branch
      %76 = sbr.rel (0) target = $region65
    $region64: #{forward.5} parent=1 // pred_region
      %78 = dma.done [#allocation5], 768
    $region65: #{forward.5} parent=1 // pred_fallthru
      _
    %v79 = vld [vmem:[%s0] sm:$0xff]
    %v80 = vld [vmem:[%s0 + $0x8] sm:$0xff]
    %v81 = vld [vmem:[%s2] sm:$0xff]
    %v82 = vld [vmem:[%s2 + $0x8] sm:$0xff]
    %v83 = vld [vmem:[%s2 + $0x10] sm:$0xff]
    %v84 = vld [vmem:[%s2 + $0x18] sm:$0xff]
    %v85 = vld [vmem:[%s2 + $0x20] sm:$0xff]
    %v86 = vld [vmem:[%s2 + $0x28] sm:$0xff]
    %v87 = vld [vmem:[%s2 + $0x30] sm:$0xff]
    %v88 = vld [vmem:[%s2 + $0x38] sm:$0xff]
    %v89 = vld [vmem:[%s2 + $0x40] sm:$0xff]
    %v90 = vld [vmem:[%s2 + $0x48] sm:$0xff]
    %v91 = vld [vmem:[%s2 + $0x50] sm:$0xff]
    %v92 = vld [vmem:[%s2 + $0x58] sm:$0xff]
    %v93 = vld [vmem:[%s3] sm:$0x3]
    %v94 = vld [vmem:[#allocation2] sm:$0xff]
    %v95 = vld [vmem:[#allocation2 + $0x8] sm:$0xff]
    %v96 = vld [vmem:[#allocation2 + $0x10] sm:$0xff]
    %v97 = vld [vmem:[#allocation2 + $0x18] sm:$0xff]
    %v98 = vld [vmem:[#allocation2 + $0x20] sm:$0xff]
    %v99 = vld [vmem:[#allocation2 + $0x28] sm:$0xff]
    %v100 = vld [vmem:[%s5] sm:$0x1]
    %v101 = vld [vmem:[%s1] sm:$0x1]
    %v102 = vld [vmem:[%s1 + $0x1] sm:$0x1]
    %v104 = vperm.slane %v93, 0
    %v105 = vperm.slane %v93, 1
    %vm108 = vcmask 392192
    %v110 = vsel %vm108, %v79, 0
    %v113 = vsel %vm108, %v80, 0
    %115 = vmatpush.msra.mxu0 0.0
    %116 = vmatpush.msra.mxu0 0.0
    %117 = vmatpush.msra.mxu0 0.0
    %118 = vmatpush.msra.mxu0 0.0
    %119 = vmatpush.msra.mxu0 0.0
    %120 = vmatpush.msra.mxu0 0.0
    %121 = vmatpush.msra.mxu0 0.0
    %122 = vmatpush.msra.mxu0 0.0
    %123 = vmatpush.msra.mxu0 0.0
    %124 = vmatpush.msra.mxu0 0.0
    %125 = vmatpush.msra.mxu0 %v91
    %126 = vmatpush.msra.mxu0 %v89
    %127 = vmatpush.msra.mxu0 %v87
    %128 = vmatpush.msra.mxu0 %v85
    %129 = vmatpush.msra.mxu0 %v83
    %130 = vmatpush.msra.mxu0 %v81
    %131 = vmatmul.f32.gmra.mxu0 %v110
    %v132 = vpop.f32.mrf.mxu0
    %v133 = vadd.f32 %v104, %v132
    %134 = vmatmul.f32.gmra.mxu0 %v113
    %v135 = vpop.f32.mrf.mxu0
    %v136 = vadd.f32 %v104, %v135
    %137 = vdwg.mxu0
    %138 = vmatpush.msra.mxu0 0.0
    %139 = vmatpush.msra.mxu0 0.0
    %140 = vmatpush.msra.mxu0 0.0
    %141 = vmatpush.msra.mxu0 0.0
    %142 = vmatpush.msra.mxu0 0.0
    %143 = vmatpush.msra.mxu0 0.0
    %144 = vmatpush.msra.mxu0 0.0
    %145 = vmatpush.msra.mxu0 0.0
    %146 = vmatpush.msra.mxu0 0.0
    %147 = vmatpush.msra.mxu0 0.0
    %148 = vmatpush.msra.mxu0 %v92
    %149 = vmatpush.msra.mxu0 %v90
    %150 = vmatpush.msra.mxu0 %v88
    %151 = vmatpush.msra.mxu0 %v86
    %152 = vmatpush.msra.mxu0 %v84
    %153 = vmatpush.msra.mxu0 %v82
    %154 = vmatmul.f32.gmra.mxu0 %v110
    %v155 = vpop.f32.mrf.mxu0
    %v156 = vadd.f32 %v105, %v155
    %157 = vmatmul.f32.gmra.mxu0 %v113
    %v158 = vpop.f32.mrf.mxu0
    %v159 = vadd.f32 %v105, %v158
    %160 = vdwg.mxu0
    %162 = vrot.lane.b32.xlu0 %v133, 80
    %v163 = vpop.permute.xlu0 %162
    %vm164 = vcmask 31744
    %v165 = vsel %vm164, %v133, 0
    %v167 = vsel %vm164, %v163, 0
    %169 = vmatpush.xpose.msra.mxu0 0.0
    %170 = vmatpush.xpose.msra.mxu0 0.0
    %171 = vmatpush.xpose.msra.mxu0 0.0
    %172 = vmatpush.xpose.msra.mxu0 0.0
    %173 = vmatpush.xpose.msra.mxu0 0.0
    %174 = vmatpush.xpose.msra.mxu0 0.0
    %175 = vmatpush.xpose.msra.mxu0 0.0
    %176 = vmatpush.xpose.msra.mxu0 0.0
    %177 = vmatpush.xpose.msra.mxu0 0.0
    %178 = vmatpush.xpose.msra.mxu0 0.0
    %179 = vmatpush.xpose.msra.mxu0 0.0
    %180 = vmatpush.xpose.msra.mxu0 0.0
    %181 = vmatpush.xpose.msra.mxu0 0.0
    %182 = vmatpush.xpose.msra.mxu0 0.0
    %183 = vmatpush.xpose.msra.mxu0 0.0
    %184 = vmatpush.xpose.msra.mxu0 %v167
    %185 = vmatmul.f32.gmra.mxu0 %v165
    %v186 = vpop.f32.mrf.mxu0
    %v187 = vadd.f32 0.0, %v186
    %188 = vdwg.mxu0
    %190 = vrot.lane.b32.xlu0 %v136, 80
    %v191 = vpop.permute.xlu0 %190
    %v192 = vsel %vm164, %v136, 0
    %v194 = vsel %vm164, %v191, 0
    %196 = vmatpush.xpose.msra.mxu0 0.0
    %197 = vmatpush.xpose.msra.mxu0 0.0
    %198 = vmatpush.xpose.msra.mxu0 0.0
    %199 = vmatpush.xpose.msra.mxu0 0.0
    %200 = vmatpush.xpose.msra.mxu0 0.0
    %201 = vmatpush.xpose.msra.mxu0 0.0
    %202 = vmatpush.xpose.msra.mxu0 0.0
    %203 = vmatpush.xpose.msra.mxu0 0.0
    %204 = vmatpush.xpose.msra.mxu0 0.0
    %205 = vmatpush.xpose.msra.mxu0 0.0
    %206 = vmatpush.xpose.msra.mxu0 0.0
    %207 = vmatpush.xpose.msra.mxu0 0.0
    %208 = vmatpush.xpose.msra.mxu0 0.0
    %209 = vmatpush.xpose.msra.mxu0 0.0
    %210 = vmatpush.xpose.msra.mxu0 0.0
    %211 = vmatpush.xpose.msra.mxu0 %v194
    %212 = vmatmul.f32.gmra.mxu0 %v192
    %v213 = vpop.f32.mrf.mxu0
    %v214 = vadd.f32 0.0, %v213
    %215 = vdwg.mxu0
    %v216 = vmul.f32 %v187, 0.5
    %v217 = vmul.f32 %v214, 0.5
    %v220 = vperm.slane %v101, 0
    %v221 = vperm.slane %v102, 0
    %v224 = vadd.f32 %v216, %v220
    %v225 = vadd.f32 %v217, %v221
    %vm226 = vcmask 64512
    %v227 = vsel %vm226, %v224, -inf
    %228 = vmax.xlane.f32.xlu0 %v227
    %v229 = vpop.xlane.xlu0 %228
    %v230 = vsel %vm226, %v225, -inf
    %231 = vmax.xlane.f32.xlu0 %v230
    %v232 = vpop.xlane.xlu0 %231
    %v233 = vsub.f32 %v224, %v229
    %v234 = vsub.f32 %v225, %v232
    %v235 = vmul.f32 %v233, 1.442695
    %v236 = vpow.pop %v235
    %v237 = vmul.f32 %v234, 1.442695
    %v238 = vpow.pop %v237
    %v239 = vsel %vm226, %v236, 0.0
    %240 = vadd.xlane.f32.xlu0 %v239
    %v241 = vpop.xlane.xlu0 %240
    %v242 = vsel %vm226, %v238, 0.0
    %243 = vadd.xlane.f32.xlu0 %v242
    %v244 = vpop.xlane.xlu0 %243
    %v245 = vrcp.pop %v241
    %v246 = vmul.f32 %v241, %v245
    %v247 = vsub.f32 1.0, %v246
    %v248 = vmul.f32 %v245, %v247
    %v249 = vadd.f32 %v245, %v248
    %vm250 = vweird.f32 %v241
    %vm251 = vweird.f32 %v245
    %vm252 = vmor %vm250, %vm251
    %v253 = vsel %vm252, %v245, %v249
    %v254 = vand.u32 2147483647, %v241
    %vm255 = vcmp.eq.f32.partialorder %v254, 8.507059e+37
    %v256 = vand.u32 %v241, 2147483648
    %v257 = vor.u32 1.1754944e-38, %v256
    %v258 = vsel %vm255, %v257, %v253
    %v259 = vmul.f32 %v236, %v258
    %v260 = vrcp.pop %v244
    %v261 = vmul.f32 %v244, %v260
    %v262 = vsub.f32 1.0, %v261
    %v263 = vmul.f32 %v260, %v262
    %v264 = vadd.f32 %v260, %v263
    %vm265 = vweird.f32 %v244
    %vm266 = vweird.f32 %v260
    %vm267 = vmor %vm265, %vm266
    %v268 = vsel %vm267, %v260, %v264
    %v269 = vand.u32 2147483647, %v244
    %vm270 = vcmp.eq.f32.partialorder %v269, 8.507059e+37
    %v271 = vand.u32 %v244, 2147483648
    %v272 = vor.u32 1.1754944e-38, %v271
    %v273 = vsel %vm270, %v272, %v268
    %v274 = vmul.f32 %v238, %v273
    %275 = vrot.lane.b32.xlu0 %v133, 32
    %v276 = vpop.permute.xlu0 %275
    %v279 = vsel %vm226, %v259, 0
    %281 = vmatpush.msra.mxu0 0.0
    %282 = vmatpush.msra.mxu0 0.0
    %283 = vmatpush.msra.mxu0 0.0
    %284 = vmatpush.msra.mxu0 0.0
    %285 = vmatpush.msra.mxu0 0.0
    %286 = vmatpush.msra.mxu0 0.0
    %287 = vmatpush.msra.mxu0 0.0
    %288 = vmatpush.msra.mxu0 0.0
    %289 = vmatpush.msra.mxu0 0.0
    %290 = vmatpush.msra.mxu0 0.0
    %291 = vmatpush.msra.mxu0 0.0
    %292 = vmatpush.msra.mxu0 0.0
    %293 = vmatpush.msra.mxu0 0.0
    %294 = vmatpush.msra.mxu0 0.0
    %295 = vmatpush.msra.mxu0 0.0
    %296 = vmatpush.msra.mxu0 %v276
    %297 = vmatmul.f32.gmra.mxu0 %v279
    %v298 = vpop.f32.mrf.mxu0
    %v299 = vadd.f32 0.0, %v298
    %300 = vdwg.mxu0
    %301 = vrot.lane.b32.xlu0 %v136, 32
    %v302 = vpop.permute.xlu0 %301
    %v305 = vsel %vm226, %v274, 0
    %307 = vmatpush.msra.mxu0 0.0
    %308 = vmatpush.msra.mxu0 0.0
    %309 = vmatpush.msra.mxu0 0.0
    %310 = vmatpush.msra.mxu0 0.0
    %311 = vmatpush.msra.mxu0 0.0
    %312 = vmatpush.msra.mxu0 0.0
    %313 = vmatpush.msra.mxu0 0.0
    %314 = vmatpush.msra.mxu0 0.0
    %315 = vmatpush.msra.mxu0 0.0
    %316 = vmatpush.msra.mxu0 0.0
    %317 = vmatpush.msra.mxu0 0.0
    %318 = vmatpush.msra.mxu0 0.0
    %319 = vmatpush.msra.mxu0 0.0
    %320 = vmatpush.msra.mxu0 0.0
    %321 = vmatpush.msra.mxu0 0.0
    %322 = vmatpush.msra.mxu0 %v302
    %323 = vmatmul.f32.gmra.mxu0 %v305
    %v324 = vpop.f32.mrf.mxu0
    %v325 = vadd.f32 0.0, %v324
    %326 = vdwg.mxu0
    %327 = vrot.lane.b32.xlu0 %v133, 124
    %v328 = vpop.permute.xlu0 %327
    %329 = vrot.lane.b32.xlu0 %v133, 76
    %v330 = vpop.permute.xlu0 %329
    %v331 = vsel %vm164, %v328, 0
    %v333 = vsel %vm164, %v330, 0
    %335 = vmatpush.xpose.msra.mxu0 0.0
    %336 = vmatpush.xpose.msra.mxu0 0.0
    %337 = vmatpush.xpose.msra.mxu0 0.0
    %338 = vmatpush.xpose.msra.mxu0 0.0
    %339 = vmatpush.xpose.msra.mxu0 0.0
    %340 = vmatpush.xpose.msra.mxu0 0.0
    %341 = vmatpush.xpose.msra.mxu0 0.0
    %342 = vmatpush.xpose.msra.mxu0 0.0
    %343 = vmatpush.xpose.msra.mxu0 0.0
    %344 = vmatpush.xpose.msra.mxu0 0.0
    %345 = vmatpush.xpose.msra.mxu0 0.0
    %346 = vmatpush.xpose.msra.mxu0 0.0
    %347 = vmatpush.xpose.msra.mxu0 0.0
    %348 = vmatpush.xpose.msra.mxu0 0.0
    %349 = vmatpush.xpose.msra.mxu0 0.0
    %350 = vmatpush.xpose.msra.mxu0 %v333
    %351 = vmatmul.f32.gmra.mxu0 %v331
    %v352 = vpop.f32.mrf.mxu0
    %v353 = vadd.f32 0.0, %v352
    %354 = vdwg.mxu0
    %355 = vrot.lane.b32.xlu0 %v136, 124
    %v356 = vpop.permute.xlu0 %355
    %357 = vrot.lane.b32.xlu0 %v136, 76
    %v358 = vpop.permute.xlu0 %357
    %v359 = vsel %vm164, %v356, 0
    %v361 = vsel %vm164, %v358, 0
    %363 = vmatpush.xpose.msra.mxu0 0.0
    %364 = vmatpush.xpose.msra.mxu0 0.0
    %365 = vmatpush.xpose.msra.mxu0 0.0
    %366 = vmatpush.xpose.msra.mxu0 0.0
    %367 = vmatpush.xpose.msra.mxu0 0.0
    %368 = vmatpush.xpose.msra.mxu0 0.0
    %369 = vmatpush.xpose.msra.mxu0 0.0
    %370 = vmatpush.xpose.msra.mxu0 0.0
    %371 = vmatpush.xpose.msra.mxu0 0.0
    %372 = vmatpush.xpose.msra.mxu0 0.0
    %373 = vmatpush.xpose.msra.mxu0 0.0
    %374 = vmatpush.xpose.msra.mxu0 0.0
    %375 = vmatpush.xpose.msra.mxu0 0.0
    %376 = vmatpush.xpose.msra.mxu0 0.0
    %377 = vmatpush.xpose.msra.mxu0 0.0
    %378 = vmatpush.xpose.msra.mxu0 %v361
    %379 = vmatmul.f32.gmra.mxu0 %v359
    %v380 = vpop.f32.mrf.mxu0
    %v381 = vadd.f32 0.0, %v380
    %382 = vdwg.mxu0
    %v383 = vmul.f32 %v353, 0.5
    %v384 = vmul.f32 %v381, 0.5
    %v385 = vadd.f32 %v383, %v220
    %v386 = vadd.f32 %v384, %v221
    %v387 = vsel %vm226, %v385, -inf
    %388 = vmax.xlane.f32.xlu0 %v387
    %v389 = vpop.xlane.xlu0 %388
    %v390 = vsel %vm226, %v386, -inf
    %391 = vmax.xlane.f32.xlu0 %v390
    %v392 = vpop.xlane.xlu0 %391
    %v393 = vsub.f32 %v385, %v389
    %v394 = vsub.f32 %v386, %v392
    %v395 = vmul.f32 %v393, 1.442695
    %v396 = vpow.pop %v395
    %v397 = vmul.f32 %v394, 1.442695
    %v398 = vpow.pop %v397
    %v399 = vsel %vm226, %v396, 0.0
    %400 = vadd.xlane.f32.xlu0 %v399
    %v401 = vpop.xlane.xlu0 %400
    %v402 = vsel %vm226, %v398, 0.0
    %403 = vadd.xlane.f32.xlu0 %v402
    %v404 = vpop.xlane.xlu0 %403
    %v405 = vrcp.pop %v401
    %v406 = vmul.f32 %v401, %v405
    %v407 = vsub.f32 1.0, %v406
    %v408 = vmul.f32 %v405, %v407
    %v409 = vadd.f32 %v405, %v408
    %vm410 = vweird.f32 %v401
    %vm411 = vweird.f32 %v405
    %vm412 = vmor %vm410, %vm411
    %v413 = vsel %vm412, %v405, %v409
    %v414 = vand.u32 2147483647, %v401
    %vm415 = vcmp.eq.f32.partialorder %v414, 8.507059e+37
    %v416 = vand.u32 %v401, 2147483648
    %v417 = vor.u32 1.1754944e-38, %v416
    %v418 = vsel %vm415, %v417, %v413
    %v419 = vmul.f32 %v396, %v418
    %v420 = vrcp.pop %v404
    %v421 = vmul.f32 %v404, %v420
    %v422 = vsub.f32 1.0, %v421
    %v423 = vmul.f32 %v420, %v422
    %v424 = vadd.f32 %v420, %v423
    %vm425 = vweird.f32 %v404
    %vm426 = vweird.f32 %v420
    %vm427 = vmor %vm425, %vm426
    %v428 = vsel %vm427, %v420, %v424
    %v429 = vand.u32 2147483647, %v404
    %vm430 = vcmp.eq.f32.partialorder %v429, 8.507059e+37
    %v431 = vand.u32 %v404, 2147483648
    %v432 = vor.u32 1.1754944e-38, %v431
    %v433 = vsel %vm430, %v432, %v428
    %v434 = vmul.f32 %v398, %v433
    %435 = vrot.lane.b32.xlu0 %v133, 28
    %v436 = vpop.permute.xlu0 %435
    %v439 = vsel %vm226, %v419, 0
    %441 = vmatpush.msra.mxu0 0.0
    %442 = vmatpush.msra.mxu0 0.0
    %443 = vmatpush.msra.mxu0 0.0
    %444 = vmatpush.msra.mxu0 0.0
    %445 = vmatpush.msra.mxu0 0.0
    %446 = vmatpush.msra.mxu0 0.0
    %447 = vmatpush.msra.mxu0 0.0
    %448 = vmatpush.msra.mxu0 0.0
    %449 = vmatpush.msra.mxu0 0.0
    %450 = vmatpush.msra.mxu0 0.0
    %451 = vmatpush.msra.mxu0 0.0
    %452 = vmatpush.msra.mxu0 0.0
    %453 = vmatpush.msra.mxu0 0.0
    %454 = vmatpush.msra.mxu0 0.0
    %455 = vmatpush.msra.mxu0 0.0
    %456 = vmatpush.msra.mxu0 %v436
    %457 = vmatmul.f32.gmra.mxu0 %v439
    %v458 = vpop.f32.mrf.mxu0
    %v459 = vadd.f32 0.0, %v458
    %460 = vdwg.mxu0
    %461 = vrot.lane.b32.xlu0 %v136, 28
    %v462 = vpop.permute.xlu0 %461
    %v465 = vsel %vm226, %v434, 0
    %467 = vmatpush.msra.mxu0 0.0
    %468 = vmatpush.msra.mxu0 0.0
    %469 = vmatpush.msra.mxu0 0.0
    %470 = vmatpush.msra.mxu0 0.0
    %471 = vmatpush.msra.mxu0 0.0
    %472 = vmatpush.msra.mxu0 0.0
    %473 = vmatpush.msra.mxu0 0.0
    %474 = vmatpush.msra.mxu0 0.0
    %475 = vmatpush.msra.mxu0 0.0
    %476 = vmatpush.msra.mxu0 0.0
    %477 = vmatpush.msra.mxu0 0.0
    %478 = vmatpush.msra.mxu0 0.0
    %479 = vmatpush.msra.mxu0 0.0
    %480 = vmatpush.msra.mxu0 0.0
    %481 = vmatpush.msra.mxu0 0.0
    %482 = vmatpush.msra.mxu0 %v462
    %483 = vmatmul.f32.gmra.mxu0 %v465
    %v484 = vpop.f32.mrf.mxu0
    %v485 = vadd.f32 0.0, %v484
    %486 = vdwg.mxu0
    %487 = vrot.lane.b32.xlu0 %v133, 120
    %v488 = vpop.permute.xlu0 %487
    %489 = vrot.lane.b32.xlu0 %v133, 72
    %v490 = vpop.permute.xlu0 %489
    %v491 = vsel %vm164, %v488, 0
    %v493 = vsel %vm164, %v490, 0
    %495 = vmatpush.xpose.msra.mxu0 0.0
    %496 = vmatpush.xpose.msra.mxu0 0.0
    %497 = vmatpush.xpose.msra.mxu0 0.0
    %498 = vmatpush.xpose.msra.mxu0 0.0
    %499 = vmatpush.xpose.msra.mxu0 0.0
    %500 = vmatpush.xpose.msra.mxu0 0.0
    %501 = vmatpush.xpose.msra.mxu0 0.0
    %502 = vmatpush.xpose.msra.mxu0 0.0
    %503 = vmatpush.xpose.msra.mxu0 0.0
    %504 = vmatpush.xpose.msra.mxu0 0.0
    %505 = vmatpush.xpose.msra.mxu0 0.0
    %506 = vmatpush.xpose.msra.mxu0 0.0
    %507 = vmatpush.xpose.msra.mxu0 0.0
    %508 = vmatpush.xpose.msra.mxu0 0.0
    %509 = vmatpush.xpose.msra.mxu0 0.0
    %510 = vmatpush.xpose.msra.mxu0 %v493
    %511 = vmatmul.f32.gmra.mxu0 %v491
    %v512 = vpop.f32.mrf.mxu0
    %v513 = vadd.f32 0.0, %v512
    %514 = vdwg.mxu0
    %515 = vrot.lane.b32.xlu0 %v136, 120
    %v516 = vpop.permute.xlu0 %515
    %517 = vrot.lane.b32.xlu0 %v136, 72
    %v518 = vpop.permute.xlu0 %517
    %v519 = vsel %vm164, %v516, 0
    %v521 = vsel %vm164, %v518, 0
    %523 = vmatpush.xpose.msra.mxu0 0.0
    %524 = vmatpush.xpose.msra.mxu0 0.0
    %525 = vmatpush.xpose.msra.mxu0 0.0
    %526 = vmatpush.xpose.msra.mxu0 0.0
    %527 = vmatpush.xpose.msra.mxu0 0.0
    %528 = vmatpush.xpose.msra.mxu0 0.0
    %529 = vmatpush.xpose.msra.mxu0 0.0
    %530 = vmatpush.xpose.msra.mxu0 0.0
    %531 = vmatpush.xpose.msra.mxu0 0.0
    %532 = vmatpush.xpose.msra.mxu0 0.0
    %533 = vmatpush.xpose.msra.mxu0 0.0
    %534 = vmatpush.xpose.msra.mxu0 0.0
    %535 = vmatpush.xpose.msra.mxu0 0.0
    %536 = vmatpush.xpose.msra.mxu0 0.0
    %537 = vmatpush.xpose.msra.mxu0 0.0
    %538 = vmatpush.xpose.msra.mxu0 %v521
    %539 = vmatmul.f32.gmra.mxu0 %v519
    %v540 = vpop.f32.mrf.mxu0
    %v541 = vadd.f32 0.0, %v540
    %542 = vdwg.mxu0
    %v543 = vmul.f32 %v513, 0.5
    %v544 = vmul.f32 %v541, 0.5
    %v545 = vadd.f32 %v543, %v220
    %v546 = vadd.f32 %v544, %v221
    %v547 = vsel %vm226, %v545, -inf
    %548 = vmax.xlane.f32.xlu0 %v547
    %v549 = vpop.xlane.xlu0 %548
    %v550 = vsel %vm226, %v546, -inf
    %551 = vmax.xlane.f32.xlu0 %v550
    %v552 = vpop.xlane.xlu0 %551
    %v553 = vsub.f32 %v545, %v549
    %v554 = vsub.f32 %v546, %v552
    %v555 = vmul.f32 %v553, 1.442695
    %v556 = vpow.pop %v555
    %v557 = vmul.f32 %v554, 1.442695
    %v558 = vpow.pop %v557
    %v559 = vsel %vm226, %v556, 0.0
    %560 = vadd.xlane.f32.xlu0 %v559
    %v561 = vpop.xlane.xlu0 %560
    %v562 = vsel %vm226, %v558, 0.0
    %563 = vadd.xlane.f32.xlu0 %v562
    %v564 = vpop.xlane.xlu0 %563
    %v565 = vrcp.pop %v561
    %v566 = vmul.f32 %v561, %v565
    %v567 = vsub.f32 1.0, %v566
    %v568 = vmul.f32 %v565, %v567
    %v569 = vadd.f32 %v565, %v568
    %vm570 = vweird.f32 %v561
    %vm571 = vweird.f32 %v565
    %vm572 = vmor %vm570, %vm571
    %v573 = vsel %vm572, %v565, %v569
    %v574 = vand.u32 2147483647, %v561
    %vm575 = vcmp.eq.f32.partialorder %v574, 8.507059e+37
    %v576 = vand.u32 %v561, 2147483648
    %v577 = vor.u32 1.1754944e-38, %v576
    %v578 = vsel %vm575, %v577, %v573
    %v579 = vmul.f32 %v556, %v578
    %v580 = vrcp.pop %v564
    %v581 = vmul.f32 %v564, %v580
    %v582 = vsub.f32 1.0, %v581
    %v583 = vmul.f32 %v580, %v582
    %v584 = vadd.f32 %v580, %v583
    %vm585 = vweird.f32 %v564
    %vm586 = vweird.f32 %v580
    %vm587 = vmor %vm585, %vm586
    %v588 = vsel %vm587, %v580, %v584
    %v589 = vand.u32 2147483647, %v564
    %vm590 = vcmp.eq.f32.partialorder %v589, 8.507059e+37
    %v591 = vand.u32 %v564, 2147483648
    %v592 = vor.u32 1.1754944e-38, %v591
    %v593 = vsel %vm590, %v592, %v588
    %v594 = vmul.f32 %v558, %v593
    %595 = vrot.lane.b32.xlu0 %v133, 24
    %v596 = vpop.permute.xlu0 %595
    %v599 = vsel %vm226, %v579, 0
    %601 = vmatpush.msra.mxu0 0.0
    %602 = vmatpush.msra.mxu0 0.0
    %603 = vmatpush.msra.mxu0 0.0
    %604 = vmatpush.msra.mxu0 0.0
    %605 = vmatpush.msra.mxu0 0.0
    %606 = vmatpush.msra.mxu0 0.0
    %607 = vmatpush.msra.mxu0 0.0
    %608 = vmatpush.msra.mxu0 0.0
    %609 = vmatpush.msra.mxu0 0.0
    %610 = vmatpush.msra.mxu0 0.0
    %611 = vmatpush.msra.mxu0 0.0
    %612 = vmatpush.msra.mxu0 0.0
    %613 = vmatpush.msra.mxu0 0.0
    %614 = vmatpush.msra.mxu0 0.0
    %615 = vmatpush.msra.mxu0 0.0
    %616 = vmatpush.msra.mxu0 %v596
    %617 = vmatmul.f32.gmra.mxu0 %v599
    %v618 = vpop.f32.mrf.mxu0
    %v619 = vadd.f32 0.0, %v618
    %620 = vdwg.mxu0
    %621 = vrot.lane.b32.xlu0 %v136, 24
    %v622 = vpop.permute.xlu0 %621
    %v625 = vsel %vm226, %v594, 0
    %627 = vmatpush.msra.mxu0 0.0
    %628 = vmatpush.msra.mxu0 0.0
    %629 = vmatpush.msra.mxu0 0.0
    %630 = vmatpush.msra.mxu0 0.0
    %631 = vmatpush.msra.mxu0 0.0
    %632 = vmatpush.msra.mxu0 0.0
    %633 = vmatpush.msra.mxu0 0.0
    %634 = vmatpush.msra.mxu0 0.0
    %635 = vmatpush.msra.mxu0 0.0
    %636 = vmatpush.msra.mxu0 0.0
    %637 = vmatpush.msra.mxu0 0.0
    %638 = vmatpush.msra.mxu0 0.0
    %639 = vmatpush.msra.mxu0 0.0
    %640 = vmatpush.msra.mxu0 0.0
    %641 = vmatpush.msra.mxu0 0.0
    %642 = vmatpush.msra.mxu0 %v622
    %643 = vmatmul.f32.gmra.mxu0 %v625
    %v644 = vpop.f32.mrf.mxu0
    %v645 = vadd.f32 0.0, %v644
    %646 = vdwg.mxu0
    %647 = vrot.lane.b32.xlu0 %v133, 116
    %v648 = vpop.permute.xlu0 %647
    %649 = vrot.lane.b32.xlu0 %v133, 68
    %v650 = vpop.permute.xlu0 %649
    %v651 = vsel %vm164, %v648, 0
    %v653 = vsel %vm164, %v650, 0
    %655 = vmatpush.xpose.msra.mxu0 0.0
    %656 = vmatpush.xpose.msra.mxu0 0.0
    %657 = vmatpush.xpose.msra.mxu0 0.0
    %658 = vmatpush.xpose.msra.mxu0 0.0
    %659 = vmatpush.xpose.msra.mxu0 0.0
    %660 = vmatpush.xpose.msra.mxu0 0.0
    %661 = vmatpush.xpose.msra.mxu0 0.0
    %662 = vmatpush.xpose.msra.mxu0 0.0
    %663 = vmatpush.xpose.msra.mxu0 0.0
    %664 = vmatpush.xpose.msra.mxu0 0.0
    %665 = vmatpush.xpose.msra.mxu0 0.0
    %666 = vmatpush.xpose.msra.mxu0 0.0
    %667 = vmatpush.xpose.msra.mxu0 0.0
    %668 = vmatpush.xpose.msra.mxu0 0.0
    %669 = vmatpush.xpose.msra.mxu0 0.0
    %670 = vmatpush.xpose.msra.mxu0 %v653
    %671 = vmatmul.f32.gmra.mxu0 %v651
    %v672 = vpop.f32.mrf.mxu0
    %v673 = vadd.f32 0.0, %v672
    %674 = vdwg.mxu0
    %675 = vrot.lane.b32.xlu0 %v136, 116
    %v676 = vpop.permute.xlu0 %675
    %677 = vrot.lane.b32.xlu0 %v136, 68
    %v678 = vpop.permute.xlu0 %677
    %v679 = vsel %vm164, %v676, 0
    %v681 = vsel %vm164, %v678, 0
    %683 = vmatpush.xpose.msra.mxu0 0.0
    %684 = vmatpush.xpose.msra.mxu0 0.0
    %685 = vmatpush.xpose.msra.mxu0 0.0
    %686 = vmatpush.xpose.msra.mxu0 0.0
    %687 = vmatpush.xpose.msra.mxu0 0.0
    %688 = vmatpush.xpose.msra.mxu0 0.0
    %689 = vmatpush.xpose.msra.mxu0 0.0
    %690 = vmatpush.xpose.msra.mxu0 0.0
    %691 = vmatpush.xpose.msra.mxu0 0.0
    %692 = vmatpush.xpose.msra.mxu0 0.0
    %693 = vmatpush.xpose.msra.mxu0 0.0
    %694 = vmatpush.xpose.msra.mxu0 0.0
    %695 = vmatpush.xpose.msra.mxu0 0.0
    %696 = vmatpush.xpose.msra.mxu0 0.0
    %697 = vmatpush.xpose.msra.mxu0 0.0
    %698 = vmatpush.xpose.msra.mxu0 %v681
    %699 = vmatmul.f32.gmra.mxu0 %v679
    %v700 = vpop.f32.mrf.mxu0
    %v701 = vadd.f32 0.0, %v700
    %702 = vdwg.mxu0
    %v703 = vmul.f32 %v673, 0.5
    %v704 = vmul.f32 %v701, 0.5
    %v705 = vadd.f32 %v703, %v220
    %v706 = vadd.f32 %v704, %v221
    %v707 = vsel %vm226, %v705, -inf
    %708 = vmax.xlane.f32.xlu0 %v707
    %v709 = vpop.xlane.xlu0 %708
    %v710 = vsel %vm226, %v706, -inf
    %711 = vmax.xlane.f32.xlu0 %v710
    %v712 = vpop.xlane.xlu0 %711
    %v713 = vsub.f32 %v705, %v709
    %v714 = vsub.f32 %v706, %v712
    %v715 = vmul.f32 %v713, 1.442695
    %v716 = vpow.pop %v715
    %v717 = vmul.f32 %v714, 1.442695
    %v718 = vpow.pop %v717
    %v719 = vsel %vm226, %v716, 0.0
    %720 = vadd.xlane.f32.xlu0 %v719
    %v721 = vpop.xlane.xlu0 %720
    %v722 = vsel %vm226, %v718, 0.0
    %723 = vadd.xlane.f32.xlu0 %v722
    %v724 = vpop.xlane.xlu0 %723
    %v725 = vrcp.pop %v721
    %v726 = vmul.f32 %v721, %v725
    %v727 = vsub.f32 1.0, %v726
    %v728 = vmul.f32 %v725, %v727
    %v729 = vadd.f32 %v725, %v728
    %vm730 = vweird.f32 %v721
    %vm731 = vweird.f32 %v725
    %vm732 = vmor %vm730, %vm731
    %v733 = vsel %vm732, %v725, %v729
    %v734 = vand.u32 2147483647, %v721
    %vm735 = vcmp.eq.f32.partialorder %v734, 8.507059e+37
    %v736 = vand.u32 %v721, 2147483648
    %v737 = vor.u32 1.1754944e-38, %v736
    %v738 = vsel %vm735, %v737, %v733
    %v739 = vmul.f32 %v716, %v738
    %v740 = vrcp.pop %v724
    %v741 = vmul.f32 %v724, %v740
    %v742 = vsub.f32 1.0, %v741
    %v743 = vmul.f32 %v740, %v742
    %v744 = vadd.f32 %v740, %v743
    %vm745 = vweird.f32 %v724
    %vm746 = vweird.f32 %v740
    %vm747 = vmor %vm745, %vm746
    %v748 = vsel %vm747, %v740, %v744
    %v749 = vand.u32 2147483647, %v724
    %vm750 = vcmp.eq.f32.partialorder %v749, 8.507059e+37
    %v751 = vand.u32 %v724, 2147483648
    %v752 = vor.u32 1.1754944e-38, %v751
    %v753 = vsel %vm750, %v752, %v748
    %v754 = vmul.f32 %v718, %v753
    %755 = vrot.lane.b32.xlu0 %v133, 20
    %v756 = vpop.permute.xlu0 %755
    %v759 = vsel %vm226, %v739, 0
    %761 = vmatpush.msra.mxu0 0.0
    %762 = vmatpush.msra.mxu0 0.0
    %763 = vmatpush.msra.mxu0 0.0
    %764 = vmatpush.msra.mxu0 0.0
    %765 = vmatpush.msra.mxu0 0.0
    %766 = vmatpush.msra.mxu0 0.0
    %767 = vmatpush.msra.mxu0 0.0
    %768 = vmatpush.msra.mxu0 0.0
    %769 = vmatpush.msra.mxu0 0.0
    %770 = vmatpush.msra.mxu0 0.0
    %771 = vmatpush.msra.mxu0 0.0
    %772 = vmatpush.msra.mxu0 0.0
    %773 = vmatpush.msra.mxu0 0.0
    %774 = vmatpush.msra.mxu0 0.0
    %775 = vmatpush.msra.mxu0 0.0
    %776 = vmatpush.msra.mxu0 %v756
    %777 = vmatmul.f32.gmra.mxu0 %v759
    %v778 = vpop.f32.mrf.mxu0
    %v779 = vadd.f32 0.0, %v778
    %780 = vdwg.mxu0
    %781 = vrot.lane.b32.xlu0 %v136, 20
    %v782 = vpop.permute.xlu0 %781
    %v785 = vsel %vm226, %v754, 0
    %787 = vmatpush.msra.mxu0 0.0
    %788 = vmatpush.msra.mxu0 0.0
    %789 = vmatpush.msra.mxu0 0.0
    %790 = vmatpush.msra.mxu0 0.0
    %791 = vmatpush.msra.mxu0 0.0
    %792 = vmatpush.msra.mxu0 0.0
    %793 = vmatpush.msra.mxu0 0.0
    %794 = vmatpush.msra.mxu0 0.0
    %795 = vmatpush.msra.mxu0 0.0
    %796 = vmatpush.msra.mxu0 0.0
    %797 = vmatpush.msra.mxu0 0.0
    %798 = vmatpush.msra.mxu0 0.0
    %799 = vmatpush.msra.mxu0 0.0
    %800 = vmatpush.msra.mxu0 0.0
    %801 = vmatpush.msra.mxu0 0.0
    %802 = vmatpush.msra.mxu0 %v782
    %803 = vmatmul.f32.gmra.mxu0 %v785
    %v804 = vpop.f32.mrf.mxu0
    %v805 = vadd.f32 0.0, %v804
    %806 = vdwg.mxu0
    %807 = vrot.lane.b32.xlu0 %v133, 112
    %v808 = vpop.permute.xlu0 %807
    %809 = vrot.lane.b32.xlu0 %v133, 64
    %v810 = vpop.permute.xlu0 %809
    %v811 = vsel %vm164, %v808, 0
    %v813 = vsel %vm164, %v810, 0
    %815 = vmatpush.xpose.msra.mxu0 0.0
    %816 = vmatpush.xpose.msra.mxu0 0.0
    %817 = vmatpush.xpose.msra.mxu0 0.0
    %818 = vmatpush.xpose.msra.mxu0 0.0
    %819 = vmatpush.xpose.msra.mxu0 0.0
    %820 = vmatpush.xpose.msra.mxu0 0.0
    %821 = vmatpush.xpose.msra.mxu0 0.0
    %822 = vmatpush.xpose.msra.mxu0 0.0
    %823 = vmatpush.xpose.msra.mxu0 0.0
    %824 = vmatpush.xpose.msra.mxu0 0.0
    %825 = vmatpush.xpose.msra.mxu0 0.0
    %826 = vmatpush.xpose.msra.mxu0 0.0
    %827 = vmatpush.xpose.msra.mxu0 0.0
    %828 = vmatpush.xpose.msra.mxu0 0.0
    %829 = vmatpush.xpose.msra.mxu0 0.0
    %830 = vmatpush.xpose.msra.mxu0 %v813
    %831 = vmatmul.f32.gmra.mxu0 %v811
    %v832 = vpop.f32.mrf.mxu0
    %v833 = vadd.f32 0.0, %v832
    %834 = vdwg.mxu0
    %835 = vrot.lane.b32.xlu0 %v136, 112
    %v836 = vpop.permute.xlu0 %835
    %837 = vrot.lane.b32.xlu0 %v136, 64
    %v838 = vpop.permute.xlu0 %837
    %v839 = vsel %vm164, %v836, 0
    %v841 = vsel %vm164, %v838, 0
    %843 = vmatpush.xpose.msra.mxu0 0.0
    %844 = vmatpush.xpose.msra.mxu0 0.0
    %845 = vmatpush.xpose.msra.mxu0 0.0
    %846 = vmatpush.xpose.msra.mxu0 0.0
    %847 = vmatpush.xpose.msra.mxu0 0.0
    %848 = vmatpush.xpose.msra.mxu0 0.0
    %849 = vmatpush.xpose.msra.mxu0 0.0
    %850 = vmatpush.xpose.msra.mxu0 0.0
    %851 = vmatpush.xpose.msra.mxu0 0.0
    %852 = vmatpush.xpose.msra.mxu0 0.0
    %853 = vmatpush.xpose.msra.mxu0 0.0
    %854 = vmatpush.xpose.msra.mxu0 0.0
    %855 = vmatpush.xpose.msra.mxu0 0.0
    %856 = vmatpush.xpose.msra.mxu0 0.0
    %857 = vmatpush.xpose.msra.mxu0 0.0
    %858 = vmatpush.xpose.msra.mxu0 %v841
    %859 = vmatmul.f32.gmra.mxu0 %v839
    %v860 = vpop.f32.mrf.mxu0
    %v861 = vadd.f32 0.0, %v860
    %862 = vdwg.mxu0
    %v863 = vmul.f32 %v833, 0.5
    %v864 = vmul.f32 %v861, 0.5
    %v865 = vadd.f32 %v863, %v220
    %v866 = vadd.f32 %v864, %v221
    %v867 = vsel %vm226, %v865, -inf
    %868 = vmax.xlane.f32.xlu0 %v867
    %v869 = vpop.xlane.xlu0 %868
    %v870 = vsel %vm226, %v866, -inf
    %871 = vmax.xlane.f32.xlu0 %v870
    %v872 = vpop.xlane.xlu0 %871
    %v873 = vsub.f32 %v865, %v869
    %v874 = vsub.f32 %v866, %v872
    %v875 = vmul.f32 %v873, 1.442695
    %v876 = vpow.pop %v875
    %v877 = vmul.f32 %v874, 1.442695
    %v878 = vpow.pop %v877
    %v879 = vsel %vm226, %v876, 0.0
    %880 = vadd.xlane.f32.xlu0 %v879
    %v881 = vpop.xlane.xlu0 %880
    %v882 = vsel %vm226, %v878, 0.0
    %883 = vadd.xlane.f32.xlu0 %v882
    %v884 = vpop.xlane.xlu0 %883
    %v885 = vrcp.pop %v881
    %v886 = vmul.f32 %v881, %v885
    %v887 = vsub.f32 1.0, %v886
    %v888 = vmul.f32 %v885, %v887
    %v889 = vadd.f32 %v885, %v888
    %vm890 = vweird.f32 %v881
    %vm891 = vweird.f32 %v885
    %vm892 = vmor %vm890, %vm891
    %v893 = vsel %vm892, %v885, %v889
    %v894 = vand.u32 2147483647, %v881
    %vm895 = vcmp.eq.f32.partialorder %v894, 8.507059e+37
    %v896 = vand.u32 %v881, 2147483648
    %v897 = vor.u32 1.1754944e-38, %v896
    %v898 = vsel %vm895, %v897, %v893
    %v899 = vmul.f32 %v876, %v898
    %v900 = vrcp.pop %v884
    %v901 = vmul.f32 %v884, %v900
    %v902 = vsub.f32 1.0, %v901
    %v903 = vmul.f32 %v900, %v902
    %v904 = vadd.f32 %v900, %v903
    %vm905 = vweird.f32 %v884
    %vm906 = vweird.f32 %v900
    %vm907 = vmor %vm905, %vm906
    %v908 = vsel %vm907, %v900, %v904
    %v909 = vand.u32 2147483647, %v884
    %vm910 = vcmp.eq.f32.partialorder %v909, 8.507059e+37
    %v911 = vand.u32 %v884, 2147483648
    %v912 = vor.u32 1.1754944e-38, %v911
    %v913 = vsel %vm910, %v912, %v908
    %v914 = vmul.f32 %v878, %v913
    %915 = vrot.lane.b32.xlu0 %v133, 16
    %v916 = vpop.permute.xlu0 %915
    %v919 = vsel %vm226, %v899, 0
    %921 = vmatpush.msra.mxu0 0.0
    %922 = vmatpush.msra.mxu0 0.0
    %923 = vmatpush.msra.mxu0 0.0
    %924 = vmatpush.msra.mxu0 0.0
    %925 = vmatpush.msra.mxu0 0.0
    %926 = vmatpush.msra.mxu0 0.0
    %927 = vmatpush.msra.mxu0 0.0
    %928 = vmatpush.msra.mxu0 0.0
    %929 = vmatpush.msra.mxu0 0.0
    %930 = vmatpush.msra.mxu0 0.0
    %931 = vmatpush.msra.mxu0 0.0
    %932 = vmatpush.msra.mxu0 0.0
    %933 = vmatpush.msra.mxu0 0.0
    %934 = vmatpush.msra.mxu0 0.0
    %935 = vmatpush.msra.mxu0 0.0
    %936 = vmatpush.msra.mxu0 %v916
    %937 = vmatmul.f32.gmra.mxu0 %v919
    %v938 = vpop.f32.mrf.mxu0
    %v939 = vadd.f32 0.0, %v938
    %940 = vdwg.mxu0
    %941 = vrot.lane.b32.xlu0 %v136, 16
    %v942 = vpop.permute.xlu0 %941
    %v945 = vsel %vm226, %v914, 0
    %947 = vmatpush.msra.mxu0 0.0
    %948 = vmatpush.msra.mxu0 0.0
    %949 = vmatpush.msra.mxu0 0.0
    %950 = vmatpush.msra.mxu0 0.0
    %951 = vmatpush.msra.mxu0 0.0
    %952 = vmatpush.msra.mxu0 0.0
    %953 = vmatpush.msra.mxu0 0.0
    %954 = vmatpush.msra.mxu0 0.0
    %955 = vmatpush.msra.mxu0 0.0
    %956 = vmatpush.msra.mxu0 0.0
    %957 = vmatpush.msra.mxu0 0.0
    %958 = vmatpush.msra.mxu0 0.0
    %959 = vmatpush.msra.mxu0 0.0
    %960 = vmatpush.msra.mxu0 0.0
    %961 = vmatpush.msra.mxu0 0.0
    %962 = vmatpush.msra.mxu0 %v942
    %963 = vmatmul.f32.gmra.mxu0 %v945
    %v964 = vpop.f32.mrf.mxu0
    %v965 = vadd.f32 0.0, %v964
    %966 = vdwg.mxu0
    %967 = vrot.lane.b32.xlu0 %v133, 108
    %v968 = vpop.permute.xlu0 %967
    %969 = vrot.lane.b32.xlu0 %v133, 60
    %v970 = vpop.permute.xlu0 %969
    %v971 = vsel %vm164, %v968, 0
    %v973 = vsel %vm164, %v970, 0
    %975 = vmatpush.xpose.msra.mxu0 0.0
    %976 = vmatpush.xpose.msra.mxu0 0.0
    %977 = vmatpush.xpose.msra.mxu0 0.0
    %978 = vmatpush.xpose.msra.mxu0 0.0
    %979 = vmatpush.xpose.msra.mxu0 0.0
    %980 = vmatpush.xpose.msra.mxu0 0.0
    %981 = vmatpush.xpose.msra.mxu0 0.0
    %982 = vmatpush.xpose.msra.mxu0 0.0
    %983 = vmatpush.xpose.msra.mxu0 0.0
    %984 = vmatpush.xpose.msra.mxu0 0.0
    %985 = vmatpush.xpose.msra.mxu0 0.0
    %986 = vmatpush.xpose.msra.mxu0 0.0
    %987 = vmatpush.xpose.msra.mxu0 0.0
    %988 = vmatpush.xpose.msra.mxu0 0.0
    %989 = vmatpush.xpose.msra.mxu0 0.0
    %990 = vmatpush.xpose.msra.mxu0 %v973
    %991 = vmatmul.f32.gmra.mxu0 %v971
    %v992 = vpop.f32.mrf.mxu0
    %v993 = vadd.f32 0.0, %v992
    %994 = vdwg.mxu0
    %995 = vrot.lane.b32.xlu0 %v136, 108
    %v996 = vpop.permute.xlu0 %995
    %997 = vrot.lane.b32.xlu0 %v136, 60
    %v998 = vpop.permute.xlu0 %997
    %v999 = vsel %vm164, %v996, 0
    %v1001 = vsel %vm164, %v998, 0
    %1003 = vmatpush.xpose.msra.mxu0 0.0
    %1004 = vmatpush.xpose.msra.mxu0 0.0
    %1005 = vmatpush.xpose.msra.mxu0 0.0
    %1006 = vmatpush.xpose.msra.mxu0 0.0
    %1007 = vmatpush.xpose.msra.mxu0 0.0
    %1008 = vmatpush.xpose.msra.mxu0 0.0
    %1009 = vmatpush.xpose.msra.mxu0 0.0
    %1010 = vmatpush.xpose.msra.mxu0 0.0
    %1011 = vmatpush.xpose.msra.mxu0 0.0
    %1012 = vmatpush.xpose.msra.mxu0 0.0
    %1013 = vmatpush.xpose.msra.mxu0 0.0
    %1014 = vmatpush.xpose.msra.mxu0 0.0
    %1015 = vmatpush.xpose.msra.mxu0 0.0
    %1016 = vmatpush.xpose.msra.mxu0 0.0
    %1017 = vmatpush.xpose.msra.mxu0 0.0
    %1018 = vmatpush.xpose.msra.mxu0 %v1001
    %1019 = vmatmul.f32.gmra.mxu0 %v999
    %v1020 = vpop.f32.mrf.mxu0
    %v1021 = vadd.f32 0.0, %v1020
    %1022 = vdwg.mxu0
    %v1023 = vmul.f32 %v993, 0.5
    %v1024 = vmul.f32 %v1021, 0.5
    %v1025 = vadd.f32 %v1023, %v220
    %v1026 = vadd.f32 %v1024, %v221
    %v1027 = vsel %vm226, %v1025, -inf
    %1028 = vmax.xlane.f32.xlu0 %v1027
    %v1029 = vpop.xlane.xlu0 %1028
    %v1030 = vsel %vm226, %v1026, -inf
    %1031 = vmax.xlane.f32.xlu0 %v1030
    %v1032 = vpop.xlane.xlu0 %1031
    %v1033 = vsub.f32 %v1025, %v1029
    %v1034 = vsub.f32 %v1026, %v1032
    %v1035 = vmul.f32 %v1033, 1.442695
    %v1036 = vpow.pop %v1035
    %v1037 = vmul.f32 %v1034, 1.442695
    %v1038 = vpow.pop %v1037
    %v1039 = vsel %vm226, %v1036, 0.0
    %1040 = vadd.xlane.f32.xlu0 %v1039
    %v1041 = vpop.xlane.xlu0 %1040
    %v1042 = vsel %vm226, %v1038, 0.0
    %1043 = vadd.xlane.f32.xlu0 %v1042
    %v1044 = vpop.xlane.xlu0 %1043
    %v1045 = vrcp.pop %v1041
    %v1046 = vmul.f32 %v1041, %v1045
    %v1047 = vsub.f32 1.0, %v1046
    %v1048 = vmul.f32 %v1045, %v1047
    %v1049 = vadd.f32 %v1045, %v1048
    %vm1050 = vweird.f32 %v1041
    %vm1051 = vweird.f32 %v1045
    %vm1052 = vmor %vm1050, %vm1051
    %v1053 = vsel %vm1052, %v1045, %v1049
    %v1054 = vand.u32 2147483647, %v1041
    %vm1055 = vcmp.eq.f32.partialorder %v1054, 8.507059e+37
    %v1056 = vand.u32 %v1041, 2147483648
    %v1057 = vor.u32 1.1754944e-38, %v1056
    %v1058 = vsel %vm1055, %v1057, %v1053
    %v1059 = vmul.f32 %v1036, %v1058
    %v1060 = vrcp.pop %v1044
    %v1061 = vmul.f32 %v1044, %v1060
    %v1062 = vsub.f32 1.0, %v1061
    %v1063 = vmul.f32 %v1060, %v1062
    %v1064 = vadd.f32 %v1060, %v1063
    %vm1065 = vweird.f32 %v1044
    %vm1066 = vweird.f32 %v1060
    %vm1067 = vmor %vm1065, %vm1066
    %v1068 = vsel %vm1067, %v1060, %v1064
    %v1069 = vand.u32 2147483647, %v1044
    %vm1070 = vcmp.eq.f32.partialorder %v1069, 8.507059e+37
    %v1071 = vand.u32 %v1044, 2147483648
    %v1072 = vor.u32 1.1754944e-38, %v1071
    %v1073 = vsel %vm1070, %v1072, %v1068
    %v1074 = vmul.f32 %v1038, %v1073
    %1075 = vrot.lane.b32.xlu0 %v133, 12
    %v1076 = vpop.permute.xlu0 %1075
    %v1079 = vsel %vm226, %v1059, 0
    %1081 = vmatpush.msra.mxu0 0.0
    %1082 = vmatpush.msra.mxu0 0.0
    %1083 = vmatpush.msra.mxu0 0.0
    %1084 = vmatpush.msra.mxu0 0.0
    %1085 = vmatpush.msra.mxu0 0.0
    %1086 = vmatpush.msra.mxu0 0.0
    %1087 = vmatpush.msra.mxu0 0.0
    %1088 = vmatpush.msra.mxu0 0.0
    %1089 = vmatpush.msra.mxu0 0.0
    %1090 = vmatpush.msra.mxu0 0.0
    %1091 = vmatpush.msra.mxu0 0.0
    %1092 = vmatpush.msra.mxu0 0.0
    %1093 = vmatpush.msra.mxu0 0.0
    %1094 = vmatpush.msra.mxu0 0.0
    %1095 = vmatpush.msra.mxu0 0.0
    %1096 = vmatpush.msra.mxu0 %v1076
    %1097 = vmatmul.f32.gmra.mxu0 %v1079
    %v1098 = vpop.f32.mrf.mxu0
    %v1099 = vadd.f32 0.0, %v1098
    %1100 = vdwg.mxu0
    %1101 = vrot.lane.b32.xlu0 %v136, 12
    %v1102 = vpop.permute.xlu0 %1101
    %v1105 = vsel %vm226, %v1074, 0
    %1107 = vmatpush.msra.mxu0 0.0
    %1108 = vmatpush.msra.mxu0 0.0
    %1109 = vmatpush.msra.mxu0 0.0
    %1110 = vmatpush.msra.mxu0 0.0
    %1111 = vmatpush.msra.mxu0 0.0
    %1112 = vmatpush.msra.mxu0 0.0
    %1113 = vmatpush.msra.mxu0 0.0
    %1114 = vmatpush.msra.mxu0 0.0
    %1115 = vmatpush.msra.mxu0 0.0
    %1116 = vmatpush.msra.mxu0 0.0
    %1117 = vmatpush.msra.mxu0 0.0
    %1118 = vmatpush.msra.mxu0 0.0
    %1119 = vmatpush.msra.mxu0 0.0
    %1120 = vmatpush.msra.mxu0 0.0
    %1121 = vmatpush.msra.mxu0 0.0
    %1122 = vmatpush.msra.mxu0 %v1102
    %1123 = vmatmul.f32.gmra.mxu0 %v1105
    %v1124 = vpop.f32.mrf.mxu0
    %v1125 = vadd.f32 0.0, %v1124
    %1126 = vdwg.mxu0
    %1127 = vrot.lane.b32.xlu0 %v133, 104
    %v1128 = vpop.permute.xlu0 %1127
    %1129 = vrot.lane.b32.xlu0 %v133, 56
    %v1130 = vpop.permute.xlu0 %1129
    %v1131 = vsel %vm164, %v1128, 0
    %v1133 = vsel %vm164, %v1130, 0
    %1135 = vmatpush.xpose.msra.mxu0 0.0
    %1136 = vmatpush.xpose.msra.mxu0 0.0
    %1137 = vmatpush.xpose.msra.mxu0 0.0
    %1138 = vmatpush.xpose.msra.mxu0 0.0
    %1139 = vmatpush.xpose.msra.mxu0 0.0
    %1140 = vmatpush.xpose.msra.mxu0 0.0
    %1141 = vmatpush.xpose.msra.mxu0 0.0
    %1142 = vmatpush.xpose.msra.mxu0 0.0
    %1143 = vmatpush.xpose.msra.mxu0 0.0
    %1144 = vmatpush.xpose.msra.mxu0 0.0
    %1145 = vmatpush.xpose.msra.mxu0 0.0
    %1146 = vmatpush.xpose.msra.mxu0 0.0
    %1147 = vmatpush.xpose.msra.mxu0 0.0
    %1148 = vmatpush.xpose.msra.mxu0 0.0
    %1149 = vmatpush.xpose.msra.mxu0 0.0
    %1150 = vmatpush.xpose.msra.mxu0 %v1133
    %1151 = vmatmul.f32.gmra.mxu0 %v1131
    %v1152 = vpop.f32.mrf.mxu0
    %v1153 = vadd.f32 0.0, %v1152
    %1154 = vdwg.mxu0
    %1155 = vrot.lane.b32.xlu0 %v136, 104
    %v1156 = vpop.permute.xlu0 %1155
    %1157 = vrot.lane.b32.xlu0 %v136, 56
    %v1158 = vpop.permute.xlu0 %1157
    %v1159 = vsel %vm164, %v1156, 0
    %v1161 = vsel %vm164, %v1158, 0
    %1163 = vmatpush.xpose.msra.mxu0 0.0
    %1164 = vmatpush.xpose.msra.mxu0 0.0
    %1165 = vmatpush.xpose.msra.mxu0 0.0
    %1166 = vmatpush.xpose.msra.mxu0 0.0
    %1167 = vmatpush.xpose.msra.mxu0 0.0
    %1168 = vmatpush.xpose.msra.mxu0 0.0
    %1169 = vmatpush.xpose.msra.mxu0 0.0
    %1170 = vmatpush.xpose.msra.mxu0 0.0
    %1171 = vmatpush.xpose.msra.mxu0 0.0
    %1172 = vmatpush.xpose.msra.mxu0 0.0
    %1173 = vmatpush.xpose.msra.mxu0 0.0
    %1174 = vmatpush.xpose.msra.mxu0 0.0
    %1175 = vmatpush.xpose.msra.mxu0 0.0
    %1176 = vmatpush.xpose.msra.mxu0 0.0
    %1177 = vmatpush.xpose.msra.mxu0 0.0
    %1178 = vmatpush.xpose.msra.mxu0 %v1161
    %1179 = vmatmul.f32.gmra.mxu0 %v1159
    %v1180 = vpop.f32.mrf.mxu0
    %v1181 = vadd.f32 0.0, %v1180
    %1182 = vdwg.mxu0
    %v1183 = vmul.f32 %v1153, 0.5
    %v1184 = vmul.f32 %v1181, 0.5
    %v1185 = vadd.f32 %v1183, %v220
    %v1186 = vadd.f32 %v1184, %v221
    %v1187 = vsel %vm226, %v1185, -inf
    %1188 = vmax.xlane.f32.xlu0 %v1187
    %v1189 = vpop.xlane.xlu0 %1188
    %v1190 = vsel %vm226, %v1186, -inf
    %1191 = vmax.xlane.f32.xlu0 %v1190
    %v1192 = vpop.xlane.xlu0 %1191
    %v1193 = vsub.f32 %v1185, %v1189
    %v1194 = vsub.f32 %v1186, %v1192
    %v1195 = vmul.f32 %v1193, 1.442695
    %v1196 = vpow.pop %v1195
    %v1197 = vmul.f32 %v1194, 1.442695
    %v1198 = vpow.pop %v1197
    %v1199 = vsel %vm226, %v1196, 0.0
    %1200 = vadd.xlane.f32.xlu0 %v1199
    %v1201 = vpop.xlane.xlu0 %1200
    %v1202 = vsel %vm226, %v1198, 0.0
    %1203 = vadd.xlane.f32.xlu0 %v1202
    %v1204 = vpop.xlane.xlu0 %1203
    %v1205 = vrcp.pop %v1201
    %v1206 = vmul.f32 %v1201, %v1205
    %v1207 = vsub.f32 1.0, %v1206
    %v1208 = vmul.f32 %v1205, %v1207
    %v1209 = vadd.f32 %v1205, %v1208
    %vm1210 = vweird.f32 %v1201
    %vm1211 = vweird.f32 %v1205
    %vm1212 = vmor %vm1210, %vm1211
    %v1213 = vsel %vm1212, %v1205, %v1209
    %v1214 = vand.u32 2147483647, %v1201
    %vm1215 = vcmp.eq.f32.partialorder %v1214, 8.507059e+37
    %v1216 = vand.u32 %v1201, 2147483648
    %v1217 = vor.u32 1.1754944e-38, %v1216
    %v1218 = vsel %vm1215, %v1217, %v1213
    %v1219 = vmul.f32 %v1196, %v1218
    %v1220 = vrcp.pop %v1204
    %v1221 = vmul.f32 %v1204, %v1220
    %v1222 = vsub.f32 1.0, %v1221
    %v1223 = vmul.f32 %v1220, %v1222
    %v1224 = vadd.f32 %v1220, %v1223
    %vm1225 = vweird.f32 %v1204
    %vm1226 = vweird.f32 %v1220
    %vm1227 = vmor %vm1225, %vm1226
    %v1228 = vsel %vm1227, %v1220, %v1224
    %v1229 = vand.u32 2147483647, %v1204
    %vm1230 = vcmp.eq.f32.partialorder %v1229, 8.507059e+37
    %v1231 = vand.u32 %v1204, 2147483648
    %v1232 = vor.u32 1.1754944e-38, %v1231
    %v1233 = vsel %vm1230, %v1232, %v1228
    %v1234 = vmul.f32 %v1198, %v1233
    %1235 = vrot.lane.b32.xlu0 %v133, 8
    %v1236 = vpop.permute.xlu0 %1235
    %v1239 = vsel %vm226, %v1219, 0
    %1241 = vmatpush.msra.mxu0 0.0
    %1242 = vmatpush.msra.mxu0 0.0
    %1243 = vmatpush.msra.mxu0 0.0
    %1244 = vmatpush.msra.mxu0 0.0
    %1245 = vmatpush.msra.mxu0 0.0
    %1246 = vmatpush.msra.mxu0 0.0
    %1247 = vmatpush.msra.mxu0 0.0
    %1248 = vmatpush.msra.mxu0 0.0
    %1249 = vmatpush.msra.mxu0 0.0
    %1250 = vmatpush.msra.mxu0 0.0
    %1251 = vmatpush.msra.mxu0 0.0
    %1252 = vmatpush.msra.mxu0 0.0
    %1253 = vmatpush.msra.mxu0 0.0
    %1254 = vmatpush.msra.mxu0 0.0
    %1255 = vmatpush.msra.mxu0 0.0
    %1256 = vmatpush.msra.mxu0 %v1236
    %1257 = vmatmul.f32.gmra.mxu0 %v1239
    %v1258 = vpop.f32.mrf.mxu0
    %v1259 = vadd.f32 0.0, %v1258
    %1260 = vdwg.mxu0
    %1261 = vrot.lane.b32.xlu0 %v136, 8
    %v1262 = vpop.permute.xlu0 %1261
    %v1265 = vsel %vm226, %v1234, 0
    %1267 = vmatpush.msra.mxu0 0.0
    %1268 = vmatpush.msra.mxu0 0.0
    %1269 = vmatpush.msra.mxu0 0.0
    %1270 = vmatpush.msra.mxu0 0.0
    %1271 = vmatpush.msra.mxu0 0.0
    %1272 = vmatpush.msra.mxu0 0.0
    %1273 = vmatpush.msra.mxu0 0.0
    %1274 = vmatpush.msra.mxu0 0.0
    %1275 = vmatpush.msra.mxu0 0.0
    %1276 = vmatpush.msra.mxu0 0.0
    %1277 = vmatpush.msra.mxu0 0.0
    %1278 = vmatpush.msra.mxu0 0.0
    %1279 = vmatpush.msra.mxu0 0.0
    %1280 = vmatpush.msra.mxu0 0.0
    %1281 = vmatpush.msra.mxu0 0.0
    %1282 = vmatpush.msra.mxu0 %v1262
    %1283 = vmatmul.f32.gmra.mxu0 %v1265
    %v1284 = vpop.f32.mrf.mxu0
    %v1285 = vadd.f32 0.0, %v1284
    %1286 = vdwg.mxu0
    %1287 = vrot.lane.b32.xlu0 %v133, 100
    %v1288 = vpop.permute.xlu0 %1287
    %1289 = vrot.lane.b32.xlu0 %v133, 52
    %v1290 = vpop.permute.xlu0 %1289
    %v1291 = vsel %vm164, %v1288, 0
    %v1293 = vsel %vm164, %v1290, 0
    %1295 = vmatpush.xpose.msra.mxu0 0.0
    %1296 = vmatpush.xpose.msra.mxu0 0.0
    %1297 = vmatpush.xpose.msra.mxu0 0.0
    %1298 = vmatpush.xpose.msra.mxu0 0.0
    %1299 = vmatpush.xpose.msra.mxu0 0.0
    %1300 = vmatpush.xpose.msra.mxu0 0.0
    %1301 = vmatpush.xpose.msra.mxu0 0.0
    %1302 = vmatpush.xpose.msra.mxu0 0.0
    %1303 = vmatpush.xpose.msra.mxu0 0.0
    %1304 = vmatpush.xpose.msra.mxu0 0.0
    %1305 = vmatpush.xpose.msra.mxu0 0.0
    %1306 = vmatpush.xpose.msra.mxu0 0.0
    %1307 = vmatpush.xpose.msra.mxu0 0.0
    %1308 = vmatpush.xpose.msra.mxu0 0.0
    %1309 = vmatpush.xpose.msra.mxu0 0.0
    %1310 = vmatpush.xpose.msra.mxu0 %v1293
    %1311 = vmatmul.f32.gmra.mxu0 %v1291
    %v1312 = vpop.f32.mrf.mxu0
    %v1313 = vadd.f32 0.0, %v1312
    %1314 = vdwg.mxu0
    %1315 = vrot.lane.b32.xlu0 %v136, 100
    %v1316 = vpop.permute.xlu0 %1315
    %1317 = vrot.lane.b32.xlu0 %v136, 52
    %v1318 = vpop.permute.xlu0 %1317
    %v1319 = vsel %vm164, %v1316, 0
    %v1321 = vsel %vm164, %v1318, 0
    %1323 = vmatpush.xpose.msra.mxu0 0.0
    %1324 = vmatpush.xpose.msra.mxu0 0.0
    %1325 = vmatpush.xpose.msra.mxu0 0.0
    %1326 = vmatpush.xpose.msra.mxu0 0.0
    %1327 = vmatpush.xpose.msra.mxu0 0.0
    %1328 = vmatpush.xpose.msra.mxu0 0.0
    %1329 = vmatpush.xpose.msra.mxu0 0.0
    %1330 = vmatpush.xpose.msra.mxu0 0.0
    %1331 = vmatpush.xpose.msra.mxu0 0.0
    %1332 = vmatpush.xpose.msra.mxu0 0.0
    %1333 = vmatpush.xpose.msra.mxu0 0.0
    %1334 = vmatpush.xpose.msra.mxu0 0.0
    %1335 = vmatpush.xpose.msra.mxu0 0.0
    %1336 = vmatpush.xpose.msra.mxu0 0.0
    %1337 = vmatpush.xpose.msra.mxu0 0.0
    %1338 = vmatpush.xpose.msra.mxu0 %v1321
    %1339 = vmatmul.f32.gmra.mxu0 %v1319
    %v1340 = vpop.f32.mrf.mxu0
    %v1341 = vadd.f32 0.0, %v1340
    %1342 = vdwg.mxu0
    %v1343 = vmul.f32 %v1313, 0.5
    %v1344 = vmul.f32 %v1341, 0.5
    %v1345 = vadd.f32 %v1343, %v220
    %v1346 = vadd.f32 %v1344, %v221
    %v1347 = vsel %vm226, %v1345, -inf
    %1348 = vmax.xlane.f32.xlu0 %v1347
    %v1349 = vpop.xlane.xlu0 %1348
    %v1350 = vsel %vm226, %v1346, -inf
    %1351 = vmax.xlane.f32.xlu0 %v1350
    %v1352 = vpop.xlane.xlu0 %1351
    %v1353 = vsub.f32 %v1345, %v1349
    %v1354 = vsub.f32 %v1346, %v1352
    %v1355 = vmul.f32 %v1353, 1.442695
    %v1356 = vpow.pop %v1355
    %v1357 = vmul.f32 %v1354, 1.442695
    %v1358 = vpow.pop %v1357
    %v1359 = vsel %vm226, %v1356, 0.0
    %1360 = vadd.xlane.f32.xlu0 %v1359
    %v1361 = vpop.xlane.xlu0 %1360
    %v1362 = vsel %vm226, %v1358, 0.0
    %1363 = vadd.xlane.f32.xlu0 %v1362
    %v1364 = vpop.xlane.xlu0 %1363
    %v1365 = vrcp.pop %v1361
    %v1366 = vmul.f32 %v1361, %v1365
    %v1367 = vsub.f32 1.0, %v1366
    %v1368 = vmul.f32 %v1365, %v1367
    %v1369 = vadd.f32 %v1365, %v1368
    %vm1370 = vweird.f32 %v1361
    %vm1371 = vweird.f32 %v1365
    %vm1372 = vmor %vm1370, %vm1371
    %v1373 = vsel %vm1372, %v1365, %v1369
    %v1374 = vand.u32 2147483647, %v1361
    %vm1375 = vcmp.eq.f32.partialorder %v1374, 8.507059e+37
    %v1376 = vand.u32 %v1361, 2147483648
    %v1377 = vor.u32 1.1754944e-38, %v1376
    %v1378 = vsel %vm1375, %v1377, %v1373
    %v1379 = vmul.f32 %v1356, %v1378
    %v1380 = vrcp.pop %v1364
    %v1381 = vmul.f32 %v1364, %v1380
    %v1382 = vsub.f32 1.0, %v1381
    %v1383 = vmul.f32 %v1380, %v1382
    %v1384 = vadd.f32 %v1380, %v1383
    %vm1385 = vweird.f32 %v1364
    %vm1386 = vweird.f32 %v1380
    %vm1387 = vmor %vm1385, %vm1386
    %v1388 = vsel %vm1387, %v1380, %v1384
    %v1389 = vand.u32 2147483647, %v1364
    %vm1390 = vcmp.eq.f32.partialorder %v1389, 8.507059e+37
    %v1391 = vand.u32 %v1364, 2147483648
    %v1392 = vor.u32 1.1754944e-38, %v1391
    %v1393 = vsel %vm1390, %v1392, %v1388
    %v1394 = vmul.f32 %v1358, %v1393
    %1395 = vrot.lane.b32.xlu0 %v133, 4
    %v1396 = vpop.permute.xlu0 %1395
    %v1399 = vsel %vm226, %v1379, 0
    %1401 = vmatpush.msra.mxu0 0.0
    %1402 = vmatpush.msra.mxu0 0.0
    %1403 = vmatpush.msra.mxu0 0.0
    %1404 = vmatpush.msra.mxu0 0.0
    %1405 = vmatpush.msra.mxu0 0.0
    %1406 = vmatpush.msra.mxu0 0.0
    %1407 = vmatpush.msra.mxu0 0.0
    %1408 = vmatpush.msra.mxu0 0.0
    %1409 = vmatpush.msra.mxu0 0.0
    %1410 = vmatpush.msra.mxu0 0.0
    %1411 = vmatpush.msra.mxu0 0.0
    %1412 = vmatpush.msra.mxu0 0.0
    %1413 = vmatpush.msra.mxu0 0.0
    %1414 = vmatpush.msra.mxu0 0.0
    %1415 = vmatpush.msra.mxu0 0.0
    %1416 = vmatpush.msra.mxu0 %v1396
    %1417 = vmatmul.f32.gmra.mxu0 %v1399
    %v1418 = vpop.f32.mrf.mxu0
    %v1419 = vadd.f32 0.0, %v1418
    %1420 = vdwg.mxu0
    %1421 = vrot.lane.b32.xlu0 %v136, 4
    %v1422 = vpop.permute.xlu0 %1421
    %v1425 = vsel %vm226, %v1394, 0
    %1427 = vmatpush.msra.mxu0 0.0
    %1428 = vmatpush.msra.mxu0 0.0
    %1429 = vmatpush.msra.mxu0 0.0
    %1430 = vmatpush.msra.mxu0 0.0
    %1431 = vmatpush.msra.mxu0 0.0
    %1432 = vmatpush.msra.mxu0 0.0
    %1433 = vmatpush.msra.mxu0 0.0
    %1434 = vmatpush.msra.mxu0 0.0
    %1435 = vmatpush.msra.mxu0 0.0
    %1436 = vmatpush.msra.mxu0 0.0
    %1437 = vmatpush.msra.mxu0 0.0
    %1438 = vmatpush.msra.mxu0 0.0
    %1439 = vmatpush.msra.mxu0 0.0
    %1440 = vmatpush.msra.mxu0 0.0
    %1441 = vmatpush.msra.mxu0 0.0
    %1442 = vmatpush.msra.mxu0 %v1422
    %1443 = vmatmul.f32.gmra.mxu0 %v1425
    %v1444 = vpop.f32.mrf.mxu0
    %v1445 = vadd.f32 0.0, %v1444
    %1446 = vdwg.mxu0
    %1447 = vrot.lane.b32.xlu0 %v133, 96
    %v1448 = vpop.permute.xlu0 %1447
    %1449 = vrot.lane.b32.xlu0 %v133, 48
    %v1450 = vpop.permute.xlu0 %1449
    %v1451 = vsel %vm164, %v1448, 0
    %v1453 = vsel %vm164, %v1450, 0
    %1455 = vmatpush.xpose.msra.mxu0 0.0
    %1456 = vmatpush.xpose.msra.mxu0 0.0
    %1457 = vmatpush.xpose.msra.mxu0 0.0
    %1458 = vmatpush.xpose.msra.mxu0 0.0
    %1459 = vmatpush.xpose.msra.mxu0 0.0
    %1460 = vmatpush.xpose.msra.mxu0 0.0
    %1461 = vmatpush.xpose.msra.mxu0 0.0
    %1462 = vmatpush.xpose.msra.mxu0 0.0
    %1463 = vmatpush.xpose.msra.mxu0 0.0
    %1464 = vmatpush.xpose.msra.mxu0 0.0
    %1465 = vmatpush.xpose.msra.mxu0 0.0
    %1466 = vmatpush.xpose.msra.mxu0 0.0
    %1467 = vmatpush.xpose.msra.mxu0 0.0
    %1468 = vmatpush.xpose.msra.mxu0 0.0
    %1469 = vmatpush.xpose.msra.mxu0 0.0
    %1470 = vmatpush.xpose.msra.mxu0 %v1453
    %1471 = vmatmul.f32.gmra.mxu0 %v1451
    %v1472 = vpop.f32.mrf.mxu0
    %v1473 = vadd.f32 0.0, %v1472
    %1474 = vdwg.mxu0
    %1475 = vrot.lane.b32.xlu0 %v136, 96
    %v1476 = vpop.permute.xlu0 %1475
    %1477 = vrot.lane.b32.xlu0 %v136, 48
    %v1478 = vpop.permute.xlu0 %1477
    %v1479 = vsel %vm164, %v1476, 0
    %v1481 = vsel %vm164, %v1478, 0
    %1483 = vmatpush.xpose.msra.mxu0 0.0
    %1484 = vmatpush.xpose.msra.mxu0 0.0
    %1485 = vmatpush.xpose.msra.mxu0 0.0
    %1486 = vmatpush.xpose.msra.mxu0 0.0
    %1487 = vmatpush.xpose.msra.mxu0 0.0
    %1488 = vmatpush.xpose.msra.mxu0 0.0
    %1489 = vmatpush.xpose.msra.mxu0 0.0
    %1490 = vmatpush.xpose.msra.mxu0 0.0
    %1491 = vmatpush.xpose.msra.mxu0 0.0
    %1492 = vmatpush.xpose.msra.mxu0 0.0
    %1493 = vmatpush.xpose.msra.mxu0 0.0
    %1494 = vmatpush.xpose.msra.mxu0 0.0
    %1495 = vmatpush.xpose.msra.mxu0 0.0
    %1496 = vmatpush.xpose.msra.mxu0 0.0
    %1497 = vmatpush.xpose.msra.mxu0 0.0
    %1498 = vmatpush.xpose.msra.mxu0 %v1481
    %1499 = vmatmul.f32.gmra.mxu0 %v1479
    %v1500 = vpop.f32.mrf.mxu0
    %v1501 = vadd.f32 0.0, %v1500
    %1502 = vdwg.mxu0
    %v1503 = vmul.f32 %v1473, 0.5
    %v1504 = vmul.f32 %v1501, 0.5
    %v1505 = vadd.f32 %v1503, %v220
    %v1506 = vadd.f32 %v1504, %v221
    %v1507 = vsel %vm226, %v1505, -inf
    %1508 = vmax.xlane.f32.xlu0 %v1507
    %v1509 = vpop.xlane.xlu0 %1508
    %v1510 = vsel %vm226, %v1506, -inf
    %1511 = vmax.xlane.f32.xlu0 %v1510
    %v1512 = vpop.xlane.xlu0 %1511
    %v1513 = vsub.f32 %v1505, %v1509
    %v1514 = vsub.f32 %v1506, %v1512
    %v1515 = vmul.f32 %v1513, 1.442695
    %v1516 = vpow.pop %v1515
    %v1517 = vmul.f32 %v1514, 1.442695
    %v1518 = vpow.pop %v1517
    %v1519 = vsel %vm226, %v1516, 0.0
    %1520 = vadd.xlane.f32.xlu0 %v1519
    %v1521 = vpop.xlane.xlu0 %1520
    %v1522 = vsel %vm226, %v1518, 0.0
    %1523 = vadd.xlane.f32.xlu0 %v1522
    %v1524 = vpop.xlane.xlu0 %1523
    %v1525 = vrcp.pop %v1521
    %v1526 = vmul.f32 %v1521, %v1525
    %v1527 = vsub.f32 1.0, %v1526
    %v1528 = vmul.f32 %v1525, %v1527
    %v1529 = vadd.f32 %v1525, %v1528
    %vm1530 = vweird.f32 %v1521
    %vm1531 = vweird.f32 %v1525
    %vm1532 = vmor %vm1530, %vm1531
    %v1533 = vsel %vm1532, %v1525, %v1529
    %v1534 = vand.u32 2147483647, %v1521
    %vm1535 = vcmp.eq.f32.partialorder %v1534, 8.507059e+37
    %v1536 = vand.u32 %v1521, 2147483648
    %v1537 = vor.u32 1.1754944e-38, %v1536
    %v1538 = vsel %vm1535, %v1537, %v1533
    %v1539 = vmul.f32 %v1516, %v1538
    %v1540 = vrcp.pop %v1524
    %v1541 = vmul.f32 %v1524, %v1540
    %v1542 = vsub.f32 1.0, %v1541
    %v1543 = vmul.f32 %v1540, %v1542
    %v1544 = vadd.f32 %v1540, %v1543
    %vm1545 = vweird.f32 %v1524
    %vm1546 = vweird.f32 %v1540
    %vm1547 = vmor %vm1545, %vm1546
    %v1548 = vsel %vm1547, %v1540, %v1544
    %v1549 = vand.u32 2147483647, %v1524
    %vm1550 = vcmp.eq.f32.partialorder %v1549, 8.507059e+37
    %v1551 = vand.u32 %v1524, 2147483648
    %v1552 = vor.u32 1.1754944e-38, %v1551
    %v1553 = vsel %vm1550, %v1552, %v1548
    %v1554 = vmul.f32 %v1518, %v1553
    %v1556 = vsel %vm226, %v1539, 0
    %1558 = vmatpush.msra.mxu0 0.0
    %1559 = vmatpush.msra.mxu0 0.0
    %1560 = vmatpush.msra.mxu0 0.0
    %1561 = vmatpush.msra.mxu0 0.0
    %1562 = vmatpush.msra.mxu0 0.0
    %1563 = vmatpush.msra.mxu0 0.0
    %1564 = vmatpush.msra.mxu0 0.0
    %1565 = vmatpush.msra.mxu0 0.0
    %1566 = vmatpush.msra.mxu0 0.0
    %1567 = vmatpush.msra.mxu0 0.0
    %1568 = vmatpush.msra.mxu0 0.0
    %1569 = vmatpush.msra.mxu0 0.0
    %1570 = vmatpush.msra.mxu0 0.0
    %1571 = vmatpush.msra.mxu0 0.0
    %1572 = vmatpush.msra.mxu0 0.0
    %1573 = vmatpush.msra.mxu0 %v156
    %1574 = vmatmul.f32.gmra.mxu0 %v1556
    %v1575 = vpop.f32.mrf.mxu0
    %v1576 = vadd.f32 0.0, %v1575
    %1577 = vdwg.mxu0
    %v1579 = vsel %vm226, %v1554, 0
    %1581 = vmatpush.msra.mxu0 0.0
    %1582 = vmatpush.msra.mxu0 0.0
    %1583 = vmatpush.msra.mxu0 0.0
    %1584 = vmatpush.msra.mxu0 0.0
    %1585 = vmatpush.msra.mxu0 0.0
    %1586 = vmatpush.msra.mxu0 0.0
    %1587 = vmatpush.msra.mxu0 0.0
    %1588 = vmatpush.msra.mxu0 0.0
    %1589 = vmatpush.msra.mxu0 0.0
    %1590 = vmatpush.msra.mxu0 0.0
    %1591 = vmatpush.msra.mxu0 0.0
    %1592 = vmatpush.msra.mxu0 0.0
    %1593 = vmatpush.msra.mxu0 0.0
    %1594 = vmatpush.msra.mxu0 0.0
    %1595 = vmatpush.msra.mxu0 0.0
    %1596 = vmatpush.msra.mxu0 %v159
    %1597 = vmatmul.f32.gmra.mxu0 %v1579
    %v1598 = vpop.f32.mrf.mxu0
    %v1599 = vadd.f32 0.0, %v1598
    %1600 = vdwg.mxu0
    %1601 = vrot.lane.b32.xlu0 %v133, 92
    %v1602 = vpop.permute.xlu0 %1601
    %1603 = vrot.lane.b32.xlu0 %v133, 44
    %v1604 = vpop.permute.xlu0 %1603
    %v1605 = vsel %vm164, %v1602, 0
    %v1607 = vsel %vm164, %v1604, 0
    %1609 = vmatpush.xpose.msra.mxu0 0.0
    %1610 = vmatpush.xpose.msra.mxu0 0.0
    %1611 = vmatpush.xpose.msra.mxu0 0.0
    %1612 = vmatpush.xpose.msra.mxu0 0.0
    %1613 = vmatpush.xpose.msra.mxu0 0.0
    %1614 = vmatpush.xpose.msra.mxu0 0.0
    %1615 = vmatpush.xpose.msra.mxu0 0.0
    %1616 = vmatpush.xpose.msra.mxu0 0.0
    %1617 = vmatpush.xpose.msra.mxu0 0.0
    %1618 = vmatpush.xpose.msra.mxu0 0.0
    %1619 = vmatpush.xpose.msra.mxu0 0.0
    %1620 = vmatpush.xpose.msra.mxu0 0.0
    %1621 = vmatpush.xpose.msra.mxu0 0.0
    %1622 = vmatpush.xpose.msra.mxu0 0.0
    %1623 = vmatpush.xpose.msra.mxu0 0.0
    %1624 = vmatpush.xpose.msra.mxu0 %v1607
    %1625 = vmatmul.f32.gmra.mxu0 %v1605
    %v1626 = vpop.f32.mrf.mxu0
    %v1627 = vadd.f32 0.0, %v1626
    %1628 = vdwg.mxu0
    %1629 = vrot.lane.b32.xlu0 %v136, 92
    %v1630 = vpop.permute.xlu0 %1629
    %1631 = vrot.lane.b32.xlu0 %v136, 44
    %v1632 = vpop.permute.xlu0 %1631
    %v1633 = vsel %vm164, %v1630, 0
    %v1635 = vsel %vm164, %v1632, 0
    %1637 = vmatpush.xpose.msra.mxu0 0.0
    %1638 = vmatpush.xpose.msra.mxu0 0.0
    %1639 = vmatpush.xpose.msra.mxu0 0.0
    %1640 = vmatpush.xpose.msra.mxu0 0.0
    %1641 = vmatpush.xpose.msra.mxu0 0.0
    %1642 = vmatpush.xpose.msra.mxu0 0.0
    %1643 = vmatpush.xpose.msra.mxu0 0.0
    %1644 = vmatpush.xpose.msra.mxu0 0.0
    %1645 = vmatpush.xpose.msra.mxu0 0.0
    %1646 = vmatpush.xpose.msra.mxu0 0.0
    %1647 = vmatpush.xpose.msra.mxu0 0.0
    %1648 = vmatpush.xpose.msra.mxu0 0.0
    %1649 = vmatpush.xpose.msra.mxu0 0.0
    %1650 = vmatpush.xpose.msra.mxu0 0.0
    %1651 = vmatpush.xpose.msra.mxu0 0.0
    %1652 = vmatpush.xpose.msra.mxu0 %v1635
    %1653 = vmatmul.f32.gmra.mxu0 %v1633
    %v1654 = vpop.f32.mrf.mxu0
    %v1655 = vadd.f32 0.0, %v1654
    %1656 = vdwg.mxu0
    %v1657 = vmul.f32 %v1627, 0.5
    %v1658 = vmul.f32 %v1655, 0.5
    %v1659 = vadd.f32 %v1657, %v220
    %v1660 = vadd.f32 %v1658, %v221
    %v1661 = vsel %vm226, %v1659, -inf
    %1662 = vmax.xlane.f32.xlu0 %v1661
    %v1663 = vpop.xlane.xlu0 %1662
    %v1664 = vsel %vm226, %v1660, -inf
    %1665 = vmax.xlane.f32.xlu0 %v1664
    %v1666 = vpop.xlane.xlu0 %1665
    %v1667 = vsub.f32 %v1659, %v1663
    %v1668 = vsub.f32 %v1660, %v1666
    %v1669 = vmul.f32 %v1667, 1.442695
    %v1670 = vpow.pop %v1669
    %v1671 = vmul.f32 %v1668, 1.442695
    %v1672 = vpow.pop %v1671
    %v1673 = vsel %vm226, %v1670, 0.0
    %1674 = vadd.xlane.f32.xlu0 %v1673
    %v1675 = vpop.xlane.xlu0 %1674
    %v1676 = vsel %vm226, %v1672, 0.0
    %1677 = vadd.xlane.f32.xlu0 %v1676
    %v1678 = vpop.xlane.xlu0 %1677
    %v1679 = vrcp.pop %v1675
    %v1680 = vmul.f32 %v1675, %v1679
    %v1681 = vsub.f32 1.0, %v1680
    %v1682 = vmul.f32 %v1679, %v1681
    %v1683 = vadd.f32 %v1679, %v1682
    %vm1684 = vweird.f32 %v1675
    %vm1685 = vweird.f32 %v1679
    %vm1686 = vmor %vm1684, %vm1685
    %v1687 = vsel %vm1686, %v1679, %v1683
    %v1688 = vand.u32 2147483647, %v1675
    %vm1689 = vcmp.eq.f32.partialorder %v1688, 8.507059e+37
    %v1690 = vand.u32 %v1675, 2147483648
    %v1691 = vor.u32 1.1754944e-38, %v1690
    %v1692 = vsel %vm1689, %v1691, %v1687
    %v1693 = vmul.f32 %v1670, %v1692
    %v1694 = vrcp.pop %v1678
    %v1695 = vmul.f32 %v1678, %v1694
    %v1696 = vsub.f32 1.0, %v1695
    %v1697 = vmul.f32 %v1694, %v1696
    %v1698 = vadd.f32 %v1694, %v1697
    %vm1699 = vweird.f32 %v1678
    %vm1700 = vweird.f32 %v1694
    %vm1701 = vmor %vm1699, %vm1700
    %v1702 = vsel %vm1701, %v1694, %v1698
    %v1703 = vand.u32 2147483647, %v1678
    %vm1704 = vcmp.eq.f32.partialorder %v1703, 8.507059e+37
    %v1705 = vand.u32 %v1678, 2147483648
    %v1706 = vor.u32 1.1754944e-38, %v1705
    %v1707 = vsel %vm1704, %v1706, %v1702
    %v1708 = vmul.f32 %v1672, %v1707
    %1710 = vrot.lane.b32.xlu0 %v156, 124
    %v1711 = vpop.permute.xlu0 %1710
    %v1714 = vsel %vm226, %v1693, 0
    %1716 = vmatpush.msra.mxu0 0.0
    %1717 = vmatpush.msra.mxu0 0.0
    %1718 = vmatpush.msra.mxu0 0.0
    %1719 = vmatpush.msra.mxu0 0.0
    %1720 = vmatpush.msra.mxu0 0.0
    %1721 = vmatpush.msra.mxu0 0.0
    %1722 = vmatpush.msra.mxu0 0.0
    %1723 = vmatpush.msra.mxu0 0.0
    %1724 = vmatpush.msra.mxu0 0.0
    %1725 = vmatpush.msra.mxu0 0.0
    %1726 = vmatpush.msra.mxu0 0.0
    %1727 = vmatpush.msra.mxu0 0.0
    %1728 = vmatpush.msra.mxu0 0.0
    %1729 = vmatpush.msra.mxu0 0.0
    %1730 = vmatpush.msra.mxu0 0.0
    %1731 = vmatpush.msra.mxu0 %v1711
    %1732 = vmatmul.f32.gmra.mxu0 %v1714
    %v1733 = vpop.f32.mrf.mxu0
    %v1734 = vadd.f32 0.0, %v1733
    %1735 = vdwg.mxu0
    %1737 = vrot.lane.b32.xlu0 %v159, 124
    %v1738 = vpop.permute.xlu0 %1737
    %v1741 = vsel %vm226, %v1708, 0
    %1743 = vmatpush.msra.mxu0 0.0
    %1744 = vmatpush.msra.mxu0 0.0
    %1745 = vmatpush.msra.mxu0 0.0
    %1746 = vmatpush.msra.mxu0 0.0
    %1747 = vmatpush.msra.mxu0 0.0
    %1748 = vmatpush.msra.mxu0 0.0
    %1749 = vmatpush.msra.mxu0 0.0
    %1750 = vmatpush.msra.mxu0 0.0
    %1751 = vmatpush.msra.mxu0 0.0
    %1752 = vmatpush.msra.mxu0 0.0
    %1753 = vmatpush.msra.mxu0 0.0
    %1754 = vmatpush.msra.mxu0 0.0
    %1755 = vmatpush.msra.mxu0 0.0
    %1756 = vmatpush.msra.mxu0 0.0
    %1757 = vmatpush.msra.mxu0 0.0
    %1758 = vmatpush.msra.mxu0 %v1738
    %1759 = vmatmul.f32.gmra.mxu0 %v1741
    %v1760 = vpop.f32.mrf.mxu0
    %v1761 = vadd.f32 0.0, %v1760
    %1762 = vdwg.mxu0
    %1763 = vrot.lane.b32.xlu0 %v133, 88
    %v1764 = vpop.permute.xlu0 %1763
    %1765 = vrot.lane.b32.xlu0 %v133, 40
    %v1766 = vpop.permute.xlu0 %1765
    %v1767 = vsel %vm164, %v1764, 0
    %v1769 = vsel %vm164, %v1766, 0
    %1771 = vmatpush.xpose.msra.mxu0 0.0
    %1772 = vmatpush.xpose.msra.mxu0 0.0
    %1773 = vmatpush.xpose.msra.mxu0 0.0
    %1774 = vmatpush.xpose.msra.mxu0 0.0
    %1775 = vmatpush.xpose.msra.mxu0 0.0
    %1776 = vmatpush.xpose.msra.mxu0 0.0
    %1777 = vmatpush.xpose.msra.mxu0 0.0
    %1778 = vmatpush.xpose.msra.mxu0 0.0
    %1779 = vmatpush.xpose.msra.mxu0 0.0
    %1780 = vmatpush.xpose.msra.mxu0 0.0
    %1781 = vmatpush.xpose.msra.mxu0 0.0
    %1782 = vmatpush.xpose.msra.mxu0 0.0
    %1783 = vmatpush.xpose.msra.mxu0 0.0
    %1784 = vmatpush.xpose.msra.mxu0 0.0
    %1785 = vmatpush.xpose.msra.mxu0 0.0
    %1786 = vmatpush.xpose.msra.mxu0 %v1769
    %1787 = vmatmul.f32.gmra.mxu0 %v1767
    %v1788 = vpop.f32.mrf.mxu0
    %v1789 = vadd.f32 0.0, %v1788
    %1790 = vdwg.mxu0
    %1791 = vrot.lane.b32.xlu0 %v136, 88
    %v1792 = vpop.permute.xlu0 %1791
    %1793 = vrot.lane.b32.xlu0 %v136, 40
    %v1794 = vpop.permute.xlu0 %1793
    %v1795 = vsel %vm164, %v1792, 0
    %v1797 = vsel %vm164, %v1794, 0
    %1799 = vmatpush.xpose.msra.mxu0 0.0
    %1800 = vmatpush.xpose.msra.mxu0 0.0
    %1801 = vmatpush.xpose.msra.mxu0 0.0
    %1802 = vmatpush.xpose.msra.mxu0 0.0
    %1803 = vmatpush.xpose.msra.mxu0 0.0
    %1804 = vmatpush.xpose.msra.mxu0 0.0
    %1805 = vmatpush.xpose.msra.mxu0 0.0
    %1806 = vmatpush.xpose.msra.mxu0 0.0
    %1807 = vmatpush.xpose.msra.mxu0 0.0
    %1808 = vmatpush.xpose.msra.mxu0 0.0
    %1809 = vmatpush.xpose.msra.mxu0 0.0
    %1810 = vmatpush.xpose.msra.mxu0 0.0
    %1811 = vmatpush.xpose.msra.mxu0 0.0
    %1812 = vmatpush.xpose.msra.mxu0 0.0
    %1813 = vmatpush.xpose.msra.mxu0 0.0
    %1814 = vmatpush.xpose.msra.mxu0 %v1797
    %1815 = vmatmul.f32.gmra.mxu0 %v1795
    %v1816 = vpop.f32.mrf.mxu0
    %v1817 = vadd.f32 0.0, %v1816
    %1818 = vdwg.mxu0
    %v1819 = vmul.f32 %v1789, 0.5
    %v1820 = vmul.f32 %v1817, 0.5
    %v1821 = vadd.f32 %v1819, %v220
    %v1822 = vadd.f32 %v1820, %v221
    %v1823 = vsel %vm226, %v1821, -inf
    %1824 = vmax.xlane.f32.xlu0 %v1823
    %v1825 = vpop.xlane.xlu0 %1824
    %v1826 = vsel %vm226, %v1822, -inf
    %1827 = vmax.xlane.f32.xlu0 %v1826
    %v1828 = vpop.xlane.xlu0 %1827
    %v1829 = vsub.f32 %v1821, %v1825
    %v1830 = vsub.f32 %v1822, %v1828
    %v1831 = vmul.f32 %v1829, 1.442695
    %v1832 = vpow.pop %v1831
    %v1833 = vmul.f32 %v1830, 1.442695
    %v1834 = vpow.pop %v1833
    %v1835 = vsel %vm226, %v1832, 0.0
    %1836 = vadd.xlane.f32.xlu0 %v1835
    %v1837 = vpop.xlane.xlu0 %1836
    %v1838 = vsel %vm226, %v1834, 0.0
    %1839 = vadd.xlane.f32.xlu0 %v1838
    %v1840 = vpop.xlane.xlu0 %1839
    %v1841 = vrcp.pop %v1837
    %v1842 = vmul.f32 %v1837, %v1841
    %v1843 = vsub.f32 1.0, %v1842
    %v1844 = vmul.f32 %v1841, %v1843
    %v1845 = vadd.f32 %v1841, %v1844
    %vm1846 = vweird.f32 %v1837
    %vm1847 = vweird.f32 %v1841
    %vm1848 = vmor %vm1846, %vm1847
    %v1849 = vsel %vm1848, %v1841, %v1845
    %v1850 = vand.u32 2147483647, %v1837
    %vm1851 = vcmp.eq.f32.partialorder %v1850, 8.507059e+37
    %v1852 = vand.u32 %v1837, 2147483648
    %v1853 = vor.u32 1.1754944e-38, %v1852
    %v1854 = vsel %vm1851, %v1853, %v1849
    %v1855 = vmul.f32 %v1832, %v1854
    %v1856 = vrcp.pop %v1840
    %v1857 = vmul.f32 %v1840, %v1856
    %v1858 = vsub.f32 1.0, %v1857
    %v1859 = vmul.f32 %v1856, %v1858
    %v1860 = vadd.f32 %v1856, %v1859
    %vm1861 = vweird.f32 %v1840
    %vm1862 = vweird.f32 %v1856
    %vm1863 = vmor %vm1861, %vm1862
    %v1864 = vsel %vm1863, %v1856, %v1860
    %v1865 = vand.u32 2147483647, %v1840
    %vm1866 = vcmp.eq.f32.partialorder %v1865, 8.507059e+37
    %v1867 = vand.u32 %v1840, 2147483648
    %v1868 = vor.u32 1.1754944e-38, %v1867
    %v1869 = vsel %vm1866, %v1868, %v1864
    %v1870 = vmul.f32 %v1834, %v1869
    %1871 = vrot.lane.b32.xlu0 %v156, 120
    %v1872 = vpop.permute.xlu0 %1871
    %v1875 = vsel %vm226, %v1855, 0
    %1877 = vmatpush.msra.mxu0 0.0
    %1878 = vmatpush.msra.mxu0 0.0
    %1879 = vmatpush.msra.mxu0 0.0
    %1880 = vmatpush.msra.mxu0 0.0
    %1881 = vmatpush.msra.mxu0 0.0
    %1882 = vmatpush.msra.mxu0 0.0
    %1883 = vmatpush.msra.mxu0 0.0
    %1884 = vmatpush.msra.mxu0 0.0
    %1885 = vmatpush.msra.mxu0 0.0
    %1886 = vmatpush.msra.mxu0 0.0
    %1887 = vmatpush.msra.mxu0 0.0
    %1888 = vmatpush.msra.mxu0 0.0
    %1889 = vmatpush.msra.mxu0 0.0
    %1890 = vmatpush.msra.mxu0 0.0
    %1891 = vmatpush.msra.mxu0 0.0
    %1892 = vmatpush.msra.mxu0 %v1872
    %1893 = vmatmul.f32.gmra.mxu0 %v1875
    %v1894 = vpop.f32.mrf.mxu0
    %v1895 = vadd.f32 0.0, %v1894
    %1896 = vdwg.mxu0
    %1897 = vrot.lane.b32.xlu0 %v159, 120
    %v1898 = vpop.permute.xlu0 %1897
    %v1901 = vsel %vm226, %v1870, 0
    %1903 = vmatpush.msra.mxu0 0.0
    %1904 = vmatpush.msra.mxu0 0.0
    %1905 = vmatpush.msra.mxu0 0.0
    %1906 = vmatpush.msra.mxu0 0.0
    %1907 = vmatpush.msra.mxu0 0.0
    %1908 = vmatpush.msra.mxu0 0.0
    %1909 = vmatpush.msra.mxu0 0.0
    %1910 = vmatpush.msra.mxu0 0.0
    %1911 = vmatpush.msra.mxu0 0.0
    %1912 = vmatpush.msra.mxu0 0.0
    %1913 = vmatpush.msra.mxu0 0.0
    %1914 = vmatpush.msra.mxu0 0.0
    %1915 = vmatpush.msra.mxu0 0.0
    %1916 = vmatpush.msra.mxu0 0.0
    %1917 = vmatpush.msra.mxu0 0.0
    %1918 = vmatpush.msra.mxu0 %v1898
    %1919 = vmatmul.f32.gmra.mxu0 %v1901
    %v1920 = vpop.f32.mrf.mxu0
    %v1921 = vadd.f32 0.0, %v1920
    %1922 = vdwg.mxu0
    %1923 = vrot.lane.b32.xlu0 %v133, 84
    %v1924 = vpop.permute.xlu0 %1923
    %1925 = vrot.lane.b32.xlu0 %v133, 36
    %v1926 = vpop.permute.xlu0 %1925
    %v1927 = vsel %vm164, %v1924, 0
    %v1929 = vsel %vm164, %v1926, 0
    %1931 = vmatpush.xpose.msra.mxu0 0.0
    %1932 = vmatpush.xpose.msra.mxu0 0.0
    %1933 = vmatpush.xpose.msra.mxu0 0.0
    %1934 = vmatpush.xpose.msra.mxu0 0.0
    %1935 = vmatpush.xpose.msra.mxu0 0.0
    %1936 = vmatpush.xpose.msra.mxu0 0.0
    %1937 = vmatpush.xpose.msra.mxu0 0.0
    %1938 = vmatpush.xpose.msra.mxu0 0.0
    %1939 = vmatpush.xpose.msra.mxu0 0.0
    %1940 = vmatpush.xpose.msra.mxu0 0.0
    %1941 = vmatpush.xpose.msra.mxu0 0.0
    %1942 = vmatpush.xpose.msra.mxu0 0.0
    %1943 = vmatpush.xpose.msra.mxu0 0.0
    %1944 = vmatpush.xpose.msra.mxu0 0.0
    %1945 = vmatpush.xpose.msra.mxu0 0.0
    %1946 = vmatpush.xpose.msra.mxu0 %v1929
    %1947 = vmatmul.f32.gmra.mxu0 %v1927
    %v1948 = vpop.f32.mrf.mxu0
    %v1949 = vadd.f32 0.0, %v1948
    %1950 = vdwg.mxu0
    %1951 = vrot.lane.b32.xlu0 %v136, 84
    %v1952 = vpop.permute.xlu0 %1951
    %1953 = vrot.lane.b32.xlu0 %v136, 36
    %v1954 = vpop.permute.xlu0 %1953
    %v1955 = vsel %vm164, %v1952, 0
    %v1957 = vsel %vm164, %v1954, 0
    %1959 = vmatpush.xpose.msra.mxu0 0.0
    %1960 = vmatpush.xpose.msra.mxu0 0.0
    %1961 = vmatpush.xpose.msra.mxu0 0.0
    %1962 = vmatpush.xpose.msra.mxu0 0.0
    %1963 = vmatpush.xpose.msra.mxu0 0.0
    %1964 = vmatpush.xpose.msra.mxu0 0.0
    %1965 = vmatpush.xpose.msra.mxu0 0.0
    %1966 = vmatpush.xpose.msra.mxu0 0.0
    %1967 = vmatpush.xpose.msra.mxu0 0.0
    %1968 = vmatpush.xpose.msra.mxu0 0.0
    %1969 = vmatpush.xpose.msra.mxu0 0.0
    %1970 = vmatpush.xpose.msra.mxu0 0.0
    %1971 = vmatpush.xpose.msra.mxu0 0.0
    %1972 = vmatpush.xpose.msra.mxu0 0.0
    %1973 = vmatpush.xpose.msra.mxu0 0.0
    %1974 = vmatpush.xpose.msra.mxu0 %v1957
    %1975 = vmatmul.f32.gmra.mxu0 %v1955
    %v1976 = vpop.f32.mrf.mxu0
    %v1977 = vadd.f32 0.0, %v1976
    %1978 = vdwg.mxu0
    %v1979 = vmul.f32 %v1949, 0.5
    %v1980 = vmul.f32 %v1977, 0.5
    %v1981 = vadd.f32 %v1979, %v220
    %v1982 = vadd.f32 %v1980, %v221
    %v1983 = vsel %vm226, %v1981, -inf
    %1984 = vmax.xlane.f32.xlu0 %v1983
    %v1985 = vpop.xlane.xlu0 %1984
    %v1986 = vsel %vm226, %v1982, -inf
    %1987 = vmax.xlane.f32.xlu0 %v1986
    %v1988 = vpop.xlane.xlu0 %1987
    %v1989 = vsub.f32 %v1981, %v1985
    %v1990 = vsub.f32 %v1982, %v1988
    %v1991 = vmul.f32 %v1989, 1.442695
    %v1992 = vpow.pop %v1991
    %v1993 = vmul.f32 %v1990, 1.442695
    %v1994 = vpow.pop %v1993
    %v1995 = vsel %vm226, %v1992, 0.0
    %1996 = vadd.xlane.f32.xlu0 %v1995
    %v1997 = vpop.xlane.xlu0 %1996
    %v1998 = vsel %vm226, %v1994, 0.0
    %1999 = vadd.xlane.f32.xlu0 %v1998
    %v2000 = vpop.xlane.xlu0 %1999
    %v2001 = vrcp.pop %v1997
    %v2002 = vmul.f32 %v1997, %v2001
    %v2003 = vsub.f32 1.0, %v2002
    %v2004 = vmul.f32 %v2001, %v2003
    %v2005 = vadd.f32 %v2001, %v2004
    %vm2006 = vweird.f32 %v1997
    %vm2007 = vweird.f32 %v2001
    %vm2008 = vmor %vm2006, %vm2007
    %v2009 = vsel %vm2008, %v2001, %v2005
    %v2010 = vand.u32 2147483647, %v1997
    %vm2011 = vcmp.eq.f32.partialorder %v2010, 8.507059e+37
    %v2012 = vand.u32 %v1997, 2147483648
    %v2013 = vor.u32 1.1754944e-38, %v2012
    %v2014 = vsel %vm2011, %v2013, %v2009
    %v2015 = vmul.f32 %v1992, %v2014
    %v2016 = vrcp.pop %v2000
    %v2017 = vmul.f32 %v2000, %v2016
    %v2018 = vsub.f32 1.0, %v2017
    %v2019 = vmul.f32 %v2016, %v2018
    %v2020 = vadd.f32 %v2016, %v2019
    %vm2021 = vweird.f32 %v2000
    %vm2022 = vweird.f32 %v2016
    %vm2023 = vmor %vm2021, %vm2022
    %v2024 = vsel %vm2023, %v2016, %v2020
    %v2025 = vand.u32 2147483647, %v2000
    %vm2026 = vcmp.eq.f32.partialorder %v2025, 8.507059e+37
    %v2027 = vand.u32 %v2000, 2147483648
    %v2028 = vor.u32 1.1754944e-38, %v2027
    %v2029 = vsel %vm2026, %v2028, %v2024
    %v2030 = vmul.f32 %v1994, %v2029
    %2031 = vrot.lane.b32.xlu0 %v156, 116
    %v2032 = vpop.permute.xlu0 %2031
    %v2035 = vsel %vm226, %v2015, 0
    %2037 = vmatpush.msra.mxu0 0.0
    %2038 = vmatpush.msra.mxu0 0.0
    %2039 = vmatpush.msra.mxu0 0.0
    %2040 = vmatpush.msra.mxu0 0.0
    %2041 = vmatpush.msra.mxu0 0.0
    %2042 = vmatpush.msra.mxu0 0.0
    %2043 = vmatpush.msra.mxu0 0.0
    %2044 = vmatpush.msra.mxu0 0.0
    %2045 = vmatpush.msra.mxu0 0.0
    %2046 = vmatpush.msra.mxu0 0.0
    %2047 = vmatpush.msra.mxu0 0.0
    %2048 = vmatpush.msra.mxu0 0.0
    %2049 = vmatpush.msra.mxu0 0.0
    %2050 = vmatpush.msra.mxu0 0.0
    %2051 = vmatpush.msra.mxu0 0.0
    %2052 = vmatpush.msra.mxu0 %v2032
    %2053 = vmatmul.f32.gmra.mxu0 %v2035
    %v2054 = vpop.f32.mrf.mxu0
    %v2055 = vadd.f32 0.0, %v2054
    %2056 = vdwg.mxu0
    %2057 = vrot.lane.b32.xlu0 %v159, 116
    %v2058 = vpop.permute.xlu0 %2057
    %v2061 = vsel %vm226, %v2030, 0
    %2063 = vmatpush.msra.mxu0 0.0
    %2064 = vmatpush.msra.mxu0 0.0
    %2065 = vmatpush.msra.mxu0 0.0
    %2066 = vmatpush.msra.mxu0 0.0
    %2067 = vmatpush.msra.mxu0 0.0
    %2068 = vmatpush.msra.mxu0 0.0
    %2069 = vmatpush.msra.mxu0 0.0
    %2070 = vmatpush.msra.mxu0 0.0
    %2071 = vmatpush.msra.mxu0 0.0
    %2072 = vmatpush.msra.mxu0 0.0
    %2073 = vmatpush.msra.mxu0 0.0
    %2074 = vmatpush.msra.mxu0 0.0
    %2075 = vmatpush.msra.mxu0 0.0
    %2076 = vmatpush.msra.mxu0 0.0
    %2077 = vmatpush.msra.mxu0 0.0
    %2078 = vmatpush.msra.mxu0 %v2058
    %2079 = vmatmul.f32.gmra.mxu0 %v2061
    %v2080 = vpop.f32.mrf.mxu0
    %v2081 = vadd.f32 0.0, %v2080
    %2082 = vdwg.mxu0
    %2085 = vrot.lane.b32.xlu0 %v459, 4
    %v2086 = vpop.permute.xlu0 %2085
    %2087 = vrot.lane.b32.xlu0 %v485, 4
    %v2088 = vpop.permute.xlu0 %2087
    %2093 = vrot.lane.b32.xlu0 %v619, 8
    %v2094 = vpop.permute.xlu0 %2093
    %2095 = vrot.lane.b32.xlu0 %v645, 8
    %v2096 = vpop.permute.xlu0 %2095
    %2101 = vrot.lane.b32.xlu0 %v779, 12
    %v2102 = vpop.permute.xlu0 %2101
    %2103 = vrot.lane.b32.xlu0 %v805, 12
    %v2104 = vpop.permute.xlu0 %2103
    %2109 = vrot.lane.b32.xlu0 %v939, 16
    %v2110 = vpop.permute.xlu0 %2109
    %2111 = vrot.lane.b32.xlu0 %v965, 16
    %v2112 = vpop.permute.xlu0 %2111
    %2117 = vrot.lane.b32.xlu0 %v1099, 20
    %v2118 = vpop.permute.xlu0 %2117
    %2119 = vrot.lane.b32.xlu0 %v1125, 20
    %v2120 = vpop.permute.xlu0 %2119
    %2125 = vrot.lane.b32.xlu0 %v1259, 24
    %v2126 = vpop.permute.xlu0 %2125
    %2127 = vrot.lane.b32.xlu0 %v1285, 24
    %v2128 = vpop.permute.xlu0 %2127
    %2133 = vrot.lane.b32.xlu0 %v1419, 28
    %v2134 = vpop.permute.xlu0 %2133
    %2135 = vrot.lane.b32.xlu0 %v1445, 28
    %v2136 = vpop.permute.xlu0 %2135
    %2141 = vrot.lane.b32.xlu0 %v1576, 32
    %v2142 = vpop.permute.xlu0 %2141
    %2143 = vrot.lane.b32.xlu0 %v1599, 32
    %v2144 = vpop.permute.xlu0 %2143
    %2149 = vrot.lane.b32.xlu0 %v1734, 36
    %v2150 = vpop.permute.xlu0 %2149
    %2151 = vrot.lane.b32.xlu0 %v1761, 36
    %v2152 = vpop.permute.xlu0 %2151
    %2157 = vrot.lane.b32.xlu0 %v1895, 40
    %v2158 = vpop.permute.xlu0 %2157
    %2159 = vrot.lane.b32.xlu0 %v1921, 40
    %v2160 = vpop.permute.xlu0 %2159
    %2165 = vrot.lane.b32.xlu0 %v2055, 44
    %v2166 = vpop.permute.xlu0 %2165
    %2167 = vrot.lane.b32.xlu0 %v2081, 44
    %v2168 = vpop.permute.xlu0 %2167
    %v2171 = vsel %vm164, %v299, %v2086
    %v2172 = vsel %vm164, %v325, %v2088
    %v2173 = vsel %vm226, %v2171, %v2094
    %v2174 = vsel %vm226, %v2172, %v2096
    %vm2175 = vcmask 97280
    %v2176 = vsel %vm2175, %v2173, %v2102
    %v2177 = vsel %vm2175, %v2174, %v2104
    %vm2178 = vcmask 130048
    %v2179 = vsel %vm2178, %v2176, %v2110
    %v2180 = vsel %vm2178, %v2177, %v2112
    %vm2181 = vcmask 162816
    %v2182 = vsel %vm2181, %v2179, %v2118
    %v2183 = vsel %vm2181, %v2180, %v2120
    %vm2184 = vcmask 195584
    %v2185 = vsel %vm2184, %v2182, %v2126
    %v2186 = vsel %vm2184, %v2183, %v2128
    %vm2187 = vcmask 228352
    %v2188 = vsel %vm2187, %v2185, %v2134
    %v2189 = vsel %vm2187, %v2186, %v2136
    %vm2190 = vcmask 261120
    %v2191 = vsel %vm2190, %v2188, %v2142
    %v2192 = vsel %vm2190, %v2189, %v2144
    %vm2193 = vcmask 293888
    %v2194 = vsel %vm2193, %v2191, %v2150
    %v2195 = vsel %vm2193, %v2192, %v2152
    %vm2196 = vcmask 326656
    %v2197 = vsel %vm2196, %v2194, %v2158
    %v2198 = vsel %vm2196, %v2195, %v2160
    %vm2199 = vcmask 359424
    %v2200 = vsel %vm2199, %v2197, %v2166
    %v2201 = vsel %vm2199, %v2198, %v2168
    %v2203 = vperm.slane %v100, 0
    %v2206 = vsel %vm108, %v2200, 0
    %v2209 = vsel %vm108, %v2201, 0
    %2211 = vmatpush.msra.mxu0 0.0
    %2212 = vmatpush.msra.mxu0 0.0
    %2213 = vmatpush.msra.mxu0 0.0
    %2214 = vmatpush.msra.mxu0 0.0
    %2215 = vmatpush.msra.mxu0 0.0
    %2216 = vmatpush.msra.mxu0 0.0
    %2217 = vmatpush.msra.mxu0 0.0
    %2218 = vmatpush.msra.mxu0 0.0
    %2219 = vmatpush.msra.mxu0 0.0
    %2220 = vmatpush.msra.mxu0 0.0
    %2221 = vmatpush.msra.mxu0 %v99
    %2222 = vmatpush.msra.mxu0 %v98
    %2223 = vmatpush.msra.mxu0 %v97
    %2224 = vmatpush.msra.mxu0 %v96
    %2225 = vmatpush.msra.mxu0 %v95
    %2226 = vmatpush.msra.mxu0 %v94
    %2227 = vmatmul.f32.gmra.mxu0 %v2206
    %v2228 = vpop.f32.mrf.mxu0
    %v2229 = vadd.f32 %v2203, %v2228
    %2230 = vmatmul.f32.gmra.mxu0 %v2209
    %v2231 = vpop.f32.mrf.mxu0
    %v2232 = vadd.f32 %v2203, %v2231
    %2233 = vdwg.mxu0
    %v2234 = vadd.f32 %v79, %v2229
    %v2235 = vadd.f32 %v80, %v2232
    %v2236 = vld [vmem:[%s6] sm:$0x1]
    %v2237 = vld [vmem:[%s7] sm:$0x1]
    %v2238 = vsel %vm108, %v2234, 0.0
    %2239 = vadd.xlane.f32.xlu0 %v2238
    %v2240 = vpop.xlane.xlu0 %2239
    %v2241 = vsel %vm108, %v2235, 0.0
    %2242 = vadd.xlane.f32.xlu0 %v2241
    %v2243 = vpop.xlane.xlu0 %2242
    %v2244 = vrcp.pop 48.0
    %v2245 = vmul.f32 48.0, %v2244
    %v2246 = vsub.f32 1.0, %v2245
    %v2247 = vmul.f32 %v2244, %v2246
    %v2248 = vadd.f32 %v2244, %v2247
    %vm2249 = vweird.f32 %v2244
    %v2250 = vsel %vm2249, %v2244, %v2248
    %v2251 = vmul.f32 %v2240, %v2250
    %v2252 = vmul.f32 %v2243, %v2250
    %v2253 = vsub.f32 %v2234, %v2251
    %v2254 = vsub.f32 %v2235, %v2252
    %v2255 = vmul.f32 %v2253, %v2253
    %v2256 = vmul.f32 %v2254, %v2254
    %v2257 = vsel %vm108, %v2255, 0.0
    %2258 = vadd.xlane.f32.xlu0 %v2257
    %v2259 = vpop.xlane.xlu0 %2258
    %v2260 = vsel %vm108, %v2256, 0.0
    %2261 = vadd.xlane.f32.xlu0 %v2260
    %v2262 = vpop.xlane.xlu0 %2261
    %v2263 = vmul.f32 %v2259, %v2250
    %v2264 = vmul.f32 %v2262, %v2250
    %v2265 = vadd.f32 %v2263, 1e-12
    %v2266 = vadd.f32 %v2264, 1e-12
    %v2267 = vrsqrt.pop %v2265
    %v2268 = vmul.f32 %v2267, %v2265
    %v2269 = vmul.f32 %v2268, %v2267
    %v2270 = vmul.f32 0.5, %v2269
    %v2271 = vsub.f32 1.5, %v2270
    %v2272 = vmul.f32 %v2267, %v2271
    %vm2273 = vweird.f32 %v2265
    %vm2274 = vweird.f32 %v2267
    %vm2275 = vmor %vm2273, %vm2274
    %v2276 = vsel %vm2275, %v2267, %v2272
    %v2277 = vrsqrt.pop %v2266
    %v2278 = vmul.f32 %v2277, %v2266
    %v2279 = vmul.f32 %v2278, %v2277
    %v2280 = vmul.f32 0.5, %v2279
    %v2281 = vsub.f32 1.5, %v2280
    %v2282 = vmul.f32 %v2277, %v2281
    %vm2283 = vweird.f32 %v2266
    %vm2284 = vweird.f32 %v2277
    %vm2285 = vmor %vm2283, %vm2284
    %v2286 = vsel %vm2285, %v2277, %v2282
    %v2287 = vmul.f32 %v2253, %v2276
    %v2288 = vmul.f32 %v2254, %v2286
    %v2290 = vperm.slane %v2236, 0
    %v2292 = vmul.f32 %v2287, %v2290
    %v2293 = vmul.f32 %v2288, %v2290
    %v2295 = vperm.slane %v2237, 0
    %v2297 = vadd.f32 %v2292, %v2295
    %v2298 = vadd.f32 %v2293, %v2295
    %v2299 = vld [vmem:[#allocation4] sm:$0xff]
    %v2300 = vld [vmem:[#allocation4 + $0x8] sm:$0xff]
    %v2301 = vld [vmem:[#allocation4 + $0x10] sm:$0xff]
    %v2302 = vld [vmem:[#allocation4 + $0x18] sm:$0xff]
    %v2303 = vld [vmem:[#allocation4 + $0x20] sm:$0xff]
    %v2304 = vld [vmem:[#allocation4 + $0x28] sm:$0xff]
    %v2305 = vld [vmem:[%s9] sm:$0x1]
    %v2307 = vperm.slane %v2305, 0
    %v2310 = vsel %vm108, %v2297, 0
    %v2313 = vsel %vm108, %v2298, 0
    %2315 = vmatpush.msra.mxu0 0.0
    %2316 = vmatpush.msra.mxu0 0.0
    %2317 = vmatpush.msra.mxu0 0.0
    %2318 = vmatpush.msra.mxu0 0.0
    %2319 = vmatpush.msra.mxu0 0.0
    %2320 = vmatpush.msra.mxu0 0.0
    %2321 = vmatpush.msra.mxu0 0.0
    %2322 = vmatpush.msra.mxu0 0.0
    %2323 = vmatpush.msra.mxu0 0.0
    %2324 = vmatpush.msra.mxu0 0.0
    %2325 = vmatpush.msra.mxu0 %v2304
    %2326 = vmatpush.msra.mxu0 %v2303
    %2327 = vmatpush.msra.mxu0 %v2302
    %2328 = vmatpush.msra.mxu0 %v2301
    %2329 = vmatpush.msra.mxu0 %v2300
    %2330 = vmatpush.msra.mxu0 %v2299
    %2331 = vmatmul.f32.gmra.mxu0 %v2310
    %v2332 = vpop.f32.mrf.mxu0
    %v2333 = vadd.f32 %v2307, %v2332
    %2334 = vmatmul.f32.gmra.mxu0 %v2313
    %v2335 = vpop.f32.mrf.mxu0
    %v2336 = vadd.f32 %v2307, %v2335
    %2337 = vdwg.mxu0
    %v2338 = vmul.f32 %v2333, 0.5
    %v2339 = vmul.f32 %v2336, 0.5
    %v2340 = vmul.f32 %v2333, 0.044715
    %v2341 = vmul.f32 %v2336, 0.044715
    %v2342 = vmul.f32 %v2340, %v2333
    %v2343 = vmul.f32 %v2341, %v2336
    %v2344 = vmul.f32 %v2342, %v2333
    %v2345 = vmul.f32 %v2343, %v2336
    %v2346 = vadd.f32 %v2333, %v2344
    %v2347 = vadd.f32 %v2336, %v2345
    %v2348 = vmul.f32 %v2346, 0.7978846
    %v2349 = vmul.f32 %v2347, 0.7978846
    %v2350 = vtanh.pop %v2348
    %v2351 = vtanh.pop %v2349
    %v2352 = vadd.f32 %v2350, 1.0
    %v2353 = vadd.f32 %v2351, 1.0
    %v2354 = vmul.f32 %v2338, %v2352
    %v2355 = vmul.f32 %v2339, %v2353
    %v2356 = vld [vmem:[%s10] sm:$0xff]
    %v2357 = vld [vmem:[%s10 + $0x8] sm:$0xff]
    %v2358 = vld [vmem:[%s10 + $0x10] sm:$0xff]
    %v2359 = vld [vmem:[%s10 + $0x18] sm:$0xff]
    %v2360 = vld [vmem:[%s10 + $0x20] sm:$0xff]
    %v2361 = vld [vmem:[%s10 + $0x28] sm:$0xff]
    %v2362 = vld [vmem:[%s10 + $0x30] sm:$0xff]
    %v2363 = vld [vmem:[%s10 + $0x38] sm:$0xff]
    %v2364 = vld [vmem:[%s10 + $0x40] sm:$0xff]
    %v2365 = vld [vmem:[%s10 + $0x48] sm:$0xff]
    %v2366 = vld [vmem:[%s10 + $0x50] sm:$0xff]
    %v2367 = vld [vmem:[%s10 + $0x58] sm:$0xff]
    %v2368 = vld [vmem:[%s11] sm:$0x1]
    %v2370 = vperm.slane %v2368, 0
    %vm2372 = vcmask 785408
    %v2374 = vsel %vm2372, %v2354, 0
    %v2377 = vsel %vm2372, %v2355, 0
    %2379 = vmatpush.msra.mxu0 0.0
    %2380 = vmatpush.msra.mxu0 0.0
    %2381 = vmatpush.msra.mxu0 0.0
    %2382 = vmatpush.msra.mxu0 0.0
    %2383 = vmatpush.msra.mxu0 %v2367
    %2384 = vmatpush.msra.mxu0 %v2366
    %2385 = vmatpush.msra.mxu0 %v2365
    %2386 = vmatpush.msra.mxu0 %v2364
    %2387 = vmatpush.msra.mxu0 %v2363
    %2388 = vmatpush.msra.mxu0 %v2362
    %2389 = vmatpush.msra.mxu0 %v2361
    %2390 = vmatpush.msra.mxu0 %v2360
    %2391 = vmatpush.msra.mxu0 %v2359
    %2392 = vmatpush.msra.mxu0 %v2358
    %2393 = vmatpush.msra.mxu0 %v2357
    %2394 = vmatpush.msra.mxu0 %v2356
    %2395 = vmatmul.f32.gmra.mxu0 %v2374
    %v2396 = vpop.f32.mrf.mxu0
    %v2397 = vadd.f32 %v2370, %v2396
    %2398 = vmatmul.f32.gmra.mxu0 %v2377
    %v2399 = vpop.f32.mrf.mxu0
    %v2400 = vadd.f32 %v2370, %v2399
    %2401 = vdwg.mxu0
    %v2402 = vadd.f32 %v2297, %v2397
    %v2403 = vadd.f32 %v2298, %v2400
    %v2404 = vld [vmem:[%s12] sm:$0x1]
    %v2405 = vld [vmem:[%s13] sm:$0x1]
    %v2406 = vsel %vm108, %v2402, 0.0
    %2407 = vadd.xlane.f32.xlu0 %v2406
    %v2408 = vpop.xlane.xlu0 %2407
    %v2409 = vsel %vm108, %v2403, 0.0
    %2410 = vadd.xlane.f32.xlu0 %v2409
    %v2411 = vpop.xlane.xlu0 %2410
    %v2412 = vmul.f32 %v2408, %v2250
    %v2413 = vmul.f32 %v2411, %v2250
    %v2414 = vsub.f32 %v2402, %v2412
    %v2415 = vsub.f32 %v2403, %v2413
    %v2416 = vmul.f32 %v2414, %v2414
    %v2417 = vmul.f32 %v2415, %v2415
    %v2418 = vsel %vm108, %v2416, 0.0
    %2419 = vadd.xlane.f32.xlu0 %v2418
    %v2420 = vpop.xlane.xlu0 %2419
    %v2421 = vsel %vm108, %v2417, 0.0
    %2422 = vadd.xlane.f32.xlu0 %v2421
    %v2423 = vpop.xlane.xlu0 %2422
    %v2424 = vmul.f32 %v2420, %v2250
    %v2425 = vmul.f32 %v2423, %v2250
    %v2426 = vadd.f32 %v2424, 1e-12
    %v2427 = vadd.f32 %v2425, 1e-12
    %v2428 = vrsqrt.pop %v2426
    %v2429 = vmul.f32 %v2428, %v2426
    %v2430 = vmul.f32 %v2429, %v2428
    %v2431 = vmul.f32 0.5, %v2430
    %v2432 = vsub.f32 1.5, %v2431
    %v2433 = vmul.f32 %v2428, %v2432
    %vm2434 = vweird.f32 %v2426
    %vm2435 = vweird.f32 %v2428
    %vm2436 = vmor %vm2434, %vm2435
    %v2437 = vsel %vm2436, %v2428, %v2433
    %v2438 = vrsqrt.pop %v2427
    %v2439 = vmul.f32 %v2438, %v2427
    %v2440 = vmul.f32 %v2439, %v2438
    %v2441 = vmul.f32 0.5, %v2440
    %v2442 = vsub.f32 1.5, %v2441
    %v2443 = vmul.f32 %v2438, %v2442
    %vm2444 = vweird.f32 %v2427
    %vm2445 = vweird.f32 %v2438
    %vm2446 = vmor %vm2444, %vm2445
    %v2447 = vsel %vm2446, %v2438, %v2443
    %v2448 = vmul.f32 %v2414, %v2437
    %v2449 = vmul.f32 %v2415, %v2447
    %v2451 = vperm.slane %v2404, 0
    %v2453 = vmul.f32 %v2448, %v2451
    %v2454 = vmul.f32 %v2449, %v2451
    %v2456 = vperm.slane %v2405, 0
    %v2458 = vadd.f32 %v2453, %v2456
    %v2459 = vadd.f32 %v2454, %v2456
    %2460 = vst.msk [vmem:[%s14] sm:$0xff] %vm108, %v2458
    %2461 = vst.msk [vmem:[%s14 + $0x8] sm:$0xff] %vm108, %v2459
    // Predicated region
    $region66: #{forward.5} parent=1 // pred_check
      _
    $region67: #{forward.5} parent=1 // pred_check_branch
      %2463 = sbr.rel (0) target = $region69
    $region68: #{forward.5} parent=1 // pred_region
      _
    $region69: #{forward.5} parent=1 // pred_fallthru
      _
    // Predicated region
    $region70: #{forward.5} parent=1 // pred_check
      _
    $region71: #{forward.5} parent=1 // pred_check_branch
      %2465 = sbr.rel (0) target = $region73
    $region72: #{forward.5} parent=1 // pred_region
      _
    $region73: #{forward.5} parent=1 // pred_fallthru
      _
    %2466 = vsyncpa [#allocation3], 1
    %2467 = vsyncpa [#allocation5], 1

// kernel: forward.6
$region0: #{forward.6}
  #allocation0 [shape = 'u32[]', space=smem, size = 0x4, offset = 0x4, fixed_abs, tag = 'smem constant byte address 0x4 - core index']
  #allocation1 [shape = 'u32[72,128]{1,0:T(1,128)}', space=vmem, size = 0x9000, scoped, tag = 'internal scratch']
  %s0 = inlined_call_operand.vmem [shape: f32[16,48], index: 0, kind: input, shape index: {}]
  %s1 = inlined_call_operand.vmem [shape: f32[2,1,8], index: 1, kind: input, shape index: {}]
  %s2 = inlined_call_operand.vmem [shape: f32[48,144], index: 2, kind: input, shape index: {}]
  %s3 = inlined_call_operand.vmem [shape: f32[1,144], index: 3, kind: input, shape index: {}]
  %s4 = inlined_call_operand.vmem [shape: f32[48,48], index: 4, kind: input, shape index: {}]
  %s5 = inlined_call_operand.vmem [shape: f32[1,48], index: 5, kind: input, shape index: {}]
  %s6 = inlined_call_operand.vmem [shape: f32[1,48], index: 6, kind: input, shape index: {}]
  %s7 = inlined_call_operand.vmem [shape: f32[1,48], index: 7, kind: input, shape index: {}]
  %s8 = inlined_call_operand.hbm [shape: f32[48,96], index: 8, kind: input, shape index: {}]
  %s9 = inlined_call_operand.vmem [shape: f32[1,96], index: 9, kind: input, shape index: {}]
  %s10 = inlined_call_operand.vmem [shape: f32[96,48], index: 10, kind: input, shape index: {}]
  %s11 = inlined_call_operand.vmem [shape: f32[1,48], index: 11, kind: input, shape index: {}]
  %s12 = inlined_call_operand.vmem [shape: f32[1,48], index: 12, kind: input, shape index: {}]
  %s13 = inlined_call_operand.vmem [shape: f32[1,48], index: 13, kind: input, shape index: {}]
  %s14 = inlined_call_operand.vmem [shape: f32[16,48], index: 14, kind: output, shape index: {}]
  %s15 = sld [smem:[#allocation0]]
  $region70: #{forward.6} parent=0
    _
  %s17 = ssub.s32 1, %s15
  %s18 = scalar_select 0, %s17, %s15
  $region1: #{forward.6} parent=0
    #allocation2 [shape = 'u8[24576]{0}', space=vmem, size = 0x6000, scoped, tag = 'input window, operand 8, single buffered']
    #allocation3 [shape = 's32[1]{0}', space=sflag, size = 0x4, scoped, tag = 'scoped memory for forward.6']
    %19 = vsyncpa [#allocation3], 0
    // Predicated region
    $region2: #{forward.6} parent=1 // pred_check
      _
    $region3: #{forward.6} parent=1 // pred_check_branch
      %21 = sbr.rel (0) target = $region5
    $region4: #{forward.6} parent=1 // pred_region
      _
    $region5: #{forward.6} parent=1 // pred_fallthru
      _
    // Predicated region
    $region6: #{forward.6} parent=1 // pred_check
      _
    $region7: #{forward.6} parent=1 // pred_check_branch
      %23 = sbr.rel (0) target = $region9
    $region8: #{forward.6} parent=1 // pred_region
      _
    $region9: #{forward.6} parent=1 // pred_fallthru
      _
    // Predicated region
    $region10: #{forward.6} parent=1 // pred_check
      _
    $region11: #{forward.6} parent=1 // pred_check_branch
      %25 = sbr.rel (0) target = $region13
    $region12: #{forward.6} parent=1 // pred_region
      _
    $region13: #{forward.6} parent=1 // pred_fallthru
      _
    // Predicated region
    $region14: #{forward.6} parent=1 // pred_check
      _
    $region15: #{forward.6} parent=1 // pred_check_branch
      %27 = sbr.rel (0) target = $region17
    $region16: #{forward.6} parent=1 // pred_region
      _
    $region17: #{forward.6} parent=1 // pred_fallthru
      _
    // Predicated region
    $region18: #{forward.6} parent=1 // pred_check
      _
    $region19: #{forward.6} parent=1 // pred_check_branch
      %29 = sbr.rel (0) target = $region21
    $region20: #{forward.6} parent=1 // pred_region
      _
    $region21: #{forward.6} parent=1 // pred_fallthru
      _
    // Predicated region
    $region22: #{forward.6} parent=1 // pred_check
      _
    $region23: #{forward.6} parent=1 // pred_check_branch
      %31 = sbr.rel (0) target = $region25
    $region24: #{forward.6} parent=1 // pred_region
      _
    $region25: #{forward.6} parent=1 // pred_fallthru
      _
    // Predicated region
    $region26: #{forward.6} parent=1 // pred_check
      _
    $region27: #{forward.6} parent=1 // pred_check_branch
      %33 = sbr.rel (0) target = $region29
    $region28: #{forward.6} parent=1 // pred_region
      _
    $region29: #{forward.6} parent=1 // pred_fallthru
      _
    // Predicated region
    $region30: #{forward.6} parent=1 // pred_check
      _
    $region31: #{forward.6} parent=1 // pred_check_branch
      %35 = sbr.rel (0) target = $region33
    $region32: #{forward.6} parent=1 // pred_region
      _
    $region33: #{forward.6} parent=1 // pred_fallthru
      _
    // Predicated region
    $region34: #{forward.6} parent=1 // pred_check
      _
    $region35: #{forward.6} parent=1 // pred_check_branch
      %37 = sbr.rel (0) target = $region37
    $region36: #{forward.6} parent=1 // pred_region
      %39 = vsyncadd [#allocation3], 0
      %s40 = sshll.u32 %s8, 4
      %s41 = int_to_ptr.hbm [resolvable:$true] %s40
      %s42 = sshll.u32 [#allocation2], 4
      %s43 = int_to_ptr.vmem [resolvable:$true] %s42
      %48 = dma.hbm_to_vmem [thread:$0]  %s41, 768, %s43, [#allocation3], 128, 128, 8
    $region37: #{forward.6} parent=1 // pred_fallthru
      _
    // Predicated region
    $region38: #{forward.6} parent=1 // pred_check
      _
    $region39: #{forward.6} parent=1 // pred_check_branch
      %50 = sbr.rel (0) target = $region41
    $region40: #{forward.6} parent=1 // pred_region
      _
    $region41: #{forward.6} parent=1 // pred_fallthru
      _
    // Predicated region
    $region42: #{forward.6} parent=1 // pred_check
      _
    $region43: #{forward.6} parent=1 // pred_check_branch
      %52 = sbr.rel (0) target = $region45
    $region44: #{forward.6} parent=1 // pred_region
      _
    $region45: #{forward.6} parent=1 // pred_fallthru
      _
    // Predicated region
    $region46: #{forward.6} parent=1 // pred_check
      _
    $region47: #{forward.6} parent=1 // pred_check_branch
      %54 = sbr.rel (0) target = $region49
    $region48: #{forward.6} parent=1 // pred_region
      _
    $region49: #{forward.6} parent=1 // pred_fallthru
      _
    // Predicated region
    $region50: #{forward.6} parent=1 // pred_check
      _
    $region51: #{forward.6} parent=1 // pred_check_branch
      %56 = sbr.rel (0) target = $region53
    $region52: #{forward.6} parent=1 // pred_region
      _
    $region53: #{forward.6} parent=1 // pred_fallthru
      _
    // Predicated region
    $region54: #{forward.6} parent=1 // pred_check
      _
    $region55: #{forward.6} parent=1 // pred_check_branch
      %58 = sbr.rel (0) target = $region57
    $region56: #{forward.6} parent=1 // pred_region
      _
    $region57: #{forward.6} parent=1 // pred_fallthru
      _
    // Predicated region
    $region58: #{forward.6} parent=1 // pred_check
      _
    $region59: #{forward.6} parent=1 // pred_check_branch
      %60 = sbr.rel (0) target = $region61
    $region60: #{forward.6} parent=1 // pred_region
      %62 = dma.done [#allocation3], 768
    $region61: #{forward.6} parent=1 // pred_fallthru
      _
    %v63 = vld [vmem:[%s0] sm:$0xff]
    %v64 = vld [vmem:[%s0 + $0x8] sm:$0xff]
    %v65 = vld [vmem:[%s2] sm:$0xff]
    %v66 = vld [vmem:[%s2 + $0x8] sm:$0xff]
    %v67 = vld [vmem:[%s2 + $0x10] sm:$0xff]
    %v68 = vld [vmem:[%s2 + $0x18] sm:$0xff]
    %v69 = vld [vmem:[%s2 + $0x20] sm:$0xff]
    %v70 = vld [vmem:[%s2 + $0x28] sm:$0xff]
    %v71 = vld [vmem:[%s2 + $0x30] sm:$0xff]
    %v72 = vld [vmem:[%s2 + $0x38] sm:$0xff]
    %v73 = vld [vmem:[%s2 + $0x40] sm:$0xff]
    %v74 = vld [vmem:[%s2 + $0x48] sm:$0xff]
    %v75 = vld [vmem:[%s2 + $0x50] sm:$0xff]
    %v76 = vld [vmem:[%s2 + $0x58] sm:$0xff]
    %v77 = vld [vmem:[%s3] sm:$0x3]
    %v78 = vld [vmem:[%s4] sm:$0xff]
    %v79 = vld [vmem:[%s4 + $0x8] sm:$0xff]
    %v80 = vld [vmem:[%s4 + $0x10] sm:$0xff]
    %v81 = vld [vmem:[%s4 + $0x18] sm:$0xff]
    %v82 = vld [vmem:[%s4 + $0x20] sm:$0xff]
    %v83 = vld [vmem:[%s4 + $0x28] sm:$0xff]
    %v84 = vld [vmem:[%s5] sm:$0x1]
    %v85 = vld [vmem:[%s1] sm:$0x1]
    %v86 = vld [vmem:[%s1 + $0x1] sm:$0x1]
    %v88 = vperm.slane %v77, 0
    %v89 = vperm.slane %v77, 1
    %vm92 = vcmask 392192
    %v94 = vsel %vm92, %v63, 0
    %v97 = vsel %vm92, %v64, 0
    %99 = vmatpush.msra.mxu0 0.0
    %100 = vmatpush.msra.mxu0 0.0
    %101 = vmatpush.msra.mxu0 0.0
    %102 = vmatpush.msra.mxu0 0.0
    %103 = vmatpush.msra.mxu0 0.0
    %104 = vmatpush.msra.mxu0 0.0
    %105 = vmatpush.msra.mxu0 0.0
    %106 = vmatpush.msra.mxu0 0.0
    %107 = vmatpush.msra.mxu0 0.0
    %108 = vmatpush.msra.mxu0 0.0
    %109 = vmatpush.msra.mxu0 %v75
    %110 = vmatpush.msra.mxu0 %v73
    %111 = vmatpush.msra.mxu0 %v71
    %112 = vmatpush.msra.mxu0 %v69
    %113 = vmatpush.msra.mxu0 %v67
    %114 = vmatpush.msra.mxu0 %v65
    %115 = vmatmul.f32.gmra.mxu0 %v94
    %v116 = vpop.f32.mrf.mxu0
    %v117 = vadd.f32 %v88, %v116
    %118 = vmatmul.f32.gmra.mxu0 %v97
    %v119 = vpop.f32.mrf.mxu0
    %v120 = vadd.f32 %v88, %v119
    %121 = vdwg.mxu0
    %122 = vmatpush.msra.mxu0 0.0
    %123 = vmatpush.msra.mxu0 0.0
    %124 = vmatpush.msra.mxu0 0.0
    %125 = vmatpush.msra.mxu0 0.0
    %126 = vmatpush.msra.mxu0 0.0
    %127 = vmatpush.msra.mxu0 0.0
    %128 = vmatpush.msra.mxu0 0.0
    %129 = vmatpush.msra.mxu0 0.0
    %130 = vmatpush.msra.mxu0 0.0
    %131 = vmatpush.msra.mxu0 0.0
    %132 = vmatpush.msra.mxu0 %v76
    %133 = vmatpush.msra.mxu0 %v74
    %134 = vmatpush.msra.mxu0 %v72
    %135 = vmatpush.msra.mxu0 %v70
    %136 = vmatpush.msra.mxu0 %v68
    %137 = vmatpush.msra.mxu0 %v66
    %138 = vmatmul.f32.gmra.mxu0 %v94
    %v139 = vpop.f32.mrf.mxu0
    %v140 = vadd.f32 %v89, %v139
    %141 = vmatmul.f32.gmra.mxu0 %v97
    %v142 = vpop.f32.mrf.mxu0
    %v143 = vadd.f32 %v89, %v142
    %144 = vdwg.mxu0
    %146 = vrot.lane.b32.xlu0 %v117, 80
    %v147 = vpop.permute.xlu0 %146
    %vm148 = vcmask 31744
    %v149 = vsel %vm148, %v117, 0
    %v151 = vsel %vm148, %v147, 0
    %153 = vmatpush.xpose.msra.mxu0 0.0
    %154 = vmatpush.xpose.msra.mxu0 0.0
    %155 = vmatpush.xpose.msra.mxu0 0.0
    %156 = vmatpush.xpose.msra.mxu0 0.0
    %157 = vmatpush.xpose.msra.mxu0 0.0
    %158 = vmatpush.xpose.msra.mxu0 0.0
    %159 = vmatpush.xpose.msra.mxu0 0.0
    %160 = vmatpush.xpose.msra.mxu0 0.0
    %161 = vmatpush.xpose.msra.mxu0 0.0
    %162 = vmatpush.xpose.msra.mxu0 0.0
    %163 = vmatpush.xpose.msra.mxu0 0.0
    %164 = vmatpush.xpose.msra.mxu0 0.0
    %165 = vmatpush.xpose.msra.mxu0 0.0
    %166 = vmatpush.xpose.msra.mxu0 0.0
    %167 = vmatpush.xpose.msra.mxu0 0.0
    %168 = vmatpush.xpose.msra.mxu0 %v151
    %169 = vmatmul.f32.gmra.mxu0 %v149
    %v170 = vpop.f32.mrf.mxu0
    %v171 = vadd.f32 0.0, %v170
    %172 = vdwg.mxu0
    %174 = vrot.lane.b32.xlu0 %v120, 80
    %v175 = vpop.permute.xlu0 %174
    %v176 = vsel %vm148, %v120, 0
    %v178 = vsel %vm148, %v175, 0
    %180 = vmatpush.xpose.msra.mxu0 0.0
    %181 = vmatpush.xpose.msra.mxu0 0.0
    %182 = vmatpush.xpose.msra.mxu0 0.0
    %183 = vmatpush.xpose.msra.mxu0 0.0
    %184 = vmatpush.xpose.msra.mxu0 0.0
    %185 = vmatpush.xpose.msra.mxu0 0.0
    %186 = vmatpush.xpose.msra.mxu0 0.0
    %187 = vmatpush.xpose.msra.mxu0 0.0
    %188 = vmatpush.xpose.msra.mxu0 0.0
    %189 = vmatpush.xpose.msra.mxu0 0.0
    %190 = vmatpush.xpose.msra.mxu0 0.0
    %191 = vmatpush.xpose.msra.mxu0 0.0
    %192 = vmatpush.xpose.msra.mxu0 0.0
    %193 = vmatpush.xpose.msra.mxu0 0.0
    %194 = vmatpush.xpose.msra.mxu0 0.0
    %195 = vmatpush.xpose.msra.mxu0 %v178
    %196 = vmatmul.f32.gmra.mxu0 %v176
    %v197 = vpop.f32.mrf.mxu0
    %v198 = vadd.f32 0.0, %v197
    %199 = vdwg.mxu0
    %v200 = vmul.f32 %v171, 0.5
    %v201 = vmul.f32 %v198, 0.5
    %v204 = vperm.slane %v85, 0
    %v205 = vperm.slane %v86, 0
    %v208 = vadd.f32 %v200, %v204
    %v209 = vadd.f32 %v201, %v205
    %vm210 = vcmask 64512
    %v211 = vsel %vm210, %v208, -inf
    %212 = vmax.xlane.f32.xlu0 %v211
    %v213 = vpop.xlane.xlu0 %212
    %v214 = vsel %vm210, %v209, -inf
    %215 = vmax.xlane.f32.xlu0 %v214
    %v216 = vpop.xlane.xlu0 %215
    %v217 = vsub.f32 %v208, %v213
    %v218 = vsub.f32 %v209, %v216
    %v219 = vmul.f32 %v217, 1.442695
    %v220 = vpow.pop %v219
    %v221 = vmul.f32 %v218, 1.442695
    %v222 = vpow.pop %v221
    %v223 = vsel %vm210, %v220, 0.0
    %224 = vadd.xlane.f32.xlu0 %v223
    %v225 = vpop.xlane.xlu0 %224
    %v226 = vsel %vm210, %v222, 0.0
    %227 = vadd.xlane.f32.xlu0 %v226
    %v228 = vpop.xlane.xlu0 %227
    %v229 = vrcp.pop %v225
    %v230 = vmul.f32 %v225, %v229
    %v231 = vsub.f32 1.0, %v230
    %v232 = vmul.f32 %v229, %v231
    %v233 = vadd.f32 %v229, %v232
    %vm234 = vweird.f32 %v225
    %vm235 = vweird.f32 %v229
    %vm236 = vmor %vm234, %vm235
    %v237 = vsel %vm236, %v229, %v233
    %v238 = vand.u32 2147483647, %v225
    %vm239 = vcmp.eq.f32.partialorder %v238, 8.507059e+37
    %v240 = vand.u32 %v225, 2147483648
    %v241 = vor.u32 1.1754944e-38, %v240
    %v242 = vsel %vm239, %v241, %v237
    %v243 = vmul.f32 %v220, %v242
    %v244 = vrcp.pop %v228
    %v245 = vmul.f32 %v228, %v244
    %v246 = vsub.f32 1.0, %v245
    %v247 = vmul.f32 %v244, %v246
    %v248 = vadd.f32 %v244, %v247
    %vm249 = vweird.f32 %v228
    %vm250 = vweird.f32 %v244
    %vm251 = vmor %vm249, %vm250
    %v252 = vsel %vm251, %v244, %v248
    %v253 = vand.u32 2147483647, %v228
    %vm254 = vcmp.eq.f32.partialorder %v253, 8.507059e+37
    %v255 = vand.u32 %v228, 2147483648
    %v256 = vor.u32 1.1754944e-38, %v255
    %v257 = vsel %vm254, %v256, %v252
    %v258 = vmul.f32 %v222, %v257
    %259 = vrot.lane.b32.xlu0 %v117, 32
    %v260 = vpop.permute.xlu0 %259
    %v263 = vsel %vm210, %v243, 0
    %265 = vmatpush.msra.mxu0 0.0
    %266 = vmatpush.msra.mxu0 0.0
    %267 = vmatpush.msra.mxu0 0.0
    %268 = vmatpush.msra.mxu0 0.0
    %269 = vmatpush.msra.mxu0 0.0
    %270 = vmatpush.msra.mxu0 0.0
    %271 = vmatpush.msra.mxu0 0.0
    %272 = vmatpush.msra.mxu0 0.0
    %273 = vmatpush.msra.mxu0 0.0
    %274 = vmatpush.msra.mxu0 0.0
    %275 = vmatpush.msra.mxu0 0.0
    %276 = vmatpush.msra.mxu0 0.0
    %277 = vmatpush.msra.mxu0 0.0
    %278 = vmatpush.msra.mxu0 0.0
    %279 = vmatpush.msra.mxu0 0.0
    %280 = vmatpush.msra.mxu0 %v260
    %281 = vmatmul.f32.gmra.mxu0 %v263
    %v282 = vpop.f32.mrf.mxu0
    %v283 = vadd.f32 0.0, %v282
    %284 = vdwg.mxu0
    %285 = vrot.lane.b32.xlu0 %v120, 32
    %v286 = vpop.permute.xlu0 %285
    %v289 = vsel %vm210, %v258, 0
    %291 = vmatpush.msra.mxu0 0.0
    %292 = vmatpush.msra.mxu0 0.0
    %293 = vmatpush.msra.mxu0 0.0
    %294 = vmatpush.msra.mxu0 0.0
    %295 = vmatpush.msra.mxu0 0.0
    %296 = vmatpush.msra.mxu0 0.0
    %297 = vmatpush.msra.mxu0 0.0
    %298 = vmatpush.msra.mxu0 0.0
    %299 = vmatpush.msra.mxu0 0.0
    %300 = vmatpush.msra.mxu0 0.0
    %301 = vmatpush.msra.mxu0 0.0
    %302 = vmatpush.msra.mxu0 0.0
    %303 = vmatpush.msra.mxu0 0.0
    %304 = vmatpush.msra.mxu0 0.0
    %305 = vmatpush.msra.mxu0 0.0
    %306 = vmatpush.msra.mxu0 %v286
    %307 = vmatmul.f32.gmra.mxu0 %v289
    %v308 = vpop.f32.mrf.mxu0
    %v309 = vadd.f32 0.0, %v308
    %310 = vdwg.mxu0
    %311 = vrot.lane.b32.xlu0 %v117, 124
    %v312 = vpop.permute.xlu0 %311
    %313 = vrot.lane.b32.xlu0 %v117, 76
    %v314 = vpop.permute.xlu0 %313
    %v315 = vsel %vm148, %v312, 0
    %v317 = vsel %vm148, %v314, 0
    %319 = vmatpush.xpose.msra.mxu0 0.0
    %320 = vmatpush.xpose.msra.mxu0 0.0
    %321 = vmatpush.xpose.msra.mxu0 0.0
    %322 = vmatpush.xpose.msra.mxu0 0.0
    %323 = vmatpush.xpose.msra.mxu0 0.0
    %324 = vmatpush.xpose.msra.mxu0 0.0
    %325 = vmatpush.xpose.msra.mxu0 0.0
    %326 = vmatpush.xpose.msra.mxu0 0.0
    %327 = vmatpush.xpose.msra.mxu0 0.0
    %328 = vmatpush.xpose.msra.mxu0 0.0
    %329 = vmatpush.xpose.msra.mxu0 0.0
    %330 = vmatpush.xpose.msra.mxu0 0.0
    %331 = vmatpush.xpose.msra.mxu0 0.0
    %332 = vmatpush.xpose.msra.mxu0 0.0
    %333 = vmatpush.xpose.msra.mxu0 0.0
    %334 = vmatpush.xpose.msra.mxu0 %v317
    %335 = vmatmul.f32.gmra.mxu0 %v315
    %v336 = vpop.f32.mrf.mxu0
    %v337 = vadd.f32 0.0, %v336
    %338 = vdwg.mxu0
    %339 = vrot.lane.b32.xlu0 %v120, 124
    %v340 = vpop.permute.xlu0 %339
    %341 = vrot.lane.b32.xlu0 %v120, 76
    %v342 = vpop.permute.xlu0 %341
    %v343 = vsel %vm148, %v340, 0
    %v345 = vsel %vm148, %v342, 0
    %347 = vmatpush.xpose.msra.mxu0 0.0
    %348 = vmatpush.xpose.msra.mxu0 0.0
    %349 = vmatpush.xpose.msra.mxu0 0.0
    %350 = vmatpush.xpose.msra.mxu0 0.0
    %351 = vmatpush.xpose.msra.mxu0 0.0
    %352 = vmatpush.xpose.msra.mxu0 0.0
    %353 = vmatpush.xpose.msra.mxu0 0.0
    %354 = vmatpush.xpose.msra.mxu0 0.0
    %355 = vmatpush.xpose.msra.mxu0 0.0
    %356 = vmatpush.xpose.msra.mxu0 0.0
    %357 = vmatpush.xpose.msra.mxu0 0.0
    %358 = vmatpush.xpose.msra.mxu0 0.0
    %359 = vmatpush.xpose.msra.mxu0 0.0
    %360 = vmatpush.xpose.msra.mxu0 0.0
    %361 = vmatpush.xpose.msra.mxu0 0.0
    %362 = vmatpush.xpose.msra.mxu0 %v345
    %363 = vmatmul.f32.gmra.mxu0 %v343
    %v364 = vpop.f32.mrf.mxu0
    %v365 = vadd.f32 0.0, %v364
    %366 = vdwg.mxu0
    %v367 = vmul.f32 %v337, 0.5
    %v368 = vmul.f32 %v365, 0.5
    %v369 = vadd.f32 %v367, %v204
    %v370 = vadd.f32 %v368, %v205
    %v371 = vsel %vm210, %v369, -inf
    %372 = vmax.xlane.f32.xlu0 %v371
    %v373 = vpop.xlane.xlu0 %372
    %v374 = vsel %vm210, %v370, -inf
    %375 = vmax.xlane.f32.xlu0 %v374
    %v376 = vpop.xlane.xlu0 %375
    %v377 = vsub.f32 %v369, %v373
    %v378 = vsub.f32 %v370, %v376
    %v379 = vmul.f32 %v377, 1.442695
    %v380 = vpow.pop %v379
    %v381 = vmul.f32 %v378, 1.442695
    %v382 = vpow.pop %v381
    %v383 = vsel %vm210, %v380, 0.0
    %384 = vadd.xlane.f32.xlu0 %v383
    %v385 = vpop.xlane.xlu0 %384
    %v386 = vsel %vm210, %v382, 0.0
    %387 = vadd.xlane.f32.xlu0 %v386
    %v388 = vpop.xlane.xlu0 %387
    %v389 = vrcp.pop %v385
    %v390 = vmul.f32 %v385, %v389
    %v391 = vsub.f32 1.0, %v390
    %v392 = vmul.f32 %v389, %v391
    %v393 = vadd.f32 %v389, %v392
    %vm394 = vweird.f32 %v385
    %vm395 = vweird.f32 %v389
    %vm396 = vmor %vm394, %vm395
    %v397 = vsel %vm396, %v389, %v393
    %v398 = vand.u32 2147483647, %v385
    %vm399 = vcmp.eq.f32.partialorder %v398, 8.507059e+37
    %v400 = vand.u32 %v385, 2147483648
    %v401 = vor.u32 1.1754944e-38, %v400
    %v402 = vsel %vm399, %v401, %v397
    %v403 = vmul.f32 %v380, %v402
    %v404 = vrcp.pop %v388
    %v405 = vmul.f32 %v388, %v404
    %v406 = vsub.f32 1.0, %v405
    %v407 = vmul.f32 %v404, %v406
    %v408 = vadd.f32 %v404, %v407
    %vm409 = vweird.f32 %v388
    %vm410 = vweird.f32 %v404
    %vm411 = vmor %vm409, %vm410
    %v412 = vsel %vm411, %v404, %v408
    %v413 = vand.u32 2147483647, %v388
    %vm414 = vcmp.eq.f32.partialorder %v413, 8.507059e+37
    %v415 = vand.u32 %v388, 2147483648
    %v416 = vor.u32 1.1754944e-38, %v415
    %v417 = vsel %vm414, %v416, %v412
    %v418 = vmul.f32 %v382, %v417
    %419 = vrot.lane.b32.xlu0 %v117, 28
    %v420 = vpop.permute.xlu0 %419
    %v423 = vsel %vm210, %v403, 0
    %425 = vmatpush.msra.mxu0 0.0
    %426 = vmatpush.msra.mxu0 0.0
    %427 = vmatpush.msra.mxu0 0.0
    %428 = vmatpush.msra.mxu0 0.0
    %429 = vmatpush.msra.mxu0 0.0
    %430 = vmatpush.msra.mxu0 0.0
    %431 = vmatpush.msra.mxu0 0.0
    %432 = vmatpush.msra.mxu0 0.0
    %433 = vmatpush.msra.mxu0 0.0
    %434 = vmatpush.msra.mxu0 0.0
    %435 = vmatpush.msra.mxu0 0.0
    %436 = vmatpush.msra.mxu0 0.0
    %437 = vmatpush.msra.mxu0 0.0
    %438 = vmatpush.msra.mxu0 0.0
    %439 = vmatpush.msra.mxu0 0.0
    %440 = vmatpush.msra.mxu0 %v420
    %441 = vmatmul.f32.gmra.mxu0 %v423
    %v442 = vpop.f32.mrf.mxu0
    %v443 = vadd.f32 0.0, %v442
    %444 = vdwg.mxu0
    %445 = vrot.lane.b32.xlu0 %v120, 28
    %v446 = vpop.permute.xlu0 %445
    %v449 = vsel %vm210, %v418, 0
    %451 = vmatpush.msra.mxu0 0.0
    %452 = vmatpush.msra.mxu0 0.0
    %453 = vmatpush.msra.mxu0 0.0
    %454 = vmatpush.msra.mxu0 0.0
    %455 = vmatpush.msra.mxu0 0.0
    %456 = vmatpush.msra.mxu0 0.0
    %457 = vmatpush.msra.mxu0 0.0
    %458 = vmatpush.msra.mxu0 0.0
    %459 = vmatpush.msra.mxu0 0.0
    %460 = vmatpush.msra.mxu0 0.0
    %461 = vmatpush.msra.mxu0 0.0
    %462 = vmatpush.msra.mxu0 0.0
    %463 = vmatpush.msra.mxu0 0.0
    %464 = vmatpush.msra.mxu0 0.0
    %465 = vmatpush.msra.mxu0 0.0
    %466 = vmatpush.msra.mxu0 %v446
    %467 = vmatmul.f32.gmra.mxu0 %v449
    %v468 = vpop.f32.mrf.mxu0
    %v469 = vadd.f32 0.0, %v468
    %470 = vdwg.mxu0
    %471 = vrot.lane.b32.xlu0 %v117, 120
    %v472 = vpop.permute.xlu0 %471
    %473 = vrot.lane.b32.xlu0 %v117, 72
    %v474 = vpop.permute.xlu0 %473
    %v475 = vsel %vm148, %v472, 0
    %v477 = vsel %vm148, %v474, 0
    %479 = vmatpush.xpose.msra.mxu0 0.0
    %480 = vmatpush.xpose.msra.mxu0 0.0
    %481 = vmatpush.xpose.msra.mxu0 0.0
    %482 = vmatpush.xpose.msra.mxu0 0.0
    %483 = vmatpush.xpose.msra.mxu0 0.0
    %484 = vmatpush.xpose.msra.mxu0 0.0
    %485 = vmatpush.xpose.msra.mxu0 0.0
    %486 = vmatpush.xpose.msra.mxu0 0.0
    %487 = vmatpush.xpose.msra.mxu0 0.0
    %488 = vmatpush.xpose.msra.mxu0 0.0
    %489 = vmatpush.xpose.msra.mxu0 0.0
    %490 = vmatpush.xpose.msra.mxu0 0.0
    %491 = vmatpush.xpose.msra.mxu0 0.0
    %492 = vmatpush.xpose.msra.mxu0 0.0
    %493 = vmatpush.xpose.msra.mxu0 0.0
    %494 = vmatpush.xpose.msra.mxu0 %v477
    %495 = vmatmul.f32.gmra.mxu0 %v475
    %v496 = vpop.f32.mrf.mxu0
    %v497 = vadd.f32 0.0, %v496
    %498 = vdwg.mxu0
    %499 = vrot.lane.b32.xlu0 %v120, 120
    %v500 = vpop.permute.xlu0 %499
    %501 = vrot.lane.b32.xlu0 %v120, 72
    %v502 = vpop.permute.xlu0 %501
    %v503 = vsel %vm148, %v500, 0
    %v505 = vsel %vm148, %v502, 0
    %507 = vmatpush.xpose.msra.mxu0 0.0
    %508 = vmatpush.xpose.msra.mxu0 0.0
    %509 = vmatpush.xpose.msra.mxu0 0.0
    %510 = vmatpush.xpose.msra.mxu0 0.0
    %511 = vmatpush.xpose.msra.mxu0 0.0
    %512 = vmatpush.xpose.msra.mxu0 0.0
    %513 = vmatpush.xpose.msra.mxu0 0.0
    %514 = vmatpush.xpose.msra.mxu0 0.0
    %515 = vmatpush.xpose.msra.mxu0 0.0
    %516 = vmatpush.xpose.msra.mxu0 0.0
    %517 = vmatpush.xpose.msra.mxu0 0.0
    %518 = vmatpush.xpose.msra.mxu0 0.0
    %519 = vmatpush.xpose.msra.mxu0 0.0
    %520 = vmatpush.xpose.msra.mxu0 0.0
    %521 = vmatpush.xpose.msra.mxu0 0.0
    %522 = vmatpush.xpose.msra.mxu0 %v505
    %523 = vmatmul.f32.gmra.mxu0 %v503
    %v524 = vpop.f32.mrf.mxu0
    %v525 = vadd.f32 0.0, %v524
    %526 = vdwg.mxu0
    %v527 = vmul.f32 %v497, 0.5
    %v528 = vmul.f32 %v525, 0.5
    %v529 = vadd.f32 %v527, %v204
    %v530 = vadd.f32 %v528, %v205
    %v531 = vsel %vm210, %v529, -inf
    %532 = vmax.xlane.f32.xlu0 %v531
    %v533 = vpop.xlane.xlu0 %532
    %v534 = vsel %vm210, %v530, -inf
    %535 = vmax.xlane.f32.xlu0 %v534
    %v536 = vpop.xlane.xlu0 %535
    %v537 = vsub.f32 %v529, %v533
    %v538 = vsub.f32 %v530, %v536
    %v539 = vmul.f32 %v537, 1.442695
    %v540 = vpow.pop %v539
    %v541 = vmul.f32 %v538, 1.442695
    %v542 = vpow.pop %v541
    %v543 = vsel %vm210, %v540, 0.0
    %544 = vadd.xlane.f32.xlu0 %v543
    %v545 = vpop.xlane.xlu0 %544
    %v546 = vsel %vm210, %v542, 0.0
    %547 = vadd.xlane.f32.xlu0 %v546
    %v548 = vpop.xlane.xlu0 %547
    %v549 = vrcp.pop %v545
    %v550 = vmul.f32 %v545, %v549
    %v551 = vsub.f32 1.0, %v550
    %v552 = vmul.f32 %v549, %v551
    %v553 = vadd.f32 %v549, %v552
    %vm554 = vweird.f32 %v545
    %vm555 = vweird.f32 %v549
    %vm556 = vmor %vm554, %vm555
    %v557 = vsel %vm556, %v549, %v553
    %v558 = vand.u32 2147483647, %v545
    %vm559 = vcmp.eq.f32.partialorder %v558, 8.507059e+37
    %v560 = vand.u32 %v545, 2147483648
    %v561 = vor.u32 1.1754944e-38, %v560
    %v562 = vsel %vm559, %v561, %v557
    %v563 = vmul.f32 %v540, %v562
    %v564 = vrcp.pop %v548
    %v565 = vmul.f32 %v548, %v564
    %v566 = vsub.f32 1.0, %v565
    %v567 = vmul.f32 %v564, %v566
    %v568 = vadd.f32 %v564, %v567
    %vm569 = vweird.f32 %v548
    %vm570 = vweird.f32 %v564
    %vm571 = vmor %vm569, %vm570
    %v572 = vsel %vm571, %v564, %v568
    %v573 = vand.u32 2147483647, %v548
    %vm574 = vcmp.eq.f32.partialorder %v573, 8.507059e+37
    %v575 = vand.u32 %v548, 2147483648
    %v576 = vor.u32 1.1754944e-38, %v575
    %v577 = vsel %vm574, %v576, %v572
    %v578 = vmul.f32 %v542, %v577
    %579 = vrot.lane.b32.xlu0 %v117, 24
    %v580 = vpop.permute.xlu0 %579
    %v583 = vsel %vm210, %v563, 0
    %585 = vmatpush.msra.mxu0 0.0
    %586 = vmatpush.msra.mxu0 0.0
    %587 = vmatpush.msra.mxu0 0.0
    %588 = vmatpush.msra.mxu0 0.0
    %589 = vmatpush.msra.mxu0 0.0
    %590 = vmatpush.msra.mxu0 0.0
    %591 = vmatpush.msra.mxu0 0.0
    %592 = vmatpush.msra.mxu0 0.0
    %593 = vmatpush.msra.mxu0 0.0
    %594 = vmatpush.msra.mxu0 0.0
    %595 = vmatpush.msra.mxu0 0.0
    %596 = vmatpush.msra.mxu0 0.0
    %597 = vmatpush.msra.mxu0 0.0
    %598 = vmatpush.msra.mxu0 0.0
    %599 = vmatpush.msra.mxu0 0.0
    %600 = vmatpush.msra.mxu0 %v580
    %601 = vmatmul.f32.gmra.mxu0 %v583
    %v602 = vpop.f32.mrf.mxu0
    %v603 = vadd.f32 0.0, %v602
    %604 = vdwg.mxu0
    %605 = vrot.lane.b32.xlu0 %v120, 24
    %v606 = vpop.permute.xlu0 %605
    %v609 = vsel %vm210, %v578, 0
    %611 = vmatpush.msra.mxu0 0.0
    %612 = vmatpush.msra.mxu0 0.0
    %613 = vmatpush.msra.mxu0 0.0
    %614 = vmatpush.msra.mxu0 0.0
    %615 = vmatpush.msra.mxu0 0.0
    %616 = vmatpush.msra.mxu0 0.0
    %617 = vmatpush.msra.mxu0 0.0
    %618 = vmatpush.msra.mxu0 0.0
    %619 = vmatpush.msra.mxu0 0.0
    %620 = vmatpush.msra.mxu0 0.0
    %621 = vmatpush.msra.mxu0 0.0
    %622 = vmatpush.msra.mxu0 0.0
    %623 = vmatpush.msra.mxu0 0.0
    %624 = vmatpush.msra.mxu0 0.0
    %625 = vmatpush.msra.mxu0 0.0
    %626 = vmatpush.msra.mxu0 %v606
    %627 = vmatmul.f32.gmra.mxu0 %v609
    %v628 = vpop.f32.mrf.mxu0
    %v629 = vadd.f32 0.0, %v628
    %630 = vdwg.mxu0
    %631 = vrot.lane.b32.xlu0 %v117, 116
    %v632 = vpop.permute.xlu0 %631
    %633 = vrot.lane.b32.xlu0 %v117, 68
    %v634 = vpop.permute.xlu0 %633
    %v635 = vsel %vm148, %v632, 0
    %v637 = vsel %vm148, %v634, 0
    %639 = vmatpush.xpose.msra.mxu0 0.0
    %640 = vmatpush.xpose.msra.mxu0 0.0
    %641 = vmatpush.xpose.msra.mxu0 0.0
    %642 = vmatpush.xpose.msra.mxu0 0.0
    %643 = vmatpush.xpose.msra.mxu0 0.0
    %644 = vmatpush.xpose.msra.mxu0 0.0
    %645 = vmatpush.xpose.msra.mxu0 0.0
    %646 = vmatpush.xpose.msra.mxu0 0.0
    %647 = vmatpush.xpose.msra.mxu0 0.0
    %648 = vmatpush.xpose.msra.mxu0 0.0
    %649 = vmatpush.xpose.msra.mxu0 0.0
    %650 = vmatpush.xpose.msra.mxu0 0.0
    %651 = vmatpush.xpose.msra.mxu0 0.0
    %652 = vmatpush.xpose.msra.mxu0 0.0
    %653 = vmatpush.xpose.msra.mxu0 0.0
    %654 = vmatpush.xpose.msra.mxu0 %v637
    %655 = vmatmul.f32.gmra.mxu0 %v635
    %v656 = vpop.f32.mrf.mxu0
    %v657 = vadd.f32 0.0, %v656
    %658 = vdwg.mxu0
    %659 = vrot.lane.b32.xlu0 %v120, 116
    %v660 = vpop.permute.xlu0 %659
    %661 = vrot.lane.b32.xlu0 %v120, 68
    %v662 = vpop.permute.xlu0 %661
    %v663 = vsel %vm148, %v660, 0
    %v665 = vsel %vm148, %v662, 0
    %667 = vmatpush.xpose.msra.mxu0 0.0
    %668 = vmatpush.xpose.msra.mxu0 0.0
    %669 = vmatpush.xpose.msra.mxu0 0.0
    %670 = vmatpush.xpose.msra.mxu0 0.0
    %671 = vmatpush.xpose.msra.mxu0 0.0
    %672 = vmatpush.xpose.msra.mxu0 0.0
    %673 = vmatpush.xpose.msra.mxu0 0.0
    %674 = vmatpush.xpose.msra.mxu0 0.0
    %675 = vmatpush.xpose.msra.mxu0 0.0
    %676 = vmatpush.xpose.msra.mxu0 0.0
    %677 = vmatpush.xpose.msra.mxu0 0.0
    %678 = vmatpush.xpose.msra.mxu0 0.0
    %679 = vmatpush.xpose.msra.mxu0 0.0
    %680 = vmatpush.xpose.msra.mxu0 0.0
    %681 = vmatpush.xpose.msra.mxu0 0.0
    %682 = vmatpush.xpose.msra.mxu0 %v665
    %683 = vmatmul.f32.gmra.mxu0 %v663
    %v684 = vpop.f32.mrf.mxu0
    %v685 = vadd.f32 0.0, %v684
    %686 = vdwg.mxu0
    %v687 = vmul.f32 %v657, 0.5
    %v688 = vmul.f32 %v685, 0.5
    %v689 = vadd.f32 %v687, %v204
    %v690 = vadd.f32 %v688, %v205
    %v691 = vsel %vm210, %v689, -inf
    %692 = vmax.xlane.f32.xlu0 %v691
    %v693 = vpop.xlane.xlu0 %692
    %v694 = vsel %vm210, %v690, -inf
    %695 = vmax.xlane.f32.xlu0 %v694
    %v696 = vpop.xlane.xlu0 %695
    %v697 = vsub.f32 %v689, %v693
    %v698 = vsub.f32 %v690, %v696
    %v699 = vmul.f32 %v697, 1.442695
    %v700 = vpow.pop %v699
    %v701 = vmul.f32 %v698, 1.442695
    %v702 = vpow.pop %v701
    %v703 = vsel %vm210, %v700, 0.0
    %704 = vadd.xlane.f32.xlu0 %v703
    %v705 = vpop.xlane.xlu0 %704
    %v706 = vsel %vm210, %v702, 0.0
    %707 = vadd.xlane.f32.xlu0 %v706
    %v708 = vpop.xlane.xlu0 %707
    %v709 = vrcp.pop %v705
    %v710 = vmul.f32 %v705, %v709
    %v711 = vsub.f32 1.0, %v710
    %v712 = vmul.f32 %v709, %v711
    %v713 = vadd.f32 %v709, %v712
    %vm714 = vweird.f32 %v705
    %vm715 = vweird.f32 %v709
    %vm716 = vmor %vm714, %vm715
    %v717 = vsel %vm716, %v709, %v713
    %v718 = vand.u32 2147483647, %v705
    %vm719 = vcmp.eq.f32.partialorder %v718, 8.507059e+37
    %v720 = vand.u32 %v705, 2147483648
    %v721 = vor.u32 1.1754944e-38, %v720
    %v722 = vsel %vm719, %v721, %v717
    %v723 = vmul.f32 %v700, %v722
    %v724 = vrcp.pop %v708
    %v725 = vmul.f32 %v708, %v724
    %v726 = vsub.f32 1.0, %v725
    %v727 = vmul.f32 %v724, %v726
    %v728 = vadd.f32 %v724, %v727
    %vm729 = vweird.f32 %v708
    %vm730 = vweird.f32 %v724
    %vm731 = vmor %vm729, %vm730
    %v732 = vsel %vm731, %v724, %v728
    %v733 = vand.u32 2147483647, %v708
    %vm734 = vcmp.eq.f32.partialorder %v733, 8.507059e+37
    %v735 = vand.u32 %v708, 2147483648
    %v736 = vor.u32 1.1754944e-38, %v735
    %v737 = vsel %vm734, %v736, %v732
    %v738 = vmul.f32 %v702, %v737
    %739 = vrot.lane.b32.xlu0 %v117, 20
    %v740 = vpop.permute.xlu0 %739
    %v743 = vsel %vm210, %v723, 0
    %745 = vmatpush.msra.mxu0 0.0
    %746 = vmatpush.msra.mxu0 0.0
    %747 = vmatpush.msra.mxu0 0.0
    %748 = vmatpush.msra.mxu0 0.0
    %749 = vmatpush.msra.mxu0 0.0
    %750 = vmatpush.msra.mxu0 0.0
    %751 = vmatpush.msra.mxu0 0.0
    %752 = vmatpush.msra.mxu0 0.0
    %753 = vmatpush.msra.mxu0 0.0
    %754 = vmatpush.msra.mxu0 0.0
    %755 = vmatpush.msra.mxu0 0.0
    %756 = vmatpush.msra.mxu0 0.0
    %757 = vmatpush.msra.mxu0 0.0
    %758 = vmatpush.msra.mxu0 0.0
    %759 = vmatpush.msra.mxu0 0.0
    %760 = vmatpush.msra.mxu0 %v740
    %761 = vmatmul.f32.gmra.mxu0 %v743
    %v762 = vpop.f32.mrf.mxu0
    %v763 = vadd.f32 0.0, %v762
    %764 = vdwg.mxu0
    %765 = vrot.lane.b32.xlu0 %v120, 20
    %v766 = vpop.permute.xlu0 %765
    %v769 = vsel %vm210, %v738, 0
    %771 = vmatpush.msra.mxu0 0.0
    %772 = vmatpush.msra.mxu0 0.0
    %773 = vmatpush.msra.mxu0 0.0
    %774 = vmatpush.msra.mxu0 0.0
    %775 = vmatpush.msra.mxu0 0.0
    %776 = vmatpush.msra.mxu0 0.0
    %777 = vmatpush.msra.mxu0 0.0
    %778 = vmatpush.msra.mxu0 0.0
    %779 = vmatpush.msra.mxu0 0.0
    %780 = vmatpush.msra.mxu0 0.0
    %781 = vmatpush.msra.mxu0 0.0
    %782 = vmatpush.msra.mxu0 0.0
    %783 = vmatpush.msra.mxu0 0.0
    %784 = vmatpush.msra.mxu0 0.0
    %785 = vmatpush.msra.mxu0 0.0
    %786 = vmatpush.msra.mxu0 %v766
    %787 = vmatmul.f32.gmra.mxu0 %v769
    %v788 = vpop.f32.mrf.mxu0
    %v789 = vadd.f32 0.0, %v788
    %790 = vdwg.mxu0
    %791 = vrot.lane.b32.xlu0 %v117, 112
    %v792 = vpop.permute.xlu0 %791
    %793 = vrot.lane.b32.xlu0 %v117, 64
    %v794 = vpop.permute.xlu0 %793
    %v795 = vsel %vm148, %v792, 0
    %v797 = vsel %vm148, %v794, 0
    %799 = vmatpush.xpose.msra.mxu0 0.0
    %800 = vmatpush.xpose.msra.mxu0 0.0
    %801 = vmatpush.xpose.msra.mxu0 0.0
    %802 = vmatpush.xpose.msra.mxu0 0.0
    %803 = vmatpush.xpose.msra.mxu0 0.0
    %804 = vmatpush.xpose.msra.mxu0 0.0
    %805 = vmatpush.xpose.msra.mxu0 0.0
    %806 = vmatpush.xpose.msra.mxu0 0.0
    %807 = vmatpush.xpose.msra.mxu0 0.0
    %808 = vmatpush.xpose.msra.mxu0 0.0
    %809 = vmatpush.xpose.msra.mxu0 0.0
    %810 = vmatpush.xpose.msra.mxu0 0.0
    %811 = vmatpush.xpose.msra.mxu0 0.0
    %812 = vmatpush.xpose.msra.mxu0 0.0
    %813 = vmatpush.xpose.msra.mxu0 0.0
    %814 = vmatpush.xpose.msra.mxu0 %v797
    %815 = vmatmul.f32.gmra.mxu0 %v795
    %v816 = vpop.f32.mrf.mxu0
    %v817 = vadd.f32 0.0, %v816
    %818 = vdwg.mxu0
    %819 = vrot.lane.b32.xlu0 %v120, 112
    %v820 = vpop.permute.xlu0 %819
    %821 = vrot.lane.b32.xlu0 %v120, 64
    %v822 = vpop.permute.xlu0 %821
    %v823 = vsel %vm148, %v820, 0
    %v825 = vsel %vm148, %v822, 0
    %827 = vmatpush.xpose.msra.mxu0 0.0
    %828 = vmatpush.xpose.msra.mxu0 0.0
    %829 = vmatpush.xpose.msra.mxu0 0.0
    %830 = vmatpush.xpose.msra.mxu0 0.0
    %831 = vmatpush.xpose.msra.mxu0 0.0
    %832 = vmatpush.xpose.msra.mxu0 0.0
    %833 = vmatpush.xpose.msra.mxu0 0.0
    %834 = vmatpush.xpose.msra.mxu0 0.0
    %835 = vmatpush.xpose.msra.mxu0 0.0
    %836 = vmatpush.xpose.msra.mxu0 0.0
    %837 = vmatpush.xpose.msra.mxu0 0.0
    %838 = vmatpush.xpose.msra.mxu0 0.0
    %839 = vmatpush.xpose.msra.mxu0 0.0
    %840 = vmatpush.xpose.msra.mxu0 0.0
    %841 = vmatpush.xpose.msra.mxu0 0.0
    %842 = vmatpush.xpose.msra.mxu0 %v825
    %843 = vmatmul.f32.gmra.mxu0 %v823
    %v844 = vpop.f32.mrf.mxu0
    %v845 = vadd.f32 0.0, %v844
    %846 = vdwg.mxu0
    %v847 = vmul.f32 %v817, 0.5
    %v848 = vmul.f32 %v845, 0.5
    %v849 = vadd.f32 %v847, %v204
    %v850 = vadd.f32 %v848, %v205
    %v851 = vsel %vm210, %v849, -inf
    %852 = vmax.xlane.f32.xlu0 %v851
    %v853 = vpop.xlane.xlu0 %852
    %v854 = vsel %vm210, %v850, -inf
    %855 = vmax.xlane.f32.xlu0 %v854
    %v856 = vpop.xlane.xlu0 %855
    %v857 = vsub.f32 %v849, %v853
    %v858 = vsub.f32 %v850, %v856
    %v859 = vmul.f32 %v857, 1.442695
    %v860 = vpow.pop %v859
    %v861 = vmul.f32 %v858, 1.442695
    %v862 = vpow.pop %v861
    %v863 = vsel %vm210, %v860, 0.0
    %864 = vadd.xlane.f32.xlu0 %v863
    %v865 = vpop.xlane.xlu0 %864
    %v866 = vsel %vm210, %v862, 0.0
    %867 = vadd.xlane.f32.xlu0 %v866
    %v868 = vpop.xlane.xlu0 %867
    %v869 = vrcp.pop %v865
    %v870 = vmul.f32 %v865, %v869
    %v871 = vsub.f32 1.0, %v870
    %v872 = vmul.f32 %v869, %v871
    %v873 = vadd.f32 %v869, %v872
    %vm874 = vweird.f32 %v865
    %vm875 = vweird.f32 %v869
    %vm876 = vmor %vm874, %vm875
    %v877 = vsel %vm876, %v869, %v873
    %v878 = vand.u32 2147483647, %v865
    %vm879 = vcmp.eq.f32.partialorder %v878, 8.507059e+37
    %v880 = vand.u32 %v865, 2147483648
    %v881 = vor.u32 1.1754944e-38, %v880
    %v882 = vsel %vm879, %v881, %v877
    %v883 = vmul.f32 %v860, %v882
    %v884 = vrcp.pop %v868
    %v885 = vmul.f32 %v868, %v884
    %v886 = vsub.f32 1.0, %v885
    %v887 = vmul.f32 %v884, %v886
    %v888 = vadd.f32 %v884, %v887
    %vm889 = vweird.f32 %v868
    %vm890 = vweird.f32 %v884
    %vm891 = vmor %vm889, %vm890
    %v892 = vsel %vm891, %v884, %v888
    %v893 = vand.u32 2147483647, %v868
    %vm894 = vcmp.eq.f32.partialorder %v893, 8.507059e+37
    %v895 = vand.u32 %v868, 2147483648
    %v896 = vor.u32 1.1754944e-38, %v895
    %v897 = vsel %vm894, %v896, %v892
    %v898 = vmul.f32 %v862, %v897
    %899 = vrot.lane.b32.xlu0 %v117, 16
    %v900 = vpop.permute.xlu0 %899
    %v903 = vsel %vm210, %v883, 0
    %905 = vmatpush.msra.mxu0 0.0
    %906 = vmatpush.msra.mxu0 0.0
    %907 = vmatpush.msra.mxu0 0.0
    %908 = vmatpush.msra.mxu0 0.0
    %909 = vmatpush.msra.mxu0 0.0
    %910 = vmatpush.msra.mxu0 0.0
    %911 = vmatpush.msra.mxu0 0.0
    %912 = vmatpush.msra.mxu0 0.0
    %913 = vmatpush.msra.mxu0 0.0
    %914 = vmatpush.msra.mxu0 0.0
    %915 = vmatpush.msra.mxu0 0.0
    %916 = vmatpush.msra.mxu0 0.0
    %917 = vmatpush.msra.mxu0 0.0
    %918 = vmatpush.msra.mxu0 0.0
    %919 = vmatpush.msra.mxu0 0.0
    %920 = vmatpush.msra.mxu0 %v900
    %921 = vmatmul.f32.gmra.mxu0 %v903
    %v922 = vpop.f32.mrf.mxu0
    %v923 = vadd.f32 0.0, %v922
    %924 = vdwg.mxu0
    %925 = vrot.lane.b32.xlu0 %v120, 16
    %v926 = vpop.permute.xlu0 %925
    %v929 = vsel %vm210, %v898, 0
    %931 = vmatpush.msra.mxu0 0.0
    %932 = vmatpush.msra.mxu0 0.0
    %933 = vmatpush.msra.mxu0 0.0
    %934 = vmatpush.msra.mxu0 0.0
    %935 = vmatpush.msra.mxu0 0.0
    %936 = vmatpush.msra.mxu0 0.0
    %937 = vmatpush.msra.mxu0 0.0
    %938 = vmatpush.msra.mxu0 0.0
    %939 = vmatpush.msra.mxu0 0.0
    %940 = vmatpush.msra.mxu0 0.0
    %941 = vmatpush.msra.mxu0 0.0
    %942 = vmatpush.msra.mxu0 0.0
    %943 = vmatpush.msra.mxu0 0.0
    %944 = vmatpush.msra.mxu0 0.0
    %945 = vmatpush.msra.mxu0 0.0
    %946 = vmatpush.msra.mxu0 %v926
    %947 = vmatmul.f32.gmra.mxu0 %v929
    %v948 = vpop.f32.mrf.mxu0
    %v949 = vadd.f32 0.0, %v948
    %950 = vdwg.mxu0
    %951 = vrot.lane.b32.xlu0 %v117, 108
    %v952 = vpop.permute.xlu0 %951
    %953 = vrot.lane.b32.xlu0 %v117, 60
    %v954 = vpop.permute.xlu0 %953
    %v955 = vsel %vm148, %v952, 0
    %v957 = vsel %vm148, %v954, 0
    %959 = vmatpush.xpose.msra.mxu0 0.0
    %960 = vmatpush.xpose.msra.mxu0 0.0
    %961 = vmatpush.xpose.msra.mxu0 0.0
    %962 = vmatpush.xpose.msra.mxu0 0.0
    %963 = vmatpush.xpose.msra.mxu0 0.0
    %964 = vmatpush.xpose.msra.mxu0 0.0
    %965 = vmatpush.xpose.msra.mxu0 0.0
    %966 = vmatpush.xpose.msra.mxu0 0.0
    %967 = vmatpush.xpose.msra.mxu0 0.0
    %968 = vmatpush.xpose.msra.mxu0 0.0
    %969 = vmatpush.xpose.msra.mxu0 0.0
    %970 = vmatpush.xpose.msra.mxu0 0.0
    %971 = vmatpush.xpose.msra.mxu0 0.0
    %972 = vmatpush.xpose.msra.mxu0 0.0
    %973 = vmatpush.xpose.msra.mxu0 0.0
    %974 = vmatpush.xpose.msra.mxu0 %v957
    %975 = vmatmul.f32.gmra.mxu0 %v955
    %v976 = vpop.f32.mrf.mxu0
    %v977 = vadd.f32 0.0, %v976
    %978 = vdwg.mxu0
    %979 = vrot.lane.b32.xlu0 %v120, 108
    %v980 = vpop.permute.xlu0 %979
    %981 = vrot.lane.b32.xlu0 %v120, 60
    %v982 = vpop.permute.xlu0 %981
    %v983 = vsel %vm148, %v980, 0
    %v985 = vsel %vm148, %v982, 0
    %987 = vmatpush.xpose.msra.mxu0 0.0
    %988 = vmatpush.xpose.msra.mxu0 0.0
    %989 = vmatpush.xpose.msra.mxu0 0.0
    %990 = vmatpush.xpose.msra.mxu0 0.0
    %991 = vmatpush.xpose.msra.mxu0 0.0
    %992 = vmatpush.xpose.msra.mxu0 0.0
    %993 = vmatpush.xpose.msra.mxu0 0.0
    %994 = vmatpush.xpose.msra.mxu0 0.0
    %995 = vmatpush.xpose.msra.mxu0 0.0
    %996 = vmatpush.xpose.msra.mxu0 0.0
    %997 = vmatpush.xpose.msra.mxu0 0.0
    %998 = vmatpush.xpose.msra.mxu0 0.0
    %999 = vmatpush.xpose.msra.mxu0 0.0
    %1000 = vmatpush.xpose.msra.mxu0 0.0
    %1001 = vmatpush.xpose.msra.mxu0 0.0
    %1002 = vmatpush.xpose.msra.mxu0 %v985
    %1003 = vmatmul.f32.gmra.mxu0 %v983
    %v1004 = vpop.f32.mrf.mxu0
    %v1005 = vadd.f32 0.0, %v1004
    %1006 = vdwg.mxu0
    %v1007 = vmul.f32 %v977, 0.5
    %v1008 = vmul.f32 %v1005, 0.5
    %v1009 = vadd.f32 %v1007, %v204
    %v1010 = vadd.f32 %v1008, %v205
    %v1011 = vsel %vm210, %v1009, -inf
    %1012 = vmax.xlane.f32.xlu0 %v1011
    %v1013 = vpop.xlane.xlu0 %1012
    %v1014 = vsel %vm210, %v1010, -inf
    %1015 = vmax.xlane.f32.xlu0 %v1014
    %v1016 = vpop.xlane.xlu0 %1015
    %v1017 = vsub.f32 %v1009, %v1013
    %v1018 = vsub.f32 %v1010, %v1016
    %v1019 = vmul.f32 %v1017, 1.442695
    %v1020 = vpow.pop %v1019
    %v1021 = vmul.f32 %v1018, 1.442695
    %v1022 = vpow.pop %v1021
    %v1023 = vsel %vm210, %v1020, 0.0
    %1024 = vadd.xlane.f32.xlu0 %v1023
    %v1025 = vpop.xlane.xlu0 %1024
    %v1026 = vsel %vm210, %v1022, 0.0
    %1027 = vadd.xlane.f32.xlu0 %v1026
    %v1028 = vpop.xlane.xlu0 %1027
    %v1029 = vrcp.pop %v1025
    %v1030 = vmul.f32 %v1025, %v1029
    %v1031 = vsub.f32 1.0, %v1030
    %v1032 = vmul.f32 %v1029, %v1031
    %v1033 = vadd.f32 %v1029, %v1032
    %vm1034 = vweird.f32 %v1025
    %vm1035 = vweird.f32 %v1029
    %vm1036 = vmor %vm1034, %vm1035
    %v1037 = vsel %vm1036, %v1029, %v1033
    %v1038 = vand.u32 2147483647, %v1025
    %vm1039 = vcmp.eq.f32.partialorder %v1038, 8.507059e+37
    %v1040 = vand.u32 %v1025, 2147483648
    %v1041 = vor.u32 1.1754944e-38, %v1040
    %v1042 = vsel %vm1039, %v1041, %v1037
    %v1043 = vmul.f32 %v1020, %v1042
    %v1044 = vrcp.pop %v1028
    %v1045 = vmul.f32 %v1028, %v1044
    %v1046 = vsub.f32 1.0, %v1045
    %v1047 = vmul.f32 %v1044, %v1046
    %v1048 = vadd.f32 %v1044, %v1047
    %vm1049 = vweird.f32 %v1028
    %vm1050 = vweird.f32 %v1044
    %vm1051 = vmor %vm1049, %vm1050
    %v1052 = vsel %vm1051, %v1044, %v1048
    %v1053 = vand.u32 2147483647, %v1028
    %vm1054 = vcmp.eq.f32.partialorder %v1053, 8.507059e+37
    %v1055 = vand.u32 %v1028, 2147483648
    %v1056 = vor.u32 1.1754944e-38, %v1055
    %v1057 = vsel %vm1054, %v1056, %v1052
    %v1058 = vmul.f32 %v1022, %v1057
    %1059 = vrot.lane.b32.xlu0 %v117, 12
    %v1060 = vpop.permute.xlu0 %1059
    %v1063 = vsel %vm210, %v1043, 0
    %1065 = vmatpush.msra.mxu0 0.0
    %1066 = vmatpush.msra.mxu0 0.0
    %1067 = vmatpush.msra.mxu0 0.0
    %1068 = vmatpush.msra.mxu0 0.0
    %1069 = vmatpush.msra.mxu0 0.0
    %1070 = vmatpush.msra.mxu0 0.0
    %1071 = vmatpush.msra.mxu0 0.0
    %1072 = vmatpush.msra.mxu0 0.0
    %1073 = vmatpush.msra.mxu0 0.0
    %1074 = vmatpush.msra.mxu0 0.0
    %1075 = vmatpush.msra.mxu0 0.0
    %1076 = vmatpush.msra.mxu0 0.0
    %1077 = vmatpush.msra.mxu0 0.0
    %1078 = vmatpush.msra.mxu0 0.0
    %1079 = vmatpush.msra.mxu0 0.0
    %1080 = vmatpush.msra.mxu0 %v1060
    %1081 = vmatmul.f32.gmra.mxu0 %v1063
    %v1082 = vpop.f32.mrf.mxu0
    %v1083 = vadd.f32 0.0, %v1082
    %1084 = vdwg.mxu0
    %1085 = vrot.lane.b32.xlu0 %v120, 12
    %v1086 = vpop.permute.xlu0 %1085
    %v1089 = vsel %vm210, %v1058, 0
    %1091 = vmatpush.msra.mxu0 0.0
    %1092 = vmatpush.msra.mxu0 0.0
    %1093 = vmatpush.msra.mxu0 0.0
    %1094 = vmatpush.msra.mxu0 0.0
    %1095 = vmatpush.msra.mxu0 0.0
    %1096 = vmatpush.msra.mxu0 0.0
    %1097 = vmatpush.msra.mxu0 0.0
    %1098 = vmatpush.msra.mxu0 0.0
    %1099 = vmatpush.msra.mxu0 0.0
    %1100 = vmatpush.msra.mxu0 0.0
    %1101 = vmatpush.msra.mxu0 0.0
    %1102 = vmatpush.msra.mxu0 0.0
    %1103 = vmatpush.msra.mxu0 0.0
    %1104 = vmatpush.msra.mxu0 0.0
    %1105 = vmatpush.msra.mxu0 0.0
    %1106 = vmatpush.msra.mxu0 %v1086
    %1107 = vmatmul.f32.gmra.mxu0 %v1089
    %v1108 = vpop.f32.mrf.mxu0
    %v1109 = vadd.f32 0.0, %v1108
    %1110 = vdwg.mxu0
    %1111 = vrot.lane.b32.xlu0 %v117, 104
    %v1112 = vpop.permute.xlu0 %1111
    %1113 = vrot.lane.b32.xlu0 %v117, 56
    %v1114 = vpop.permute.xlu0 %1113
    %v1115 = vsel %vm148, %v1112, 0
    %v1117 = vsel %vm148, %v1114, 0
    %1119 = vmatpush.xpose.msra.mxu0 0.0
    %1120 = vmatpush.xpose.msra.mxu0 0.0
    %1121 = vmatpush.xpose.msra.mxu0 0.0
    %1122 = vmatpush.xpose.msra.mxu0 0.0
    %1123 = vmatpush.xpose.msra.mxu0 0.0
    %1124 = vmatpush.xpose.msra.mxu0 0.0
    %1125 = vmatpush.xpose.msra.mxu0 0.0
    %1126 = vmatpush.xpose.msra.mxu0 0.0
    %1127 = vmatpush.xpose.msra.mxu0 0.0
    %1128 = vmatpush.xpose.msra.mxu0 0.0
    %1129 = vmatpush.xpose.msra.mxu0 0.0
    %1130 = vmatpush.xpose.msra.mxu0 0.0
    %1131 = vmatpush.xpose.msra.mxu0 0.0
    %1132 = vmatpush.xpose.msra.mxu0 0.0
    %1133 = vmatpush.xpose.msra.mxu0 0.0
    %1134 = vmatpush.xpose.msra.mxu0 %v1117
    %1135 = vmatmul.f32.gmra.mxu0 %v1115
    %v1136 = vpop.f32.mrf.mxu0
    %v1137 = vadd.f32 0.0, %v1136
    %1138 = vdwg.mxu0
    %1139 = vrot.lane.b32.xlu0 %v120, 104
    %v1140 = vpop.permute.xlu0 %1139
    %1141 = vrot.lane.b32.xlu0 %v120, 56
    %v1142 = vpop.permute.xlu0 %1141
    %v1143 = vsel %vm148, %v1140, 0
    %v1145 = vsel %vm148, %v1142, 0
    %1147 = vmatpush.xpose.msra.mxu0 0.0
    %1148 = vmatpush.xpose.msra.mxu0 0.0
    %1149 = vmatpush.xpose.msra.mxu0 0.0
    %1150 = vmatpush.xpose.msra.mxu0 0.0
    %1151 = vmatpush.xpose.msra.mxu0 0.0
    %1152 = vmatpush.xpose.msra.mxu0 0.0
    %1153 = vmatpush.xpose.msra.mxu0 0.0
    %1154 = vmatpush.xpose.msra.mxu0 0.0
    %1155 = vmatpush.xpose.msra.mxu0 0.0
    %1156 = vmatpush.xpose.msra.mxu0 0.0
    %1157 = vmatpush.xpose.msra.mxu0 0.0
    %1158 = vmatpush.xpose.msra.mxu0 0.0
    %1159 = vmatpush.xpose.msra.mxu0 0.0
    %1160 = vmatpush.xpose.msra.mxu0 0.0
    %1161 = vmatpush.xpose.msra.mxu0 0.0
    %1162 = vmatpush.xpose.msra.mxu0 %v1145
    %1163 = vmatmul.f32.gmra.mxu0 %v1143
    %v1164 = vpop.f32.mrf.mxu0
    %v1165 = vadd.f32 0.0, %v1164
    %1166 = vdwg.mxu0
    %v1167 = vmul.f32 %v1137, 0.5
    %v1168 = vmul.f32 %v1165, 0.5
    %v1169 = vadd.f32 %v1167, %v204
    %v1170 = vadd.f32 %v1168, %v205
    %v1171 = vsel %vm210, %v1169, -inf
    %1172 = vmax.xlane.f32.xlu0 %v1171
    %v1173 = vpop.xlane.xlu0 %1172
    %v1174 = vsel %vm210, %v1170, -inf
    %1175 = vmax.xlane.f32.xlu0 %v1174
    %v1176 = vpop.xlane.xlu0 %1175
    %v1177 = vsub.f32 %v1169, %v1173
    %v1178 = vsub.f32 %v1170, %v1176
    %v1179 = vmul.f32 %v1177, 1.442695
    %v1180 = vpow.pop %v1179
    %v1181 = vmul.f32 %v1178, 1.442695
    %v1182 = vpow.pop %v1181
    %v1183 = vsel %vm210, %v1180, 0.0
    %1184 = vadd.xlane.f32.xlu0 %v1183
    %v1185 = vpop.xlane.xlu0 %1184
    %v1186 = vsel %vm210, %v1182, 0.0
    %1187 = vadd.xlane.f32.xlu0 %v1186
    %v1188 = vpop.xlane.xlu0 %1187
    %v1189 = vrcp.pop %v1185
    %v1190 = vmul.f32 %v1185, %v1189
    %v1191 = vsub.f32 1.0, %v1190
    %v1192 = vmul.f32 %v1189, %v1191
    %v1193 = vadd.f32 %v1189, %v1192
    %vm1194 = vweird.f32 %v1185
    %vm1195 = vweird.f32 %v1189
    %vm1196 = vmor %vm1194, %vm1195
    %v1197 = vsel %vm1196, %v1189, %v1193
    %v1198 = vand.u32 2147483647, %v1185
    %vm1199 = vcmp.eq.f32.partialorder %v1198, 8.507059e+37
    %v1200 = vand.u32 %v1185, 2147483648
    %v1201 = vor.u32 1.1754944e-38, %v1200
    %v1202 = vsel %vm1199, %v1201, %v1197
    %v1203 = vmul.f32 %v1180, %v1202
    %v1204 = vrcp.pop %v1188
    %v1205 = vmul.f32 %v1188, %v1204
    %v1206 = vsub.f32 1.0, %v1205
    %v1207 = vmul.f32 %v1204, %v1206
    %v1208 = vadd.f32 %v1204, %v1207
    %vm1209 = vweird.f32 %v1188
    %vm1210 = vweird.f32 %v1204
    %vm1211 = vmor %vm1209, %vm1210
    %v1212 = vsel %vm1211, %v1204, %v1208
    %v1213 = vand.u32 2147483647, %v1188
    %vm1214 = vcmp.eq.f32.partialorder %v1213, 8.507059e+37
    %v1215 = vand.u32 %v1188, 2147483648
    %v1216 = vor.u32 1.1754944e-38, %v1215
    %v1217 = vsel %vm1214, %v1216, %v1212
    %v1218 = vmul.f32 %v1182, %v1217
    %1219 = vrot.lane.b32.xlu0 %v117, 8
    %v1220 = vpop.permute.xlu0 %1219
    %v1223 = vsel %vm210, %v1203, 0
    %1225 = vmatpush.msra.mxu0 0.0
    %1226 = vmatpush.msra.mxu0 0.0
    %1227 = vmatpush.msra.mxu0 0.0
    %1228 = vmatpush.msra.mxu0 0.0
    %1229 = vmatpush.msra.mxu0 0.0
    %1230 = vmatpush.msra.mxu0 0.0
    %1231 = vmatpush.msra.mxu0 0.0
    %1232 = vmatpush.msra.mxu0 0.0
    %1233 = vmatpush.msra.mxu0 0.0
    %1234 = vmatpush.msra.mxu0 0.0
    %1235 = vmatpush.msra.mxu0 0.0
    %1236 = vmatpush.msra.mxu0 0.0
    %1237 = vmatpush.msra.mxu0 0.0
    %1238 = vmatpush.msra.mxu0 0.0
    %1239 = vmatpush.msra.mxu0 0.0
    %1240 = vmatpush.msra.mxu0 %v1220
    %1241 = vmatmul.f32.gmra.mxu0 %v1223
    %v1242 = vpop.f32.mrf.mxu0
    %v1243 = vadd.f32 0.0, %v1242
    %1244 = vdwg.mxu0
    %1245 = vrot.lane.b32.xlu0 %v120, 8
    %v1246 = vpop.permute.xlu0 %1245
    %v1249 = vsel %vm210, %v1218, 0
    %1251 = vmatpush.msra.mxu0 0.0
    %1252 = vmatpush.msra.mxu0 0.0
    %1253 = vmatpush.msra.mxu0 0.0
    %1254 = vmatpush.msra.mxu0 0.0
    %1255 = vmatpush.msra.mxu0 0.0
    %1256 = vmatpush.msra.mxu0 0.0
    %1257 = vmatpush.msra.mxu0 0.0
    %1258 = vmatpush.msra.mxu0 0.0
    %1259 = vmatpush.msra.mxu0 0.0
    %1260 = vmatpush.msra.mxu0 0.0
    %1261 = vmatpush.msra.mxu0 0.0
    %1262 = vmatpush.msra.mxu0 0.0
    %1263 = vmatpush.msra.mxu0 0.0
    %1264 = vmatpush.msra.mxu0 0.0
    %1265 = vmatpush.msra.mxu0 0.0
    %1266 = vmatpush.msra.mxu0 %v1246
    %1267 = vmatmul.f32.gmra.mxu0 %v1249
    %v1268 = vpop.f32.mrf.mxu0
    %v1269 = vadd.f32 0.0, %v1268
    %1270 = vdwg.mxu0
    %1271 = vrot.lane.b32.xlu0 %v117, 100
    %v1272 = vpop.permute.xlu0 %1271
    %1273 = vrot.lane.b32.xlu0 %v117, 52
    %v1274 = vpop.permute.xlu0 %1273
    %v1275 = vsel %vm148, %v1272, 0
    %v1277 = vsel %vm148, %v1274, 0
    %1279 = vmatpush.xpose.msra.mxu0 0.0
    %1280 = vmatpush.xpose.msra.mxu0 0.0
    %1281 = vmatpush.xpose.msra.mxu0 0.0
    %1282 = vmatpush.xpose.msra.mxu0 0.0
    %1283 = vmatpush.xpose.msra.mxu0 0.0
    %1284 = vmatpush.xpose.msra.mxu0 0.0
    %1285 = vmatpush.xpose.msra.mxu0 0.0
    %1286 = vmatpush.xpose.msra.mxu0 0.0
    %1287 = vmatpush.xpose.msra.mxu0 0.0
    %1288 = vmatpush.xpose.msra.mxu0 0.0
    %1289 = vmatpush.xpose.msra.mxu0 0.0
    %1290 = vmatpush.xpose.msra.mxu0 0.0
    %1291 = vmatpush.xpose.msra.mxu0 0.0
    %1292 = vmatpush.xpose.msra.mxu0 0.0
    %1293 = vmatpush.xpose.msra.mxu0 0.0
    %1294 = vmatpush.xpose.msra.mxu0 %v1277
    %1295 = vmatmul.f32.gmra.mxu0 %v1275
    %v1296 = vpop.f32.mrf.mxu0
    %v1297 = vadd.f32 0.0, %v1296
    %1298 = vdwg.mxu0
    %1299 = vrot.lane.b32.xlu0 %v120, 100
    %v1300 = vpop.permute.xlu0 %1299
    %1301 = vrot.lane.b32.xlu0 %v120, 52
    %v1302 = vpop.permute.xlu0 %1301
    %v1303 = vsel %vm148, %v1300, 0
    %v1305 = vsel %vm148, %v1302, 0
    %1307 = vmatpush.xpose.msra.mxu0 0.0
    %1308 = vmatpush.xpose.msra.mxu0 0.0
    %1309 = vmatpush.xpose.msra.mxu0 0.0
    %1310 = vmatpush.xpose.msra.mxu0 0.0
    %1311 = vmatpush.xpose.msra.mxu0 0.0
    %1312 = vmatpush.xpose.msra.mxu0 0.0
    %1313 = vmatpush.xpose.msra.mxu0 0.0
    %1314 = vmatpush.xpose.msra.mxu0 0.0
    %1315 = vmatpush.xpose.msra.mxu0 0.0
    %1316 = vmatpush.xpose.msra.mxu0 0.0
    %1317 = vmatpush.xpose.msra.mxu0 0.0
    %1318 = vmatpush.xpose.msra.mxu0 0.0
    %1319 = vmatpush.xpose.msra.mxu0 0.0
    %1320 = vmatpush.xpose.msra.mxu0 0.0
    %1321 = vmatpush.xpose.msra.mxu0 0.0
    %1322 = vmatpush.xpose.msra.mxu0 %v1305
    %1323 = vmatmul.f32.gmra.mxu0 %v1303
    %v1324 = vpop.f32.mrf.mxu0
    %v1325 = vadd.f32 0.0, %v1324
    %1326 = vdwg.mxu0
    %v1327 = vmul.f32 %v1297, 0.5
    %v1328 = vmul.f32 %v1325, 0.5
    %v1329 = vadd.f32 %v1327, %v204
    %v1330 = vadd.f32 %v1328, %v205
    %v1331 = vsel %vm210, %v1329, -inf
    %1332 = vmax.xlane.f32.xlu0 %v1331
    %v1333 = vpop.xlane.xlu0 %1332
    %v1334 = vsel %vm210, %v1330, -inf
    %1335 = vmax.xlane.f32.xlu0 %v1334
    %v1336 = vpop.xlane.xlu0 %1335
    %v1337 = vsub.f32 %v1329, %v1333
    %v1338 = vsub.f32 %v1330, %v1336
    %v1339 = vmul.f32 %v1337, 1.442695
    %v1340 = vpow.pop %v1339
    %v1341 = vmul.f32 %v1338, 1.442695
    %v1342 = vpow.pop %v1341
    %v1343 = vsel %vm210, %v1340, 0.0
    %1344 = vadd.xlane.f32.xlu0 %v1343
    %v1345 = vpop.xlane.xlu0 %1344
    %v1346 = vsel %vm210, %v1342, 0.0
    %1347 = vadd.xlane.f32.xlu0 %v1346
    %v1348 = vpop.xlane.xlu0 %1347
    %v1349 = vrcp.pop %v1345
    %v1350 = vmul.f32 %v1345, %v1349
    %v1351 = vsub.f32 1.0, %v1350
    %v1352 = vmul.f32 %v1349, %v1351
    %v1353 = vadd.f32 %v1349, %v1352
    %vm1354 = vweird.f32 %v1345
    %vm1355 = vweird.f32 %v1349
    %vm1356 = vmor %vm1354, %vm1355
    %v1357 = vsel %vm1356, %v1349, %v1353
    %v1358 = vand.u32 2147483647, %v1345
    %vm1359 = vcmp.eq.f32.partialorder %v1358, 8.507059e+37
    %v1360 = vand.u32 %v1345, 2147483648
    %v1361 = vor.u32 1.1754944e-38, %v1360
    %v1362 = vsel %vm1359, %v1361, %v1357
    %v1363 = vmul.f32 %v1340, %v1362
    %v1364 = vrcp.pop %v1348
    %v1365 = vmul.f32 %v1348, %v1364
    %v1366 = vsub.f32 1.0, %v1365
    %v1367 = vmul.f32 %v1364, %v1366
    %v1368 = vadd.f32 %v1364, %v1367
    %vm1369 = vweird.f32 %v1348
    %vm1370 = vweird.f32 %v1364
    %vm1371 = vmor %vm1369, %vm1370
    %v1372 = vsel %vm1371, %v1364, %v1368
    %v1373 = vand.u32 2147483647, %v1348
    %vm1374 = vcmp.eq.f32.partialorder %v1373, 8.507059e+37
    %v1375 = vand.u32 %v1348, 2147483648
    %v1376 = vor.u32 1.1754944e-38, %v1375
    %v1377 = vsel %vm1374, %v1376, %v1372
    %v1378 = vmul.f32 %v1342, %v1377
    %1379 = vrot.lane.b32.xlu0 %v117, 4
    %v1380 = vpop.permute.xlu0 %1379
    %v1383 = vsel %vm210, %v1363, 0
    %1385 = vmatpush.msra.mxu0 0.0
    %1386 = vmatpush.msra.mxu0 0.0
    %1387 = vmatpush.msra.mxu0 0.0
    %1388 = vmatpush.msra.mxu0 0.0
    %1389 = vmatpush.msra.mxu0 0.0
    %1390 = vmatpush.msra.mxu0 0.0
    %1391 = vmatpush.msra.mxu0 0.0
    %1392 = vmatpush.msra.mxu0 0.0
    %1393 = vmatpush.msra.mxu0 0.0
    %1394 = vmatpush.msra.mxu0 0.0
    %1395 = vmatpush.msra.mxu0 0.0
    %1396 = vmatpush.msra.mxu0 0.0
    %1397 = vmatpush.msra.mxu0 0.0
    %1398 = vmatpush.msra.mxu0 0.0
    %1399 = vmatpush.msra.mxu0 0.0
    %1400 = vmatpush.msra.mxu0 %v1380
    %1401 = vmatmul.f32.gmra.mxu0 %v1383
    %v1402 = vpop.f32.mrf.mxu0
    %v1403 = vadd.f32 0.0, %v1402
    %1404 = vdwg.mxu0
    %1405 = vrot.lane.b32.xlu0 %v120, 4
    %v1406 = vpop.permute.xlu0 %1405
    %v1409 = vsel %vm210, %v1378, 0
    %1411 = vmatpush.msra.mxu0 0.0
    %1412 = vmatpush.msra.mxu0 0.0
    %1413 = vmatpush.msra.mxu0 0.0
    %1414 = vmatpush.msra.mxu0 0.0
    %1415 = vmatpush.msra.mxu0 0.0
    %1416 = vmatpush.msra.mxu0 0.0
    %1417 = vmatpush.msra.mxu0 0.0
    %1418 = vmatpush.msra.mxu0 0.0
    %1419 = vmatpush.msra.mxu0 0.0
    %1420 = vmatpush.msra.mxu0 0.0
    %1421 = vmatpush.msra.mxu0 0.0
    %1422 = vmatpush.msra.mxu0 0.0
    %1423 = vmatpush.msra.mxu0 0.0
    %1424 = vmatpush.msra.mxu0 0.0
    %1425 = vmatpush.msra.mxu0 0.0
    %1426 = vmatpush.msra.mxu0 %v1406
    %1427 = vmatmul.f32.gmra.mxu0 %v1409
    %v1428 = vpop.f32.mrf.mxu0
    %v1429 = vadd.f32 0.0, %v1428
    %1430 = vdwg.mxu0
    %1431 = vrot.lane.b32.xlu0 %v117, 96
    %v1432 = vpop.permute.xlu0 %1431
    %1433 = vrot.lane.b32.xlu0 %v117, 48
    %v1434 = vpop.permute.xlu0 %1433
    %v1435 = vsel %vm148, %v1432, 0
    %v1437 = vsel %vm148, %v1434, 0
    %1439 = vmatpush.xpose.msra.mxu0 0.0
    %1440 = vmatpush.xpose.msra.mxu0 0.0
    %1441 = vmatpush.xpose.msra.mxu0 0.0
    %1442 = vmatpush.xpose.msra.mxu0 0.0
    %1443 = vmatpush.xpose.msra.mxu0 0.0
    %1444 = vmatpush.xpose.msra.mxu0 0.0
    %1445 = vmatpush.xpose.msra.mxu0 0.0
    %1446 = vmatpush.xpose.msra.mxu0 0.0
    %1447 = vmatpush.xpose.msra.mxu0 0.0
    %1448 = vmatpush.xpose.msra.mxu0 0.0
    %1449 = vmatpush.xpose.msra.mxu0 0.0
    %1450 = vmatpush.xpose.msra.mxu0 0.0
    %1451 = vmatpush.xpose.msra.mxu0 0.0
    %1452 = vmatpush.xpose.msra.mxu0 0.0
    %1453 = vmatpush.xpose.msra.mxu0 0.0
    %1454 = vmatpush.xpose.msra.mxu0 %v1437
    %1455 = vmatmul.f32.gmra.mxu0 %v1435
    %v1456 = vpop.f32.mrf.mxu0
    %v1457 = vadd.f32 0.0, %v1456
    %1458 = vdwg.mxu0
    %1459 = vrot.lane.b32.xlu0 %v120, 96
    %v1460 = vpop.permute.xlu0 %1459
    %1461 = vrot.lane.b32.xlu0 %v120, 48
    %v1462 = vpop.permute.xlu0 %1461
    %v1463 = vsel %vm148, %v1460, 0
    %v1465 = vsel %vm148, %v1462, 0
    %1467 = vmatpush.xpose.msra.mxu0 0.0
    %1468 = vmatpush.xpose.msra.mxu0 0.0
    %1469 = vmatpush.xpose.msra.mxu0 0.0
    %1470 = vmatpush.xpose.msra.mxu0 0.0
    %1471 = vmatpush.xpose.msra.mxu0 0.0
    %1472 = vmatpush.xpose.msra.mxu0 0.0
    %1473 = vmatpush.xpose.msra.mxu0 0.0
    %1474 = vmatpush.xpose.msra.mxu0 0.0
    %1475 = vmatpush.xpose.msra.mxu0 0.0
    %1476 = vmatpush.xpose.msra.mxu0 0.0
    %1477 = vmatpush.xpose.msra.mxu0 0.0
    %1478 = vmatpush.xpose.msra.mxu0 0.0
    %1479 = vmatpush.xpose.msra.mxu0 0.0
    %1480 = vmatpush.xpose.msra.mxu0 0.0
    %1481 = vmatpush.xpose.msra.mxu0 0.0
    %1482 = vmatpush.xpose.msra.mxu0 %v1465
    %1483 = vmatmul.f32.gmra.mxu0 %v1463
    %v1484 = vpop.f32.mrf.mxu0
    %v1485 = vadd.f32 0.0, %v1484
    %1486 = vdwg.mxu0
    %v1487 = vmul.f32 %v1457, 0.5
    %v1488 = vmul.f32 %v1485, 0.5
    %v1489 = vadd.f32 %v1487, %v204
    %v1490 = vadd.f32 %v1488, %v205
    %v1491 = vsel %vm210, %v1489, -inf
    %1492 = vmax.xlane.f32.xlu0 %v1491
    %v1493 = vpop.xlane.xlu0 %1492
    %v1494 = vsel %vm210, %v1490, -inf
    %1495 = vmax.xlane.f32.xlu0 %v1494
    %v1496 = vpop.xlane.xlu0 %1495
    %v1497 = vsub.f32 %v1489, %v1493
    %v1498 = vsub.f32 %v1490, %v1496
    %v1499 = vmul.f32 %v1497, 1.442695
    %v1500 = vpow.pop %v1499
    %v1501 = vmul.f32 %v1498, 1.442695
    %v1502 = vpow.pop %v1501
    %v1503 = vsel %vm210, %v1500, 0.0
    %1504 = vadd.xlane.f32.xlu0 %v1503
    %v1505 = vpop.xlane.xlu0 %1504
    %v1506 = vsel %vm210, %v1502, 0.0
    %1507 = vadd.xlane.f32.xlu0 %v1506
    %v1508 = vpop.xlane.xlu0 %1507
    %v1509 = vrcp.pop %v1505
    %v1510 = vmul.f32 %v1505, %v1509
    %v1511 = vsub.f32 1.0, %v1510
    %v1512 = vmul.f32 %v1509, %v1511
    %v1513 = vadd.f32 %v1509, %v1512
    %vm1514 = vweird.f32 %v1505
    %vm1515 = vweird.f32 %v1509
    %vm1516 = vmor %vm1514, %vm1515
    %v1517 = vsel %vm1516, %v1509, %v1513
    %v1518 = vand.u32 2147483647, %v1505
    %vm1519 = vcmp.eq.f32.partialorder %v1518, 8.507059e+37
    %v1520 = vand.u32 %v1505, 2147483648
    %v1521 = vor.u32 1.1754944e-38, %v1520
    %v1522 = vsel %vm1519, %v1521, %v1517
    %v1523 = vmul.f32 %v1500, %v1522
    %v1524 = vrcp.pop %v1508
    %v1525 = vmul.f32 %v1508, %v1524
    %v1526 = vsub.f32 1.0, %v1525
    %v1527 = vmul.f32 %v1524, %v1526
    %v1528 = vadd.f32 %v1524, %v1527
    %vm1529 = vweird.f32 %v1508
    %vm1530 = vweird.f32 %v1524
    %vm1531 = vmor %vm1529, %vm1530
    %v1532 = vsel %vm1531, %v1524, %v1528
    %v1533 = vand.u32 2147483647, %v1508
    %vm1534 = vcmp.eq.f32.partialorder %v1533, 8.507059e+37
    %v1535 = vand.u32 %v1508, 2147483648
    %v1536 = vor.u32 1.1754944e-38, %v1535
    %v1537 = vsel %vm1534, %v1536, %v1532
    %v1538 = vmul.f32 %v1502, %v1537
    %v1540 = vsel %vm210, %v1523, 0
    %1542 = vmatpush.msra.mxu0 0.0
    %1543 = vmatpush.msra.mxu0 0.0
    %1544 = vmatpush.msra.mxu0 0.0
    %1545 = vmatpush.msra.mxu0 0.0
    %1546 = vmatpush.msra.mxu0 0.0
    %1547 = vmatpush.msra.mxu0 0.0
    %1548 = vmatpush.msra.mxu0 0.0
    %1549 = vmatpush.msra.mxu0 0.0
    %1550 = vmatpush.msra.mxu0 0.0
    %1551 = vmatpush.msra.mxu0 0.0
    %1552 = vmatpush.msra.mxu0 0.0
    %1553 = vmatpush.msra.mxu0 0.0
    %1554 = vmatpush.msra.mxu0 0.0
    %1555 = vmatpush.msra.mxu0 0.0
    %1556 = vmatpush.msra.mxu0 0.0
    %1557 = vmatpush.msra.mxu0 %v140
    %1558 = vmatmul.f32.gmra.mxu0 %v1540
    %v1559 = vpop.f32.mrf.mxu0
    %v1560 = vadd.f32 0.0, %v1559
    %1561 = vdwg.mxu0
    %v1563 = vsel %vm210, %v1538, 0
    %1565 = vmatpush.msra.mxu0 0.0
    %1566 = vmatpush.msra.mxu0 0.0
    %1567 = vmatpush.msra.mxu0 0.0
    %1568 = vmatpush.msra.mxu0 0.0
    %1569 = vmatpush.msra.mxu0 0.0
    %1570 = vmatpush.msra.mxu0 0.0
    %1571 = vmatpush.msra.mxu0 0.0
    %1572 = vmatpush.msra.mxu0 0.0
    %1573 = vmatpush.msra.mxu0 0.0
    %1574 = vmatpush.msra.mxu0 0.0
    %1575 = vmatpush.msra.mxu0 0.0
    %1576 = vmatpush.msra.mxu0 0.0
    %1577 = vmatpush.msra.mxu0 0.0
    %1578 = vmatpush.msra.mxu0 0.0
    %1579 = vmatpush.msra.mxu0 0.0
    %1580 = vmatpush.msra.mxu0 %v143
    %1581 = vmatmul.f32.gmra.mxu0 %v1563
    %v1582 = vpop.f32.mrf.mxu0
    %v1583 = vadd.f32 0.0, %v1582
    %1584 = vdwg.mxu0
    %1585 = vrot.lane.b32.xlu0 %v117, 92
    %v1586 = vpop.permute.xlu0 %1585
    %1587 = vrot.lane.b32.xlu0 %v117, 44
    %v1588 = vpop.permute.xlu0 %1587
    %v1589 = vsel %vm148, %v1586, 0
    %v1591 = vsel %vm148, %v1588, 0
    %1593 = vmatpush.xpose.msra.mxu0 0.0
    %1594 = vmatpush.xpose.msra.mxu0 0.0
    %1595 = vmatpush.xpose.msra.mxu0 0.0
    %1596 = vmatpush.xpose.msra.mxu0 0.0
    %1597 = vmatpush.xpose.msra.mxu0 0.0
    %1598 = vmatpush.xpose.msra.mxu0 0.0
    %1599 = vmatpush.xpose.msra.mxu0 0.0
    %1600 = vmatpush.xpose.msra.mxu0 0.0
    %1601 = vmatpush.xpose.msra.mxu0 0.0
    %1602 = vmatpush.xpose.msra.mxu0 0.0
    %1603 = vmatpush.xpose.msra.mxu0 0.0
    %1604 = vmatpush.xpose.msra.mxu0 0.0
    %1605 = vmatpush.xpose.msra.mxu0 0.0
    %1606 = vmatpush.xpose.msra.mxu0 0.0
    %1607 = vmatpush.xpose.msra.mxu0 0.0
    %1608 = vmatpush.xpose.msra.mxu0 %v1591
    %1609 = vmatmul.f32.gmra.mxu0 %v1589
    %v1610 = vpop.f32.mrf.mxu0
    %v1611 = vadd.f32 0.0, %v1610
    %1612 = vdwg.mxu0
    %1613 = vrot.lane.b32.xlu0 %v120, 92
    %v1614 = vpop.permute.xlu0 %1613
    %1615 = vrot.lane.b32.xlu0 %v120, 44
    %v1616 = vpop.permute.xlu0 %1615
    %v1617 = vsel %vm148, %v1614, 0
    %v1619 = vsel %vm148, %v1616, 0
    %1621 = vmatpush.xpose.msra.mxu0 0.0
    %1622 = vmatpush.xpose.msra.mxu0 0.0
    %1623 = vmatpush.xpose.msra.mxu0 0.0
    %1624 = vmatpush.xpose.msra.mxu0 0.0
    %1625 = vmatpush.xpose.msra.mxu0 0.0
    %1626 = vmatpush.xpose.msra.mxu0 0.0
    %1627 = vmatpush.xpose.msra.mxu0 0.0
    %1628 = vmatpush.xpose.msra.mxu0 0.0
    %1629 = vmatpush.xpose.msra.mxu0 0.0
    %1630 = vmatpush.xpose.msra.mxu0 0.0
    %1631 = vmatpush.xpose.msra.mxu0 0.0
    %1632 = vmatpush.xpose.msra.mxu0 0.0
    %1633 = vmatpush.xpose.msra.mxu0 0.0
    %1634 = vmatpush.xpose.msra.mxu0 0.0
    %1635 = vmatpush.xpose.msra.mxu0 0.0
    %1636 = vmatpush.xpose.msra.mxu0 %v1619
    %1637 = vmatmul.f32.gmra.mxu0 %v1617
    %v1638 = vpop.f32.mrf.mxu0
    %v1639 = vadd.f32 0.0, %v1638
    %1640 = vdwg.mxu0
    %v1641 = vmul.f32 %v1611, 0.5
    %v1642 = vmul.f32 %v1639, 0.5
    %v1643 = vadd.f32 %v1641, %v204
    %v1644 = vadd.f32 %v1642, %v205
    %v1645 = vsel %vm210, %v1643, -inf
    %1646 = vmax.xlane.f32.xlu0 %v1645
    %v1647 = vpop.xlane.xlu0 %1646
    %v1648 = vsel %vm210, %v1644, -inf
    %1649 = vmax.xlane.f32.xlu0 %v1648
    %v1650 = vpop.xlane.xlu0 %1649
    %v1651 = vsub.f32 %v1643, %v1647
    %v1652 = vsub.f32 %v1644, %v1650
    %v1653 = vmul.f32 %v1651, 1.442695
    %v1654 = vpow.pop %v1653
    %v1655 = vmul.f32 %v1652, 1.442695
    %v1656 = vpow.pop %v1655
    %v1657 = vsel %vm210, %v1654, 0.0
    %1658 = vadd.xlane.f32.xlu0 %v1657
    %v1659 = vpop.xlane.xlu0 %1658
    %v1660 = vsel %vm210, %v1656, 0.0
    %1661 = vadd.xlane.f32.xlu0 %v1660
    %v1662 = vpop.xlane.xlu0 %1661
    %v1663 = vrcp.pop %v1659
    %v1664 = vmul.f32 %v1659, %v1663
    %v1665 = vsub.f32 1.0, %v1664
    %v1666 = vmul.f32 %v1663, %v1665
    %v1667 = vadd.f32 %v1663, %v1666
    %vm1668 = vweird.f32 %v1659
    %vm1669 = vweird.f32 %v1663
    %vm1670 = vmor %vm1668, %vm1669
    %v1671 = vsel %vm1670, %v1663, %v1667
    %v1672 = vand.u32 2147483647, %v1659
    %vm1673 = vcmp.eq.f32.partialorder %v1672, 8.507059e+37
    %v1674 = vand.u32 %v1659, 2147483648
    %v1675 = vor.u32 1.1754944e-38, %v1674
    %v1676 = vsel %vm1673, %v1675, %v1671
    %v1677 = vmul.f32 %v1654, %v1676
    %v1678 = vrcp.pop %v1662
    %v1679 = vmul.f32 %v1662, %v1678
    %v1680 = vsub.f32 1.0, %v1679
    %v1681 = vmul.f32 %v1678, %v1680
    %v1682 = vadd.f32 %v1678, %v1681
    %vm1683 = vweird.f32 %v1662
    %vm1684 = vweird.f32 %v1678
    %vm1685 = vmor %vm1683, %vm1684
    %v1686 = vsel %vm1685, %v1678, %v1682
    %v1687 = vand.u32 2147483647, %v1662
    %vm1688 = vcmp.eq.f32.partialorder %v1687, 8.507059e+37
    %v1689 = vand.u32 %v1662, 2147483648
    %v1690 = vor.u32 1.1754944e-38, %v1689
    %v1691 = vsel %vm1688, %v1690, %v1686
    %v1692 = vmul.f32 %v1656, %v1691
    %1694 = vrot.lane.b32.xlu0 %v140, 124
    %v1695 = vpop.permute.xlu0 %1694
    %v1698 = vsel %vm210, %v1677, 0
    %1700 = vmatpush.msra.mxu0 0.0
    %1701 = vmatpush.msra.mxu0 0.0
    %1702 = vmatpush.msra.mxu0 0.0
    %1703 = vmatpush.msra.mxu0 0.0
    %1704 = vmatpush.msra.mxu0 0.0
    %1705 = vmatpush.msra.mxu0 0.0
    %1706 = vmatpush.msra.mxu0 0.0
    %1707 = vmatpush.msra.mxu0 0.0
    %1708 = vmatpush.msra.mxu0 0.0
    %1709 = vmatpush.msra.mxu0 0.0
    %1710 = vmatpush.msra.mxu0 0.0
    %1711 = vmatpush.msra.mxu0 0.0
    %1712 = vmatpush.msra.mxu0 0.0
    %1713 = vmatpush.msra.mxu0 0.0
    %1714 = vmatpush.msra.mxu0 0.0
    %1715 = vmatpush.msra.mxu0 %v1695
    %1716 = vmatmul.f32.gmra.mxu0 %v1698
    %v1717 = vpop.f32.mrf.mxu0
    %v1718 = vadd.f32 0.0, %v1717
    %1719 = vdwg.mxu0
    %1721 = vrot.lane.b32.xlu0 %v143, 124
    %v1722 = vpop.permute.xlu0 %1721
    %v1725 = vsel %vm210, %v1692, 0
    %1727 = vmatpush.msra.mxu0 0.0
    %1728 = vmatpush.msra.mxu0 0.0
    %1729 = vmatpush.msra.mxu0 0.0
    %1730 = vmatpush.msra.mxu0 0.0
    %1731 = vmatpush.msra.mxu0 0.0
    %1732 = vmatpush.msra.mxu0 0.0
    %1733 = vmatpush.msra.mxu0 0.0
    %1734 = vmatpush.msra.mxu0 0.0
    %1735 = vmatpush.msra.mxu0 0.0
    %1736 = vmatpush.msra.mxu0 0.0
    %1737 = vmatpush.msra.mxu0 0.0
    %1738 = vmatpush.msra.mxu0 0.0
    %1739 = vmatpush.msra.mxu0 0.0
    %1740 = vmatpush.msra.mxu0 0.0
    %1741 = vmatpush.msra.mxu0 0.0
    %1742 = vmatpush.msra.mxu0 %v1722
    %1743 = vmatmul.f32.gmra.mxu0 %v1725
    %v1744 = vpop.f32.mrf.mxu0
    %v1745 = vadd.f32 0.0, %v1744
    %1746 = vdwg.mxu0
    %1747 = vrot.lane.b32.xlu0 %v117, 88
    %v1748 = vpop.permute.xlu0 %1747
    %1749 = vrot.lane.b32.xlu0 %v117, 40
    %v1750 = vpop.permute.xlu0 %1749
    %v1751 = vsel %vm148, %v1748, 0
    %v1753 = vsel %vm148, %v1750, 0
    %1755 = vmatpush.xpose.msra.mxu0 0.0
    %1756 = vmatpush.xpose.msra.mxu0 0.0
    %1757 = vmatpush.xpose.msra.mxu0 0.0
    %1758 = vmatpush.xpose.msra.mxu0 0.0
    %1759 = vmatpush.xpose.msra.mxu0 0.0
    %1760 = vmatpush.xpose.msra.mxu0 0.0
    %1761 = vmatpush.xpose.msra.mxu0 0.0
    %1762 = vmatpush.xpose.msra.mxu0 0.0
    %1763 = vmatpush.xpose.msra.mxu0 0.0
    %1764 = vmatpush.xpose.msra.mxu0 0.0
    %1765 = vmatpush.xpose.msra.mxu0 0.0
    %1766 = vmatpush.xpose.msra.mxu0 0.0
    %1767 = vmatpush.xpose.msra.mxu0 0.0
    %1768 = vmatpush.xpose.msra.mxu0 0.0
    %1769 = vmatpush.xpose.msra.mxu0 0.0
    %1770 = vmatpush.xpose.msra.mxu0 %v1753
    %1771 = vmatmul.f32.gmra.mxu0 %v1751
    %v1772 = vpop.f32.mrf.mxu0
    %v1773 = vadd.f32 0.0, %v1772
    %1774 = vdwg.mxu0
    %1775 = vrot.lane.b32.xlu0 %v120, 88
    %v1776 = vpop.permute.xlu0 %1775
    %1777 = vrot.lane.b32.xlu0 %v120, 40
    %v1778 = vpop.permute.xlu0 %1777
    %v1779 = vsel %vm148, %v1776, 0
    %v1781 = vsel %vm148, %v1778, 0
    %1783 = vmatpush.xpose.msra.mxu0 0.0
    %1784 = vmatpush.xpose.msra.mxu0 0.0
    %1785 = vmatpush.xpose.msra.mxu0 0.0
    %1786 = vmatpush.xpose.msra.mxu0 0.0
    %1787 = vmatpush.xpose.msra.mxu0 0.0
    %1788 = vmatpush.xpose.msra.mxu0 0.0
    %1789 = vmatpush.xpose.msra.mxu0 0.0
    %1790 = vmatpush.xpose.msra.mxu0 0.0
    %1791 = vmatpush.xpose.msra.mxu0 0.0
    %1792 = vmatpush.xpose.msra.mxu0 0.0
    %1793 = vmatpush.xpose.msra.mxu0 0.0
    %1794 = vmatpush.xpose.msra.mxu0 0.0
    %1795 = vmatpush.xpose.msra.mxu0 0.0
    %1796 = vmatpush.xpose.msra.mxu0 0.0
    %1797 = vmatpush.xpose.msra.mxu0 0.0
    %1798 = vmatpush.xpose.msra.mxu0 %v1781
    %1799 = vmatmul.f32.gmra.mxu0 %v1779
    %v1800 = vpop.f32.mrf.mxu0
    %v1801 = vadd.f32 0.0, %v1800
    %1802 = vdwg.mxu0
    %v1803 = vmul.f32 %v1773, 0.5
    %v1804 = vmul.f32 %v1801, 0.5
    %v1805 = vadd.f32 %v1803, %v204
    %v1806 = vadd.f32 %v1804, %v205
    %v1807 = vsel %vm210, %v1805, -inf
    %1808 = vmax.xlane.f32.xlu0 %v1807
    %v1809 = vpop.xlane.xlu0 %1808
    %v1810 = vsel %vm210, %v1806, -inf
    %1811 = vmax.xlane.f32.xlu0 %v1810
    %v1812 = vpop.xlane.xlu0 %1811
    %v1813 = vsub.f32 %v1805, %v1809
    %v1814 = vsub.f32 %v1806, %v1812
    %v1815 = vmul.f32 %v1813, 1.442695
    %v1816 = vpow.pop %v1815
    %v1817 = vmul.f32 %v1814, 1.442695
    %v1818 = vpow.pop %v1817
    %v1819 = vsel %vm210, %v1816, 0.0
    %1820 = vadd.xlane.f32.xlu0 %v1819
    %v1821 = vpop.xlane.xlu0 %1820
    %v1822 = vsel %vm210, %v1818, 0.0
    %1823 = vadd.xlane.f32.xlu0 %v1822
    %v1824 = vpop.xlane.xlu0 %1823
    %v1825 = vrcp.pop %v1821
    %v1826 = vmul.f32 %v1821, %v1825
    %v1827 = vsub.f32 1.0, %v1826
    %v1828 = vmul.f32 %v1825, %v1827
    %v1829 = vadd.f32 %v1825, %v1828
    %vm1830 = vweird.f32 %v1821
    %vm1831 = vweird.f32 %v1825
    %vm1832 = vmor %vm1830, %vm1831
    %v1833 = vsel %vm1832, %v1825, %v1829
    %v1834 = vand.u32 2147483647, %v1821
    %vm1835 = vcmp.eq.f32.partialorder %v1834, 8.507059e+37
    %v1836 = vand.u32 %v1821, 2147483648
    %v1837 = vor.u32 1.1754944e-38, %v1836
    %v1838 = vsel %vm1835, %v1837, %v1833
    %v1839 = vmul.f32 %v1816, %v1838
    %v1840 = vrcp.pop %v1824
    %v1841 = vmul.f32 %v1824, %v1840
    %v1842 = vsub.f32 1.0, %v1841
    %v1843 = vmul.f32 %v1840, %v1842
    %v1844 = vadd.f32 %v1840, %v1843
    %vm1845 = vweird.f32 %v1824
    %vm1846 = vweird.f32 %v1840
    %vm1847 = vmor %vm1845, %vm1846
    %v1848 = vsel %vm1847, %v1840, %v1844
    %v1849 = vand.u32 2147483647, %v1824
    %vm1850 = vcmp.eq.f32.partialorder %v1849, 8.507059e+37
    %v1851 = vand.u32 %v1824, 2147483648
    %v1852 = vor.u32 1.1754944e-38, %v1851
    %v1853 = vsel %vm1850, %v1852, %v1848
    %v1854 = vmul.f32 %v1818, %v1853
    %1855 = vrot.lane.b32.xlu0 %v140, 120
    %v1856 = vpop.permute.xlu0 %1855
    %v1859 = vsel %vm210, %v1839, 0
    %1861 = vmatpush.msra.mxu0 0.0
    %1862 = vmatpush.msra.mxu0 0.0
    %1863 = vmatpush.msra.mxu0 0.0
    %1864 = vmatpush.msra.mxu0 0.0
    %1865 = vmatpush.msra.mxu0 0.0
    %1866 = vmatpush.msra.mxu0 0.0
    %1867 = vmatpush.msra.mxu0 0.0
    %1868 = vmatpush.msra.mxu0 0.0
    %1869 = vmatpush.msra.mxu0 0.0
    %1870 = vmatpush.msra.mxu0 0.0
    %1871 = vmatpush.msra.mxu0 0.0
    %1872 = vmatpush.msra.mxu0 0.0
    %1873 = vmatpush.msra.mxu0 0.0
    %1874 = vmatpush.msra.mxu0 0.0
    %1875 = vmatpush.msra.mxu0 0.0
    %1876 = vmatpush.msra.mxu0 %v1856
    %1877 = vmatmul.f32.gmra.mxu0 %v1859
    %v1878 = vpop.f32.mrf.mxu0
    %v1879 = vadd.f32 0.0, %v1878
    %1880 = vdwg.mxu0
    %1881 = vrot.lane.b32.xlu0 %v143, 120
    %v1882 = vpop.permute.xlu0 %1881
    %v1885 = vsel %vm210, %v1854, 0
    %1887 = vmatpush.msra.mxu0 0.0
    %1888 = vmatpush.msra.mxu0 0.0
    %1889 = vmatpush.msra.mxu0 0.0
    %1890 = vmatpush.msra.mxu0 0.0
    %1891 = vmatpush.msra.mxu0 0.0
    %1892 = vmatpush.msra.mxu0 0.0
    %1893 = vmatpush.msra.mxu0 0.0
    %1894 = vmatpush.msra.mxu0 0.0
    %1895 = vmatpush.msra.mxu0 0.0
    %1896 = vmatpush.msra.mxu0 0.0
    %1897 = vmatpush.msra.mxu0 0.0
    %1898 = vmatpush.msra.mxu0 0.0
    %1899 = vmatpush.msra.mxu0 0.0
    %1900 = vmatpush.msra.mxu0 0.0
    %1901 = vmatpush.msra.mxu0 0.0
    %1902 = vmatpush.msra.mxu0 %v1882
    %1903 = vmatmul.f32.gmra.mxu0 %v1885
    %v1904 = vpop.f32.mrf.mxu0
    %v1905 = vadd.f32 0.0, %v1904
    %1906 = vdwg.mxu0
    %1907 = vrot.lane.b32.xlu0 %v117, 84
    %v1908 = vpop.permute.xlu0 %1907
    %1909 = vrot.lane.b32.xlu0 %v117, 36
    %v1910 = vpop.permute.xlu0 %1909
    %v1911 = vsel %vm148, %v1908, 0
    %v1913 = vsel %vm148, %v1910, 0
    %1915 = vmatpush.xpose.msra.mxu0 0.0
    %1916 = vmatpush.xpose.msra.mxu0 0.0
    %1917 = vmatpush.xpose.msra.mxu0 0.0
    %1918 = vmatpush.xpose.msra.mxu0 0.0
    %1919 = vmatpush.xpose.msra.mxu0 0.0
    %1920 = vmatpush.xpose.msra.mxu0 0.0
    %1921 = vmatpush.xpose.msra.mxu0 0.0
    %1922 = vmatpush.xpose.msra.mxu0 0.0
    %1923 = vmatpush.xpose.msra.mxu0 0.0
    %1924 = vmatpush.xpose.msra.mxu0 0.0
    %1925 = vmatpush.xpose.msra.mxu0 0.0
    %1926 = vmatpush.xpose.msra.mxu0 0.0
    %1927 = vmatpush.xpose.msra.mxu0 0.0
    %1928 = vmatpush.xpose.msra.mxu0 0.0
    %1929 = vmatpush.xpose.msra.mxu0 0.0
    %1930 = vmatpush.xpose.msra.mxu0 %v1913
    %1931 = vmatmul.f32.gmra.mxu0 %v1911
    %v1932 = vpop.f32.mrf.mxu0
    %v1933 = vadd.f32 0.0, %v1932
    %1934 = vdwg.mxu0
    %1935 = vrot.lane.b32.xlu0 %v120, 84
    %v1936 = vpop.permute.xlu0 %1935
    %1937 = vrot.lane.b32.xlu0 %v120, 36
    %v1938 = vpop.permute.xlu0 %1937
    %v1939 = vsel %vm148, %v1936, 0
    %v1941 = vsel %vm148, %v1938, 0
    %1943 = vmatpush.xpose.msra.mxu0 0.0
    %1944 = vmatpush.xpose.msra.mxu0 0.0
    %1945 = vmatpush.xpose.msra.mxu0 0.0
    %1946 = vmatpush.xpose.msra.mxu0 0.0
    %1947 = vmatpush.xpose.msra.mxu0 0.0
    %1948 = vmatpush.xpose.msra.mxu0 0.0
    %1949 = vmatpush.xpose.msra.mxu0 0.0
    %1950 = vmatpush.xpose.msra.mxu0 0.0
    %1951 = vmatpush.xpose.msra.mxu0 0.0
    %1952 = vmatpush.xpose.msra.mxu0 0.0
    %1953 = vmatpush.xpose.msra.mxu0 0.0
    %1954 = vmatpush.xpose.msra.mxu0 0.0
    %1955 = vmatpush.xpose.msra.mxu0 0.0
    %1956 = vmatpush.xpose.msra.mxu0 0.0
    %1957 = vmatpush.xpose.msra.mxu0 0.0
    %1958 = vmatpush.xpose.msra.mxu0 %v1941
    %1959 = vmatmul.f32.gmra.mxu0 %v1939
    %v1960 = vpop.f32.mrf.mxu0
    %v1961 = vadd.f32 0.0, %v1960
    %1962 = vdwg.mxu0
    %v1963 = vmul.f32 %v1933, 0.5
    %v1964 = vmul.f32 %v1961, 0.5
    %v1965 = vadd.f32 %v1963, %v204
    %v1966 = vadd.f32 %v1964, %v205
    %v1967 = vsel %vm210, %v1965, -inf
    %1968 = vmax.xlane.f32.xlu0 %v1967
    %v1969 = vpop.xlane.xlu0 %1968
    %v1970 = vsel %vm210, %v1966, -inf
    %1971 = vmax.xlane.f32.xlu0 %v1970
    %v1972 = vpop.xlane.xlu0 %1971
    %v1973 = vsub.f32 %v1965, %v1969
    %v1974 = vsub.f32 %v1966, %v1972
    %v1975 = vmul.f32 %v1973, 1.442695
    %v1976 = vpow.pop %v1975
    %v1977 = vmul.f32 %v1974, 1.442695
    %v1978 = vpow.pop %v1977
    %v1979 = vsel %vm210, %v1976, 0.0
    %1980 = vadd.xlane.f32.xlu0 %v1979
    %v1981 = vpop.xlane.xlu0 %1980
    %v1982 = vsel %vm210, %v1978, 0.0
    %1983 = vadd.xlane.f32.xlu0 %v1982
    %v1984 = vpop.xlane.xlu0 %1983
    %v1985 = vrcp.pop %v1981
    %v1986 = vmul.f32 %v1981, %v1985
    %v1987 = vsub.f32 1.0, %v1986
    %v1988 = vmul.f32 %v1985, %v1987
    %v1989 = vadd.f32 %v1985, %v1988
    %vm1990 = vweird.f32 %v1981
    %vm1991 = vweird.f32 %v1985
    %vm1992 = vmor %vm1990, %vm1991
    %v1993 = vsel %vm1992, %v1985, %v1989
    %v1994 = vand.u32 2147483647, %v1981
    %vm1995 = vcmp.eq.f32.partialorder %v1994, 8.507059e+37
    %v1996 = vand.u32 %v1981, 2147483648
    %v1997 = vor.u32 1.1754944e-38, %v1996
    %v1998 = vsel %vm1995, %v1997, %v1993
    %v1999 = vmul.f32 %v1976, %v1998
    %v2000 = vrcp.pop %v1984
    %v2001 = vmul.f32 %v1984, %v2000
    %v2002 = vsub.f32 1.0, %v2001
    %v2003 = vmul.f32 %v2000, %v2002
    %v2004 = vadd.f32 %v2000, %v2003
    %vm2005 = vweird.f32 %v1984
    %vm2006 = vweird.f32 %v2000
    %vm2007 = vmor %vm2005, %vm2006
    %v2008 = vsel %vm2007, %v2000, %v2004
    %v2009 = vand.u32 2147483647, %v1984
    %vm2010 = vcmp.eq.f32.partialorder %v2009, 8.507059e+37
    %v2011 = vand.u32 %v1984, 2147483648
    %v2012 = vor.u32 1.1754944e-38, %v2011
    %v2013 = vsel %vm2010, %v2012, %v2008
    %v2014 = vmul.f32 %v1978, %v2013
    %2015 = vrot.lane.b32.xlu0 %v140, 116
    %v2016 = vpop.permute.xlu0 %2015
    %v2019 = vsel %vm210, %v1999, 0
    %2021 = vmatpush.msra.mxu0 0.0
    %2022 = vmatpush.msra.mxu0 0.0
    %2023 = vmatpush.msra.mxu0 0.0
    %2024 = vmatpush.msra.mxu0 0.0
    %2025 = vmatpush.msra.mxu0 0.0
    %2026 = vmatpush.msra.mxu0 0.0
    %2027 = vmatpush.msra.mxu0 0.0
    %2028 = vmatpush.msra.mxu0 0.0
    %2029 = vmatpush.msra.mxu0 0.0
    %2030 = vmatpush.msra.mxu0 0.0
    %2031 = vmatpush.msra.mxu0 0.0
    %2032 = vmatpush.msra.mxu0 0.0
    %2033 = vmatpush.msra.mxu0 0.0
    %2034 = vmatpush.msra.mxu0 0.0
    %2035 = vmatpush.msra.mxu0 0.0
    %2036 = vmatpush.msra.mxu0 %v2016
    %2037 = vmatmul.f32.gmra.mxu0 %v2019
    %v2038 = vpop.f32.mrf.mxu0
    %v2039 = vadd.f32 0.0, %v2038
    %2040 = vdwg.mxu0
    %2041 = vrot.lane.b32.xlu0 %v143, 116
    %v2042 = vpop.permute.xlu0 %2041
    %v2045 = vsel %vm210, %v2014, 0
    %2047 = vmatpush.msra.mxu0 0.0
    %2048 = vmatpush.msra.mxu0 0.0
    %2049 = vmatpush.msra.mxu0 0.0
    %2050 = vmatpush.msra.mxu0 0.0
    %2051 = vmatpush.msra.mxu0 0.0
    %2052 = vmatpush.msra.mxu0 0.0
    %2053 = vmatpush.msra.mxu0 0.0
    %2054 = vmatpush.msra.mxu0 0.0
    %2055 = vmatpush.msra.mxu0 0.0
    %2056 = vmatpush.msra.mxu0 0.0
    %2057 = vmatpush.msra.mxu0 0.0
    %2058 = vmatpush.msra.mxu0 0.0
    %2059 = vmatpush.msra.mxu0 0.0
    %2060 = vmatpush.msra.mxu0 0.0
    %2061 = vmatpush.msra.mxu0 0.0
    %2062 = vmatpush.msra.mxu0 %v2042
    %2063 = vmatmul.f32.gmra.mxu0 %v2045
    %v2064 = vpop.f32.mrf.mxu0
    %v2065 = vadd.f32 0.0, %v2064
    %2066 = vdwg.mxu0
    %2069 = vrot.lane.b32.xlu0 %v443, 4
    %v2070 = vpop.permute.xlu0 %2069
    %2071 = vrot.lane.b32.xlu0 %v469, 4
    %v2072 = vpop.permute.xlu0 %2071
    %2077 = vrot.lane.b32.xlu0 %v603, 8
    %v2078 = vpop.permute.xlu0 %2077
    %2079 = vrot.lane.b32.xlu0 %v629, 8
    %v2080 = vpop.permute.xlu0 %2079
    %2085 = vrot.lane.b32.xlu0 %v763, 12
    %v2086 = vpop.permute.xlu0 %2085
    %2087 = vrot.lane.b32.xlu0 %v789, 12
    %v2088 = vpop.permute.xlu0 %2087
    %2093 = vrot.lane.b32.xlu0 %v923, 16
    %v2094 = vpop.permute.xlu0 %2093
    %2095 = vrot.lane.b32.xlu0 %v949, 16
    %v2096 = vpop.permute.xlu0 %2095
    %2101 = vrot.lane.b32.xlu0 %v1083, 20
    %v2102 = vpop.permute.xlu0 %2101
    %2103 = vrot.lane.b32.xlu0 %v1109, 20
    %v2104 = vpop.permute.xlu0 %2103
    %2109 = vrot.lane.b32.xlu0 %v1243, 24
    %v2110 = vpop.permute.xlu0 %2109
    %2111 = vrot.lane.b32.xlu0 %v1269, 24
    %v2112 = vpop.permute.xlu0 %2111
    %2117 = vrot.lane.b32.xlu0 %v1403, 28
    %v2118 = vpop.permute.xlu0 %2117
    %2119 = vrot.lane.b32.xlu0 %v1429, 28
    %v2120 = vpop.permute.xlu0 %2119
    %2125 = vrot.lane.b32.xlu0 %v1560, 32
    %v2126 = vpop.permute.xlu0 %2125
    %2127 = vrot.lane.b32.xlu0 %v1583, 32
    %v2128 = vpop.permute.xlu0 %2127
    %2133 = vrot.lane.b32.xlu0 %v1718, 36
    %v2134 = vpop.permute.xlu0 %2133
    %2135 = vrot.lane.b32.xlu0 %v1745, 36
    %v2136 = vpop.permute.xlu0 %2135
    %2141 = vrot.lane.b32.xlu0 %v1879, 40
    %v2142 = vpop.permute.xlu0 %2141
    %2143 = vrot.lane.b32.xlu0 %v1905, 40
    %v2144 = vpop.permute.xlu0 %2143
    %2149 = vrot.lane.b32.xlu0 %v2039, 44
    %v2150 = vpop.permute.xlu0 %2149
    %2151 = vrot.lane.b32.xlu0 %v2065, 44
    %v2152 = vpop.permute.xlu0 %2151
    %v2155 = vsel %vm148, %v283, %v2070
    %v2156 = vsel %vm148, %v309, %v2072
    %v2157 = vsel %vm210, %v2155, %v2078
    %v2158 = vsel %vm210, %v2156, %v2080
    %vm2159 = vcmask 97280
    %v2160 = vsel %vm2159, %v2157, %v2086
    %v2161 = vsel %vm2159, %v2158, %v2088
    %vm2162 = vcmask 130048
    %v2163 = vsel %vm2162, %v2160, %v2094
    %v2164 = vsel %vm2162, %v2161, %v2096
    %vm2165 = vcmask 162816
    %v2166 = vsel %vm2165, %v2163, %v2102
    %v2167 = vsel %vm2165, %v2164, %v2104
    %vm2168 = vcmask 195584
    %v2169 = vsel %vm2168, %v2166, %v2110
    %v2170 = vsel %vm2168, %v2167, %v2112
    %vm2171 = vcmask 228352
    %v2172 = vsel %vm2171, %v2169, %v2118
    %v2173 = vsel %vm2171, %v2170, %v2120
    %vm2174 = vcmask 261120
    %v2175 = vsel %vm2174, %v2172, %v2126
    %v2176 = vsel %vm2174, %v2173, %v2128
    %vm2177 = vcmask 293888
    %v2178 = vsel %vm2177, %v2175, %v2134
    %v2179 = vsel %vm2177, %v2176, %v2136
    %vm2180 = vcmask 326656
    %v2181 = vsel %vm2180, %v2178, %v2142
    %v2182 = vsel %vm2180, %v2179, %v2144
    %vm2183 = vcmask 359424
    %v2184 = vsel %vm2183, %v2181, %v2150
    %v2185 = vsel %vm2183, %v2182, %v2152
    %v2187 = vperm.slane %v84, 0
    %v2190 = vsel %vm92, %v2184, 0
    %v2193 = vsel %vm92, %v2185, 0
    %2195 = vmatpush.msra.mxu0 0.0
    %2196 = vmatpush.msra.mxu0 0.0
    %2197 = vmatpush.msra.mxu0 0.0
    %2198 = vmatpush.msra.mxu0 0.0
    %2199 = vmatpush.msra.mxu0 0.0
    %2200 = vmatpush.msra.mxu0 0.0
    %2201 = vmatpush.msra.mxu0 0.0
    %2202 = vmatpush.msra.mxu0 0.0
    %2203 = vmatpush.msra.mxu0 0.0
    %2204 = vmatpush.msra.mxu0 0.0
    %2205 = vmatpush.msra.mxu0 %v83
    %2206 = vmatpush.msra.mxu0 %v82
    %2207 = vmatpush.msra.mxu0 %v81
    %2208 = vmatpush.msra.mxu0 %v80
    %2209 = vmatpush.msra.mxu0 %v79
    %2210 = vmatpush.msra.mxu0 %v78
    %2211 = vmatmul.f32.gmra.mxu0 %v2190
    %v2212 = vpop.f32.mrf.mxu0
    %v2213 = vadd.f32 %v2187, %v2212
    %2214 = vmatmul.f32.gmra.mxu0 %v2193
    %v2215 = vpop.f32.mrf.mxu0
    %v2216 = vadd.f32 %v2187, %v2215
    %2217 = vdwg.mxu0
    %v2218 = vadd.f32 %v63, %v2213
    %v2219 = vadd.f32 %v64, %v2216
    %v2220 = vld [vmem:[%s6] sm:$0x1]
    %v2221 = vld [vmem:[%s7] sm:$0x1]
    %v2222 = vsel %vm92, %v2218, 0.0
    %2223 = vadd.xlane.f32.xlu0 %v2222
    %v2224 = vpop.xlane.xlu0 %2223
    %v2225 = vsel %vm92, %v2219, 0.0
    %2226 = vadd.xlane.f32.xlu0 %v2225
    %v2227 = vpop.xlane.xlu0 %2226
    %v2228 = vrcp.pop 48.0
    %v2229 = vmul.f32 48.0, %v2228
    %v2230 = vsub.f32 1.0, %v2229
    %v2231 = vmul.f32 %v2228, %v2230
    %v2232 = vadd.f32 %v2228, %v2231
    %vm2233 = vweird.f32 %v2228
    %v2234 = vsel %vm2233, %v2228, %v2232
    %v2235 = vmul.f32 %v2224, %v2234
    %v2236 = vmul.f32 %v2227, %v2234
    %v2237 = vsub.f32 %v2218, %v2235
    %v2238 = vsub.f32 %v2219, %v2236
    %v2239 = vmul.f32 %v2237, %v2237
    %v2240 = vmul.f32 %v2238, %v2238
    %v2241 = vsel %vm92, %v2239, 0.0
    %2242 = vadd.xlane.f32.xlu0 %v2241
    %v2243 = vpop.xlane.xlu0 %2242
    %v2244 = vsel %vm92, %v2240, 0.0
    %2245 = vadd.xlane.f32.xlu0 %v2244
    %v2246 = vpop.xlane.xlu0 %2245
    %v2247 = vmul.f32 %v2243, %v2234
    %v2248 = vmul.f32 %v2246, %v2234
    %v2249 = vadd.f32 %v2247, 1e-12
    %v2250 = vadd.f32 %v2248, 1e-12
    %v2251 = vrsqrt.pop %v2249
    %v2252 = vmul.f32 %v2251, %v2249
    %v2253 = vmul.f32 %v2252, %v2251
    %v2254 = vmul.f32 0.5, %v2253
    %v2255 = vsub.f32 1.5, %v2254
    %v2256 = vmul.f32 %v2251, %v2255
    %vm2257 = vweird.f32 %v2249
    %vm2258 = vweird.f32 %v2251
    %vm2259 = vmor %vm2257, %vm2258
    %v2260 = vsel %vm2259, %v2251, %v2256
    %v2261 = vrsqrt.pop %v2250
    %v2262 = vmul.f32 %v2261, %v2250
    %v2263 = vmul.f32 %v2262, %v2261
    %v2264 = vmul.f32 0.5, %v2263
    %v2265 = vsub.f32 1.5, %v2264
    %v2266 = vmul.f32 %v2261, %v2265
    %vm2267 = vweird.f32 %v2250
    %vm2268 = vweird.f32 %v2261
    %vm2269 = vmor %vm2267, %vm2268
    %v2270 = vsel %vm2269, %v2261, %v2266
    %v2271 = vmul.f32 %v2237, %v2260
    %v2272 = vmul.f32 %v2238, %v2270
    %v2274 = vperm.slane %v2220, 0
    %v2276 = vmul.f32 %v2271, %v2274
    %v2277 = vmul.f32 %v2272, %v2274
    %v2279 = vperm.slane %v2221, 0
    %v2281 = vadd.f32 %v2276, %v2279
    %v2282 = vadd.f32 %v2277, %v2279
    %v2283 = vld [vmem:[#allocation2] sm:$0xff]
    %v2284 = vld [vmem:[#allocation2 + $0x8] sm:$0xff]
    %v2285 = vld [vmem:[#allocation2 + $0x10] sm:$0xff]
    %v2286 = vld [vmem:[#allocation2 + $0x18] sm:$0xff]
    %v2287 = vld [vmem:[#allocation2 + $0x20] sm:$0xff]
    %v2288 = vld [vmem:[#allocation2 + $0x28] sm:$0xff]
    %v2289 = vld [vmem:[%s9] sm:$0x1]
    %v2291 = vperm.slane %v2289, 0
    %v2294 = vsel %vm92, %v2281, 0
    %v2297 = vsel %vm92, %v2282, 0
    %2299 = vmatpush.msra.mxu0 0.0
    %2300 = vmatpush.msra.mxu0 0.0
    %2301 = vmatpush.msra.mxu0 0.0
    %2302 = vmatpush.msra.mxu0 0.0
    %2303 = vmatpush.msra.mxu0 0.0
    %2304 = vmatpush.msra.mxu0 0.0
    %2305 = vmatpush.msra.mxu0 0.0
    %2306 = vmatpush.msra.mxu0 0.0
    %2307 = vmatpush.msra.mxu0 0.0
    %2308 = vmatpush.msra.mxu0 0.0
    %2309 = vmatpush.msra.mxu0 %v2288
    %2310 = vmatpush.msra.mxu0 %v2287
    %2311 = vmatpush.msra.mxu0 %v2286
    %2312 = vmatpush.msra.mxu0 %v2285
    %2313 = vmatpush.msra.mxu0 %v2284
    %2314 = vmatpush.msra.mxu0 %v2283
    %2315 = vmatmul.f32.gmra.mxu0 %v2294
    %v2316 = vpop.f32.mrf.mxu0
    %v2317 = vadd.f32 %v2291, %v2316
    %2318 = vmatmul.f32.gmra.mxu0 %v2297
    %v2319 = vpop.f32.mrf.mxu0
    %v2320 = vadd.f32 %v2291, %v2319
    %2321 = vdwg.mxu0
    %v2322 = vmul.f32 %v2317, 0.5
    %v2323 = vmul.f32 %v2320, 0.5
    %v2324 = vmul.f32 %v2317, 0.044715
    %v2325 = vmul.f32 %v2320, 0.044715
    %v2326 = vmul.f32 %v2324, %v2317
    %v2327 = vmul.f32 %v2325, %v2320
    %v2328 = vmul.f32 %v2326, %v2317
    %v2329 = vmul.f32 %v2327, %v2320
    %v2330 = vadd.f32 %v2317, %v2328
    %v2331 = vadd.f32 %v2320, %v2329
    %v2332 = vmul.f32 %v2330, 0.7978846
    %v2333 = vmul.f32 %v2331, 0.7978846
    %v2334 = vtanh.pop %v2332
    %v2335 = vtanh.pop %v2333
    %v2336 = vadd.f32 %v2334, 1.0
    %v2337 = vadd.f32 %v2335, 1.0
    %v2338 = vmul.f32 %v2322, %v2336
    %v2339 = vmul.f32 %v2323, %v2337
    %v2340 = vld [vmem:[%s10] sm:$0xff]
    %v2341 = vld [vmem:[%s10 + $0x8] sm:$0xff]
    %v2342 = vld [vmem:[%s10 + $0x10] sm:$0xff]
    %v2343 = vld [vmem:[%s10 + $0x18] sm:$0xff]
    %v2344 = vld [vmem:[%s10 + $0x20] sm:$0xff]
    %v2345 = vld [vmem:[%s10 + $0x28] sm:$0xff]
    %v2346 = vld [vmem:[%s10 + $0x30] sm:$0xff]
    %v2347 = vld [vmem:[%s10 + $0x38] sm:$0xff]
    %v2348 = vld [vmem:[%s10 + $0x40] sm:$0xff]
    %v2349 = vld [vmem:[%s10 + $0x48] sm:$0xff]
    %v2350 = vld [vmem:[%s10 + $0x50] sm:$0xff]
    %v2351 = vld [vmem:[%s10 + $0x58] sm:$0xff]
    %v2352 = vld [vmem:[%s11] sm:$0x1]
    %v2354 = vperm.slane %v2352, 0
    %vm2356 = vcmask 785408
    %v2358 = vsel %vm2356, %v2338, 0
    %v2361 = vsel %vm2356, %v2339, 0
    %2363 = vmatpush.msra.mxu0 0.0
    %2364 = vmatpush.msra.mxu0 0.0
    %2365 = vmatpush.msra.mxu0 0.0
    %2366 = vmatpush.msra.mxu0 0.0
    %2367 = vmatpush.msra.mxu0 %v2351
    %2368 = vmatpush.msra.mxu0 %v2350
    %2369 = vmatpush.msra.mxu0 %v2349
    %2370 = vmatpush.msra.mxu0 %v2348
    %2371 = vmatpush.msra.mxu0 %v2347
    %2372 = vmatpush.msra.mxu0 %v2346
    %2373 = vmatpush.msra.mxu0 %v2345
    %2374 = vmatpush.msra.mxu0 %v2344
    %2375 = vmatpush.msra.mxu0 %v2343
    %2376 = vmatpush.msra.mxu0 %v2342
    %2377 = vmatpush.msra.mxu0 %v2341
    %2378 = vmatpush.msra.mxu0 %v2340
    %2379 = vmatmul.f32.gmra.mxu0 %v2358
    %v2380 = vpop.f32.mrf.mxu0
    %v2381 = vadd.f32 %v2354, %v2380
    %2382 = vmatmul.f32.gmra.mxu0 %v2361
    %v2383 = vpop.f32.mrf.mxu0
    %v2384 = vadd.f32 %v2354, %v2383
    %2385 = vdwg.mxu0
    %v2386 = vadd.f32 %v2281, %v2381
    %v2387 = vadd.f32 %v2282, %v2384
    %v2388 = vld [vmem:[%s12] sm:$0x1]
    %v2389 = vld [vmem:[%s13] sm:$0x1]
    %v2390 = vsel %vm92, %v2386, 0.0
    %2391 = vadd.xlane.f32.xlu0 %v2390
    %v2392 = vpop.xlane.xlu0 %2391
    %v2393 = vsel %vm92, %v2387, 0.0
    %2394 = vadd.xlane.f32.xlu0 %v2393
    %v2395 = vpop.xlane.xlu0 %2394
    %v2396 = vmul.f32 %v2392, %v2234
    %v2397 = vmul.f32 %v2395, %v2234
    %v2398 = vsub.f32 %v2386, %v2396
    %v2399 = vsub.f32 %v2387, %v2397
    %v2400 = vmul.f32 %v2398, %v2398
    %v2401 = vmul.f32 %v2399, %v2399
    %v2402 = vsel %vm92, %v2400, 0.0
    %2403 = vadd.xlane.f32.xlu0 %v2402
    %v2404 = vpop.xlane.xlu0 %2403
    %v2405 = vsel %vm92, %v2401, 0.0
    %2406 = vadd.xlane.f32.xlu0 %v2405
    %v2407 = vpop.xlane.xlu0 %2406
    %v2408 = vmul.f32 %v2404, %v2234
    %v2409 = vmul.f32 %v2407, %v2234
    %v2410 = vadd.f32 %v2408, 1e-12
    %v2411 = vadd.f32 %v2409, 1e-12
    %v2412 = vrsqrt.pop %v2410
    %v2413 = vmul.f32 %v2412, %v2410
    %v2414 = vmul.f32 %v2413, %v2412
    %v2415 = vmul.f32 0.5, %v2414
    %v2416 = vsub.f32 1.5, %v2415
    %v2417 = vmul.f32 %v2412, %v2416
    %vm2418 = vweird.f32 %v2410
    %vm2419 = vweird.f32 %v2412
    %vm2420 = vmor %vm2418, %vm2419
    %v2421 = vsel %vm2420, %v2412, %v2417
    %v2422 = vrsqrt.pop %v2411
    %v2423 = vmul.f32 %v2422, %v2411
    %v2424 = vmul.f32 %v2423, %v2422
    %v2425 = vmul.f32 0.5, %v2424
    %v2426 = vsub.f32 1.5, %v2425
    %v2427 = vmul.f32 %v2422, %v2426
    %vm2428 = vweird.f32 %v2411
    %vm2429 = vweird.f32 %v2422
    %vm2430 = vmor %vm2428, %vm2429
    %v2431 = vsel %vm2430, %v2422, %v2427
    %v2432 = vmul.f32 %v2398, %v2421
    %v2433 = vmul.f32 %v2399, %v2431
    %v2435 = vperm.slane %v2388, 0
    %v2437 = vmul.f32 %v2432, %v2435
    %v2438 = vmul.f32 %v2433, %v2435
    %v2440 = vperm.slane %v2389, 0
    %v2442 = vadd.f32 %v2437, %v2440
    %v2443 = vadd.f32 %v2438, %v2440
    %2444 = vst.msk [vmem:[%s14] sm:$0xff] %vm92, %v2442
    %2445 = vst.msk [vmem:[%s14 + $0x8] sm:$0xff] %vm92, %v2443
    // Predicated region
    $region62: #{forward.6} parent=1 // pred_check
      _
    $region63: #{forward.6} parent=1 // pred_check_branch
      %2447 = sbr.rel (0) target = $region65
    $region64: #{forward.6} parent=1 // pred_region
      _
    $region65: #{forward.6} parent=1 // pred_fallthru
      _
    // Predicated region
    $region66: #{forward.6} parent=1 // pred_check
      _
    $region67: #{forward.6} parent=1 // pred_check_branch
      %2449 = sbr.rel (0) target = $region69
    $region68: #{forward.6} parent=1 // pred_region
      _
    $region69: #{forward.6} parent=1 // pred_fallthru
      _
    %2450 = vsyncpa [#allocation3], 1

// kernel: forward.7
$region0: #{forward.7}
  #allocation0 [shape = 'u32[]', space=smem, size = 0x4, offset = 0x4, fixed_abs, tag = 'smem constant byte address 0x4 - core index']
  #allocation1 [shape = 'u32[72,128]{1,0:T(1,128)}', space=vmem, size = 0x9000, scoped, tag = 'internal scratch']
  %s0 = inlined_call_operand.vmem [shape: f32[16,48], index: 0, kind: input, shape index: {}]
  %s1 = inlined_call_operand.vmem [shape: f32[2,16], index: 1, kind: input, shape index: {}]
  %s2 = inlined_call_operand.vmem [shape: f32[2,16], index: 2, kind: input, shape index: {}]
  %s3 = inlined_call_operand.vmem [shape: f32[48,48], index: 3, kind: input, shape index: {}]
  %s4 = inlined_call_operand.vmem [shape: f32[1,48], index: 4, kind: input, shape index: {}]
  %s5 = inlined_call_operand.vmem [shape: f32[48,144], index: 5, kind: input, shape index: {}]
  %s6 = inlined_call_operand.vmem [shape: f32[1,144], index: 6, kind: input, shape index: {}]
  %s7 = inlined_call_operand.hbm [shape: f32[48,48], index: 7, kind: input, shape index: {}]
  %s8 = inlined_call_operand.hbm [shape: f32[1,48], index: 8, kind: input, shape index: {}]
  %s9 = inlined_call_operand.hbm [shape: f32[96,1024], index: 9, kind: input, shape index: {}]
  %s10 = inlined_call_operand.vmem [shape: f32[1,1024], index: 10, kind: input, shape index: {}]
  %s11 = inlined_call_operand.vmem [shape: f32[1,512], index: 11, kind: input, shape index: {}]
  %s12 = inlined_call_operand.vmem [shape: f32[1,512], index: 12, kind: input, shape index: {}]
  %s13 = inlined_call_operand.hbm [shape: f32[512,512], index: 13, kind: input, shape index: {}]
  %s14 = inlined_call_operand.vmem [shape: f32[1,512], index: 14, kind: input, shape index: {}]
  %s15 = inlined_call_operand.vmem [shape: f32[1,256], index: 15, kind: input, shape index: {}]
  %s16 = inlined_call_operand.vmem [shape: f32[1,256], index: 16, kind: input, shape index: {}]
  %s17 = inlined_call_operand.vmem [shape: f32[256,128], index: 17, kind: input, shape index: {}]
  %s18 = inlined_call_operand.hbm [shape: f32[1,128], index: 18, kind: input, shape index: {}]
  %s19 = inlined_call_operand.hbm [shape: f32[1,128], index: 19, kind: input, shape index: {}]
  %s20 = inlined_call_operand.hbm [shape: f32[1,128], index: 20, kind: input, shape index: {}]
  %s21 = inlined_call_operand.vmem [shape: f32[128,3], index: 21, kind: input, shape index: {}]
  %s22 = inlined_call_operand.hbm [shape: f32[1,3], index: 22, kind: input, shape index: {}]
  %s23 = inlined_call_operand.vmem [shape: f32[2,3], index: 23, kind: output, shape index: {}]
  %s24 = sld [smem:[#allocation0]]
  $region134: #{forward.7} parent=0
    _
  %s26 = ssub.s32 1, %s24
  %s27 = scalar_select 0, %s26, %s24
  $region1: #{forward.7} parent=0
    #allocation2 [shape = 'u8[24576]{0}', space=vmem, size = 0x6000, scoped, tag = 'input window, operand 7, single buffered']
    #allocation3 [shape = 's32[1]{0}', space=sflag, size = 0x4, scoped, tag = 'scoped memory for forward.7']
    #allocation4 [shape = 'u8[512]{0}', space=vmem, size = 0x400, scoped, tag = 'input window, operand 8, single buffered']
    #allocation5 [shape = 's32[1]{0}', space=sflag, size = 0x4, scoped, tag = 'scoped memory for forward.7']
    #allocation6 [shape = 'u8[393216]{0}', space=vmem, size = 0x60000, scoped, tag = 'input window, operand 9, single buffered']
    #allocation7 [shape = 'u8[1048576]{0}', space=vmem, size = 0x100000, scoped, tag = 'input window, operand 13, single buffered']
    #allocation8 [shape = 's32[1]{0}', space=sflag, size = 0x4, scoped, tag = 'scoped memory for forward.7']
    #allocation9 [shape = 'u8[512]{0}', space=vmem, size = 0x400, scoped, tag = 'input window, operand 18, single buffered']
    #allocation10 [shape = 'u8[512]{0}', space=vmem, size = 0x400, scoped, tag = 'input window, operand 19, single buffered']
    #allocation11 [shape = 's32[1]{0}', space=sflag, size = 0x4, scoped, tag = 'scoped memory for forward.7']
    #allocation12 [shape = 'u8[512]{0}', space=vmem, size = 0x400, scoped, tag = 'input window, operand 20, single buffered']
    #allocation13 [shape = 'u8[512]{0}', space=vmem, size = 0x400, scoped, tag = 'input window, operand 22, single buffered']
    #allocation14 [shape = 's32[1]{0}', space=sflag, size = 0x4, scoped, tag = 'scoped memory for forward.7']
    %28 = vsyncpa [#allocation3], 0
    %29 = vsyncpa [#allocation5], 0
    %30 = vsyncpa [#allocation8], 0
    %31 = vsyncpa [#allocation11], 0
    %32 = vsyncpa [#allocation14], 0
    // Predicated region
    $region2: #{forward.7} parent=1 // pred_check
      _
    $region3: #{forward.7} parent=1 // pred_check_branch
      %34 = sbr.rel (0) target = $region5
    $region4: #{forward.7} parent=1 // pred_region
      _
    $region5: #{forward.7} parent=1 // pred_fallthru
      _
    // Predicated region
    $region6: #{forward.7} parent=1 // pred_check
      _
    $region7: #{forward.7} parent=1 // pred_check_branch
      %36 = sbr.rel (0) target = $region9
    $region8: #{forward.7} parent=1 // pred_region
      _
    $region9: #{forward.7} parent=1 // pred_fallthru
      _
    // Predicated region
    $region10: #{forward.7} parent=1 // pred_check
      _
    $region11: #{forward.7} parent=1 // pred_check_branch
      %38 = sbr.rel (0) target = $region13
    $region12: #{forward.7} parent=1 // pred_region
      _
    $region13: #{forward.7} parent=1 // pred_fallthru
      _
    // Predicated region
    $region14: #{forward.7} parent=1 // pred_check
      _
    $region15: #{forward.7} parent=1 // pred_check_branch
      %40 = sbr.rel (0) target = $region17
    $region16: #{forward.7} parent=1 // pred_region
      _
    $region17: #{forward.7} parent=1 // pred_fallthru
      _
    // Predicated region
    $region18: #{forward.7} parent=1 // pred_check
      _
    $region19: #{forward.7} parent=1 // pred_check_branch
      %42 = sbr.rel (0) target = $region21
    $region20: #{forward.7} parent=1 // pred_region
      _
    $region21: #{forward.7} parent=1 // pred_fallthru
      _
    // Predicated region
    $region22: #{forward.7} parent=1 // pred_check
      _
    $region23: #{forward.7} parent=1 // pred_check_branch
      %44 = sbr.rel (0) target = $region25
    $region24: #{forward.7} parent=1 // pred_region
      _
    $region25: #{forward.7} parent=1 // pred_fallthru
      _
    // Predicated region
    $region26: #{forward.7} parent=1 // pred_check
      _
    $region27: #{forward.7} parent=1 // pred_check_branch
      %46 = sbr.rel (0) target = $region29
    $region28: #{forward.7} parent=1 // pred_region
      _
    $region29: #{forward.7} parent=1 // pred_fallthru
      _
    // Predicated region
    $region30: #{forward.7} parent=1 // pred_check
      _
    $region31: #{forward.7} parent=1 // pred_check_branch
      %48 = sbr.rel (0) target = $region33
    $region32: #{forward.7} parent=1 // pred_region
      %50 = vsyncadd [#allocation3], 0
      %s51 = sshll.u32 %s7, 4
      %s52 = int_to_ptr.hbm [resolvable:$true] %s51
      %s53 = sshll.u32 [#allocation2], 4
      %s54 = int_to_ptr.vmem [resolvable:$true] %s53
      %59 = dma.hbm_to_vmem [thread:$0]  %s52, 768, %s54, [#allocation3], 128, 128, 8
    $region33: #{forward.7} parent=1 // pred_fallthru
      _
    // Predicated region
    $region34: #{forward.7} parent=1 // pred_check
      _
    $region35: #{forward.7} parent=1 // pred_check_branch
      %61 = sbr.rel (0) target = $region37
    $region36: #{forward.7} parent=1 // pred_region
      %63 = vsyncadd [#allocation5], 0
      %s65 = sshll.u32 %s8, 4
      %s66 = int_to_ptr.hbm [resolvable:$true] %s65
      %s67 = sshll.u32 [#allocation4], 4
      %s68 = int_to_ptr.vmem [resolvable:$true] %s67
      %70 = dma.hbm_to_vmem [thread:$0]  %s66, 16, %s68, [#allocation5]
    $region37: #{forward.7} parent=1 // pred_fallthru
      _
    // Predicated region
    $region38: #{forward.7} parent=1 // pred_check
      _
    $region39: #{forward.7} parent=1 // pred_check_branch
      %72 = sbr.rel (0) target = $region41
    $region40: #{forward.7} parent=1 // pred_region
      %74 = vsyncadd [#allocation5], 0
      %s75 = sshll.u32 %s9, 4
      %s76 = int_to_ptr.hbm [resolvable:$true] %s75
      %s77 = sshll.u32 [#allocation6], 4
      %s78 = int_to_ptr.vmem [resolvable:$true] %s77
      %83 = dma.hbm_to_vmem [thread:$0]  %s76, 12288, %s78, [#allocation5], 1024, 1024, 64
    $region41: #{forward.7} parent=1 // pred_fallthru
      _
    // Predicated region
    $region42: #{forward.7} parent=1 // pred_check
      _
    $region43: #{forward.7} parent=1 // pred_check_branch
      %85 = sbr.rel (0) target = $region45
    $region44: #{forward.7} parent=1 // pred_region
      _
    $region45: #{forward.7} parent=1 // pred_fallthru
      _
    // Predicated region
    $region46: #{forward.7} parent=1 // pred_check
      _
    $region47: #{forward.7} parent=1 // pred_check_branch
      %87 = sbr.rel (0) target = $region49
    $region48: #{forward.7} parent=1 // pred_region
      _
    $region49: #{forward.7} parent=1 // pred_fallthru
      _
    // Predicated region
    $region50: #{forward.7} parent=1 // pred_check
      _
    $region51: #{forward.7} parent=1 // pred_check_branch
      %89 = sbr.rel (0) target = $region53
    $region52: #{forward.7} parent=1 // pred_region
      _
    $region53: #{forward.7} parent=1 // pred_fallthru
      _
    // Predicated region
    $region54: #{forward.7} parent=1 // pred_check
      _
    $region55: #{forward.7} parent=1 // pred_check_branch
      %91 = sbr.rel (0) target = $region57
    $region56: #{forward.7} parent=1 // pred_region
      %93 = vsyncadd [#allocation8], 0
      %s94 = sshll.u32 %s13, 4
      %s95 = int_to_ptr.hbm [resolvable:$true] %s94
      %s96 = sshll.u32 [#allocation7], 4
      %s97 = int_to_ptr.vmem [resolvable:$true] %s96
      %102 = dma.hbm_to_vmem [thread:$0]  %s95, 32768, %s97, [#allocation8], 512, 512, 32
    $region57: #{forward.7} parent=1 // pred_fallthru
      _
    // Predicated region
    $region58: #{forward.7} parent=1 // pred_check
      _
    $region59: #{forward.7} parent=1 // pred_check_branch
      %104 = sbr.rel (0) target = $region61
    $region60: #{forward.7} parent=1 // pred_region
      _
    $region61: #{forward.7} parent=1 // pred_fallthru
      _
    // Predicated region
    $region62: #{forward.7} parent=1 // pred_check
      _
    $region63: #{forward.7} parent=1 // pred_check_branch
      %106 = sbr.rel (0) target = $region65
    $region64: #{forward.7} parent=1 // pred_region
      _
    $region65: #{forward.7} parent=1 // pred_fallthru
      _
    // Predicated region
    $region66: #{forward.7} parent=1 // pred_check
      _
    $region67: #{forward.7} parent=1 // pred_check_branch
      %108 = sbr.rel (0) target = $region69
    $region68: #{forward.7} parent=1 // pred_region
      _
    $region69: #{forward.7} parent=1 // pred_fallthru
      _
    // Predicated region
    $region70: #{forward.7} parent=1 // pred_check
      _
    $region71: #{forward.7} parent=1 // pred_check_branch
      %110 = sbr.rel (0) target = $region73
    $region72: #{forward.7} parent=1 // pred_region
      _
    $region73: #{forward.7} parent=1 // pred_fallthru
      _
    // Predicated region
    $region74: #{forward.7} parent=1 // pred_check
      _
    $region75: #{forward.7} parent=1 // pred_check_branch
      %112 = sbr.rel (0) target = $region77
    $region76: #{forward.7} parent=1 // pred_region
      %114 = vsyncadd [#allocation8], 0
      %s116 = sshll.u32 %s18, 4
      %s117 = int_to_ptr.hbm [resolvable:$true] %s116
      %s118 = sshll.u32 [#allocation9], 4
      %s119 = int_to_ptr.vmem [resolvable:$true] %s118
      %121 = dma.hbm_to_vmem [thread:$0]  %s117, 16, %s119, [#allocation8]
    $region77: #{forward.7} parent=1 // pred_fallthru
      _
    // Predicated region
    $region78: #{forward.7} parent=1 // pred_check
      _
    $region79: #{forward.7} parent=1 // pred_check_branch
      %123 = sbr.rel (0) target = $region81
    $region80: #{forward.7} parent=1 // pred_region
      %125 = vsyncadd [#allocation11], 0
      %s127 = sshll.u32 %s19, 4
      %s128 = int_to_ptr.hbm [resolvable:$true] %s127
      %s129 = sshll.u32 [#allocation10], 4
      %s130 = int_to_ptr.vmem [resolvable:$true] %s129
      %132 = dma.hbm_to_vmem [thread:$0]  %s128, 16, %s130, [#allocation11]
    $region81: #{forward.7} parent=1 // pred_fallthru
      _
    // Predicated region
    $region82: #{forward.7} parent=1 // pred_check
      _
    $region83: #{forward.7} parent=1 // pred_check_branch
      %134 = sbr.rel (0) target = $region85
    $region84: #{forward.7} parent=1 // pred_region
      %136 = vsyncadd [#allocation11], 0
      %s138 = sshll.u32 %s20, 4
      %s139 = int_to_ptr.hbm [resolvable:$true] %s138
      %s140 = sshll.u32 [#allocation12], 4
      %s141 = int_to_ptr.vmem [resolvable:$true] %s140
      %143 = dma.hbm_to_vmem [thread:$0]  %s139, 16, %s141, [#allocation11]
    $region85: #{forward.7} parent=1 // pred_fallthru
      _
    // Predicated region
    $region86: #{forward.7} parent=1 // pred_check
      _
    $region87: #{forward.7} parent=1 // pred_check_branch
      %145 = sbr.rel (0) target = $region89
    $region88: #{forward.7} parent=1 // pred_region
      _
    $region89: #{forward.7} parent=1 // pred_fallthru
      _
    // Predicated region
    $region90: #{forward.7} parent=1 // pred_check
      _
    $region91: #{forward.7} parent=1 // pred_check_branch
      %147 = sbr.rel (0) target = $region93
    $region92: #{forward.7} parent=1 // pred_region
      %149 = vsyncadd [#allocation14], 0
      %s151 = sshll.u32 %s22, 4
      %s152 = int_to_ptr.hbm [resolvable:$true] %s151
      %s153 = sshll.u32 [#allocation13], 4
      %s154 = int_to_ptr.vmem [resolvable:$true] %s153
      %156 = dma.hbm_to_vmem [thread:$0]  %s152, 16, %s154, [#allocation14]
    $region93: #{forward.7} parent=1 // pred_fallthru
      _
    // Predicated region
    $region94: #{forward.7} parent=1 // pred_check
      _
    $region95: #{forward.7} parent=1 // pred_check_branch
      %158 = sbr.rel (0) target = $region97
    $region96: #{forward.7} parent=1 // pred_region
      %160 = dma.done [#allocation3], 768
    $region97: #{forward.7} parent=1 // pred_fallthru
      _
    // Predicated region
    $region98: #{forward.7} parent=1 // pred_check
      _
    $region99: #{forward.7} parent=1 // pred_check_branch
      %162 = sbr.rel (0) target = $region101
    $region100: #{forward.7} parent=1 // pred_region
      %164 = dma.done [#allocation5], 16
    $region101: #{forward.7} parent=1 // pred_fallthru
      _
    // Predicated region
    $region102: #{forward.7} parent=1 // pred_check
      _
    $region103: #{forward.7} parent=1 // pred_check_branch
      %166 = sbr.rel (0) target = $region105
    $region104: #{forward.7} parent=1 // pred_region
      %168 = dma.done [#allocation5], 12288
    $region105: #{forward.7} parent=1 // pred_fallthru
      _
    // Predicated region
    $region106: #{forward.7} parent=1 // pred_check
      _
    $region107: #{forward.7} parent=1 // pred_check_branch
      %170 = sbr.rel (0) target = $region109
    $region108: #{forward.7} parent=1 // pred_region
      %172 = dma.done [#allocation8], 32768
    $region109: #{forward.7} parent=1 // pred_fallthru
      _
    // Predicated region
    $region110: #{forward.7} parent=1 // pred_check
      _
    $region111: #{forward.7} parent=1 // pred_check_branch
      %174 = sbr.rel (0) target = $region113
    $region112: #{forward.7} parent=1 // pred_region
      %176 = dma.done [#allocation8], 16
    $region113: #{forward.7} parent=1 // pred_fallthru
      _
    // Predicated region
    $region114: #{forward.7} parent=1 // pred_check
      _
    $region115: #{forward.7} parent=1 // pred_check_branch
      %178 = sbr.rel (0) target = $region117
    $region116: #{forward.7} parent=1 // pred_region
      %180 = dma.done [#allocation11], 16
    $region117: #{forward.7} parent=1 // pred_fallthru
      _
    // Predicated region
    $region118: #{forward.7} parent=1 // pred_check
      _
    $region119: #{forward.7} parent=1 // pred_check_branch
      %182 = sbr.rel (0) target = $region121
    $region120: #{forward.7} parent=1 // pred_region
      %184 = dma.done [#allocation11], 16
    $region121: #{forward.7} parent=1 // pred_fallthru
      _
    // Predicated region
    $region122: #{forward.7} parent=1 // pred_check
      _
    $region123: #{forward.7} parent=1 // pred_check_branch
      %186 = sbr.rel (0) target = $region125
    $region124: #{forward.7} parent=1 // pred_region
      %188 = dma.done [#allocation14], 16
    $region125: #{forward.7} parent=1 // pred_fallthru
      _
    %v189 = vld [vmem:[%s0] sm:$0xff]
    %v190 = vld [vmem:[%s0 + $0x8] sm:$0xff]
    %v191 = vld [vmem:[%s1] sm:$0x3]
    %vm192 = vcmask 130048
    %v194 = vsel %vm192, %v191, 0
    %196 = vmatpush.msra.mxu0 0.0
    %197 = vmatpush.msra.mxu0 0.0
    %198 = vmatpush.msra.mxu0 0.0
    %199 = vmatpush.msra.mxu0 0.0
    %200 = vmatpush.msra.mxu0 0.0
    %201 = vmatpush.msra.mxu0 0.0
    %202 = vmatpush.msra.mxu0 0.0
    %203 = vmatpush.msra.mxu0 0.0
    %204 = vmatpush.msra.mxu0 0.0
    %205 = vmatpush.msra.mxu0 0.0
    %206 = vmatpush.msra.mxu0 0.0
    %207 = vmatpush.msra.mxu0 0.0
    %208 = vmatpush.msra.mxu0 0.0
    %209 = vmatpush.msra.mxu0 0.0
    %210 = vmatpush.msra.mxu0 %v190
    %211 = vmatpush.msra.mxu0 %v189
    %212 = vmatmul.f32.gmra.mxu0 %v194
    %v213 = vpop.f32.mrf.mxu0
    %v214 = vadd.f32 0.0, %v213
    %215 = vdwg.mxu0
    %v216 = vld [vmem:[%s3] sm:$0xff]
    %v217 = vld [vmem:[%s3 + $0x8] sm:$0xff]
    %v218 = vld [vmem:[%s3 + $0x10] sm:$0xff]
    %v219 = vld [vmem:[%s3 + $0x18] sm:$0xff]
    %v220 = vld [vmem:[%s3 + $0x20] sm:$0xff]
    %v221 = vld [vmem:[%s3 + $0x28] sm:$0xff]
    %v222 = vld [vmem:[%s4] sm:$0x1]
    %v224 = vperm.slane %v222, 0
    %vm226 = vcmask 392192
    %v228 = vsel %vm226, %v214, 0
    %230 = vmatpush.msra.mxu0 0.0
    %231 = vmatpush.msra.mxu0 0.0
    %232 = vmatpush.msra.mxu0 0.0
    %233 = vmatpush.msra.mxu0 0.0
    %234 = vmatpush.msra.mxu0 0.0
    %235 = vmatpush.msra.mxu0 0.0
    %236 = vmatpush.msra.mxu0 0.0
    %237 = vmatpush.msra.mxu0 0.0
    %238 = vmatpush.msra.mxu0 0.0
    %239 = vmatpush.msra.mxu0 0.0
    %240 = vmatpush.msra.mxu0 %v221
    %241 = vmatpush.msra.mxu0 %v220
    %242 = vmatpush.msra.mxu0 %v219
    %243 = vmatpush.msra.mxu0 %v218
    %244 = vmatpush.msra.mxu0 %v217
    %245 = vmatpush.msra.mxu0 %v216
    %246 = vmatmul.f32.gmra.mxu0 %v228
    %v247 = vpop.f32.mrf.mxu0
    %v248 = vadd.f32 %v224, %v247
    %249 = vdwg.mxu0
    %v250 = vtanh.pop %v248
    %v251 = vld [vmem:[%s5] sm:$0xff]
    %v252 = vld [vmem:[%s5 + $0x8] sm:$0xff]
    %v253 = vld [vmem:[%s5 + $0x10] sm:$0xff]
    %v254 = vld [vmem:[%s5 + $0x18] sm:$0xff]
    %v255 = vld [vmem:[%s5 + $0x20] sm:$0xff]
    %v256 = vld [vmem:[%s5 + $0x28] sm:$0xff]
    %v257 = vld [vmem:[%s5 + $0x30] sm:$0xff]
    %v258 = vld [vmem:[%s5 + $0x38] sm:$0xff]
    %v259 = vld [vmem:[%s5 + $0x40] sm:$0xff]
    %v260 = vld [vmem:[%s5 + $0x48] sm:$0xff]
    %v261 = vld [vmem:[%s5 + $0x50] sm:$0xff]
    %v262 = vld [vmem:[%s5 + $0x58] sm:$0xff]
    %v263 = vld [vmem:[%s6] sm:$0x3]
    %v264 = vld [vmem:[#allocation2] sm:$0xff]
    %v265 = vld [vmem:[#allocation2 + $0x8] sm:$0xff]
    %v266 = vld [vmem:[#allocation2 + $0x10] sm:$0xff]
    %v267 = vld [vmem:[#allocation2 + $0x18] sm:$0xff]
    %v268 = vld [vmem:[#allocation2 + $0x20] sm:$0xff]
    %v269 = vld [vmem:[#allocation2 + $0x28] sm:$0xff]
    %v270 = vld [vmem:[#allocation4] sm:$0x1]
    %v272 = vperm.slane %v263, 0
    %v273 = vperm.slane %v263, 1
    %v277 = vsel %vm226, %v189, 0
    %v280 = vsel %vm226, %v190, 0
    %282 = vmatpush.msra.mxu0 0.0
    %283 = vmatpush.msra.mxu0 0.0
    %284 = vmatpush.msra.mxu0 0.0
    %285 = vmatpush.msra.mxu0 0.0
    %286 = vmatpush.msra.mxu0 0.0
    %287 = vmatpush.msra.mxu0 0.0
    %288 = vmatpush.msra.mxu0 0.0
    %289 = vmatpush.msra.mxu0 0.0
    %290 = vmatpush.msra.mxu0 0.0
    %291 = vmatpush.msra.mxu0 0.0
    %292 = vmatpush.msra.mxu0 %v261
    %293 = vmatpush.msra.mxu0 %v259
    %294 = vmatpush.msra.mxu0 %v257
    %295 = vmatpush.msra.mxu0 %v255
    %296 = vmatpush.msra.mxu0 %v253
    %297 = vmatpush.msra.mxu0 %v251
    %298 = vmatmul.f32.gmra.mxu0 %v277
    %v299 = vpop.f32.mrf.mxu0
    %v300 = vadd.f32 %v272, %v299
    %301 = vmatmul.f32.gmra.mxu0 %v280
    %v302 = vpop.f32.mrf.mxu0
    %v303 = vadd.f32 %v272, %v302
    %304 = vdwg.mxu0
    %305 = vmatpush.msra.mxu0 0.0
    %306 = vmatpush.msra.mxu0 0.0
    %307 = vmatpush.msra.mxu0 0.0
    %308 = vmatpush.msra.mxu0 0.0
    %309 = vmatpush.msra.mxu0 0.0
    %310 = vmatpush.msra.mxu0 0.0
    %311 = vmatpush.msra.mxu0 0.0
    %312 = vmatpush.msra.mxu0 0.0
    %313 = vmatpush.msra.mxu0 0.0
    %314 = vmatpush.msra.mxu0 0.0
    %315 = vmatpush.msra.mxu0 %v262
    %316 = vmatpush.msra.mxu0 %v260
    %317 = vmatpush.msra.mxu0 %v258
    %318 = vmatpush.msra.mxu0 %v256
    %319 = vmatpush.msra.mxu0 %v254
    %320 = vmatpush.msra.mxu0 %v252
    %321 = vmatmul.f32.gmra.mxu0 %v277
    %v322 = vpop.f32.mrf.mxu0
    %v323 = vadd.f32 %v273, %v322
    %324 = vmatmul.f32.gmra.mxu0 %v280
    %v325 = vpop.f32.mrf.mxu0
    %v326 = vadd.f32 %v273, %v325
    %327 = vdwg.mxu0
    %329 = vrot.lane.b32.xlu0 %v300, 80
    %v330 = vpop.permute.xlu0 %329
    %vm331 = vcmask 31744
    %v332 = vsel %vm331, %v300, 0
    %v334 = vsel %vm331, %v330, 0
    %336 = vmatpush.xpose.msra.mxu0 0.0
    %337 = vmatpush.xpose.msra.mxu0 0.0
    %338 = vmatpush.xpose.msra.mxu0 0.0
    %339 = vmatpush.xpose.msra.mxu0 0.0
    %340 = vmatpush.xpose.msra.mxu0 0.0
    %341 = vmatpush.xpose.msra.mxu0 0.0
    %342 = vmatpush.xpose.msra.mxu0 0.0
    %343 = vmatpush.xpose.msra.mxu0 0.0
    %344 = vmatpush.xpose.msra.mxu0 0.0
    %345 = vmatpush.xpose.msra.mxu0 0.0
    %346 = vmatpush.xpose.msra.mxu0 0.0
    %347 = vmatpush.xpose.msra.mxu0 0.0
    %348 = vmatpush.xpose.msra.mxu0 0.0
    %349 = vmatpush.xpose.msra.mxu0 0.0
    %350 = vmatpush.xpose.msra.mxu0 0.0
    %351 = vmatpush.xpose.msra.mxu0 %v334
    %352 = vmatmul.f32.gmra.mxu0 %v332
    %v353 = vpop.f32.mrf.mxu0
    %v354 = vadd.f32 0.0, %v353
    %355 = vdwg.mxu0
    %357 = vrot.lane.b32.xlu0 %v303, 80
    %v358 = vpop.permute.xlu0 %357
    %v359 = vsel %vm331, %v303, 0
    %v361 = vsel %vm331, %v358, 0
    %363 = vmatpush.xpose.msra.mxu0 0.0
    %364 = vmatpush.xpose.msra.mxu0 0.0
    %365 = vmatpush.xpose.msra.mxu0 0.0
    %366 = vmatpush.xpose.msra.mxu0 0.0
    %367 = vmatpush.xpose.msra.mxu0 0.0
    %368 = vmatpush.xpose.msra.mxu0 0.0
    %369 = vmatpush.xpose.msra.mxu0 0.0
    %370 = vmatpush.xpose.msra.mxu0 0.0
    %371 = vmatpush.xpose.msra.mxu0 0.0
    %372 = vmatpush.xpose.msra.mxu0 0.0
    %373 = vmatpush.xpose.msra.mxu0 0.0
    %374 = vmatpush.xpose.msra.mxu0 0.0
    %375 = vmatpush.xpose.msra.mxu0 0.0
    %376 = vmatpush.xpose.msra.mxu0 0.0
    %377 = vmatpush.xpose.msra.mxu0 0.0
    %378 = vmatpush.xpose.msra.mxu0 %v361
    %379 = vmatmul.f32.gmra.mxu0 %v359
    %v380 = vpop.f32.mrf.mxu0
    %v381 = vadd.f32 0.0, %v380
    %382 = vdwg.mxu0
    %v383 = vmul.f32 %v354, 0.5
    %v384 = vmul.f32 %v381, 0.5
    %vm385 = vcmask 64512
    %v386 = vsel %vm385, %v383, -inf
    %387 = vmax.xlane.f32.xlu0 %v386
    %v388 = vpop.xlane.xlu0 %387
    %v389 = vsel %vm385, %v384, -inf
    %390 = vmax.xlane.f32.xlu0 %v389
    %v391 = vpop.xlane.xlu0 %390
    %v392 = vsub.f32 %v383, %v388
    %v393 = vsub.f32 %v384, %v391
    %v394 = vmul.f32 %v392, 1.442695
    %v395 = vpow.pop %v394
    %v396 = vmul.f32 %v393, 1.442695
    %v397 = vpow.pop %v396
    %v398 = vsel %vm385, %v395, 0.0
    %399 = vadd.xlane.f32.xlu0 %v398
    %v400 = vpop.xlane.xlu0 %399
    %v401 = vsel %vm385, %v397, 0.0
    %402 = vadd.xlane.f32.xlu0 %v401
    %v403 = vpop.xlane.xlu0 %402
    %v404 = vrcp.pop %v400
    %v405 = vmul.f32 %v400, %v404
    %v406 = vsub.f32 1.0, %v405
    %v407 = vmul.f32 %v404, %v406
    %v408 = vadd.f32 %v404, %v407
    %vm409 = vweird.f32 %v400
    %vm410 = vweird.f32 %v404
    %vm411 = vmor %vm409, %vm410
    %v412 = vsel %vm411, %v404, %v408
    %v413 = vand.u32 2147483647, %v400
    %vm414 = vcmp.eq.f32.partialorder %v413, 8.507059e+37
    %v415 = vand.u32 %v400, 2147483648
    %v416 = vor.u32 1.1754944e-38, %v415
    %v417 = vsel %vm414, %v416, %v412
    %v418 = vmul.f32 %v395, %v417
    %v419 = vrcp.pop %v403
    %v420 = vmul.f32 %v403, %v419
    %v421 = vsub.f32 1.0, %v420
    %v422 = vmul.f32 %v419, %v421
    %v423 = vadd.f32 %v419, %v422
    %vm424 = vweird.f32 %v403
    %vm425 = vweird.f32 %v419
    %vm426 = vmor %vm424, %vm425
    %v427 = vsel %vm426, %v419, %v423
    %v428 = vand.u32 2147483647, %v403
    %vm429 = vcmp.eq.f32.partialorder %v428, 8.507059e+37
    %v430 = vand.u32 %v403, 2147483648
    %v431 = vor.u32 1.1754944e-38, %v430
    %v432 = vsel %vm429, %v431, %v427
    %v433 = vmul.f32 %v397, %v432
    %434 = vrot.lane.b32.xlu0 %v300, 32
    %v435 = vpop.permute.xlu0 %434
    %v438 = vsel %vm385, %v418, 0
    %440 = vmatpush.msra.mxu0 0.0
    %441 = vmatpush.msra.mxu0 0.0
    %442 = vmatpush.msra.mxu0 0.0
    %443 = vmatpush.msra.mxu0 0.0
    %444 = vmatpush.msra.mxu0 0.0
    %445 = vmatpush.msra.mxu0 0.0
    %446 = vmatpush.msra.mxu0 0.0
    %447 = vmatpush.msra.mxu0 0.0
    %448 = vmatpush.msra.mxu0 0.0
    %449 = vmatpush.msra.mxu0 0.0
    %450 = vmatpush.msra.mxu0 0.0
    %451 = vmatpush.msra.mxu0 0.0
    %452 = vmatpush.msra.mxu0 0.0
    %453 = vmatpush.msra.mxu0 0.0
    %454 = vmatpush.msra.mxu0 0.0
    %455 = vmatpush.msra.mxu0 %v435
    %456 = vmatmul.f32.gmra.mxu0 %v438
    %v457 = vpop.f32.mrf.mxu0
    %v458 = vadd.f32 0.0, %v457
    %459 = vdwg.mxu0
    %460 = vrot.lane.b32.xlu0 %v303, 32
    %v461 = vpop.permute.xlu0 %460
    %v464 = vsel %vm385, %v433, 0
    %466 = vmatpush.msra.mxu0 0.0
    %467 = vmatpush.msra.mxu0 0.0
    %468 = vmatpush.msra.mxu0 0.0
    %469 = vmatpush.msra.mxu0 0.0
    %470 = vmatpush.msra.mxu0 0.0
    %471 = vmatpush.msra.mxu0 0.0
    %472 = vmatpush.msra.mxu0 0.0
    %473 = vmatpush.msra.mxu0 0.0
    %474 = vmatpush.msra.mxu0 0.0
    %475 = vmatpush.msra.mxu0 0.0
    %476 = vmatpush.msra.mxu0 0.0
    %477 = vmatpush.msra.mxu0 0.0
    %478 = vmatpush.msra.mxu0 0.0
    %479 = vmatpush.msra.mxu0 0.0
    %480 = vmatpush.msra.mxu0 0.0
    %481 = vmatpush.msra.mxu0 %v461
    %482 = vmatmul.f32.gmra.mxu0 %v464
    %v483 = vpop.f32.mrf.mxu0
    %v484 = vadd.f32 0.0, %v483
    %485 = vdwg.mxu0
    %486 = vrot.lane.b32.xlu0 %v300, 124
    %v487 = vpop.permute.xlu0 %486
    %488 = vrot.lane.b32.xlu0 %v300, 76
    %v489 = vpop.permute.xlu0 %488
    %v490 = vsel %vm331, %v487, 0
    %v492 = vsel %vm331, %v489, 0
    %494 = vmatpush.xpose.msra.mxu0 0.0
    %495 = vmatpush.xpose.msra.mxu0 0.0
    %496 = vmatpush.xpose.msra.mxu0 0.0
    %497 = vmatpush.xpose.msra.mxu0 0.0
    %498 = vmatpush.xpose.msra.mxu0 0.0
    %499 = vmatpush.xpose.msra.mxu0 0.0
    %500 = vmatpush.xpose.msra.mxu0 0.0
    %501 = vmatpush.xpose.msra.mxu0 0.0
    %502 = vmatpush.xpose.msra.mxu0 0.0
    %503 = vmatpush.xpose.msra.mxu0 0.0
    %504 = vmatpush.xpose.msra.mxu0 0.0
    %505 = vmatpush.xpose.msra.mxu0 0.0
    %506 = vmatpush.xpose.msra.mxu0 0.0
    %507 = vmatpush.xpose.msra.mxu0 0.0
    %508 = vmatpush.xpose.msra.mxu0 0.0
    %509 = vmatpush.xpose.msra.mxu0 %v492
    %510 = vmatmul.f32.gmra.mxu0 %v490
    %v511 = vpop.f32.mrf.mxu0
    %v512 = vadd.f32 0.0, %v511
    %513 = vdwg.mxu0
    %514 = vrot.lane.b32.xlu0 %v303, 124
    %v515 = vpop.permute.xlu0 %514
    %516 = vrot.lane.b32.xlu0 %v303, 76
    %v517 = vpop.permute.xlu0 %516
    %v518 = vsel %vm331, %v515, 0
    %v520 = vsel %vm331, %v517, 0
    %522 = vmatpush.xpose.msra.mxu0 0.0
    %523 = vmatpush.xpose.msra.mxu0 0.0
    %524 = vmatpush.xpose.msra.mxu0 0.0
    %525 = vmatpush.xpose.msra.mxu0 0.0
    %526 = vmatpush.xpose.msra.mxu0 0.0
    %527 = vmatpush.xpose.msra.mxu0 0.0
    %528 = vmatpush.xpose.msra.mxu0 0.0
    %529 = vmatpush.xpose.msra.mxu0 0.0
    %530 = vmatpush.xpose.msra.mxu0 0.0
    %531 = vmatpush.xpose.msra.mxu0 0.0
    %532 = vmatpush.xpose.msra.mxu0 0.0
    %533 = vmatpush.xpose.msra.mxu0 0.0
    %534 = vmatpush.xpose.msra.mxu0 0.0
    %535 = vmatpush.xpose.msra.mxu0 0.0
    %536 = vmatpush.xpose.msra.mxu0 0.0
    %537 = vmatpush.xpose.msra.mxu0 %v520
    %538 = vmatmul.f32.gmra.mxu0 %v518
    %v539 = vpop.f32.mrf.mxu0
    %v540 = vadd.f32 0.0, %v539
    %541 = vdwg.mxu0
    %v542 = vmul.f32 %v512, 0.5
    %v543 = vmul.f32 %v540, 0.5
    %v544 = vsel %vm385, %v542, -inf
    %545 = vmax.xlane.f32.xlu0 %v544
    %v546 = vpop.xlane.xlu0 %545
    %v547 = vsel %vm385, %v543, -inf
    %548 = vmax.xlane.f32.xlu0 %v547
    %v549 = vpop.xlane.xlu0 %548
    %v550 = vsub.f32 %v542, %v546
    %v551 = vsub.f32 %v543, %v549
    %v552 = vmul.f32 %v550, 1.442695
    %v553 = vpow.pop %v552
    %v554 = vmul.f32 %v551, 1.442695
    %v555 = vpow.pop %v554
    %v556 = vsel %vm385, %v553, 0.0
    %557 = vadd.xlane.f32.xlu0 %v556
    %v558 = vpop.xlane.xlu0 %557
    %v559 = vsel %vm385, %v555, 0.0
    %560 = vadd.xlane.f32.xlu0 %v559
    %v561 = vpop.xlane.xlu0 %560
    %v562 = vrcp.pop %v558
    %v563 = vmul.f32 %v558, %v562
    %v564 = vsub.f32 1.0, %v563
    %v565 = vmul.f32 %v562, %v564
    %v566 = vadd.f32 %v562, %v565
    %vm567 = vweird.f32 %v558
    %vm568 = vweird.f32 %v562
    %vm569 = vmor %vm567, %vm568
    %v570 = vsel %vm569, %v562, %v566
    %v571 = vand.u32 2147483647, %v558
    %vm572 = vcmp.eq.f32.partialorder %v571, 8.507059e+37
    %v573 = vand.u32 %v558, 2147483648
    %v574 = vor.u32 1.1754944e-38, %v573
    %v575 = vsel %vm572, %v574, %v570
    %v576 = vmul.f32 %v553, %v575
    %v577 = vrcp.pop %v561
    %v578 = vmul.f32 %v561, %v577
    %v579 = vsub.f32 1.0, %v578
    %v580 = vmul.f32 %v577, %v579
    %v581 = vadd.f32 %v577, %v580
    %vm582 = vweird.f32 %v561
    %vm583 = vweird.f32 %v577
    %vm584 = vmor %vm582, %vm583
    %v585 = vsel %vm584, %v577, %v581
    %v586 = vand.u32 2147483647, %v561
    %vm587 = vcmp.eq.f32.partialorder %v586, 8.507059e+37
    %v588 = vand.u32 %v561, 2147483648
    %v589 = vor.u32 1.1754944e-38, %v588
    %v590 = vsel %vm587, %v589, %v585
    %v591 = vmul.f32 %v555, %v590
    %592 = vrot.lane.b32.xlu0 %v300, 28
    %v593 = vpop.permute.xlu0 %592
    %v596 = vsel %vm385, %v576, 0
    %598 = vmatpush.msra.mxu0 0.0
    %599 = vmatpush.msra.mxu0 0.0
    %600 = vmatpush.msra.mxu0 0.0
    %601 = vmatpush.msra.mxu0 0.0
    %602 = vmatpush.msra.mxu0 0.0
    %603 = vmatpush.msra.mxu0 0.0
    %604 = vmatpush.msra.mxu0 0.0
    %605 = vmatpush.msra.mxu0 0.0
    %606 = vmatpush.msra.mxu0 0.0
    %607 = vmatpush.msra.mxu0 0.0
    %608 = vmatpush.msra.mxu0 0.0
    %609 = vmatpush.msra.mxu0 0.0
    %610 = vmatpush.msra.mxu0 0.0
    %611 = vmatpush.msra.mxu0 0.0
    %612 = vmatpush.msra.mxu0 0.0
    %613 = vmatpush.msra.mxu0 %v593
    %614 = vmatmul.f32.gmra.mxu0 %v596
    %v615 = vpop.f32.mrf.mxu0
    %v616 = vadd.f32 0.0, %v615
    %617 = vdwg.mxu0
    %618 = vrot.lane.b32.xlu0 %v303, 28
    %v619 = vpop.permute.xlu0 %618
    %v622 = vsel %vm385, %v591, 0
    %624 = vmatpush.msra.mxu0 0.0
    %625 = vmatpush.msra.mxu0 0.0
    %626 = vmatpush.msra.mxu0 0.0
    %627 = vmatpush.msra.mxu0 0.0
    %628 = vmatpush.msra.mxu0 0.0
    %629 = vmatpush.msra.mxu0 0.0
    %630 = vmatpush.msra.mxu0 0.0
    %631 = vmatpush.msra.mxu0 0.0
    %632 = vmatpush.msra.mxu0 0.0
    %633 = vmatpush.msra.mxu0 0.0
    %634 = vmatpush.msra.mxu0 0.0
    %635 = vmatpush.msra.mxu0 0.0
    %636 = vmatpush.msra.mxu0 0.0
    %637 = vmatpush.msra.mxu0 0.0
    %638 = vmatpush.msra.mxu0 0.0
    %639 = vmatpush.msra.mxu0 %v619
    %640 = vmatmul.f32.gmra.mxu0 %v622
    %v641 = vpop.f32.mrf.mxu0
    %v642 = vadd.f32 0.0, %v641
    %643 = vdwg.mxu0
    %644 = vrot.lane.b32.xlu0 %v300, 120
    %v645 = vpop.permute.xlu0 %644
    %646 = vrot.lane.b32.xlu0 %v300, 72
    %v647 = vpop.permute.xlu0 %646
    %v648 = vsel %vm331, %v645, 0
    %v650 = vsel %vm331, %v647, 0
    %652 = vmatpush.xpose.msra.mxu0 0.0
    %653 = vmatpush.xpose.msra.mxu0 0.0
    %654 = vmatpush.xpose.msra.mxu0 0.0
    %655 = vmatpush.xpose.msra.mxu0 0.0
    %656 = vmatpush.xpose.msra.mxu0 0.0
    %657 = vmatpush.xpose.msra.mxu0 0.0
    %658 = vmatpush.xpose.msra.mxu0 0.0
    %659 = vmatpush.xpose.msra.mxu0 0.0
    %660 = vmatpush.xpose.msra.mxu0 0.0
    %661 = vmatpush.xpose.msra.mxu0 0.0
    %662 = vmatpush.xpose.msra.mxu0 0.0
    %663 = vmatpush.xpose.msra.mxu0 0.0
    %664 = vmatpush.xpose.msra.mxu0 0.0
    %665 = vmatpush.xpose.msra.mxu0 0.0
    %666 = vmatpush.xpose.msra.mxu0 0.0
    %667 = vmatpush.xpose.msra.mxu0 %v650
    %668 = vmatmul.f32.gmra.mxu0 %v648
    %v669 = vpop.f32.mrf.mxu0
    %v670 = vadd.f32 0.0, %v669
    %671 = vdwg.mxu0
    %672 = vrot.lane.b32.xlu0 %v303, 120
    %v673 = vpop.permute.xlu0 %672
    %674 = vrot.lane.b32.xlu0 %v303, 72
    %v675 = vpop.permute.xlu0 %674
    %v676 = vsel %vm331, %v673, 0
    %v678 = vsel %vm331, %v675, 0
    %680 = vmatpush.xpose.msra.mxu0 0.0
    %681 = vmatpush.xpose.msra.mxu0 0.0
    %682 = vmatpush.xpose.msra.mxu0 0.0
    %683 = vmatpush.xpose.msra.mxu0 0.0
    %684 = vmatpush.xpose.msra.mxu0 0.0
    %685 = vmatpush.xpose.msra.mxu0 0.0
    %686 = vmatpush.xpose.msra.mxu0 0.0
    %687 = vmatpush.xpose.msra.mxu0 0.0
    %688 = vmatpush.xpose.msra.mxu0 0.0
    %689 = vmatpush.xpose.msra.mxu0 0.0
    %690 = vmatpush.xpose.msra.mxu0 0.0
    %691 = vmatpush.xpose.msra.mxu0 0.0
    %692 = vmatpush.xpose.msra.mxu0 0.0
    %693 = vmatpush.xpose.msra.mxu0 0.0
    %694 = vmatpush.xpose.msra.mxu0 0.0
    %695 = vmatpush.xpose.msra.mxu0 %v678
    %696 = vmatmul.f32.gmra.mxu0 %v676
    %v697 = vpop.f32.mrf.mxu0
    %v698 = vadd.f32 0.0, %v697
    %699 = vdwg.mxu0
    %v700 = vmul.f32 %v670, 0.5
    %v701 = vmul.f32 %v698, 0.5
    %v702 = vsel %vm385, %v700, -inf
    %703 = vmax.xlane.f32.xlu0 %v702
    %v704 = vpop.xlane.xlu0 %703
    %v705 = vsel %vm385, %v701, -inf
    %706 = vmax.xlane.f32.xlu0 %v705
    %v707 = vpop.xlane.xlu0 %706
    %v708 = vsub.f32 %v700, %v704
    %v709 = vsub.f32 %v701, %v707
    %v710 = vmul.f32 %v708, 1.442695
    %v711 = vpow.pop %v710
    %v712 = vmul.f32 %v709, 1.442695
    %v713 = vpow.pop %v712
    %v714 = vsel %vm385, %v711, 0.0
    %715 = vadd.xlane.f32.xlu0 %v714
    %v716 = vpop.xlane.xlu0 %715
    %v717 = vsel %vm385, %v713, 0.0
    %718 = vadd.xlane.f32.xlu0 %v717
    %v719 = vpop.xlane.xlu0 %718
    %v720 = vrcp.pop %v716
    %v721 = vmul.f32 %v716, %v720
    %v722 = vsub.f32 1.0, %v721
    %v723 = vmul.f32 %v720, %v722
    %v724 = vadd.f32 %v720, %v723
    %vm725 = vweird.f32 %v716
    %vm726 = vweird.f32 %v720
    %vm727 = vmor %vm725, %vm726
    %v728 = vsel %vm727, %v720, %v724
    %v729 = vand.u32 2147483647, %v716
    %vm730 = vcmp.eq.f32.partialorder %v729, 8.507059e+37
    %v731 = vand.u32 %v716, 2147483648
    %v732 = vor.u32 1.1754944e-38, %v731
    %v733 = vsel %vm730, %v732, %v728
    %v734 = vmul.f32 %v711, %v733
    %v735 = vrcp.pop %v719
    %v736 = vmul.f32 %v719, %v735
    %v737 = vsub.f32 1.0, %v736
    %v738 = vmul.f32 %v735, %v737
    %v739 = vadd.f32 %v735, %v738
    %vm740 = vweird.f32 %v719
    %vm741 = vweird.f32 %v735
    %vm742 = vmor %vm740, %vm741
    %v743 = vsel %vm742, %v735, %v739
    %v744 = vand.u32 2147483647, %v719
    %vm745 = vcmp.eq.f32.partialorder %v744, 8.507059e+37
    %v746 = vand.u32 %v719, 2147483648
    %v747 = vor.u32 1.1754944e-38, %v746
    %v748 = vsel %vm745, %v747, %v743
    %v749 = vmul.f32 %v713, %v748
    %750 = vrot.lane.b32.xlu0 %v300, 24
    %v751 = vpop.permute.xlu0 %750
    %v754 = vsel %vm385, %v734, 0
    %756 = vmatpush.msra.mxu0 0.0
    %757 = vmatpush.msra.mxu0 0.0
    %758 = vmatpush.msra.mxu0 0.0
    %759 = vmatpush.msra.mxu0 0.0
    %760 = vmatpush.msra.mxu0 0.0
    %761 = vmatpush.msra.mxu0 0.0
    %762 = vmatpush.msra.mxu0 0.0
    %763 = vmatpush.msra.mxu0 0.0
    %764 = vmatpush.msra.mxu0 0.0
    %765 = vmatpush.msra.mxu0 0.0
    %766 = vmatpush.msra.mxu0 0.0
    %767 = vmatpush.msra.mxu0 0.0
    %768 = vmatpush.msra.mxu0 0.0
    %769 = vmatpush.msra.mxu0 0.0
    %770 = vmatpush.msra.mxu0 0.0
    %771 = vmatpush.msra.mxu0 %v751
    %772 = vmatmul.f32.gmra.mxu0 %v754
    %v773 = vpop.f32.mrf.mxu0
    %v774 = vadd.f32 0.0, %v773
    %775 = vdwg.mxu0
    %776 = vrot.lane.b32.xlu0 %v303, 24
    %v777 = vpop.permute.xlu0 %776
    %v780 = vsel %vm385, %v749, 0
    %782 = vmatpush.msra.mxu0 0.0
    %783 = vmatpush.msra.mxu0 0.0
    %784 = vmatpush.msra.mxu0 0.0
    %785 = vmatpush.msra.mxu0 0.0
    %786 = vmatpush.msra.mxu0 0.0
    %787 = vmatpush.msra.mxu0 0.0
    %788 = vmatpush.msra.mxu0 0.0
    %789 = vmatpush.msra.mxu0 0.0
    %790 = vmatpush.msra.mxu0 0.0
    %791 = vmatpush.msra.mxu0 0.0
    %792 = vmatpush.msra.mxu0 0.0
    %793 = vmatpush.msra.mxu0 0.0
    %794 = vmatpush.msra.mxu0 0.0
    %795 = vmatpush.msra.mxu0 0.0
    %796 = vmatpush.msra.mxu0 0.0
    %797 = vmatpush.msra.mxu0 %v777
    %798 = vmatmul.f32.gmra.mxu0 %v780
    %v799 = vpop.f32.mrf.mxu0
    %v800 = vadd.f32 0.0, %v799
    %801 = vdwg.mxu0
    %802 = vrot.lane.b32.xlu0 %v300, 116
    %v803 = vpop.permute.xlu0 %802
    %804 = vrot.lane.b32.xlu0 %v300, 68
    %v805 = vpop.permute.xlu0 %804
    %v806 = vsel %vm331, %v803, 0
    %v808 = vsel %vm331, %v805, 0
    %810 = vmatpush.xpose.msra.mxu0 0.0
    %811 = vmatpush.xpose.msra.mxu0 0.0
    %812 = vmatpush.xpose.msra.mxu0 0.0
    %813 = vmatpush.xpose.msra.mxu0 0.0
    %814 = vmatpush.xpose.msra.mxu0 0.0
    %815 = vmatpush.xpose.msra.mxu0 0.0
    %816 = vmatpush.xpose.msra.mxu0 0.0
    %817 = vmatpush.xpose.msra.mxu0 0.0
    %818 = vmatpush.xpose.msra.mxu0 0.0
    %819 = vmatpush.xpose.msra.mxu0 0.0
    %820 = vmatpush.xpose.msra.mxu0 0.0
    %821 = vmatpush.xpose.msra.mxu0 0.0
    %822 = vmatpush.xpose.msra.mxu0 0.0
    %823 = vmatpush.xpose.msra.mxu0 0.0
    %824 = vmatpush.xpose.msra.mxu0 0.0
    %825 = vmatpush.xpose.msra.mxu0 %v808
    %826 = vmatmul.f32.gmra.mxu0 %v806
    %v827 = vpop.f32.mrf.mxu0
    %v828 = vadd.f32 0.0, %v827
    %829 = vdwg.mxu0
    %830 = vrot.lane.b32.xlu0 %v303, 116
    %v831 = vpop.permute.xlu0 %830
    %832 = vrot.lane.b32.xlu0 %v303, 68
    %v833 = vpop.permute.xlu0 %832
    %v834 = vsel %vm331, %v831, 0
    %v836 = vsel %vm331, %v833, 0
    %838 = vmatpush.xpose.msra.mxu0 0.0
    %839 = vmatpush.xpose.msra.mxu0 0.0
    %840 = vmatpush.xpose.msra.mxu0 0.0
    %841 = vmatpush.xpose.msra.mxu0 0.0
    %842 = vmatpush.xpose.msra.mxu0 0.0
    %843 = vmatpush.xpose.msra.mxu0 0.0
    %844 = vmatpush.xpose.msra.mxu0 0.0
    %845 = vmatpush.xpose.msra.mxu0 0.0
    %846 = vmatpush.xpose.msra.mxu0 0.0
    %847 = vmatpush.xpose.msra.mxu0 0.0
    %848 = vmatpush.xpose.msra.mxu0 0.0
    %849 = vmatpush.xpose.msra.mxu0 0.0
    %850 = vmatpush.xpose.msra.mxu0 0.0
    %851 = vmatpush.xpose.msra.mxu0 0.0
    %852 = vmatpush.xpose.msra.mxu0 0.0
    %853 = vmatpush.xpose.msra.mxu0 %v836
    %854 = vmatmul.f32.gmra.mxu0 %v834
    %v855 = vpop.f32.mrf.mxu0
    %v856 = vadd.f32 0.0, %v855
    %857 = vdwg.mxu0
    %v858 = vmul.f32 %v828, 0.5
    %v859 = vmul.f32 %v856, 0.5
    %v860 = vsel %vm385, %v858, -inf
    %861 = vmax.xlane.f32.xlu0 %v860
    %v862 = vpop.xlane.xlu0 %861
    %v863 = vsel %vm385, %v859, -inf
    %864 = vmax.xlane.f32.xlu0 %v863
    %v865 = vpop.xlane.xlu0 %864
    %v866 = vsub.f32 %v858, %v862
    %v867 = vsub.f32 %v859, %v865
    %v868 = vmul.f32 %v866, 1.442695
    %v869 = vpow.pop %v868
    %v870 = vmul.f32 %v867, 1.442695
    %v871 = vpow.pop %v870
    %v872 = vsel %vm385, %v869, 0.0
    %873 = vadd.xlane.f32.xlu0 %v872
    %v874 = vpop.xlane.xlu0 %873
    %v875 = vsel %vm385, %v871, 0.0
    %876 = vadd.xlane.f32.xlu0 %v875
    %v877 = vpop.xlane.xlu0 %876
    %v878 = vrcp.pop %v874
    %v879 = vmul.f32 %v874, %v878
    %v880 = vsub.f32 1.0, %v879
    %v881 = vmul.f32 %v878, %v880
    %v882 = vadd.f32 %v878, %v881
    %vm883 = vweird.f32 %v874
    %vm884 = vweird.f32 %v878
    %vm885 = vmor %vm883, %vm884
    %v886 = vsel %vm885, %v878, %v882
    %v887 = vand.u32 2147483647, %v874
    %vm888 = vcmp.eq.f32.partialorder %v887, 8.507059e+37
    %v889 = vand.u32 %v874, 2147483648
    %v890 = vor.u32 1.1754944e-38, %v889
    %v891 = vsel %vm888, %v890, %v886
    %v892 = vmul.f32 %v869, %v891
    %v893 = vrcp.pop %v877
    %v894 = vmul.f32 %v877, %v893
    %v895 = vsub.f32 1.0, %v894
    %v896 = vmul.f32 %v893, %v895
    %v897 = vadd.f32 %v893, %v896
    %vm898 = vweird.f32 %v877
    %vm899 = vweird.f32 %v893
    %vm900 = vmor %vm898, %vm899
    %v901 = vsel %vm900, %v893, %v897
    %v902 = vand.u32 2147483647, %v877
    %vm903 = vcmp.eq.f32.partialorder %v902, 8.507059e+37
    %v904 = vand.u32 %v877, 2147483648
    %v905 = vor.u32 1.1754944e-38, %v904
    %v906 = vsel %vm903, %v905, %v901
    %v907 = vmul.f32 %v871, %v906
    %908 = vrot.lane.b32.xlu0 %v300, 20
    %v909 = vpop.permute.xlu0 %908
    %v912 = vsel %vm385, %v892, 0
    %914 = vmatpush.msra.mxu0 0.0
    %915 = vmatpush.msra.mxu0 0.0
    %916 = vmatpush.msra.mxu0 0.0
    %917 = vmatpush.msra.mxu0 0.0
    %918 = vmatpush.msra.mxu0 0.0
    %919 = vmatpush.msra.mxu0 0.0
    %920 = vmatpush.msra.mxu0 0.0
    %921 = vmatpush.msra.mxu0 0.0
    %922 = vmatpush.msra.mxu0 0.0
    %923 = vmatpush.msra.mxu0 0.0
    %924 = vmatpush.msra.mxu0 0.0
    %925 = vmatpush.msra.mxu0 0.0
    %926 = vmatpush.msra.mxu0 0.0
    %927 = vmatpush.msra.mxu0 0.0
    %928 = vmatpush.msra.mxu0 0.0
    %929 = vmatpush.msra.mxu0 %v909
    %930 = vmatmul.f32.gmra.mxu0 %v912
    %v931 = vpop.f32.mrf.mxu0
    %v932 = vadd.f32 0.0, %v931
    %933 = vdwg.mxu0
    %934 = vrot.lane.b32.xlu0 %v303, 20
    %v935 = vpop.permute.xlu0 %934
    %v938 = vsel %vm385, %v907, 0
    %940 = vmatpush.msra.mxu0 0.0
    %941 = vmatpush.msra.mxu0 0.0
    %942 = vmatpush.msra.mxu0 0.0
    %943 = vmatpush.msra.mxu0 0.0
    %944 = vmatpush.msra.mxu0 0.0
    %945 = vmatpush.msra.mxu0 0.0
    %946 = vmatpush.msra.mxu0 0.0
    %947 = vmatpush.msra.mxu0 0.0
    %948 = vmatpush.msra.mxu0 0.0
    %949 = vmatpush.msra.mxu0 0.0
    %950 = vmatpush.msra.mxu0 0.0
    %951 = vmatpush.msra.mxu0 0.0
    %952 = vmatpush.msra.mxu0 0.0
    %953 = vmatpush.msra.mxu0 0.0
    %954 = vmatpush.msra.mxu0 0.0
    %955 = vmatpush.msra.mxu0 %v935
    %956 = vmatmul.f32.gmra.mxu0 %v938
    %v957 = vpop.f32.mrf.mxu0
    %v958 = vadd.f32 0.0, %v957
    %959 = vdwg.mxu0
    %960 = vrot.lane.b32.xlu0 %v300, 112
    %v961 = vpop.permute.xlu0 %960
    %962 = vrot.lane.b32.xlu0 %v300, 64
    %v963 = vpop.permute.xlu0 %962
    %v964 = vsel %vm331, %v961, 0
    %v966 = vsel %vm331, %v963, 0
    %968 = vmatpush.xpose.msra.mxu0 0.0
    %969 = vmatpush.xpose.msra.mxu0 0.0
    %970 = vmatpush.xpose.msra.mxu0 0.0
    %971 = vmatpush.xpose.msra.mxu0 0.0
    %972 = vmatpush.xpose.msra.mxu0 0.0
    %973 = vmatpush.xpose.msra.mxu0 0.0
    %974 = vmatpush.xpose.msra.mxu0 0.0
    %975 = vmatpush.xpose.msra.mxu0 0.0
    %976 = vmatpush.xpose.msra.mxu0 0.0
    %977 = vmatpush.xpose.msra.mxu0 0.0
    %978 = vmatpush.xpose.msra.mxu0 0.0
    %979 = vmatpush.xpose.msra.mxu0 0.0
    %980 = vmatpush.xpose.msra.mxu0 0.0
    %981 = vmatpush.xpose.msra.mxu0 0.0
    %982 = vmatpush.xpose.msra.mxu0 0.0
    %983 = vmatpush.xpose.msra.mxu0 %v966
    %984 = vmatmul.f32.gmra.mxu0 %v964
    %v985 = vpop.f32.mrf.mxu0
    %v986 = vadd.f32 0.0, %v985
    %987 = vdwg.mxu0
    %988 = vrot.lane.b32.xlu0 %v303, 112
    %v989 = vpop.permute.xlu0 %988
    %990 = vrot.lane.b32.xlu0 %v303, 64
    %v991 = vpop.permute.xlu0 %990
    %v992 = vsel %vm331, %v989, 0
    %v994 = vsel %vm331, %v991, 0
    %996 = vmatpush.xpose.msra.mxu0 0.0
    %997 = vmatpush.xpose.msra.mxu0 0.0
    %998 = vmatpush.xpose.msra.mxu0 0.0
    %999 = vmatpush.xpose.msra.mxu0 0.0
    %1000 = vmatpush.xpose.msra.mxu0 0.0
    %1001 = vmatpush.xpose.msra.mxu0 0.0
    %1002 = vmatpush.xpose.msra.mxu0 0.0
    %1003 = vmatpush.xpose.msra.mxu0 0.0
    %1004 = vmatpush.xpose.msra.mxu0 0.0
    %1005 = vmatpush.xpose.msra.mxu0 0.0
    %1006 = vmatpush.xpose.msra.mxu0 0.0
    %1007 = vmatpush.xpose.msra.mxu0 0.0
    %1008 = vmatpush.xpose.msra.mxu0 0.0
    %1009 = vmatpush.xpose.msra.mxu0 0.0
    %1010 = vmatpush.xpose.msra.mxu0 0.0
    %1011 = vmatpush.xpose.msra.mxu0 %v994
    %1012 = vmatmul.f32.gmra.mxu0 %v992
    %v1013 = vpop.f32.mrf.mxu0
    %v1014 = vadd.f32 0.0, %v1013
    %1015 = vdwg.mxu0
    %v1016 = vmul.f32 %v986, 0.5
    %v1017 = vmul.f32 %v1014, 0.5
    %v1018 = vsel %vm385, %v1016, -inf
    %1019 = vmax.xlane.f32.xlu0 %v1018
    %v1020 = vpop.xlane.xlu0 %1019
    %v1021 = vsel %vm385, %v1017, -inf
    %1022 = vmax.xlane.f32.xlu0 %v1021
    %v1023 = vpop.xlane.xlu0 %1022
    %v1024 = vsub.f32 %v1016, %v1020
    %v1025 = vsub.f32 %v1017, %v1023
    %v1026 = vmul.f32 %v1024, 1.442695
    %v1027 = vpow.pop %v1026
    %v1028 = vmul.f32 %v1025, 1.442695
    %v1029 = vpow.pop %v1028
    %v1030 = vsel %vm385, %v1027, 0.0
    %1031 = vadd.xlane.f32.xlu0 %v1030
    %v1032 = vpop.xlane.xlu0 %1031
    %v1033 = vsel %vm385, %v1029, 0.0
    %1034 = vadd.xlane.f32.xlu0 %v1033
    %v1035 = vpop.xlane.xlu0 %1034
    %v1036 = vrcp.pop %v1032
    %v1037 = vmul.f32 %v1032, %v1036
    %v1038 = vsub.f32 1.0, %v1037
    %v1039 = vmul.f32 %v1036, %v1038
    %v1040 = vadd.f32 %v1036, %v1039
    %vm1041 = vweird.f32 %v1032
    %vm1042 = vweird.f32 %v1036
    %vm1043 = vmor %vm1041, %vm1042
    %v1044 = vsel %vm1043, %v1036, %v1040
    %v1045 = vand.u32 2147483647, %v1032
    %vm1046 = vcmp.eq.f32.partialorder %v1045, 8.507059e+37
    %v1047 = vand.u32 %v1032, 2147483648
    %v1048 = vor.u32 1.1754944e-38, %v1047
    %v1049 = vsel %vm1046, %v1048, %v1044
    %v1050 = vmul.f32 %v1027, %v1049
    %v1051 = vrcp.pop %v1035
    %v1052 = vmul.f32 %v1035, %v1051
    %v1053 = vsub.f32 1.0, %v1052
    %v1054 = vmul.f32 %v1051, %v1053
    %v1055 = vadd.f32 %v1051, %v1054
    %vm1056 = vweird.f32 %v1035
    %vm1057 = vweird.f32 %v1051
    %vm1058 = vmor %vm1056, %vm1057
    %v1059 = vsel %vm1058, %v1051, %v1055
    %v1060 = vand.u32 2147483647, %v1035
    %vm1061 = vcmp.eq.f32.partialorder %v1060, 8.507059e+37
    %v1062 = vand.u32 %v1035, 2147483648
    %v1063 = vor.u32 1.1754944e-38, %v1062
    %v1064 = vsel %vm1061, %v1063, %v1059
    %v1065 = vmul.f32 %v1029, %v1064
    %1066 = vrot.lane.b32.xlu0 %v300, 16
    %v1067 = vpop.permute.xlu0 %1066
    %v1070 = vsel %vm385, %v1050, 0
    %1072 = vmatpush.msra.mxu0 0.0
    %1073 = vmatpush.msra.mxu0 0.0
    %1074 = vmatpush.msra.mxu0 0.0
    %1075 = vmatpush.msra.mxu0 0.0
    %1076 = vmatpush.msra.mxu0 0.0
    %1077 = vmatpush.msra.mxu0 0.0
    %1078 = vmatpush.msra.mxu0 0.0
    %1079 = vmatpush.msra.mxu0 0.0
    %1080 = vmatpush.msra.mxu0 0.0
    %1081 = vmatpush.msra.mxu0 0.0
    %1082 = vmatpush.msra.mxu0 0.0
    %1083 = vmatpush.msra.mxu0 0.0
    %1084 = vmatpush.msra.mxu0 0.0
    %1085 = vmatpush.msra.mxu0 0.0
    %1086 = vmatpush.msra.mxu0 0.0
    %1087 = vmatpush.msra.mxu0 %v1067
    %1088 = vmatmul.f32.gmra.mxu0 %v1070
    %v1089 = vpop.f32.mrf.mxu0
    %v1090 = vadd.f32 0.0, %v1089
    %1091 = vdwg.mxu0
    %1092 = vrot.lane.b32.xlu0 %v303, 16
    %v1093 = vpop.permute.xlu0 %1092
    %v1096 = vsel %vm385, %v1065, 0
    %1098 = vmatpush.msra.mxu0 0.0
    %1099 = vmatpush.msra.mxu0 0.0
    %1100 = vmatpush.msra.mxu0 0.0
    %1101 = vmatpush.msra.mxu0 0.0
    %1102 = vmatpush.msra.mxu0 0.0
    %1103 = vmatpush.msra.mxu0 0.0
    %1104 = vmatpush.msra.mxu0 0.0
    %1105 = vmatpush.msra.mxu0 0.0
    %1106 = vmatpush.msra.mxu0 0.0
    %1107 = vmatpush.msra.mxu0 0.0
    %1108 = vmatpush.msra.mxu0 0.0
    %1109 = vmatpush.msra.mxu0 0.0
    %1110 = vmatpush.msra.mxu0 0.0
    %1111 = vmatpush.msra.mxu0 0.0
    %1112 = vmatpush.msra.mxu0 0.0
    %1113 = vmatpush.msra.mxu0 %v1093
    %1114 = vmatmul.f32.gmra.mxu0 %v1096
    %v1115 = vpop.f32.mrf.mxu0
    %v1116 = vadd.f32 0.0, %v1115
    %1117 = vdwg.mxu0
    %1118 = vrot.lane.b32.xlu0 %v300, 108
    %v1119 = vpop.permute.xlu0 %1118
    %1120 = vrot.lane.b32.xlu0 %v300, 60
    %v1121 = vpop.permute.xlu0 %1120
    %v1122 = vsel %vm331, %v1119, 0
    %v1124 = vsel %vm331, %v1121, 0
    %1126 = vmatpush.xpose.msra.mxu0 0.0
    %1127 = vmatpush.xpose.msra.mxu0 0.0
    %1128 = vmatpush.xpose.msra.mxu0 0.0
    %1129 = vmatpush.xpose.msra.mxu0 0.0
    %1130 = vmatpush.xpose.msra.mxu0 0.0
    %1131 = vmatpush.xpose.msra.mxu0 0.0
    %1132 = vmatpush.xpose.msra.mxu0 0.0
    %1133 = vmatpush.xpose.msra.mxu0 0.0
    %1134 = vmatpush.xpose.msra.mxu0 0.0
    %1135 = vmatpush.xpose.msra.mxu0 0.0
    %1136 = vmatpush.xpose.msra.mxu0 0.0
    %1137 = vmatpush.xpose.msra.mxu0 0.0
    %1138 = vmatpush.xpose.msra.mxu0 0.0
    %1139 = vmatpush.xpose.msra.mxu0 0.0
    %1140 = vmatpush.xpose.msra.mxu0 0.0
    %1141 = vmatpush.xpose.msra.mxu0 %v1124
    %1142 = vmatmul.f32.gmra.mxu0 %v1122
    %v1143 = vpop.f32.mrf.mxu0
    %v1144 = vadd.f32 0.0, %v1143
    %1145 = vdwg.mxu0
    %1146 = vrot.lane.b32.xlu0 %v303, 108
    %v1147 = vpop.permute.xlu0 %1146
    %1148 = vrot.lane.b32.xlu0 %v303, 60
    %v1149 = vpop.permute.xlu0 %1148
    %v1150 = vsel %vm331, %v1147, 0
    %v1152 = vsel %vm331, %v1149, 0
    %1154 = vmatpush.xpose.msra.mxu0 0.0
    %1155 = vmatpush.xpose.msra.mxu0 0.0
    %1156 = vmatpush.xpose.msra.mxu0 0.0
    %1157 = vmatpush.xpose.msra.mxu0 0.0
    %1158 = vmatpush.xpose.msra.mxu0 0.0
    %1159 = vmatpush.xpose.msra.mxu0 0.0
    %1160 = vmatpush.xpose.msra.mxu0 0.0
    %1161 = vmatpush.xpose.msra.mxu0 0.0
    %1162 = vmatpush.xpose.msra.mxu0 0.0
    %1163 = vmatpush.xpose.msra.mxu0 0.0
    %1164 = vmatpush.xpose.msra.mxu0 0.0
    %1165 = vmatpush.xpose.msra.mxu0 0.0
    %1166 = vmatpush.xpose.msra.mxu0 0.0
    %1167 = vmatpush.xpose.msra.mxu0 0.0
    %1168 = vmatpush.xpose.msra.mxu0 0.0
    %1169 = vmatpush.xpose.msra.mxu0 %v1152
    %1170 = vmatmul.f32.gmra.mxu0 %v1150
    %v1171 = vpop.f32.mrf.mxu0
    %v1172 = vadd.f32 0.0, %v1171
    %1173 = vdwg.mxu0
    %v1174 = vmul.f32 %v1144, 0.5
    %v1175 = vmul.f32 %v1172, 0.5
    %v1176 = vsel %vm385, %v1174, -inf
    %1177 = vmax.xlane.f32.xlu0 %v1176
    %v1178 = vpop.xlane.xlu0 %1177
    %v1179 = vsel %vm385, %v1175, -inf
    %1180 = vmax.xlane.f32.xlu0 %v1179
    %v1181 = vpop.xlane.xlu0 %1180
    %v1182 = vsub.f32 %v1174, %v1178
    %v1183 = vsub.f32 %v1175, %v1181
    %v1184 = vmul.f32 %v1182, 1.442695
    %v1185 = vpow.pop %v1184
    %v1186 = vmul.f32 %v1183, 1.442695
    %v1187 = vpow.pop %v1186
    %v1188 = vsel %vm385, %v1185, 0.0
    %1189 = vadd.xlane.f32.xlu0 %v1188
    %v1190 = vpop.xlane.xlu0 %1189
    %v1191 = vsel %vm385, %v1187, 0.0
    %1192 = vadd.xlane.f32.xlu0 %v1191
    %v1193 = vpop.xlane.xlu0 %1192
    %v1194 = vrcp.pop %v1190
    %v1195 = vmul.f32 %v1190, %v1194
    %v1196 = vsub.f32 1.0, %v1195
    %v1197 = vmul.f32 %v1194, %v1196
    %v1198 = vadd.f32 %v1194, %v1197
    %vm1199 = vweird.f32 %v1190
    %vm1200 = vweird.f32 %v1194
    %vm1201 = vmor %vm1199, %vm1200
    %v1202 = vsel %vm1201, %v1194, %v1198
    %v1203 = vand.u32 2147483647, %v1190
    %vm1204 = vcmp.eq.f32.partialorder %v1203, 8.507059e+37
    %v1205 = vand.u32 %v1190, 2147483648
    %v1206 = vor.u32 1.1754944e-38, %v1205
    %v1207 = vsel %vm1204, %v1206, %v1202
    %v1208 = vmul.f32 %v1185, %v1207
    %v1209 = vrcp.pop %v1193
    %v1210 = vmul.f32 %v1193, %v1209
    %v1211 = vsub.f32 1.0, %v1210
    %v1212 = vmul.f32 %v1209, %v1211
    %v1213 = vadd.f32 %v1209, %v1212
    %vm1214 = vweird.f32 %v1193
    %vm1215 = vweird.f32 %v1209
    %vm1216 = vmor %vm1214, %vm1215
    %v1217 = vsel %vm1216, %v1209, %v1213
    %v1218 = vand.u32 2147483647, %v1193
    %vm1219 = vcmp.eq.f32.partialorder %v1218, 8.507059e+37
    %v1220 = vand.u32 %v1193, 2147483648
    %v1221 = vor.u32 1.1754944e-38, %v1220
    %v1222 = vsel %vm1219, %v1221, %v1217
    %v1223 = vmul.f32 %v1187, %v1222
    %1224 = vrot.lane.b32.xlu0 %v300, 12
    %v1225 = vpop.permute.xlu0 %1224
    %v1228 = vsel %vm385, %v1208, 0
    %1230 = vmatpush.msra.mxu0 0.0
    %1231 = vmatpush.msra.mxu0 0.0
    %1232 = vmatpush.msra.mxu0 0.0
    %1233 = vmatpush.msra.mxu0 0.0
    %1234 = vmatpush.msra.mxu0 0.0
    %1235 = vmatpush.msra.mxu0 0.0
    %1236 = vmatpush.msra.mxu0 0.0
    %1237 = vmatpush.msra.mxu0 0.0
    %1238 = vmatpush.msra.mxu0 0.0
    %1239 = vmatpush.msra.mxu0 0.0
    %1240 = vmatpush.msra.mxu0 0.0
    %1241 = vmatpush.msra.mxu0 0.0
    %1242 = vmatpush.msra.mxu0 0.0
    %1243 = vmatpush.msra.mxu0 0.0
    %1244 = vmatpush.msra.mxu0 0.0
    %1245 = vmatpush.msra.mxu0 %v1225
    %1246 = vmatmul.f32.gmra.mxu0 %v1228
    %v1247 = vpop.f32.mrf.mxu0
    %v1248 = vadd.f32 0.0, %v1247
    %1249 = vdwg.mxu0
    %1250 = vrot.lane.b32.xlu0 %v303, 12
    %v1251 = vpop.permute.xlu0 %1250
    %v1254 = vsel %vm385, %v1223, 0
    %1256 = vmatpush.msra.mxu0 0.0
    %1257 = vmatpush.msra.mxu0 0.0
    %1258 = vmatpush.msra.mxu0 0.0
    %1259 = vmatpush.msra.mxu0 0.0
    %1260 = vmatpush.msra.mxu0 0.0
    %1261 = vmatpush.msra.mxu0 0.0
    %1262 = vmatpush.msra.mxu0 0.0
    %1263 = vmatpush.msra.mxu0 0.0
    %1264 = vmatpush.msra.mxu0 0.0
    %1265 = vmatpush.msra.mxu0 0.0
    %1266 = vmatpush.msra.mxu0 0.0
    %1267 = vmatpush.msra.mxu0 0.0
    %1268 = vmatpush.msra.mxu0 0.0
    %1269 = vmatpush.msra.mxu0 0.0
    %1270 = vmatpush.msra.mxu0 0.0
    %1271 = vmatpush.msra.mxu0 %v1251
    %1272 = vmatmul.f32.gmra.mxu0 %v1254
    %v1273 = vpop.f32.mrf.mxu0
    %v1274 = vadd.f32 0.0, %v1273
    %1275 = vdwg.mxu0
    %1276 = vrot.lane.b32.xlu0 %v300, 104
    %v1277 = vpop.permute.xlu0 %1276
    %1278 = vrot.lane.b32.xlu0 %v300, 56
    %v1279 = vpop.permute.xlu0 %1278
    %v1280 = vsel %vm331, %v1277, 0
    %v1282 = vsel %vm331, %v1279, 0
    %1284 = vmatpush.xpose.msra.mxu0 0.0
    %1285 = vmatpush.xpose.msra.mxu0 0.0
    %1286 = vmatpush.xpose.msra.mxu0 0.0
    %1287 = vmatpush.xpose.msra.mxu0 0.0
    %1288 = vmatpush.xpose.msra.mxu0 0.0
    %1289 = vmatpush.xpose.msra.mxu0 0.0
    %1290 = vmatpush.xpose.msra.mxu0 0.0
    %1291 = vmatpush.xpose.msra.mxu0 0.0
    %1292 = vmatpush.xpose.msra.mxu0 0.0
    %1293 = vmatpush.xpose.msra.mxu0 0.0
    %1294 = vmatpush.xpose.msra.mxu0 0.0
    %1295 = vmatpush.xpose.msra.mxu0 0.0
    %1296 = vmatpush.xpose.msra.mxu0 0.0
    %1297 = vmatpush.xpose.msra.mxu0 0.0
    %1298 = vmatpush.xpose.msra.mxu0 0.0
    %1299 = vmatpush.xpose.msra.mxu0 %v1282
    %1300 = vmatmul.f32.gmra.mxu0 %v1280
    %v1301 = vpop.f32.mrf.mxu0
    %v1302 = vadd.f32 0.0, %v1301
    %1303 = vdwg.mxu0
    %1304 = vrot.lane.b32.xlu0 %v303, 104
    %v1305 = vpop.permute.xlu0 %1304
    %1306 = vrot.lane.b32.xlu0 %v303, 56
    %v1307 = vpop.permute.xlu0 %1306
    %v1308 = vsel %vm331, %v1305, 0
    %v1310 = vsel %vm331, %v1307, 0
    %1312 = vmatpush.xpose.msra.mxu0 0.0
    %1313 = vmatpush.xpose.msra.mxu0 0.0
    %1314 = vmatpush.xpose.msra.mxu0 0.0
    %1315 = vmatpush.xpose.msra.mxu0 0.0
    %1316 = vmatpush.xpose.msra.mxu0 0.0
    %1317 = vmatpush.xpose.msra.mxu0 0.0
    %1318 = vmatpush.xpose.msra.mxu0 0.0
    %1319 = vmatpush.xpose.msra.mxu0 0.0
    %1320 = vmatpush.xpose.msra.mxu0 0.0
    %1321 = vmatpush.xpose.msra.mxu0 0.0
    %1322 = vmatpush.xpose.msra.mxu0 0.0
    %1323 = vmatpush.xpose.msra.mxu0 0.0
    %1324 = vmatpush.xpose.msra.mxu0 0.0
    %1325 = vmatpush.xpose.msra.mxu0 0.0
    %1326 = vmatpush.xpose.msra.mxu0 0.0
    %1327 = vmatpush.xpose.msra.mxu0 %v1310
    %1328 = vmatmul.f32.gmra.mxu0 %v1308
    %v1329 = vpop.f32.mrf.mxu0
    %v1330 = vadd.f32 0.0, %v1329
    %1331 = vdwg.mxu0
    %v1332 = vmul.f32 %v1302, 0.5
    %v1333 = vmul.f32 %v1330, 0.5
    %v1334 = vsel %vm385, %v1332, -inf
    %1335 = vmax.xlane.f32.xlu0 %v1334
    %v1336 = vpop.xlane.xlu0 %1335
    %v1337 = vsel %vm385, %v1333, -inf
    %1338 = vmax.xlane.f32.xlu0 %v1337
    %v1339 = vpop.xlane.xlu0 %1338
    %v1340 = vsub.f32 %v1332, %v1336
    %v1341 = vsub.f32 %v1333, %v1339
    %v1342 = vmul.f32 %v1340, 1.442695
    %v1343 = vpow.pop %v1342
    %v1344 = vmul.f32 %v1341, 1.442695
    %v1345 = vpow.pop %v1344
    %v1346 = vsel %vm385, %v1343, 0.0
    %1347 = vadd.xlane.f32.xlu0 %v1346
    %v1348 = vpop.xlane.xlu0 %1347
    %v1349 = vsel %vm385, %v1345, 0.0
    %1350 = vadd.xlane.f32.xlu0 %v1349
    %v1351 = vpop.xlane.xlu0 %1350
    %v1352 = vrcp.pop %v1348
    %v1353 = vmul.f32 %v1348, %v1352
    %v1354 = vsub.f32 1.0, %v1353
    %v1355 = vmul.f32 %v1352, %v1354
    %v1356 = vadd.f32 %v1352, %v1355
    %vm1357 = vweird.f32 %v1348
    %vm1358 = vweird.f32 %v1352
    %vm1359 = vmor %vm1357, %vm1358
    %v1360 = vsel %vm1359, %v1352, %v1356
    %v1361 = vand.u32 2147483647, %v1348
    %vm1362 = vcmp.eq.f32.partialorder %v1361, 8.507059e+37
    %v1363 = vand.u32 %v1348, 2147483648
    %v1364 = vor.u32 1.1754944e-38, %v1363
    %v1365 = vsel %vm1362, %v1364, %v1360
    %v1366 = vmul.f32 %v1343, %v1365
    %v1367 = vrcp.pop %v1351
    %v1368 = vmul.f32 %v1351, %v1367
    %v1369 = vsub.f32 1.0, %v1368
    %v1370 = vmul.f32 %v1367, %v1369
    %v1371 = vadd.f32 %v1367, %v1370
    %vm1372 = vweird.f32 %v1351
    %vm1373 = vweird.f32 %v1367
    %vm1374 = vmor %vm1372, %vm1373
    %v1375 = vsel %vm1374, %v1367, %v1371
    %v1376 = vand.u32 2147483647, %v1351
    %vm1377 = vcmp.eq.f32.partialorder %v1376, 8.507059e+37
    %v1378 = vand.u32 %v1351, 2147483648
    %v1379 = vor.u32 1.1754944e-38, %v1378
    %v1380 = vsel %vm1377, %v1379, %v1375
    %v1381 = vmul.f32 %v1345, %v1380
    %1382 = vrot.lane.b32.xlu0 %v300, 8
    %v1383 = vpop.permute.xlu0 %1382
    %v1386 = vsel %vm385, %v1366, 0
    %1388 = vmatpush.msra.mxu0 0.0
    %1389 = vmatpush.msra.mxu0 0.0
    %1390 = vmatpush.msra.mxu0 0.0
    %1391 = vmatpush.msra.mxu0 0.0
    %1392 = vmatpush.msra.mxu0 0.0
    %1393 = vmatpush.msra.mxu0 0.0
    %1394 = vmatpush.msra.mxu0 0.0
    %1395 = vmatpush.msra.mxu0 0.0
    %1396 = vmatpush.msra.mxu0 0.0
    %1397 = vmatpush.msra.mxu0 0.0
    %1398 = vmatpush.msra.mxu0 0.0
    %1399 = vmatpush.msra.mxu0 0.0
    %1400 = vmatpush.msra.mxu0 0.0
    %1401 = vmatpush.msra.mxu0 0.0
    %1402 = vmatpush.msra.mxu0 0.0
    %1403 = vmatpush.msra.mxu0 %v1383
    %1404 = vmatmul.f32.gmra.mxu0 %v1386
    %v1405 = vpop.f32.mrf.mxu0
    %v1406 = vadd.f32 0.0, %v1405
    %1407 = vdwg.mxu0
    %1408 = vrot.lane.b32.xlu0 %v303, 8
    %v1409 = vpop.permute.xlu0 %1408
    %v1412 = vsel %vm385, %v1381, 0
    %1414 = vmatpush.msra.mxu0 0.0
    %1415 = vmatpush.msra.mxu0 0.0
    %1416 = vmatpush.msra.mxu0 0.0
    %1417 = vmatpush.msra.mxu0 0.0
    %1418 = vmatpush.msra.mxu0 0.0
    %1419 = vmatpush.msra.mxu0 0.0
    %1420 = vmatpush.msra.mxu0 0.0
    %1421 = vmatpush.msra.mxu0 0.0
    %1422 = vmatpush.msra.mxu0 0.0
    %1423 = vmatpush.msra.mxu0 0.0
    %1424 = vmatpush.msra.mxu0 0.0
    %1425 = vmatpush.msra.mxu0 0.0
    %1426 = vmatpush.msra.mxu0 0.0
    %1427 = vmatpush.msra.mxu0 0.0
    %1428 = vmatpush.msra.mxu0 0.0
    %1429 = vmatpush.msra.mxu0 %v1409
    %1430 = vmatmul.f32.gmra.mxu0 %v1412
    %v1431 = vpop.f32.mrf.mxu0
    %v1432 = vadd.f32 0.0, %v1431
    %1433 = vdwg.mxu0
    %1434 = vrot.lane.b32.xlu0 %v300, 100
    %v1435 = vpop.permute.xlu0 %1434
    %1436 = vrot.lane.b32.xlu0 %v300, 52
    %v1437 = vpop.permute.xlu0 %1436
    %v1438 = vsel %vm331, %v1435, 0
    %v1440 = vsel %vm331, %v1437, 0
    %1442 = vmatpush.xpose.msra.mxu0 0.0
    %1443 = vmatpush.xpose.msra.mxu0 0.0
    %1444 = vmatpush.xpose.msra.mxu0 0.0
    %1445 = vmatpush.xpose.msra.mxu0 0.0
    %1446 = vmatpush.xpose.msra.mxu0 0.0
    %1447 = vmatpush.xpose.msra.mxu0 0.0
    %1448 = vmatpush.xpose.msra.mxu0 0.0
    %1449 = vmatpush.xpose.msra.mxu0 0.0
    %1450 = vmatpush.xpose.msra.mxu0 0.0
    %1451 = vmatpush.xpose.msra.mxu0 0.0
    %1452 = vmatpush.xpose.msra.mxu0 0.0
    %1453 = vmatpush.xpose.msra.mxu0 0.0
    %1454 = vmatpush.xpose.msra.mxu0 0.0
    %1455 = vmatpush.xpose.msra.mxu0 0.0
    %1456 = vmatpush.xpose.msra.mxu0 0.0
    %1457 = vmatpush.xpose.msra.mxu0 %v1440
    %1458 = vmatmul.f32.gmra.mxu0 %v1438
    %v1459 = vpop.f32.mrf.mxu0
    %v1460 = vadd.f32 0.0, %v1459
    %1461 = vdwg.mxu0
    %1462 = vrot.lane.b32.xlu0 %v303, 100
    %v1463 = vpop.permute.xlu0 %1462
    %1464 = vrot.lane.b32.xlu0 %v303, 52
    %v1465 = vpop.permute.xlu0 %1464
    %v1466 = vsel %vm331, %v1463, 0
    %v1468 = vsel %vm331, %v1465, 0
    %1470 = vmatpush.xpose.msra.mxu0 0.0
    %1471 = vmatpush.xpose.msra.mxu0 0.0
    %1472 = vmatpush.xpose.msra.mxu0 0.0
    %1473 = vmatpush.xpose.msra.mxu0 0.0
    %1474 = vmatpush.xpose.msra.mxu0 0.0
    %1475 = vmatpush.xpose.msra.mxu0 0.0
    %1476 = vmatpush.xpose.msra.mxu0 0.0
    %1477 = vmatpush.xpose.msra.mxu0 0.0
    %1478 = vmatpush.xpose.msra.mxu0 0.0
    %1479 = vmatpush.xpose.msra.mxu0 0.0
    %1480 = vmatpush.xpose.msra.mxu0 0.0
    %1481 = vmatpush.xpose.msra.mxu0 0.0
    %1482 = vmatpush.xpose.msra.mxu0 0.0
    %1483 = vmatpush.xpose.msra.mxu0 0.0
    %1484 = vmatpush.xpose.msra.mxu0 0.0
    %1485 = vmatpush.xpose.msra.mxu0 %v1468
    %1486 = vmatmul.f32.gmra.mxu0 %v1466
    %v1487 = vpop.f32.mrf.mxu0
    %v1488 = vadd.f32 0.0, %v1487
    %1489 = vdwg.mxu0
    %v1490 = vmul.f32 %v1460, 0.5
    %v1491 = vmul.f32 %v1488, 0.5
    %v1492 = vsel %vm385, %v1490, -inf
    %1493 = vmax.xlane.f32.xlu0 %v1492
    %v1494 = vpop.xlane.xlu0 %1493
    %v1495 = vsel %vm385, %v1491, -inf
    %1496 = vmax.xlane.f32.xlu0 %v1495
    %v1497 = vpop.xlane.xlu0 %1496
    %v1498 = vsub.f32 %v1490, %v1494
    %v1499 = vsub.f32 %v1491, %v1497
    %v1500 = vmul.f32 %v1498, 1.442695
    %v1501 = vpow.pop %v1500
    %v1502 = vmul.f32 %v1499, 1.442695
    %v1503 = vpow.pop %v1502
    %v1504 = vsel %vm385, %v1501, 0.0
    %1505 = vadd.xlane.f32.xlu0 %v1504
    %v1506 = vpop.xlane.xlu0 %1505
    %v1507 = vsel %vm385, %v1503, 0.0
    %1508 = vadd.xlane.f32.xlu0 %v1507
    %v1509 = vpop.xlane.xlu0 %1508
    %v1510 = vrcp.pop %v1506
    %v1511 = vmul.f32 %v1506, %v1510
    %v1512 = vsub.f32 1.0, %v1511
    %v1513 = vmul.f32 %v1510, %v1512
    %v1514 = vadd.f32 %v1510, %v1513
    %vm1515 = vweird.f32 %v1506
    %vm1516 = vweird.f32 %v1510
    %vm1517 = vmor %vm1515, %vm1516
    %v1518 = vsel %vm1517, %v1510, %v1514
    %v1519 = vand.u32 2147483647, %v1506
    %vm1520 = vcmp.eq.f32.partialorder %v1519, 8.507059e+37
    %v1521 = vand.u32 %v1506, 2147483648
    %v1522 = vor.u32 1.1754944e-38, %v1521
    %v1523 = vsel %vm1520, %v1522, %v1518
    %v1524 = vmul.f32 %v1501, %v1523
    %v1525 = vrcp.pop %v1509
    %v1526 = vmul.f32 %v1509, %v1525
    %v1527 = vsub.f32 1.0, %v1526
    %v1528 = vmul.f32 %v1525, %v1527
    %v1529 = vadd.f32 %v1525, %v1528
    %vm1530 = vweird.f32 %v1509
    %vm1531 = vweird.f32 %v1525
    %vm1532 = vmor %vm1530, %vm1531
    %v1533 = vsel %vm1532, %v1525, %v1529
    %v1534 = vand.u32 2147483647, %v1509
    %vm1535 = vcmp.eq.f32.partialorder %v1534, 8.507059e+37
    %v1536 = vand.u32 %v1509, 2147483648
    %v1537 = vor.u32 1.1754944e-38, %v1536
    %v1538 = vsel %vm1535, %v1537, %v1533
    %v1539 = vmul.f32 %v1503, %v1538
    %1540 = vrot.lane.b32.xlu0 %v300, 4
    %v1541 = vpop.permute.xlu0 %1540
    %v1544 = vsel %vm385, %v1524, 0
    %1546 = vmatpush.msra.mxu0 0.0
    %1547 = vmatpush.msra.mxu0 0.0
    %1548 = vmatpush.msra.mxu0 0.0
    %1549 = vmatpush.msra.mxu0 0.0
    %1550 = vmatpush.msra.mxu0 0.0
    %1551 = vmatpush.msra.mxu0 0.0
    %1552 = vmatpush.msra.mxu0 0.0
    %1553 = vmatpush.msra.mxu0 0.0
    %1554 = vmatpush.msra.mxu0 0.0
    %1555 = vmatpush.msra.mxu0 0.0
    %1556 = vmatpush.msra.mxu0 0.0
    %1557 = vmatpush.msra.mxu0 0.0
    %1558 = vmatpush.msra.mxu0 0.0
    %1559 = vmatpush.msra.mxu0 0.0
    %1560 = vmatpush.msra.mxu0 0.0
    %1561 = vmatpush.msra.mxu0 %v1541
    %1562 = vmatmul.f32.gmra.mxu0 %v1544
    %v1563 = vpop.f32.mrf.mxu0
    %v1564 = vadd.f32 0.0, %v1563
    %1565 = vdwg.mxu0
    %1566 = vrot.lane.b32.xlu0 %v303, 4
    %v1567 = vpop.permute.xlu0 %1566
    %v1570 = vsel %vm385, %v1539, 0
    %1572 = vmatpush.msra.mxu0 0.0
    %1573 = vmatpush.msra.mxu0 0.0
    %1574 = vmatpush.msra.mxu0 0.0
    %1575 = vmatpush.msra.mxu0 0.0
    %1576 = vmatpush.msra.mxu0 0.0
    %1577 = vmatpush.msra.mxu0 0.0
    %1578 = vmatpush.msra.mxu0 0.0
    %1579 = vmatpush.msra.mxu0 0.0
    %1580 = vmatpush.msra.mxu0 0.0
    %1581 = vmatpush.msra.mxu0 0.0
    %1582 = vmatpush.msra.mxu0 0.0
    %1583 = vmatpush.msra.mxu0 0.0
    %1584 = vmatpush.msra.mxu0 0.0
    %1585 = vmatpush.msra.mxu0 0.0
    %1586 = vmatpush.msra.mxu0 0.0
    %1587 = vmatpush.msra.mxu0 %v1567
    %1588 = vmatmul.f32.gmra.mxu0 %v1570
    %v1589 = vpop.f32.mrf.mxu0
    %v1590 = vadd.f32 0.0, %v1589
    %1591 = vdwg.mxu0
    %1592 = vrot.lane.b32.xlu0 %v300, 96
    %v1593 = vpop.permute.xlu0 %1592
    %1594 = vrot.lane.b32.xlu0 %v300, 48
    %v1595 = vpop.permute.xlu0 %1594
    %v1596 = vsel %vm331, %v1593, 0
    %v1598 = vsel %vm331, %v1595, 0
    %1600 = vmatpush.xpose.msra.mxu0 0.0
    %1601 = vmatpush.xpose.msra.mxu0 0.0
    %1602 = vmatpush.xpose.msra.mxu0 0.0
    %1603 = vmatpush.xpose.msra.mxu0 0.0
    %1604 = vmatpush.xpose.msra.mxu0 0.0
    %1605 = vmatpush.xpose.msra.mxu0 0.0
    %1606 = vmatpush.xpose.msra.mxu0 0.0
    %1607 = vmatpush.xpose.msra.mxu0 0.0
    %1608 = vmatpush.xpose.msra.mxu0 0.0
    %1609 = vmatpush.xpose.msra.mxu0 0.0
    %1610 = vmatpush.xpose.msra.mxu0 0.0
    %1611 = vmatpush.xpose.msra.mxu0 0.0
    %1612 = vmatpush.xpose.msra.mxu0 0.0
    %1613 = vmatpush.xpose.msra.mxu0 0.0
    %1614 = vmatpush.xpose.msra.mxu0 0.0
    %1615 = vmatpush.xpose.msra.mxu0 %v1598
    %1616 = vmatmul.f32.gmra.mxu0 %v1596
    %v1617 = vpop.f32.mrf.mxu0
    %v1618 = vadd.f32 0.0, %v1617
    %1619 = vdwg.mxu0
    %1620 = vrot.lane.b32.xlu0 %v303, 96
    %v1621 = vpop.permute.xlu0 %1620
    %1622 = vrot.lane.b32.xlu0 %v303, 48
    %v1623 = vpop.permute.xlu0 %1622
    %v1624 = vsel %vm331, %v1621, 0
    %v1626 = vsel %vm331, %v1623, 0
    %1628 = vmatpush.xpose.msra.mxu0 0.0
    %1629 = vmatpush.xpose.msra.mxu0 0.0
    %1630 = vmatpush.xpose.msra.mxu0 0.0
    %1631 = vmatpush.xpose.msra.mxu0 0.0
    %1632 = vmatpush.xpose.msra.mxu0 0.0
    %1633 = vmatpush.xpose.msra.mxu0 0.0
    %1634 = vmatpush.xpose.msra.mxu0 0.0
    %1635 = vmatpush.xpose.msra.mxu0 0.0
    %1636 = vmatpush.xpose.msra.mxu0 0.0
    %1637 = vmatpush.xpose.msra.mxu0 0.0
    %1638 = vmatpush.xpose.msra.mxu0 0.0
    %1639 = vmatpush.xpose.msra.mxu0 0.0
    %1640 = vmatpush.xpose.msra.mxu0 0.0
    %1641 = vmatpush.xpose.msra.mxu0 0.0
    %1642 = vmatpush.xpose.msra.mxu0 0.0
    %1643 = vmatpush.xpose.msra.mxu0 %v1626
    %1644 = vmatmul.f32.gmra.mxu0 %v1624
    %v1645 = vpop.f32.mrf.mxu0
    %v1646 = vadd.f32 0.0, %v1645
    %1647 = vdwg.mxu0
    %v1648 = vmul.f32 %v1618, 0.5
    %v1649 = vmul.f32 %v1646, 0.5
    %v1650 = vsel %vm385, %v1648, -inf
    %1651 = vmax.xlane.f32.xlu0 %v1650
    %v1652 = vpop.xlane.xlu0 %1651
    %v1653 = vsel %vm385, %v1649, -inf
    %1654 = vmax.xlane.f32.xlu0 %v1653
    %v1655 = vpop.xlane.xlu0 %1654
    %v1656 = vsub.f32 %v1648, %v1652
    %v1657 = vsub.f32 %v1649, %v1655
    %v1658 = vmul.f32 %v1656, 1.442695
    %v1659 = vpow.pop %v1658
    %v1660 = vmul.f32 %v1657, 1.442695
    %v1661 = vpow.pop %v1660
    %v1662 = vsel %vm385, %v1659, 0.0
    %1663 = vadd.xlane.f32.xlu0 %v1662
    %v1664 = vpop.xlane.xlu0 %1663
    %v1665 = vsel %vm385, %v1661, 0.0
    %1666 = vadd.xlane.f32.xlu0 %v1665
    %v1667 = vpop.xlane.xlu0 %1666
    %v1668 = vrcp.pop %v1664
    %v1669 = vmul.f32 %v1664, %v1668
    %v1670 = vsub.f32 1.0, %v1669
    %v1671 = vmul.f32 %v1668, %v1670
    %v1672 = vadd.f32 %v1668, %v1671
    %vm1673 = vweird.f32 %v1664
    %vm1674 = vweird.f32 %v1668
    %vm1675 = vmor %vm1673, %vm1674
    %v1676 = vsel %vm1675, %v1668, %v1672
    %v1677 = vand.u32 2147483647, %v1664
    %vm1678 = vcmp.eq.f32.partialorder %v1677, 8.507059e+37
    %v1679 = vand.u32 %v1664, 2147483648
    %v1680 = vor.u32 1.1754944e-38, %v1679
    %v1681 = vsel %vm1678, %v1680, %v1676
    %v1682 = vmul.f32 %v1659, %v1681
    %v1683 = vrcp.pop %v1667
    %v1684 = vmul.f32 %v1667, %v1683
    %v1685 = vsub.f32 1.0, %v1684
    %v1686 = vmul.f32 %v1683, %v1685
    %v1687 = vadd.f32 %v1683, %v1686
    %vm1688 = vweird.f32 %v1667
    %vm1689 = vweird.f32 %v1683
    %vm1690 = vmor %vm1688, %vm1689
    %v1691 = vsel %vm1690, %v1683, %v1687
    %v1692 = vand.u32 2147483647, %v1667
    %vm1693 = vcmp.eq.f32.partialorder %v1692, 8.507059e+37
    %v1694 = vand.u32 %v1667, 2147483648
    %v1695 = vor.u32 1.1754944e-38, %v1694
    %v1696 = vsel %vm1693, %v1695, %v1691
    %v1697 = vmul.f32 %v1661, %v1696
    %v1699 = vsel %vm385, %v1682, 0
    %1701 = vmatpush.msra.mxu0 0.0
    %1702 = vmatpush.msra.mxu0 0.0
    %1703 = vmatpush.msra.mxu0 0.0
    %1704 = vmatpush.msra.mxu0 0.0
    %1705 = vmatpush.msra.mxu0 0.0
    %1706 = vmatpush.msra.mxu0 0.0
    %1707 = vmatpush.msra.mxu0 0.0
    %1708 = vmatpush.msra.mxu0 0.0
    %1709 = vmatpush.msra.mxu0 0.0
    %1710 = vmatpush.msra.mxu0 0.0
    %1711 = vmatpush.msra.mxu0 0.0
    %1712 = vmatpush.msra.mxu0 0.0
    %1713 = vmatpush.msra.mxu0 0.0
    %1714 = vmatpush.msra.mxu0 0.0
    %1715 = vmatpush.msra.mxu0 0.0
    %1716 = vmatpush.msra.mxu0 %v323
    %1717 = vmatmul.f32.gmra.mxu0 %v1699
    %v1718 = vpop.f32.mrf.mxu0
    %v1719 = vadd.f32 0.0, %v1718
    %1720 = vdwg.mxu0
    %v1722 = vsel %vm385, %v1697, 0
    %1724 = vmatpush.msra.mxu0 0.0
    %1725 = vmatpush.msra.mxu0 0.0
    %1726 = vmatpush.msra.mxu0 0.0
    %1727 = vmatpush.msra.mxu0 0.0
    %1728 = vmatpush.msra.mxu0 0.0
    %1729 = vmatpush.msra.mxu0 0.0
    %1730 = vmatpush.msra.mxu0 0.0
    %1731 = vmatpush.msra.mxu0 0.0
    %1732 = vmatpush.msra.mxu0 0.0
    %1733 = vmatpush.msra.mxu0 0.0
    %1734 = vmatpush.msra.mxu0 0.0
    %1735 = vmatpush.msra.mxu0 0.0
    %1736 = vmatpush.msra.mxu0 0.0
    %1737 = vmatpush.msra.mxu0 0.0
    %1738 = vmatpush.msra.mxu0 0.0
    %1739 = vmatpush.msra.mxu0 %v326
    %1740 = vmatmul.f32.gmra.mxu0 %v1722
    %v1741 = vpop.f32.mrf.mxu0
    %v1742 = vadd.f32 0.0, %v1741
    %1743 = vdwg.mxu0
    %1744 = vrot.lane.b32.xlu0 %v300, 92
    %v1745 = vpop.permute.xlu0 %1744
    %1746 = vrot.lane.b32.xlu0 %v300, 44
    %v1747 = vpop.permute.xlu0 %1746
    %v1748 = vsel %vm331, %v1745, 0
    %v1750 = vsel %vm331, %v1747, 0
    %1752 = vmatpush.xpose.msra.mxu0 0.0
    %1753 = vmatpush.xpose.msra.mxu0 0.0
    %1754 = vmatpush.xpose.msra.mxu0 0.0
    %1755 = vmatpush.xpose.msra.mxu0 0.0
    %1756 = vmatpush.xpose.msra.mxu0 0.0
    %1757 = vmatpush.xpose.msra.mxu0 0.0
    %1758 = vmatpush.xpose.msra.mxu0 0.0
    %1759 = vmatpush.xpose.msra.mxu0 0.0
    %1760 = vmatpush.xpose.msra.mxu0 0.0
    %1761 = vmatpush.xpose.msra.mxu0 0.0
    %1762 = vmatpush.xpose.msra.mxu0 0.0
    %1763 = vmatpush.xpose.msra.mxu0 0.0
    %1764 = vmatpush.xpose.msra.mxu0 0.0
    %1765 = vmatpush.xpose.msra.mxu0 0.0
    %1766 = vmatpush.xpose.msra.mxu0 0.0
    %1767 = vmatpush.xpose.msra.mxu0 %v1750
    %1768 = vmatmul.f32.gmra.mxu0 %v1748
    %v1769 = vpop.f32.mrf.mxu0
    %v1770 = vadd.f32 0.0, %v1769
    %1771 = vdwg.mxu0
    %1772 = vrot.lane.b32.xlu0 %v303, 92
    %v1773 = vpop.permute.xlu0 %1772
    %1774 = vrot.lane.b32.xlu0 %v303, 44
    %v1775 = vpop.permute.xlu0 %1774
    %v1776 = vsel %vm331, %v1773, 0
    %v1778 = vsel %vm331, %v1775, 0
    %1780 = vmatpush.xpose.msra.mxu0 0.0
    %1781 = vmatpush.xpose.msra.mxu0 0.0
    %1782 = vmatpush.xpose.msra.mxu0 0.0
    %1783 = vmatpush.xpose.msra.mxu0 0.0
    %1784 = vmatpush.xpose.msra.mxu0 0.0
    %1785 = vmatpush.xpose.msra.mxu0 0.0
    %1786 = vmatpush.xpose.msra.mxu0 0.0
    %1787 = vmatpush.xpose.msra.mxu0 0.0
    %1788 = vmatpush.xpose.msra.mxu0 0.0
    %1789 = vmatpush.xpose.msra.mxu0 0.0
    %1790 = vmatpush.xpose.msra.mxu0 0.0
    %1791 = vmatpush.xpose.msra.mxu0 0.0
    %1792 = vmatpush.xpose.msra.mxu0 0.0
    %1793 = vmatpush.xpose.msra.mxu0 0.0
    %1794 = vmatpush.xpose.msra.mxu0 0.0
    %1795 = vmatpush.xpose.msra.mxu0 %v1778
    %1796 = vmatmul.f32.gmra.mxu0 %v1776
    %v1797 = vpop.f32.mrf.mxu0
    %v1798 = vadd.f32 0.0, %v1797
    %1799 = vdwg.mxu0
    %v1800 = vmul.f32 %v1770, 0.5
    %v1801 = vmul.f32 %v1798, 0.5
    %v1802 = vsel %vm385, %v1800, -inf
    %1803 = vmax.xlane.f32.xlu0 %v1802
    %v1804 = vpop.xlane.xlu0 %1803
    %v1805 = vsel %vm385, %v1801, -inf
    %1806 = vmax.xlane.f32.xlu0 %v1805
    %v1807 = vpop.xlane.xlu0 %1806
    %v1808 = vsub.f32 %v1800, %v1804
    %v1809 = vsub.f32 %v1801, %v1807
    %v1810 = vmul.f32 %v1808, 1.442695
    %v1811 = vpow.pop %v1810
    %v1812 = vmul.f32 %v1809, 1.442695
    %v1813 = vpow.pop %v1812
    %v1814 = vsel %vm385, %v1811, 0.0
    %1815 = vadd.xlane.f32.xlu0 %v1814
    %v1816 = vpop.xlane.xlu0 %1815
    %v1817 = vsel %vm385, %v1813, 0.0
    %1818 = vadd.xlane.f32.xlu0 %v1817
    %v1819 = vpop.xlane.xlu0 %1818
    %v1820 = vrcp.pop %v1816
    %v1821 = vmul.f32 %v1816, %v1820
    %v1822 = vsub.f32 1.0, %v1821
    %v1823 = vmul.f32 %v1820, %v1822
    %v1824 = vadd.f32 %v1820, %v1823
    %vm1825 = vweird.f32 %v1816
    %vm1826 = vweird.f32 %v1820
    %vm1827 = vmor %vm1825, %vm1826
    %v1828 = vsel %vm1827, %v1820, %v1824
    %v1829 = vand.u32 2147483647, %v1816
    %vm1830 = vcmp.eq.f32.partialorder %v1829, 8.507059e+37
    %v1831 = vand.u32 %v1816, 2147483648
    %v1832 = vor.u32 1.1754944e-38, %v1831
    %v1833 = vsel %vm1830, %v1832, %v1828
    %v1834 = vmul.f32 %v1811, %v1833
    %v1835 = vrcp.pop %v1819
    %v1836 = vmul.f32 %v1819, %v1835
    %v1837 = vsub.f32 1.0, %v1836
    %v1838 = vmul.f32 %v1835, %v1837
    %v1839 = vadd.f32 %v1835, %v1838
    %vm1840 = vweird.f32 %v1819
    %vm1841 = vweird.f32 %v1835
    %vm1842 = vmor %vm1840, %vm1841
    %v1843 = vsel %vm1842, %v1835, %v1839
    %v1844 = vand.u32 2147483647, %v1819
    %vm1845 = vcmp.eq.f32.partialorder %v1844, 8.507059e+37
    %v1846 = vand.u32 %v1819, 2147483648
    %v1847 = vor.u32 1.1754944e-38, %v1846
    %v1848 = vsel %vm1845, %v1847, %v1843
    %v1849 = vmul.f32 %v1813, %v1848
    %1851 = vrot.lane.b32.xlu0 %v323, 124
    %v1852 = vpop.permute.xlu0 %1851
    %v1855 = vsel %vm385, %v1834, 0
    %1857 = vmatpush.msra.mxu0 0.0
    %1858 = vmatpush.msra.mxu0 0.0
    %1859 = vmatpush.msra.mxu0 0.0
    %1860 = vmatpush.msra.mxu0 0.0
    %1861 = vmatpush.msra.mxu0 0.0
    %1862 = vmatpush.msra.mxu0 0.0
    %1863 = vmatpush.msra.mxu0 0.0
    %1864 = vmatpush.msra.mxu0 0.0
    %1865 = vmatpush.msra.mxu0 0.0
    %1866 = vmatpush.msra.mxu0 0.0
    %1867 = vmatpush.msra.mxu0 0.0
    %1868 = vmatpush.msra.mxu0 0.0
    %1869 = vmatpush.msra.mxu0 0.0
    %1870 = vmatpush.msra.mxu0 0.0
    %1871 = vmatpush.msra.mxu0 0.0
    %1872 = vmatpush.msra.mxu0 %v1852
    %1873 = vmatmul.f32.gmra.mxu0 %v1855
    %v1874 = vpop.f32.mrf.mxu0
    %v1875 = vadd.f32 0.0, %v1874
    %1876 = vdwg.mxu0
    %1878 = vrot.lane.b32.xlu0 %v326, 124
    %v1879 = vpop.permute.xlu0 %1878
    %v1882 = vsel %vm385, %v1849, 0
    %1884 = vmatpush.msra.mxu0 0.0
    %1885 = vmatpush.msra.mxu0 0.0
    %1886 = vmatpush.msra.mxu0 0.0
    %1887 = vmatpush.msra.mxu0 0.0
    %1888 = vmatpush.msra.mxu0 0.0
    %1889 = vmatpush.msra.mxu0 0.0
    %1890 = vmatpush.msra.mxu0 0.0
    %1891 = vmatpush.msra.mxu0 0.0
    %1892 = vmatpush.msra.mxu0 0.0
    %1893 = vmatpush.msra.mxu0 0.0
    %1894 = vmatpush.msra.mxu0 0.0
    %1895 = vmatpush.msra.mxu0 0.0
    %1896 = vmatpush.msra.mxu0 0.0
    %1897 = vmatpush.msra.mxu0 0.0
    %1898 = vmatpush.msra.mxu0 0.0
    %1899 = vmatpush.msra.mxu0 %v1879
    %1900 = vmatmul.f32.gmra.mxu0 %v1882
    %v1901 = vpop.f32.mrf.mxu0
    %v1902 = vadd.f32 0.0, %v1901
    %1903 = vdwg.mxu0
    %1904 = vrot.lane.b32.xlu0 %v300, 88
    %v1905 = vpop.permute.xlu0 %1904
    %1906 = vrot.lane.b32.xlu0 %v300, 40
    %v1907 = vpop.permute.xlu0 %1906
    %v1908 = vsel %vm331, %v1905, 0
    %v1910 = vsel %vm331, %v1907, 0
    %1912 = vmatpush.xpose.msra.mxu0 0.0
    %1913 = vmatpush.xpose.msra.mxu0 0.0
    %1914 = vmatpush.xpose.msra.mxu0 0.0
    %1915 = vmatpush.xpose.msra.mxu0 0.0
    %1916 = vmatpush.xpose.msra.mxu0 0.0
    %1917 = vmatpush.xpose.msra.mxu0 0.0
    %1918 = vmatpush.xpose.msra.mxu0 0.0
    %1919 = vmatpush.xpose.msra.mxu0 0.0
    %1920 = vmatpush.xpose.msra.mxu0 0.0
    %1921 = vmatpush.xpose.msra.mxu0 0.0
    %1922 = vmatpush.xpose.msra.mxu0 0.0
    %1923 = vmatpush.xpose.msra.mxu0 0.0
    %1924 = vmatpush.xpose.msra.mxu0 0.0
    %1925 = vmatpush.xpose.msra.mxu0 0.0
    %1926 = vmatpush.xpose.msra.mxu0 0.0
    %1927 = vmatpush.xpose.msra.mxu0 %v1910
    %1928 = vmatmul.f32.gmra.mxu0 %v1908
    %v1929 = vpop.f32.mrf.mxu0
    %v1930 = vadd.f32 0.0, %v1929
    %1931 = vdwg.mxu0
    %1932 = vrot.lane.b32.xlu0 %v303, 88
    %v1933 = vpop.permute.xlu0 %1932
    %1934 = vrot.lane.b32.xlu0 %v303, 40
    %v1935 = vpop.permute.xlu0 %1934
    %v1936 = vsel %vm331, %v1933, 0
    %v1938 = vsel %vm331, %v1935, 0
    %1940 = vmatpush.xpose.msra.mxu0 0.0
    %1941 = vmatpush.xpose.msra.mxu0 0.0
    %1942 = vmatpush.xpose.msra.mxu0 0.0
    %1943 = vmatpush.xpose.msra.mxu0 0.0
    %1944 = vmatpush.xpose.msra.mxu0 0.0
    %1945 = vmatpush.xpose.msra.mxu0 0.0
    %1946 = vmatpush.xpose.msra.mxu0 0.0
    %1947 = vmatpush.xpose.msra.mxu0 0.0
    %1948 = vmatpush.xpose.msra.mxu0 0.0
    %1949 = vmatpush.xpose.msra.mxu0 0.0
    %1950 = vmatpush.xpose.msra.mxu0 0.0
    %1951 = vmatpush.xpose.msra.mxu0 0.0
    %1952 = vmatpush.xpose.msra.mxu0 0.0
    %1953 = vmatpush.xpose.msra.mxu0 0.0
    %1954 = vmatpush.xpose.msra.mxu0 0.0
    %1955 = vmatpush.xpose.msra.mxu0 %v1938
    %1956 = vmatmul.f32.gmra.mxu0 %v1936
    %v1957 = vpop.f32.mrf.mxu0
    %v1958 = vadd.f32 0.0, %v1957
    %1959 = vdwg.mxu0
    %v1960 = vmul.f32 %v1930, 0.5
    %v1961 = vmul.f32 %v1958, 0.5
    %v1962 = vsel %vm385, %v1960, -inf
    %1963 = vmax.xlane.f32.xlu0 %v1962
    %v1964 = vpop.xlane.xlu0 %1963
    %v1965 = vsel %vm385, %v1961, -inf
    %1966 = vmax.xlane.f32.xlu0 %v1965
    %v1967 = vpop.xlane.xlu0 %1966
    %v1968 = vsub.f32 %v1960, %v1964
    %v1969 = vsub.f32 %v1961, %v1967
    %v1970 = vmul.f32 %v1968, 1.442695
    %v1971 = vpow.pop %v1970
    %v1972 = vmul.f32 %v1969, 1.442695
    %v1973 = vpow.pop %v1972
    %v1974 = vsel %vm385, %v1971, 0.0
    %1975 = vadd.xlane.f32.xlu0 %v1974
    %v1976 = vpop.xlane.xlu0 %1975
    %v1977 = vsel %vm385, %v1973, 0.0
    %1978 = vadd.xlane.f32.xlu0 %v1977
    %v1979 = vpop.xlane.xlu0 %1978
    %v1980 = vrcp.pop %v1976
    %v1981 = vmul.f32 %v1976, %v1980
    %v1982 = vsub.f32 1.0, %v1981
    %v1983 = vmul.f32 %v1980, %v1982
    %v1984 = vadd.f32 %v1980, %v1983
    %vm1985 = vweird.f32 %v1976
    %vm1986 = vweird.f32 %v1980
    %vm1987 = vmor %vm1985, %vm1986
    %v1988 = vsel %vm1987, %v1980, %v1984
    %v1989 = vand.u32 2147483647, %v1976
    %vm1990 = vcmp.eq.f32.partialorder %v1989, 8.507059e+37
    %v1991 = vand.u32 %v1976, 2147483648
    %v1992 = vor.u32 1.1754944e-38, %v1991
    %v1993 = vsel %vm1990, %v1992, %v1988
    %v1994 = vmul.f32 %v1971, %v1993
    %v1995 = vrcp.pop %v1979
    %v1996 = vmul.f32 %v1979, %v1995
    %v1997 = vsub.f32 1.0, %v1996
    %v1998 = vmul.f32 %v1995, %v1997
    %v1999 = vadd.f32 %v1995, %v1998
    %vm2000 = vweird.f32 %v1979
    %vm2001 = vweird.f32 %v1995
    %vm2002 = vmor %vm2000, %vm2001
    %v2003 = vsel %vm2002, %v1995, %v1999
    %v2004 = vand.u32 2147483647, %v1979
    %vm2005 = vcmp.eq.f32.partialorder %v2004, 8.507059e+37
    %v2006 = vand.u32 %v1979, 2147483648
    %v2007 = vor.u32 1.1754944e-38, %v2006
    %v2008 = vsel %vm2005, %v2007, %v2003
    %v2009 = vmul.f32 %v1973, %v2008
    %2010 = vrot.lane.b32.xlu0 %v323, 120
    %v2011 = vpop.permute.xlu0 %2010
    %v2014 = vsel %vm385, %v1994, 0
    %2016 = vmatpush.msra.mxu0 0.0
    %2017 = vmatpush.msra.mxu0 0.0
    %2018 = vmatpush.msra.mxu0 0.0
    %2019 = vmatpush.msra.mxu0 0.0
    %2020 = vmatpush.msra.mxu0 0.0
    %2021 = vmatpush.msra.mxu0 0.0
    %2022 = vmatpush.msra.mxu0 0.0
    %2023 = vmatpush.msra.mxu0 0.0
    %2024 = vmatpush.msra.mxu0 0.0
    %2025 = vmatpush.msra.mxu0 0.0
    %2026 = vmatpush.msra.mxu0 0.0
    %2027 = vmatpush.msra.mxu0 0.0
    %2028 = vmatpush.msra.mxu0 0.0
    %2029 = vmatpush.msra.mxu0 0.0
    %2030 = vmatpush.msra.mxu0 0.0
    %2031 = vmatpush.msra.mxu0 %v2011
    %2032 = vmatmul.f32.gmra.mxu0 %v2014
    %v2033 = vpop.f32.mrf.mxu0
    %v2034 = vadd.f32 0.0, %v2033
    %2035 = vdwg.mxu0
    %2036 = vrot.lane.b32.xlu0 %v326, 120
    %v2037 = vpop.permute.xlu0 %2036
    %v2040 = vsel %vm385, %v2009, 0
    %2042 = vmatpush.msra.mxu0 0.0
    %2043 = vmatpush.msra.mxu0 0.0
    %2044 = vmatpush.msra.mxu0 0.0
    %2045 = vmatpush.msra.mxu0 0.0
    %2046 = vmatpush.msra.mxu0 0.0
    %2047 = vmatpush.msra.mxu0 0.0
    %2048 = vmatpush.msra.mxu0 0.0
    %2049 = vmatpush.msra.mxu0 0.0
    %2050 = vmatpush.msra.mxu0 0.0
    %2051 = vmatpush.msra.mxu0 0.0
    %2052 = vmatpush.msra.mxu0 0.0
    %2053 = vmatpush.msra.mxu0 0.0
    %2054 = vmatpush.msra.mxu0 0.0
    %2055 = vmatpush.msra.mxu0 0.0
    %2056 = vmatpush.msra.mxu0 0.0
    %2057 = vmatpush.msra.mxu0 %v2037
    %2058 = vmatmul.f32.gmra.mxu0 %v2040
    %v2059 = vpop.f32.mrf.mxu0
    %v2060 = vadd.f32 0.0, %v2059
    %2061 = vdwg.mxu0
    %2062 = vrot.lane.b32.xlu0 %v300, 84
    %v2063 = vpop.permute.xlu0 %2062
    %2064 = vrot.lane.b32.xlu0 %v300, 36
    %v2065 = vpop.permute.xlu0 %2064
    %v2066 = vsel %vm331, %v2063, 0
    %v2068 = vsel %vm331, %v2065, 0
    %2070 = vmatpush.xpose.msra.mxu0 0.0
    %2071 = vmatpush.xpose.msra.mxu0 0.0
    %2072 = vmatpush.xpose.msra.mxu0 0.0
    %2073 = vmatpush.xpose.msra.mxu0 0.0
    %2074 = vmatpush.xpose.msra.mxu0 0.0
    %2075 = vmatpush.xpose.msra.mxu0 0.0
    %2076 = vmatpush.xpose.msra.mxu0 0.0
    %2077 = vmatpush.xpose.msra.mxu0 0.0
    %2078 = vmatpush.xpose.msra.mxu0 0.0
    %2079 = vmatpush.xpose.msra.mxu0 0.0
    %2080 = vmatpush.xpose.msra.mxu0 0.0
    %2081 = vmatpush.xpose.msra.mxu0 0.0
    %2082 = vmatpush.xpose.msra.mxu0 0.0
    %2083 = vmatpush.xpose.msra.mxu0 0.0
    %2084 = vmatpush.xpose.msra.mxu0 0.0
    %2085 = vmatpush.xpose.msra.mxu0 %v2068
    %2086 = vmatmul.f32.gmra.mxu0 %v2066
    %v2087 = vpop.f32.mrf.mxu0
    %v2088 = vadd.f32 0.0, %v2087
    %2089 = vdwg.mxu0
    %2090 = vrot.lane.b32.xlu0 %v303, 84
    %v2091 = vpop.permute.xlu0 %2090
    %2092 = vrot.lane.b32.xlu0 %v303, 36
    %v2093 = vpop.permute.xlu0 %2092
    %v2094 = vsel %vm331, %v2091, 0
    %v2096 = vsel %vm331, %v2093, 0
    %2098 = vmatpush.xpose.msra.mxu0 0.0
    %2099 = vmatpush.xpose.msra.mxu0 0.0
    %2100 = vmatpush.xpose.msra.mxu0 0.0
    %2101 = vmatpush.xpose.msra.mxu0 0.0
    %2102 = vmatpush.xpose.msra.mxu0 0.0
    %2103 = vmatpush.xpose.msra.mxu0 0.0
    %2104 = vmatpush.xpose.msra.mxu0 0.0
    %2105 = vmatpush.xpose.msra.mxu0 0.0
    %2106 = vmatpush.xpose.msra.mxu0 0.0
    %2107 = vmatpush.xpose.msra.mxu0 0.0
    %2108 = vmatpush.xpose.msra.mxu0 0.0
    %2109 = vmatpush.xpose.msra.mxu0 0.0
    %2110 = vmatpush.xpose.msra.mxu0 0.0
    %2111 = vmatpush.xpose.msra.mxu0 0.0
    %2112 = vmatpush.xpose.msra.mxu0 0.0
    %2113 = vmatpush.xpose.msra.mxu0 %v2096
    %2114 = vmatmul.f32.gmra.mxu0 %v2094
    %v2115 = vpop.f32.mrf.mxu0
    %v2116 = vadd.f32 0.0, %v2115
    %2117 = vdwg.mxu0
    %v2118 = vmul.f32 %v2088, 0.5
    %v2119 = vmul.f32 %v2116, 0.5
    %v2120 = vsel %vm385, %v2118, -inf
    %2121 = vmax.xlane.f32.xlu0 %v2120
    %v2122 = vpop.xlane.xlu0 %2121
    %v2123 = vsel %vm385, %v2119, -inf
    %2124 = vmax.xlane.f32.xlu0 %v2123
    %v2125 = vpop.xlane.xlu0 %2124
    %v2126 = vsub.f32 %v2118, %v2122
    %v2127 = vsub.f32 %v2119, %v2125
    %v2128 = vmul.f32 %v2126, 1.442695
    %v2129 = vpow.pop %v2128
    %v2130 = vmul.f32 %v2127, 1.442695
    %v2131 = vpow.pop %v2130
    %v2132 = vsel %vm385, %v2129, 0.0
    %2133 = vadd.xlane.f32.xlu0 %v2132
    %v2134 = vpop.xlane.xlu0 %2133
    %v2135 = vsel %vm385, %v2131, 0.0
    %2136 = vadd.xlane.f32.xlu0 %v2135
    %v2137 = vpop.xlane.xlu0 %2136
    %v2138 = vrcp.pop %v2134
    %v2139 = vmul.f32 %v2134, %v2138
    %v2140 = vsub.f32 1.0, %v2139
    %v2141 = vmul.f32 %v2138, %v2140
    %v2142 = vadd.f32 %v2138, %v2141
    %vm2143 = vweird.f32 %v2134
    %vm2144 = vweird.f32 %v2138
    %vm2145 = vmor %vm2143, %vm2144
    %v2146 = vsel %vm2145, %v2138, %v2142
    %v2147 = vand.u32 2147483647, %v2134
    %vm2148 = vcmp.eq.f32.partialorder %v2147, 8.507059e+37
    %v2149 = vand.u32 %v2134, 2147483648
    %v2150 = vor.u32 1.1754944e-38, %v2149
    %v2151 = vsel %vm2148, %v2150, %v2146
    %v2152 = vmul.f32 %v2129, %v2151
    %v2153 = vrcp.pop %v2137
    %v2154 = vmul.f32 %v2137, %v2153
    %v2155 = vsub.f32 1.0, %v2154
    %v2156 = vmul.f32 %v2153, %v2155
    %v2157 = vadd.f32 %v2153, %v2156
    %vm2158 = vweird.f32 %v2137
    %vm2159 = vweird.f32 %v2153
    %vm2160 = vmor %vm2158, %vm2159
    %v2161 = vsel %vm2160, %v2153, %v2157
    %v2162 = vand.u32 2147483647, %v2137
    %vm2163 = vcmp.eq.f32.partialorder %v2162, 8.507059e+37
    %v2164 = vand.u32 %v2137, 2147483648
    %v2165 = vor.u32 1.1754944e-38, %v2164
    %v2166 = vsel %vm2163, %v2165, %v2161
    %v2167 = vmul.f32 %v2131, %v2166
    %2168 = vrot.lane.b32.xlu0 %v323, 116
    %v2169 = vpop.permute.xlu0 %2168
    %v2172 = vsel %vm385, %v2152, 0
    %2174 = vmatpush.msra.mxu0 0.0
    %2175 = vmatpush.msra.mxu0 0.0
    %2176 = vmatpush.msra.mxu0 0.0
    %2177 = vmatpush.msra.mxu0 0.0
    %2178 = vmatpush.msra.mxu0 0.0
    %2179 = vmatpush.msra.mxu0 0.0
    %2180 = vmatpush.msra.mxu0 0.0
    %2181 = vmatpush.msra.mxu0 0.0
    %2182 = vmatpush.msra.mxu0 0.0
    %2183 = vmatpush.msra.mxu0 0.0
    %2184 = vmatpush.msra.mxu0 0.0
    %2185 = vmatpush.msra.mxu0 0.0
    %2186 = vmatpush.msra.mxu0 0.0
    %2187 = vmatpush.msra.mxu0 0.0
    %2188 = vmatpush.msra.mxu0 0.0
    %2189 = vmatpush.msra.mxu0 %v2169
    %2190 = vmatmul.f32.gmra.mxu0 %v2172
    %v2191 = vpop.f32.mrf.mxu0
    %v2192 = vadd.f32 0.0, %v2191
    %2193 = vdwg.mxu0
    %2194 = vrot.lane.b32.xlu0 %v326, 116
    %v2195 = vpop.permute.xlu0 %2194
    %v2198 = vsel %vm385, %v2167, 0
    %2200 = vmatpush.msra.mxu0 0.0
    %2201 = vmatpush.msra.mxu0 0.0
    %2202 = vmatpush.msra.mxu0 0.0
    %2203 = vmatpush.msra.mxu0 0.0
    %2204 = vmatpush.msra.mxu0 0.0
    %2205 = vmatpush.msra.mxu0 0.0
    %2206 = vmatpush.msra.mxu0 0.0
    %2207 = vmatpush.msra.mxu0 0.0
    %2208 = vmatpush.msra.mxu0 0.0
    %2209 = vmatpush.msra.mxu0 0.0
    %2210 = vmatpush.msra.mxu0 0.0
    %2211 = vmatpush.msra.mxu0 0.0
    %2212 = vmatpush.msra.mxu0 0.0
    %2213 = vmatpush.msra.mxu0 0.0
    %2214 = vmatpush.msra.mxu0 0.0
    %2215 = vmatpush.msra.mxu0 %v2195
    %2216 = vmatmul.f32.gmra.mxu0 %v2198
    %v2217 = vpop.f32.mrf.mxu0
    %v2218 = vadd.f32 0.0, %v2217
    %2219 = vdwg.mxu0
    %2222 = vrot.lane.b32.xlu0 %v616, 4
    %v2223 = vpop.permute.xlu0 %2222
    %2224 = vrot.lane.b32.xlu0 %v642, 4
    %v2225 = vpop.permute.xlu0 %2224
    %2230 = vrot.lane.b32.xlu0 %v774, 8
    %v2231 = vpop.permute.xlu0 %2230
    %2232 = vrot.lane.b32.xlu0 %v800, 8
    %v2233 = vpop.permute.xlu0 %2232
    %2238 = vrot.lane.b32.xlu0 %v932, 12
    %v2239 = vpop.permute.xlu0 %2238
    %2240 = vrot.lane.b32.xlu0 %v958, 12
    %v2241 = vpop.permute.xlu0 %2240
    %2246 = vrot.lane.b32.xlu0 %v1090, 16
    %v2247 = vpop.permute.xlu0 %2246
    %2248 = vrot.lane.b32.xlu0 %v1116, 16
    %v2249 = vpop.permute.xlu0 %2248
    %2254 = vrot.lane.b32.xlu0 %v1248, 20
    %v2255 = vpop.permute.xlu0 %2254
    %2256 = vrot.lane.b32.xlu0 %v1274, 20
    %v2257 = vpop.permute.xlu0 %2256
    %2262 = vrot.lane.b32.xlu0 %v1406, 24
    %v2263 = vpop.permute.xlu0 %2262
    %2264 = vrot.lane.b32.xlu0 %v1432, 24
    %v2265 = vpop.permute.xlu0 %2264
    %2270 = vrot.lane.b32.xlu0 %v1564, 28
    %v2271 = vpop.permute.xlu0 %2270
    %2272 = vrot.lane.b32.xlu0 %v1590, 28
    %v2273 = vpop.permute.xlu0 %2272
    %2278 = vrot.lane.b32.xlu0 %v1719, 32
    %v2279 = vpop.permute.xlu0 %2278
    %2280 = vrot.lane.b32.xlu0 %v1742, 32
    %v2281 = vpop.permute.xlu0 %2280
    %2286 = vrot.lane.b32.xlu0 %v1875, 36
    %v2287 = vpop.permute.xlu0 %2286
    %2288 = vrot.lane.b32.xlu0 %v1902, 36
    %v2289 = vpop.permute.xlu0 %2288
    %2294 = vrot.lane.b32.xlu0 %v2034, 40
    %v2295 = vpop.permute.xlu0 %2294
    %2296 = vrot.lane.b32.xlu0 %v2060, 40
    %v2297 = vpop.permute.xlu0 %2296
    %2302 = vrot.lane.b32.xlu0 %v2192, 44
    %v2303 = vpop.permute.xlu0 %2302
    %2304 = vrot.lane.b32.xlu0 %v2218, 44
    %v2305 = vpop.permute.xlu0 %2304
    %v2308 = vsel %vm331, %v458, %v2223
    %v2309 = vsel %vm331, %v484, %v2225
    %v2310 = vsel %vm385, %v2308, %v2231
    %v2311 = vsel %vm385, %v2309, %v2233
    %vm2312 = vcmask 97280
    %v2313 = vsel %vm2312, %v2310, %v2239
    %v2314 = vsel %vm2312, %v2311, %v2241
    %v2315 = vsel %vm192, %v2313, %v2247
    %v2316 = vsel %vm192, %v2314, %v2249
    %vm2317 = vcmask 162816
    %v2318 = vsel %vm2317, %v2315, %v2255
    %v2319 = vsel %vm2317, %v2316, %v2257
    %vm2320 = vcmask 195584
    %v2321 = vsel %vm2320, %v2318, %v2263
    %v2322 = vsel %vm2320, %v2319, %v2265
    %vm2323 = vcmask 228352
    %v2324 = vsel %vm2323, %v2321, %v2271
    %v2325 = vsel %vm2323, %v2322, %v2273
    %vm2326 = vcmask 261120
    %v2327 = vsel %vm2326, %v2324, %v2279
    %v2328 = vsel %vm2326, %v2325, %v2281
    %vm2329 = vcmask 293888
    %v2330 = vsel %vm2329, %v2327, %v2287
    %v2331 = vsel %vm2329, %v2328, %v2289
    %vm2332 = vcmask 326656
    %v2333 = vsel %vm2332, %v2330, %v2295
    %v2334 = vsel %vm2332, %v2331, %v2297
    %vm2335 = vcmask 359424
    %v2336 = vsel %vm2335, %v2333, %v2303
    %v2337 = vsel %vm2335, %v2334, %v2305
    %v2339 = vperm.slane %v270, 0
    %v2342 = vsel %vm226, %v2336, 0
    %v2345 = vsel %vm226, %v2337, 0
    %2347 = vmatpush.msra.mxu0 0.0
    %2348 = vmatpush.msra.mxu0 0.0
    %2349 = vmatpush.msra.mxu0 0.0
    %2350 = vmatpush.msra.mxu0 0.0
    %2351 = vmatpush.msra.mxu0 0.0
    %2352 = vmatpush.msra.mxu0 0.0
    %2353 = vmatpush.msra.mxu0 0.0
    %2354 = vmatpush.msra.mxu0 0.0
    %2355 = vmatpush.msra.mxu0 0.0
    %2356 = vmatpush.msra.mxu0 0.0
    %2357 = vmatpush.msra.mxu0 %v269
    %2358 = vmatpush.msra.mxu0 %v268
    %2359 = vmatpush.msra.mxu0 %v267
    %2360 = vmatpush.msra.mxu0 %v266
    %2361 = vmatpush.msra.mxu0 %v265
    %2362 = vmatpush.msra.mxu0 %v264
    %2363 = vmatmul.f32.gmra.mxu0 %v2342
    %v2364 = vpop.f32.mrf.mxu0
    %v2365 = vadd.f32 %v2339, %v2364
    %2366 = vmatmul.f32.gmra.mxu0 %v2345
    %v2367 = vpop.f32.mrf.mxu0
    %v2368 = vadd.f32 %v2339, %v2367
    %2369 = vdwg.mxu0
    %v2370 = vld [vmem:[%s2] sm:$0x3]
    %v2372 = vsel %vm192, %v2370, 0
    %2374 = vmatpush.msra.mxu0 0.0
    %2375 = vmatpush.msra.mxu0 0.0
    %2376 = vmatpush.msra.mxu0 0.0
    %2377 = vmatpush.msra.mxu0 0.0
    %2378 = vmatpush.msra.mxu0 0.0
    %2379 = vmatpush.msra.mxu0 0.0
    %2380 = vmatpush.msra.mxu0 0.0
    %2381 = vmatpush.msra.mxu0 0.0
    %2382 = vmatpush.msra.mxu0 0.0
    %2383 = vmatpush.msra.mxu0 0.0
    %2384 = vmatpush.msra.mxu0 0.0
    %2385 = vmatpush.msra.mxu0 0.0
    %2386 = vmatpush.msra.mxu0 0.0
    %2387 = vmatpush.msra.mxu0 0.0
    %2388 = vmatpush.msra.mxu0 %v2368
    %2389 = vmatpush.msra.mxu0 %v2365
    %2390 = vmatmul.f32.gmra.mxu0 %v2372
    %v2391 = vpop.f32.mrf.mxu0
    %v2392 = vadd.f32 0.0, %v2391
    %2393 = vdwg.mxu0
    %2395 = vrot.lane.b32.xlu0 %v250, 48
    %v2396 = vpop.permute.xlu0 %2395
    %v2398 = vsel %vm226, %v2392, %v2396
    %v2399 = vld [vmem:[#allocation6] sm:$0xff]
    %v2400 = vld [vmem:[#allocation6 + $0x8] sm:$0xff]
    %v2401 = vld [vmem:[#allocation6 + $0x10] sm:$0xff]
    %v2402 = vld [vmem:[#allocation6 + $0x18] sm:$0xff]
    %v2403 = vld [vmem:[#allocation6 + $0x20] sm:$0xff]
    %v2404 = vld [vmem:[#allocation6 + $0x28] sm:$0xff]
    %v2405 = vld [vmem:[#allocation6 + $0x30] sm:$0xff]
    %v2406 = vld [vmem:[#allocation6 + $0x38] sm:$0xff]
    %v2407 = vld [vmem:[#allocation6 + $0x40] sm:$0xff]
    %v2408 = vld [vmem:[#allocation6 + $0x48] sm:$0xff]
    %v2409 = vld [vmem:[#allocation6 + $0x50] sm:$0xff]
    %v2410 = vld [vmem:[#allocation6 + $0x58] sm:$0xff]
    %v2411 = vld [vmem:[#allocation6 + $0x60] sm:$0xff]
    %v2412 = vld [vmem:[#allocation6 + $0x68] sm:$0xff]
    %v2413 = vld [vmem:[#allocation6 + $0x70] sm:$0xff]
    %v2414 = vld [vmem:[#allocation6 + $0x78] sm:$0xff]
    %v2415 = vld [vmem:[#allocation6 + $0x80] sm:$0xff]
    %v2416 = vld [vmem:[#allocation6 + $0x88] sm:$0xff]
    %v2417 = vld [vmem:[#allocation6 + $0x90] sm:$0xff]
    %v2418 = vld [vmem:[#allocation6 + $0x98] sm:$0xff]
    %v2419 = vld [vmem:[#allocation6 + $0xa0] sm:$0xff]
    %v2420 = vld [vmem:[#allocation6 + $0xa8] sm:$0xff]
    %v2421 = vld [vmem:[#allocation6 + $0xb0] sm:$0xff]
    %v2422 = vld [vmem:[#allocation6 + $0xb8] sm:$0xff]
    %v2423 = vld [vmem:[#allocation6 + $0xc0] sm:$0xff]
    %v2424 = vld [vmem:[#allocation6 + $0xc8] sm:$0xff]
    %v2425 = vld [vmem:[#allocation6 + $0xd0] sm:$0xff]
    %v2426 = vld [vmem:[#allocation6 + $0xd8] sm:$0xff]
    %v2427 = vld [vmem:[#allocation6 + $0xe0] sm:$0xff]
    %v2428 = vld [vmem:[#allocation6 + $0xe8] sm:$0xff]
    %v2429 = vld [vmem:[#allocation6 + $0xf0] sm:$0xff]
    %v2430 = vld [vmem:[#allocation6 + $0xf8] sm:$0xff]
    %v2431 = vld [vmem:[#allocation6 + $0x100] sm:$0xff]
    %v2432 = vld [vmem:[#allocation6 + $0x108] sm:$0xff]
    %v2433 = vld [vmem:[#allocation6 + $0x110] sm:$0xff]
    %v2434 = vld [vmem:[#allocation6 + $0x118] sm:$0xff]
    %v2435 = vld [vmem:[#allocation6 + $0x120] sm:$0xff]
    %v2436 = vld [vmem:[#allocation6 + $0x128] sm:$0xff]
    %v2437 = vld [vmem:[#allocation6 + $0x130] sm:$0xff]
    %v2438 = vld [vmem:[#allocation6 + $0x138] sm:$0xff]
    %v2439 = vld [vmem:[#allocation6 + $0x140] sm:$0xff]
    %v2440 = vld [vmem:[#allocation6 + $0x148] sm:$0xff]
    %v2441 = vld [vmem:[#allocation6 + $0x150] sm:$0xff]
    %v2442 = vld [vmem:[#allocation6 + $0x158] sm:$0xff]
    %v2443 = vld [vmem:[#allocation6 + $0x160] sm:$0xff]
    %v2444 = vld [vmem:[#allocation6 + $0x168] sm:$0xff]
    %v2445 = vld [vmem:[#allocation6 + $0x170] sm:$0xff]
    %v2446 = vld [vmem:[#allocation6 + $0x178] sm:$0xff]
    %v2447 = vld [vmem:[#allocation6 + $0x180] sm:$0xff]
    %v2448 = vld [vmem:[#allocation6 + $0x188] sm:$0xff]
    %v2449 = vld [vmem:[#allocation6 + $0x190] sm:$0xff]
    %v2450 = vld [vmem:[#allocation6 + $0x198] sm:$0xff]
    %v2451 = vld [vmem:[#allocation6 + $0x1a0] sm:$0xff]
    %v2452 = vld [vmem:[#allocation6 + $0x1a8] sm:$0xff]
    %v2453 = vld [vmem:[#allocation6 + $0x1b0] sm:$0xff]
    %v2454 = vld [vmem:[#allocation6 + $0x1b8] sm:$0xff]
    %v2455 = vld [vmem:[#allocation6 + $0x1c0] sm:$0xff]
    %v2456 = vld [vmem:[#allocation6 + $0x1c8] sm:$0xff]
    %v2457 = vld [vmem:[#allocation6 + $0x1d0] sm:$0xff]
    %v2458 = vld [vmem:[#allocation6 + $0x1d8] sm:$0xff]
    %v2459 = vld [vmem:[#allocation6 + $0x1e0] sm:$0xff]
    %v2460 = vld [vmem:[#allocation6 + $0x1e8] sm:$0xff]
    %v2461 = vld [vmem:[#allocation6 + $0x1f0] sm:$0xff]
    %v2462 = vld [vmem:[#allocation6 + $0x1f8] sm:$0xff]
    %v2463 = vld [vmem:[#allocation6 + $0x200] sm:$0xff]
    %v2464 = vld [vmem:[#allocation6 + $0x208] sm:$0xff]
    %v2465 = vld [vmem:[#allocation6 + $0x210] sm:$0xff]
    %v2466 = vld [vmem:[#allocation6 + $0x218] sm:$0xff]
    %v2467 = vld [vmem:[#allocation6 + $0x220] sm:$0xff]
    %v2468 = vld [vmem:[#allocation6 + $0x228] sm:$0xff]
    %v2469 = vld [vmem:[#allocation6 + $0x230] sm:$0xff]
    %v2470 = vld [vmem:[#allocation6 + $0x238] sm:$0xff]
    %v2471 = vld [vmem:[#allocation6 + $0x240] sm:$0xff]
    %v2472 = vld [vmem:[#allocation6 + $0x248] sm:$0xff]
    %v2473 = vld [vmem:[#allocation6 + $0x250] sm:$0xff]
    %v2474 = vld [vmem:[#allocation6 + $0x258] sm:$0xff]
    %v2475 = vld [vmem:[#allocation6 + $0x260] sm:$0xff]
    %v2476 = vld [vmem:[#allocation6 + $0x268] sm:$0xff]
    %v2477 = vld [vmem:[#allocation6 + $0x270] sm:$0xff]
    %v2478 = vld [vmem:[#allocation6 + $0x278] sm:$0xff]
    %v2479 = vld [vmem:[#allocation6 + $0x280] sm:$0xff]
    %v2480 = vld [vmem:[#allocation6 + $0x288] sm:$0xff]
    %v2481 = vld [vmem:[#allocation6 + $0x290] sm:$0xff]
    %v2482 = vld [vmem:[#allocation6 + $0x298] sm:$0xff]
    %v2483 = vld [vmem:[#allocation6 + $0x2a0] sm:$0xff]
    %v2484 = vld [vmem:[#allocation6 + $0x2a8] sm:$0xff]
    %v2485 = vld [vmem:[#allocation6 + $0x2b0] sm:$0xff]
    %v2486 = vld [vmem:[#allocation6 + $0x2b8] sm:$0xff]
    %v2487 = vld [vmem:[#allocation6 + $0x2c0] sm:$0xff]
    %v2488 = vld [vmem:[#allocation6 + $0x2c8] sm:$0xff]
    %v2489 = vld [vmem:[#allocation6 + $0x2d0] sm:$0xff]
    %v2490 = vld [vmem:[#allocation6 + $0x2d8] sm:$0xff]
    %v2491 = vld [vmem:[#allocation6 + $0x2e0] sm:$0xff]
    %v2492 = vld [vmem:[#allocation6 + $0x2e8] sm:$0xff]
    %v2493 = vld [vmem:[#allocation6 + $0x2f0] sm:$0xff]
    %v2494 = vld [vmem:[#allocation6 + $0x2f8] sm:$0xff]
    %v2495 = vld [vmem:[%s10] sm:$0xff]
    %v2497 = vperm.slane %v2495, 0
    %v2498 = vperm.slane %v2495, 1
    %v2499 = vperm.slane %v2495, 2
    %v2500 = vperm.slane %v2495, 3
    %v2501 = vperm.slane %v2495, 4
    %v2502 = vperm.slane %v2495, 5
    %v2503 = vperm.slane %v2495, 6
    %v2504 = vperm.slane %v2495, 7
    %vm2513 = vcmask 785408
    %v2515 = vsel %vm2513, %v2398, 0
    %2517 = vmatpush.msra.mxu0 0.0
    %2518 = vmatpush.msra.mxu0 0.0
    %2519 = vmatpush.msra.mxu0 0.0
    %2520 = vmatpush.msra.mxu0 0.0
    %2521 = vmatpush.msra.mxu0 %v2487
    %2522 = vmatpush.msra.mxu0 %v2479
    %2523 = vmatpush.msra.mxu0 %v2471
    %2524 = vmatpush.msra.mxu0 %v2463
    %2525 = vmatpush.msra.mxu0 %v2455
    %2526 = vmatpush.msra.mxu0 %v2447
    %2527 = vmatpush.msra.mxu0 %v2439
    %2528 = vmatpush.msra.mxu0 %v2431
    %2529 = vmatpush.msra.mxu0 %v2423
    %2530 = vmatpush.msra.mxu0 %v2415
    %2531 = vmatpush.msra.mxu0 %v2407
    %2532 = vmatpush.msra.mxu0 %v2399
    %2533 = vmatmul.f32.gmra.mxu0 %v2515
    %v2534 = vpop.f32.mrf.mxu0
    %v2535 = vadd.f32 %v2497, %v2534
    %2536 = vdwg.mxu0
    %2537 = vmatpush.msra.mxu0 0.0
    %2538 = vmatpush.msra.mxu0 0.0
    %2539 = vmatpush.msra.mxu0 0.0
    %2540 = vmatpush.msra.mxu0 0.0
    %2541 = vmatpush.msra.mxu0 %v2488
    %2542 = vmatpush.msra.mxu0 %v2480
    %2543 = vmatpush.msra.mxu0 %v2472
    %2544 = vmatpush.msra.mxu0 %v2464
    %2545 = vmatpush.msra.mxu0 %v2456
    %2546 = vmatpush.msra.mxu0 %v2448
    %2547 = vmatpush.msra.mxu0 %v2440
    %2548 = vmatpush.msra.mxu0 %v2432
    %2549 = vmatpush.msra.mxu0 %v2424
    %2550 = vmatpush.msra.mxu0 %v2416
    %2551 = vmatpush.msra.mxu0 %v2408
    %2552 = vmatpush.msra.mxu0 %v2400
    %2553 = vmatmul.f32.gmra.mxu0 %v2515
    %v2554 = vpop.f32.mrf.mxu0
    %v2555 = vadd.f32 %v2498, %v2554
    %2556 = vdwg.mxu0
    %2557 = vmatpush.msra.mxu0 0.0
    %2558 = vmatpush.msra.mxu0 0.0
    %2559 = vmatpush.msra.mxu0 0.0
    %2560 = vmatpush.msra.mxu0 0.0
    %2561 = vmatpush.msra.mxu0 %v2489
    %2562 = vmatpush.msra.mxu0 %v2481
    %2563 = vmatpush.msra.mxu0 %v2473
    %2564 = vmatpush.msra.mxu0 %v2465
    %2565 = vmatpush.msra.mxu0 %v2457
    %2566 = vmatpush.msra.mxu0 %v2449
    %2567 = vmatpush.msra.mxu0 %v2441
    %2568 = vmatpush.msra.mxu0 %v2433
    %2569 = vmatpush.msra.mxu0 %v2425
    %2570 = vmatpush.msra.mxu0 %v2417
    %2571 = vmatpush.msra.mxu0 %v2409
    %2572 = vmatpush.msra.mxu0 %v2401
    %2573 = vmatmul.f32.gmra.mxu0 %v2515
    %v2574 = vpop.f32.mrf.mxu0
    %v2575 = vadd.f32 %v2499, %v2574
    %2576 = vdwg.mxu0
    %2577 = vmatpush.msra.mxu0 0.0
    %2578 = vmatpush.msra.mxu0 0.0
    %2579 = vmatpush.msra.mxu0 0.0
    %2580 = vmatpush.msra.mxu0 0.0
    %2581 = vmatpush.msra.mxu0 %v2490
    %2582 = vmatpush.msra.mxu0 %v2482
    %2583 = vmatpush.msra.mxu0 %v2474
    %2584 = vmatpush.msra.mxu0 %v2466
    %2585 = vmatpush.msra.mxu0 %v2458
    %2586 = vmatpush.msra.mxu0 %v2450
    %2587 = vmatpush.msra.mxu0 %v2442
    %2588 = vmatpush.msra.mxu0 %v2434
    %2589 = vmatpush.msra.mxu0 %v2426
    %2590 = vmatpush.msra.mxu0 %v2418
    %2591 = vmatpush.msra.mxu0 %v2410
    %2592 = vmatpush.msra.mxu0 %v2402
    %2593 = vmatmul.f32.gmra.mxu0 %v2515
    %v2594 = vpop.f32.mrf.mxu0
    %v2595 = vadd.f32 %v2500, %v2594
    %2596 = vdwg.mxu0
    %2597 = vmatpush.msra.mxu0 0.0
    %2598 = vmatpush.msra.mxu0 0.0
    %2599 = vmatpush.msra.mxu0 0.0
    %2600 = vmatpush.msra.mxu0 0.0
    %2601 = vmatpush.msra.mxu0 %v2491
    %2602 = vmatpush.msra.mxu0 %v2483
    %2603 = vmatpush.msra.mxu0 %v2475
    %2604 = vmatpush.msra.mxu0 %v2467
    %2605 = vmatpush.msra.mxu0 %v2459
    %2606 = vmatpush.msra.mxu0 %v2451
    %2607 = vmatpush.msra.mxu0 %v2443
    %2608 = vmatpush.msra.mxu0 %v2435
    %2609 = vmatpush.msra.mxu0 %v2427
    %2610 = vmatpush.msra.mxu0 %v2419
    %2611 = vmatpush.msra.mxu0 %v2411
    %2612 = vmatpush.msra.mxu0 %v2403
    %2613 = vmatmul.f32.gmra.mxu0 %v2515
    %v2614 = vpop.f32.mrf.mxu0
    %v2615 = vadd.f32 %v2501, %v2614
    %2616 = vdwg.mxu0
    %2617 = vmatpush.msra.mxu0 0.0
    %2618 = vmatpush.msra.mxu0 0.0
    %2619 = vmatpush.msra.mxu0 0.0
    %2620 = vmatpush.msra.mxu0 0.0
    %2621 = vmatpush.msra.mxu0 %v2492
    %2622 = vmatpush.msra.mxu0 %v2484
    %2623 = vmatpush.msra.mxu0 %v2476
    %2624 = vmatpush.msra.mxu0 %v2468
    %2625 = vmatpush.msra.mxu0 %v2460
    %2626 = vmatpush.msra.mxu0 %v2452
    %2627 = vmatpush.msra.mxu0 %v2444
    %2628 = vmatpush.msra.mxu0 %v2436
    %2629 = vmatpush.msra.mxu0 %v2428
    %2630 = vmatpush.msra.mxu0 %v2420
    %2631 = vmatpush.msra.mxu0 %v2412
    %2632 = vmatpush.msra.mxu0 %v2404
    %2633 = vmatmul.f32.gmra.mxu0 %v2515
    %v2634 = vpop.f32.mrf.mxu0
    %v2635 = vadd.f32 %v2502, %v2634
    %2636 = vdwg.mxu0
    %2637 = vmatpush.msra.mxu0 0.0
    %2638 = vmatpush.msra.mxu0 0.0
    %2639 = vmatpush.msra.mxu0 0.0
    %2640 = vmatpush.msra.mxu0 0.0
    %2641 = vmatpush.msra.mxu0 %v2493
    %2642 = vmatpush.msra.mxu0 %v2485
    %2643 = vmatpush.msra.mxu0 %v2477
    %2644 = vmatpush.msra.mxu0 %v2469
    %2645 = vmatpush.msra.mxu0 %v2461
    %2646 = vmatpush.msra.mxu0 %v2453
    %2647 = vmatpush.msra.mxu0 %v2445
    %2648 = vmatpush.msra.mxu0 %v2437
    %2649 = vmatpush.msra.mxu0 %v2429
    %2650 = vmatpush.msra.mxu0 %v2421
    %2651 = vmatpush.msra.mxu0 %v2413
    %2652 = vmatpush.msra.mxu0 %v2405
    %2653 = vmatmul.f32.gmra.mxu0 %v2515
    %v2654 = vpop.f32.mrf.mxu0
    %v2655 = vadd.f32 %v2503, %v2654
    %2656 = vdwg.mxu0
    %2657 = vmatpush.msra.mxu0 0.0
    %2658 = vmatpush.msra.mxu0 0.0
    %2659 = vmatpush.msra.mxu0 0.0
    %2660 = vmatpush.msra.mxu0 0.0
    %2661 = vmatpush.msra.mxu0 %v2494
    %2662 = vmatpush.msra.mxu0 %v2486
    %2663 = vmatpush.msra.mxu0 %v2478
    %2664 = vmatpush.msra.mxu0 %v2470
    %2665 = vmatpush.msra.mxu0 %v2462
    %2666 = vmatpush.msra.mxu0 %v2454
    %2667 = vmatpush.msra.mxu0 %v2446
    %2668 = vmatpush.msra.mxu0 %v2438
    %2669 = vmatpush.msra.mxu0 %v2430
    %2670 = vmatpush.msra.mxu0 %v2422
    %2671 = vmatpush.msra.mxu0 %v2414
    %2672 = vmatpush.msra.mxu0 %v2406
    %2673 = vmatmul.f32.gmra.mxu0 %v2515
    %v2674 = vpop.f32.mrf.mxu0
    %v2675 = vadd.f32 %v2504, %v2674
    %2676 = vdwg.mxu0
    %v2677 = vld [vmem:[%s11] sm:$0xf]
    %v2679 = vperm.slane %v2677, 0
    %v2680 = vperm.slane %v2677, 1
    %v2681 = vperm.slane %v2677, 2
    %v2682 = vperm.slane %v2677, 3
    %v2687 = vmul.f32 %v2615, %v2679
    %v2688 = vmul.f32 %v2635, %v2680
    %v2689 = vmul.f32 %v2655, %v2681
    %v2690 = vmul.f32 %v2675, %v2682
    %v2691 = vld [vmem:[%s12] sm:$0xf]
    %v2693 = vperm.slane %v2691, 0
    %v2694 = vperm.slane %v2691, 1
    %v2695 = vperm.slane %v2691, 2
    %v2696 = vperm.slane %v2691, 3
    %v2701 = vadd.f32 %v2687, %v2693
    %v2702 = vadd.f32 %v2688, %v2694
    %v2703 = vadd.f32 %v2689, %v2695
    %v2704 = vadd.f32 %v2690, %v2696
    %v2705 = vadd.f32 %v2701, %v2535
    %v2706 = vadd.f32 %v2702, %v2555
    %v2707 = vadd.f32 %v2703, %v2575
    %v2708 = vadd.f32 %v2704, %v2595
    %vm2709 = vcmp.gt.f32.partialorder %v2705, 0.0
    %vm2710 = vcmp.gt.f32.partialorder %v2706, 0.0
    %vm2711 = vcmp.gt.f32.partialorder %v2707, 0.0
    %vm2712 = vcmp.gt.f32.partialorder %v2708, 0.0
    %v2713 = vmul.f32 %v2705, 0.1
    %v2714 = vmul.f32 %v2706, 0.1
    %v2715 = vmul.f32 %v2707, 0.1
    %v2716 = vmul.f32 %v2708, 0.1
    %v2717 = vsel %vm2709, %v2705, %v2713
    %v2718 = vsel %vm2710, %v2706, %v2714
    %v2719 = vsel %vm2711, %v2707, %v2715
    %v2720 = vsel %vm2712, %v2708, %v2716
    %v2721 = vld [vmem:[#allocation7] sm:$0xff]
    %v2722 = vld [vmem:[#allocation7 + $0x8] sm:$0xff]
    %v2723 = vld [vmem:[#allocation7 + $0x10] sm:$0xff]
    %v2724 = vld [vmem:[#allocation7 + $0x18] sm:$0xff]
    %v2725 = vld [vmem:[#allocation7 + $0x20] sm:$0xff]
    %v2726 = vld [vmem:[#allocation7 + $0x28] sm:$0xff]
    %v2727 = vld [vmem:[#allocation7 + $0x30] sm:$0xff]
    %v2728 = vld [vmem:[#allocation7 + $0x38] sm:$0xff]
    %v2729 = vld [vmem:[#allocation7 + $0x40] sm:$0xff]
    %v2730 = vld [vmem:[#allocation7 + $0x48] sm:$0xff]
    %v2731 = vld [vmem:[#allocation7 + $0x50] sm:$0xff]
    %v2732 = vld [vmem:[#allocation7 + $0x58] sm:$0xff]
    %v2733 = vld [vmem:[#allocation7 + $0x60] sm:$0xff]
    %v2734 = vld [vmem:[#allocation7 + $0x68] sm:$0xff]
    %v2735 = vld [vmem:[#allocation7 + $0x70] sm:$0xff]
    %v2736 = vld [vmem:[#allocation7 + $0x78] sm:$0xff]
    %v2737 = vld [vmem:[#allocation7 + $0x80] sm:$0xff]
    %v2738 = vld [vmem:[#allocation7 + $0x88] sm:$0xff]
    %v2739 = vld [vmem:[#allocation7 + $0x90] sm:$0xff]
    %v2740 = vld [vmem:[#allocation7 + $0x98] sm:$0xff]
    %v2741 = vld [vmem:[#allocation7 + $0xa0] sm:$0xff]
    %v2742 = vld [vmem:[#allocation7 + $0xa8] sm:$0xff]
    %v2743 = vld [vmem:[#allocation7 + $0xb0] sm:$0xff]
    %v2744 = vld [vmem:[#allocation7 + $0xb8] sm:$0xff]
    %v2745 = vld [vmem:[#allocation7 + $0xc0] sm:$0xff]
    %v2746 = vld [vmem:[#allocation7 + $0xc8] sm:$0xff]
    %v2747 = vld [vmem:[#allocation7 + $0xd0] sm:$0xff]
    %v2748 = vld [vmem:[#allocation7 + $0xd8] sm:$0xff]
    %v2749 = vld [vmem:[#allocation7 + $0xe0] sm:$0xff]
    %v2750 = vld [vmem:[#allocation7 + $0xe8] sm:$0xff]
    %v2751 = vld [vmem:[#allocation7 + $0xf0] sm:$0xff]
    %v2752 = vld [vmem:[#allocation7 + $0xf8] sm:$0xff]
    %v2753 = vld [vmem:[#allocation7 + $0x100] sm:$0xff]
    %v2754 = vld [vmem:[#allocation7 + $0x108] sm:$0xff]
    %v2755 = vld [vmem:[#allocation7 + $0x110] sm:$0xff]
    %v2756 = vld [vmem:[#allocation7 + $0x118] sm:$0xff]
    %v2757 = vld [vmem:[#allocation7 + $0x120] sm:$0xff]
    %v2758 = vld [vmem:[#allocation7 + $0x128] sm:$0xff]
    %v2759 = vld [vmem:[#allocation7 + $0x130] sm:$0xff]
    %v2760 = vld [vmem:[#allocation7 + $0x138] sm:$0xff]
    %v2761 = vld [vmem:[#allocation7 + $0x140] sm:$0xff]
    %v2762 = vld [vmem:[#allocation7 + $0x148] sm:$0xff]
    %v2763 = vld [vmem:[#allocation7 + $0x150] sm:$0xff]
    %v2764 = vld [vmem:[#allocation7 + $0x158] sm:$0xff]
    %v2765 = vld [vmem:[#allocation7 + $0x160] sm:$0xff]
    %v2766 = vld [vmem:[#allocation7 + $0x168] sm:$0xff]
    %v2767 = vld [vmem:[#allocation7 + $0x170] sm:$0xff]
    %v2768 = vld [vmem:[#allocation7 + $0x178] sm:$0xff]
    %v2769 = vld [vmem:[#allocation7 + $0x180] sm:$0xff]
    %v2770 = vld [vmem:[#allocation7 + $0x188] sm:$0xff]
    %v2771 = vld [vmem:[#allocation7 + $0x190] sm:$0xff]
    %v2772 = vld [vmem:[#allocation7 + $0x198] sm:$0xff]
    %v2773 = vld [vmem:[#allocation7 + $0x1a0] sm:$0xff]
    %v2774 = vld [vmem:[#allocation7 + $0x1a8] sm:$0xff]
    %v2775 = vld [vmem:[#allocation7 + $0x1b0] sm:$0xff]
    %v2776 = vld [vmem:[#allocation7 + $0x1b8] sm:$0xff]
    %v2777 = vld [vmem:[#allocation7 + $0x1c0] sm:$0xff]
    %v2778 = vld [vmem:[#allocation7 + $0x1c8] sm:$0xff]
    %v2779 = vld [vmem:[#allocation7 + $0x1d0] sm:$0xff]
    %v2780 = vld [vmem:[#allocation7 + $0x1d8] sm:$0xff]
    %v2781 = vld [vmem:[#allocation7 + $0x1e0] sm:$0xff]
    %v2782 = vld [vmem:[#allocation7 + $0x1e8] sm:$0xff]
    %v2783 = vld [vmem:[#allocation7 + $0x1f0] sm:$0xff]
    %v2784 = vld [vmem:[#allocation7 + $0x1f8] sm:$0xff]
    %v2785 = vld [vmem:[#allocation7 + $0x200] sm:$0xff]
    %v2786 = vld [vmem:[#allocation7 + $0x208] sm:$0xff]
    %v2787 = vld [vmem:[#allocation7 + $0x210] sm:$0xff]
    %v2788 = vld [vmem:[#allocation7 + $0x218] sm:$0xff]
    %v2789 = vld [vmem:[#allocation7 + $0x220] sm:$0xff]
    %v2790 = vld [vmem:[#allocation7 + $0x228] sm:$0xff]
    %v2791 = vld [vmem:[#allocation7 + $0x230] sm:$0xff]
    %v2792 = vld [vmem:[#allocation7 + $0x238] sm:$0xff]
    %v2793 = vld [vmem:[#allocation7 + $0x240] sm:$0xff]
    %v2794 = vld [vmem:[#allocation7 + $0x248] sm:$0xff]
    %v2795 = vld [vmem:[#allocation7 + $0x250] sm:$0xff]
    %v2796 = vld [vmem:[#allocation7 + $0x258] sm:$0xff]
    %v2797 = vld [vmem:[#allocation7 + $0x260] sm:$0xff]
    %v2798 = vld [vmem:[#allocation7 + $0x268] sm:$0xff]
    %v2799 = vld [vmem:[#allocation7 + $0x270] sm:$0xff]
    %v2800 = vld [vmem:[#allocation7 + $0x278] sm:$0xff]
    %v2801 = vld [vmem:[#allocation7 + $0x280] sm:$0xff]
    %v2802 = vld [vmem:[#allocation7 + $0x288] sm:$0xff]
    %v2803 = vld [vmem:[#allocation7 + $0x290] sm:$0xff]
    %v2804 = vld [vmem:[#allocation7 + $0x298] sm:$0xff]
    %v2805 = vld [vmem:[#allocation7 + $0x2a0] sm:$0xff]
    %v2806 = vld [vmem:[#allocation7 + $0x2a8] sm:$0xff]
    %v2807 = vld [vmem:[#allocation7 + $0x2b0] sm:$0xff]
    %v2808 = vld [vmem:[#allocation7 + $0x2b8] sm:$0xff]
    %v2809 = vld [vmem:[#allocation7 + $0x2c0] sm:$0xff]
    %v2810 = vld [vmem:[#allocation7 + $0x2c8] sm:$0xff]
    %v2811 = vld [vmem:[#allocation7 + $0x2d0] sm:$0xff]
    %v2812 = vld [vmem:[#allocation7 + $0x2d8] sm:$0xff]
    %v2813 = vld [vmem:[#allocation7 + $0x2e0] sm:$0xff]
    %v2814 = vld [vmem:[#allocation7 + $0x2e8] sm:$0xff]
    %v2815 = vld [vmem:[#allocation7 + $0x2f0] sm:$0xff]
    %v2816 = vld [vmem:[#allocation7 + $0x2f8] sm:$0xff]
    %v2817 = vld [vmem:[#allocation7 + $0x300] sm:$0xff]
    %v2818 = vld [vmem:[#allocation7 + $0x308] sm:$0xff]
    %v2819 = vld [vmem:[#allocation7 + $0x310] sm:$0xff]
    %v2820 = vld [vmem:[#allocation7 + $0x318] sm:$0xff]
    %v2821 = vld [vmem:[#allocation7 + $0x320] sm:$0xff]
    %v2822 = vld [vmem:[#allocation7 + $0x328] sm:$0xff]
    %v2823 = vld [vmem:[#allocation7 + $0x330] sm:$0xff]
    %v2824 = vld [vmem:[#allocation7 + $0x338] sm:$0xff]
    %v2825 = vld [vmem:[#allocation7 + $0x340] sm:$0xff]
    %v2826 = vld [vmem:[#allocation7 + $0x348] sm:$0xff]
    %v2827 = vld [vmem:[#allocation7 + $0x350] sm:$0xff]
    %v2828 = vld [vmem:[#allocation7 + $0x358] sm:$0xff]
    %v2829 = vld [vmem:[#allocation7 + $0x360] sm:$0xff]
    %v2830 = vld [vmem:[#allocation7 + $0x368] sm:$0xff]
    %v2831 = vld [vmem:[#allocation7 + $0x370] sm:$0xff]
    %v2832 = vld [vmem:[#allocation7 + $0x378] sm:$0xff]
    %v2833 = vld [vmem:[#allocation7 + $0x380] sm:$0xff]
    %v2834 = vld [vmem:[#allocation7 + $0x388] sm:$0xff]
    %v2835 = vld [vmem:[#allocation7 + $0x390] sm:$0xff]
    %v2836 = vld [vmem:[#allocation7 + $0x398] sm:$0xff]
    %v2837 = vld [vmem:[#allocation7 + $0x3a0] sm:$0xff]
    %v2838 = vld [vmem:[#allocation7 + $0x3a8] sm:$0xff]
    %v2839 = vld [vmem:[#allocation7 + $0x3b0] sm:$0xff]
    %v2840 = vld [vmem:[#allocation7 + $0x3b8] sm:$0xff]
    %v2841 = vld [vmem:[#allocation7 + $0x3c0] sm:$0xff]
    %v2842 = vld [vmem:[#allocation7 + $0x3c8] sm:$0xff]
    %v2843 = vld [vmem:[#allocation7 + $0x3d0] sm:$0xff]
    %v2844 = vld [vmem:[#allocation7 + $0x3d8] sm:$0xff]
    %v2845 = vld [vmem:[#allocation7 + $0x3e0] sm:$0xff]
    %v2846 = vld [vmem:[#allocation7 + $0x3e8] sm:$0xff]
    %v2847 = vld [vmem:[#allocation7 + $0x3f0] sm:$0xff]
    %v2848 = vld [vmem:[#allocation7 + $0x3f8] sm:$0xff]
    %v2849 = vld [vmem:[#allocation7 + $0x400] sm:$0xff]
    %v2850 = vld [vmem:[#allocation7 + $0x408] sm:$0xff]
    %v2851 = vld [vmem:[#allocation7 + $0x410] sm:$0xff]
    %v2852 = vld [vmem:[#allocation7 + $0x418] sm:$0xff]
    %v2853 = vld [vmem:[#allocation7 + $0x420] sm:$0xff]
    %v2854 = vld [vmem:[#allocation7 + $0x428] sm:$0xff]
    %v2855 = vld [vmem:[#allocation7 + $0x430] sm:$0xff]
    %v2856 = vld [vmem:[#allocation7 + $0x438] sm:$0xff]
    %v2857 = vld [vmem:[#allocation7 + $0x440] sm:$0xff]
    %v2858 = vld [vmem:[#allocation7 + $0x448] sm:$0xff]
    %v2859 = vld [vmem:[#allocation7 + $0x450] sm:$0xff]
    %v2860 = vld [vmem:[#allocation7 + $0x458] sm:$0xff]
    %v2861 = vld [vmem:[#allocation7 + $0x460] sm:$0xff]
    %v2862 = vld [vmem:[#allocation7 + $0x468] sm:$0xff]
    %v2863 = vld [vmem:[#allocation7 + $0x470] sm:$0xff]
    %v2864 = vld [vmem:[#allocation7 + $0x478] sm:$0xff]
    %v2865 = vld [vmem:[#allocation7 + $0x480] sm:$0xff]
    %v2866 = vld [vmem:[#allocation7 + $0x488] sm:$0xff]
    %v2867 = vld [vmem:[#allocation7 + $0x490] sm:$0xff]
    %v2868 = vld [vmem:[#allocation7 + $0x498] sm:$0xff]
    %v2869 = vld [vmem:[#allocation7 + $0x4a0] sm:$0xff]
    %v2870 = vld [vmem:[#allocation7 + $0x4a8] sm:$0xff]
    %v2871 = vld [vmem:[#allocation7 + $0x4b0] sm:$0xff]
    %v2872 = vld [vmem:[#allocation7 + $0x4b8] sm:$0xff]
    %v2873 = vld [vmem:[#allocation7 + $0x4c0] sm:$0xff]
    %v2874 = vld [vmem:[#allocation7 + $0x4c8] sm:$0xff]
    %v2875 = vld [vmem:[#allocation7 + $0x4d0] sm:$0xff]
    %v2876 = vld [vmem:[#allocation7 + $0x4d8] sm:$0xff]
    %v2877 = vld [vmem:[#allocation7 + $0x4e0] sm:$0xff]
    %v2878 = vld [vmem:[#allocation7 + $0x4e8] sm:$0xff]
    %v2879 = vld [vmem:[#allocation7 + $0x4f0] sm:$0xff]
    %v2880 = vld [vmem:[#allocation7 + $0x4f8] sm:$0xff]
    %v2881 = vld [vmem:[#allocation7 + $0x500] sm:$0xff]
    %v2882 = vld [vmem:[#allocation7 + $0x508] sm:$0xff]
    %v2883 = vld [vmem:[#allocation7 + $0x510] sm:$0xff]
    %v2884 = vld [vmem:[#allocation7 + $0x518] sm:$0xff]
    %v2885 = vld [vmem:[#allocation7 + $0x520] sm:$0xff]
    %v2886 = vld [vmem:[#allocation7 + $0x528] sm:$0xff]
    %v2887 = vld [vmem:[#allocation7 + $0x530] sm:$0xff]
    %v2888 = vld [vmem:[#allocation7 + $0x538] sm:$0xff]
    %v2889 = vld [vmem:[#allocation7 + $0x540] sm:$0xff]
    %v2890 = vld [vmem:[#allocation7 + $0x548] sm:$0xff]
    %v2891 = vld [vmem:[#allocation7 + $0x550] sm:$0xff]
    %v2892 = vld [vmem:[#allocation7 + $0x558] sm:$0xff]
    %v2893 = vld [vmem:[#allocation7 + $0x560] sm:$0xff]
    %v2894 = vld [vmem:[#allocation7 + $0x568] sm:$0xff]
    %v2895 = vld [vmem:[#allocation7 + $0x570] sm:$0xff]
    %v2896 = vld [vmem:[#allocation7 + $0x578] sm:$0xff]
    %v2897 = vld [vmem:[#allocation7 + $0x580] sm:$0xff]
    %v2898 = vld [vmem:[#allocation7 + $0x588] sm:$0xff]
    %v2899 = vld [vmem:[#allocation7 + $0x590] sm:$0xff]
    %v2900 = vld [vmem:[#allocation7 + $0x598] sm:$0xff]
    %v2901 = vld [vmem:[#allocation7 + $0x5a0] sm:$0xff]
    %v2902 = vld [vmem:[#allocation7 + $0x5a8] sm:$0xff]
    %v2903 = vld [vmem:[#allocation7 + $0x5b0] sm:$0xff]
    %v2904 = vld [vmem:[#allocation7 + $0x5b8] sm:$0xff]
    %v2905 = vld [vmem:[#allocation7 + $0x5c0] sm:$0xff]
    %v2906 = vld [vmem:[#allocation7 + $0x5c8] sm:$0xff]
    %v2907 = vld [vmem:[#allocation7 + $0x5d0] sm:$0xff]
    %v2908 = vld [vmem:[#allocation7 + $0x5d8] sm:$0xff]
    %v2909 = vld [vmem:[#allocation7 + $0x5e0] sm:$0xff]
    %v2910 = vld [vmem:[#allocation7 + $0x5e8] sm:$0xff]
    %v2911 = vld [vmem:[#allocation7 + $0x5f0] sm:$0xff]
    %v2912 = vld [vmem:[#allocation7 + $0x5f8] sm:$0xff]
    %v2913 = vld [vmem:[#allocation7 + $0x600] sm:$0xff]
    %v2914 = vld [vmem:[#allocation7 + $0x608] sm:$0xff]
    %v2915 = vld [vmem:[#allocation7 + $0x610] sm:$0xff]
    %v2916 = vld [vmem:[#allocation7 + $0x618] sm:$0xff]
    %v2917 = vld [vmem:[#allocation7 + $0x620] sm:$0xff]
    %v2918 = vld [vmem:[#allocation7 + $0x628] sm:$0xff]
    %v2919 = vld [vmem:[#allocation7 + $0x630] sm:$0xff]
    %v2920 = vld [vmem:[#allocation7 + $0x638] sm:$0xff]
    %v2921 = vld [vmem:[#allocation7 + $0x640] sm:$0xff]
    %v2922 = vld [vmem:[#allocation7 + $0x648] sm:$0xff]
    %v2923 = vld [vmem:[#allocation7 + $0x650] sm:$0xff]
    %v2924 = vld [vmem:[#allocation7 + $0x658] sm:$0xff]
    %v2925 = vld [vmem:[#allocation7 + $0x660] sm:$0xff]
    %v2926 = vld [vmem:[#allocation7 + $0x668] sm:$0xff]
    %v2927 = vld [vmem:[#allocation7 + $0x670] sm:$0xff]
    %v2928 = vld [vmem:[#allocation7 + $0x678] sm:$0xff]
    %v2929 = vld [vmem:[#allocation7 + $0x680] sm:$0xff]
    %v2930 = vld [vmem:[#allocation7 + $0x688] sm:$0xff]
    %v2931 = vld [vmem:[#allocation7 + $0x690] sm:$0xff]
    %v2932 = vld [vmem:[#allocation7 + $0x698] sm:$0xff]
    %v2933 = vld [vmem:[#allocation7 + $0x6a0] sm:$0xff]
    %v2934 = vld [vmem:[#allocation7 + $0x6a8] sm:$0xff]
    %v2935 = vld [vmem:[#allocation7 + $0x6b0] sm:$0xff]
    %v2936 = vld [vmem:[#allocation7 + $0x6b8] sm:$0xff]
    %v2937 = vld [vmem:[#allocation7 + $0x6c0] sm:$0xff]
    %v2938 = vld [vmem:[#allocation7 + $0x6c8] sm:$0xff]
    %v2939 = vld [vmem:[#allocation7 + $0x6d0] sm:$0xff]
    %v2940 = vld [vmem:[#allocation7 + $0x6d8] sm:$0xff]
    %v2941 = vld [vmem:[#allocation7 + $0x6e0] sm:$0xff]
    %v2942 = vld [vmem:[#allocation7 + $0x6e8] sm:$0xff]
    %v2943 = vld [vmem:[#allocation7 + $0x6f0] sm:$0xff]
    %v2944 = vld [vmem:[#allocation7 + $0x6f8] sm:$0xff]
    %v2945 = vld [vmem:[#allocation7 + $0x700] sm:$0xff]
    %v2946 = vld [vmem:[#allocation7 + $0x708] sm:$0xff]
    %v2947 = vld [vmem:[#allocation7 + $0x710] sm:$0xff]
    %v2948 = vld [vmem:[#allocation7 + $0x718] sm:$0xff]
    %v2949 = vld [vmem:[#allocation7 + $0x720] sm:$0xff]
    %v2950 = vld [vmem:[#allocation7 + $0x728] sm:$0xff]
    %v2951 = vld [vmem:[#allocation7 + $0x730] sm:$0xff]
    %v2952 = vld [vmem:[#allocation7 + $0x738] sm:$0xff]
    %v2953 = vld [vmem:[#allocation7 + $0x740] sm:$0xff]
    %v2954 = vld [vmem:[#allocation7 + $0x748] sm:$0xff]
    %v2955 = vld [vmem:[#allocation7 + $0x750] sm:$0xff]
    %v2956 = vld [vmem:[#allocation7 + $0x758] sm:$0xff]
    %v2957 = vld [vmem:[#allocation7 + $0x760] sm:$0xff]
    %v2958 = vld [vmem:[#allocation7 + $0x768] sm:$0xff]
    %v2959 = vld [vmem:[#allocation7 + $0x770] sm:$0xff]
    %v2960 = vld [vmem:[#allocation7 + $0x778] sm:$0xff]
    %v2961 = vld [vmem:[#allocation7 + $0x780] sm:$0xff]
    %v2962 = vld [vmem:[#allocation7 + $0x788] sm:$0xff]
    %v2963 = vld [vmem:[#allocation7 + $0x790] sm:$0xff]
    %v2964 = vld [vmem:[#allocation7 + $0x798] sm:$0xff]
    %v2965 = vld [vmem:[#allocation7 + $0x7a0] sm:$0xff]
    %v2966 = vld [vmem:[#allocation7 + $0x7a8] sm:$0xff]
    %v2967 = vld [vmem:[#allocation7 + $0x7b0] sm:$0xff]
    %v2968 = vld [vmem:[#allocation7 + $0x7b8] sm:$0xff]
    %v2969 = vld [vmem:[#allocation7 + $0x7c0] sm:$0xff]
    %v2970 = vld [vmem:[#allocation7 + $0x7c8] sm:$0xff]
    %v2971 = vld [vmem:[#allocation7 + $0x7d0] sm:$0xff]
    %v2972 = vld [vmem:[#allocation7 + $0x7d8] sm:$0xff]
    %v2973 = vld [vmem:[#allocation7 + $0x7e0] sm:$0xff]
    %v2974 = vld [vmem:[#allocation7 + $0x7e8] sm:$0xff]
    %v2975 = vld [vmem:[#allocation7 + $0x7f0] sm:$0xff]
    %v2976 = vld [vmem:[#allocation7 + $0x7f8] sm:$0xff]
    %v2977 = vld [vmem:[%s14] sm:$0xf]
    %v2979 = vperm.slane %v2977, 0
    %v2980 = vperm.slane %v2977, 1
    %v2981 = vperm.slane %v2977, 2
    %v2982 = vperm.slane %v2977, 3
    %2987 = vmatpush.msra.mxu0 %v2781
    %2988 = vmatpush.msra.mxu0 %v2777
    %2989 = vmatpush.msra.mxu0 %v2773
    %2990 = vmatpush.msra.mxu0 %v2769
    %2991 = vmatpush.msra.mxu0 %v2765
    %2992 = vmatpush.msra.mxu0 %v2761
    %2993 = vmatpush.msra.mxu0 %v2757
    %2994 = vmatpush.msra.mxu0 %v2753
    %2995 = vmatpush.msra.mxu0 %v2749
    %2996 = vmatpush.msra.mxu0 %v2745
    %2997 = vmatpush.msra.mxu0 %v2741
    %2998 = vmatpush.msra.mxu0 %v2737
    %2999 = vmatpush.msra.mxu0 %v2733
    %3000 = vmatpush.msra.mxu0 %v2729
    %3001 = vmatpush.msra.mxu0 %v2725
    %3002 = vmatpush.msra.mxu0 %v2721
    %3003 = vmatmul.f32.gmra.mxu0 %v2717
    %v3004 = vpop.f32.mrf.mxu0
    %v3005 = vadd.f32 %v2979, %v3004
    %3006 = vdwg.mxu0
    %3007 = vmatpush.msra.mxu0 %v2845
    %3008 = vmatpush.msra.mxu0 %v2841
    %3009 = vmatpush.msra.mxu0 %v2837
    %3010 = vmatpush.msra.mxu0 %v2833
    %3011 = vmatpush.msra.mxu0 %v2829
    %3012 = vmatpush.msra.mxu0 %v2825
    %3013 = vmatpush.msra.mxu0 %v2821
    %3014 = vmatpush.msra.mxu0 %v2817
    %3015 = vmatpush.msra.mxu0 %v2813
    %3016 = vmatpush.msra.mxu0 %v2809
    %3017 = vmatpush.msra.mxu0 %v2805
    %3018 = vmatpush.msra.mxu0 %v2801
    %3019 = vmatpush.msra.mxu0 %v2797
    %3020 = vmatpush.msra.mxu0 %v2793
    %3021 = vmatpush.msra.mxu0 %v2789
    %3022 = vmatpush.msra.mxu0 %v2785
    %3023 = vmatmul.f32.gmra.mxu0 %v2718
    %v3024 = vpop.f32.mrf.mxu0
    %v3025 = vadd.f32 %v3005, %v3024
    %3026 = vdwg.mxu0
    %3027 = vmatpush.msra.mxu0 %v2909
    %3028 = vmatpush.msra.mxu0 %v2905
    %3029 = vmatpush.msra.mxu0 %v2901
    %3030 = vmatpush.msra.mxu0 %v2897
    %3031 = vmatpush.msra.mxu0 %v2893
    %3032 = vmatpush.msra.mxu0 %v2889
    %3033 = vmatpush.msra.mxu0 %v2885
    %3034 = vmatpush.msra.mxu0 %v2881
    %3035 = vmatpush.msra.mxu0 %v2877
    %3036 = vmatpush.msra.mxu0 %v2873
    %3037 = vmatpush.msra.mxu0 %v2869
    %3038 = vmatpush.msra.mxu0 %v2865
    %3039 = vmatpush.msra.mxu0 %v2861
    %3040 = vmatpush.msra.mxu0 %v2857
    %3041 = vmatpush.msra.mxu0 %v2853
    %3042 = vmatpush.msra.mxu0 %v2849
    %3043 = vmatmul.f32.gmra.mxu0 %v2719
    %v3044 = vpop.f32.mrf.mxu0
    %v3045 = vadd.f32 %v3025, %v3044
    %3046 = vdwg.mxu0
    %3047 = vmatpush.msra.mxu0 %v2973
    %3048 = vmatpush.msra.mxu0 %v2969
    %3049 = vmatpush.msra.mxu0 %v2965
    %3050 = vmatpush.msra.mxu0 %v2961
    %3051 = vmatpush.msra.mxu0 %v2957
    %3052 = vmatpush.msra.mxu0 %v2953
    %3053 = vmatpush.msra.mxu0 %v2949
    %3054 = vmatpush.msra.mxu0 %v2945
    %3055 = vmatpush.msra.mxu0 %v2941
    %3056 = vmatpush.msra.mxu0 %v2937
    %3057 = vmatpush.msra.mxu0 %v2933
    %3058 = vmatpush.msra.mxu0 %v2929
    %3059 = vmatpush.msra.mxu0 %v2925
    %3060 = vmatpush.msra.mxu0 %v2921
    %3061 = vmatpush.msra.mxu0 %v2917
    %3062 = vmatpush.msra.mxu0 %v2913
    %3063 = vmatmul.f32.gmra.mxu0 %v2720
    %v3064 = vpop.f32.mrf.mxu0
    %v3065 = vadd.f32 %v3045, %v3064
    %3066 = vdwg.mxu0
    %3067 = vmatpush.msra.mxu0 %v2782
    %3068 = vmatpush.msra.mxu0 %v2778
    %3069 = vmatpush.msra.mxu0 %v2774
    %3070 = vmatpush.msra.mxu0 %v2770
    %3071 = vmatpush.msra.mxu0 %v2766
    %3072 = vmatpush.msra.mxu0 %v2762
    %3073 = vmatpush.msra.mxu0 %v2758
    %3074 = vmatpush.msra.mxu0 %v2754
    %3075 = vmatpush.msra.mxu0 %v2750
    %3076 = vmatpush.msra.mxu0 %v2746
    %3077 = vmatpush.msra.mxu0 %v2742
    %3078 = vmatpush.msra.mxu0 %v2738
    %3079 = vmatpush.msra.mxu0 %v2734
    %3080 = vmatpush.msra.mxu0 %v2730
    %3081 = vmatpush.msra.mxu0 %v2726
    %3082 = vmatpush.msra.mxu0 %v2722
    %3083 = vmatmul.f32.gmra.mxu0 %v2717
    %v3084 = vpop.f32.mrf.mxu0
    %v3085 = vadd.f32 %v2980, %v3084
    %3086 = vdwg.mxu0
    %3087 = vmatpush.msra.mxu0 %v2846
    %3088 = vmatpush.msra.mxu0 %v2842
    %3089 = vmatpush.msra.mxu0 %v2838
    %3090 = vmatpush.msra.mxu0 %v2834
    %3091 = vmatpush.msra.mxu0 %v2830
    %3092 = vmatpush.msra.mxu0 %v2826
    %3093 = vmatpush.msra.mxu0 %v2822
    %3094 = vmatpush.msra.mxu0 %v2818
    %3095 = vmatpush.msra.mxu0 %v2814
    %3096 = vmatpush.msra.mxu0 %v2810
    %3097 = vmatpush.msra.mxu0 %v2806
    %3098 = vmatpush.msra.mxu0 %v2802
    %3099 = vmatpush.msra.mxu0 %v2798
    %3100 = vmatpush.msra.mxu0 %v2794
    %3101 = vmatpush.msra.mxu0 %v2790
    %3102 = vmatpush.msra.mxu0 %v2786
    %3103 = vmatmul.f32.gmra.mxu0 %v2718
    %v3104 = vpop.f32.mrf.mxu0
    %v3105 = vadd.f32 %v3085, %v3104
    %3106 = vdwg.mxu0
    %3107 = vmatpush.msra.mxu0 %v2910
    %3108 = vmatpush.msra.mxu0 %v2906
    %3109 = vmatpush.msra.mxu0 %v2902
    %3110 = vmatpush.msra.mxu0 %v2898
    %3111 = vmatpush.msra.mxu0 %v2894
    %3112 = vmatpush.msra.mxu0 %v2890
    %3113 = vmatpush.msra.mxu0 %v2886
    %3114 = vmatpush.msra.mxu0 %v2882
    %3115 = vmatpush.msra.mxu0 %v2878
    %3116 = vmatpush.msra.mxu0 %v2874
    %3117 = vmatpush.msra.mxu0 %v2870
    %3118 = vmatpush.msra.mxu0 %v2866
    %3119 = vmatpush.msra.mxu0 %v2862
    %3120 = vmatpush.msra.mxu0 %v2858
    %3121 = vmatpush.msra.mxu0 %v2854
    %3122 = vmatpush.msra.mxu0 %v2850
    %3123 = vmatmul.f32.gmra.mxu0 %v2719
    %v3124 = vpop.f32.mrf.mxu0
    %v3125 = vadd.f32 %v3105, %v3124
    %3126 = vdwg.mxu0
    %3127 = vmatpush.msra.mxu0 %v2974
    %3128 = vmatpush.msra.mxu0 %v2970
    %3129 = vmatpush.msra.mxu0 %v2966
    %3130 = vmatpush.msra.mxu0 %v2962
    %3131 = vmatpush.msra.mxu0 %v2958
    %3132 = vmatpush.msra.mxu0 %v2954
    %3133 = vmatpush.msra.mxu0 %v2950
    %3134 = vmatpush.msra.mxu0 %v2946
    %3135 = vmatpush.msra.mxu0 %v2942
    %3136 = vmatpush.msra.mxu0 %v2938
    %3137 = vmatpush.msra.mxu0 %v2934
    %3138 = vmatpush.msra.mxu0 %v2930
    %3139 = vmatpush.msra.mxu0 %v2926
    %3140 = vmatpush.msra.mxu0 %v2922
    %3141 = vmatpush.msra.mxu0 %v2918
    %3142 = vmatpush.msra.mxu0 %v2914
    %3143 = vmatmul.f32.gmra.mxu0 %v2720
    %v3144 = vpop.f32.mrf.mxu0
    %v3145 = vadd.f32 %v3125, %v3144
    %3146 = vdwg.mxu0
    %3147 = vmatpush.msra.mxu0 %v2783
    %3148 = vmatpush.msra.mxu0 %v2779
    %3149 = vmatpush.msra.mxu0 %v2775
    %3150 = vmatpush.msra.mxu0 %v2771
    %3151 = vmatpush.msra.mxu0 %v2767
    %3152 = vmatpush.msra.mxu0 %v2763
    %3153 = vmatpush.msra.mxu0 %v2759
    %3154 = vmatpush.msra.mxu0 %v2755
    %3155 = vmatpush.msra.mxu0 %v2751
    %3156 = vmatpush.msra.mxu0 %v2747
    %3157 = vmatpush.msra.mxu0 %v2743
    %3158 = vmatpush.msra.mxu0 %v2739
    %3159 = vmatpush.msra.mxu0 %v2735
    %3160 = vmatpush.msra.mxu0 %v2731
    %3161 = vmatpush.msra.mxu0 %v2727
    %3162 = vmatpush.msra.mxu0 %v2723
    %3163 = vmatmul.f32.gmra.mxu0 %v2717
    %v3164 = vpop.f32.mrf.mxu0
    %v3165 = vadd.f32 %v2981, %v3164
    %3166 = vdwg.mxu0
    %3167 = vmatpush.msra.mxu0 %v2847
    %3168 = vmatpush.msra.mxu0 %v2843
    %3169 = vmatpush.msra.mxu0 %v2839
    %3170 = vmatpush.msra.mxu0 %v2835
    %3171 = vmatpush.msra.mxu0 %v2831
    %3172 = vmatpush.msra.mxu0 %v2827
    %3173 = vmatpush.msra.mxu0 %v2823
    %3174 = vmatpush.msra.mxu0 %v2819
    %3175 = vmatpush.msra.mxu0 %v2815
    %3176 = vmatpush.msra.mxu0 %v2811
    %3177 = vmatpush.msra.mxu0 %v2807
    %3178 = vmatpush.msra.mxu0 %v2803
    %3179 = vmatpush.msra.mxu0 %v2799
    %3180 = vmatpush.msra.mxu0 %v2795
    %3181 = vmatpush.msra.mxu0 %v2791
    %3182 = vmatpush.msra.mxu0 %v2787
    %3183 = vmatmul.f32.gmra.mxu0 %v2718
    %v3184 = vpop.f32.mrf.mxu0
    %v3185 = vadd.f32 %v3165, %v3184
    %3186 = vdwg.mxu0
    %3187 = vmatpush.msra.mxu0 %v2911
    %3188 = vmatpush.msra.mxu0 %v2907
    %3189 = vmatpush.msra.mxu0 %v2903
    %3190 = vmatpush.msra.mxu0 %v2899
    %3191 = vmatpush.msra.mxu0 %v2895
    %3192 = vmatpush.msra.mxu0 %v2891
    %3193 = vmatpush.msra.mxu0 %v2887
    %3194 = vmatpush.msra.mxu0 %v2883
    %3195 = vmatpush.msra.mxu0 %v2879
    %3196 = vmatpush.msra.mxu0 %v2875
    %3197 = vmatpush.msra.mxu0 %v2871
    %3198 = vmatpush.msra.mxu0 %v2867
    %3199 = vmatpush.msra.mxu0 %v2863
    %3200 = vmatpush.msra.mxu0 %v2859
    %3201 = vmatpush.msra.mxu0 %v2855
    %3202 = vmatpush.msra.mxu0 %v2851
    %3203 = vmatmul.f32.gmra.mxu0 %v2719
    %v3204 = vpop.f32.mrf.mxu0
    %v3205 = vadd.f32 %v3185, %v3204
    %3206 = vdwg.mxu0
    %3207 = vmatpush.msra.mxu0 %v2975
    %3208 = vmatpush.msra.mxu0 %v2971
    %3209 = vmatpush.msra.mxu0 %v2967
    %3210 = vmatpush.msra.mxu0 %v2963
    %3211 = vmatpush.msra.mxu0 %v2959
    %3212 = vmatpush.msra.mxu0 %v2955
    %3213 = vmatpush.msra.mxu0 %v2951
    %3214 = vmatpush.msra.mxu0 %v2947
    %3215 = vmatpush.msra.mxu0 %v2943
    %3216 = vmatpush.msra.mxu0 %v2939
    %3217 = vmatpush.msra.mxu0 %v2935
    %3218 = vmatpush.msra.mxu0 %v2931
    %3219 = vmatpush.msra.mxu0 %v2927
    %3220 = vmatpush.msra.mxu0 %v2923
    %3221 = vmatpush.msra.mxu0 %v2919
    %3222 = vmatpush.msra.mxu0 %v2915
    %3223 = vmatmul.f32.gmra.mxu0 %v2720
    %v3224 = vpop.f32.mrf.mxu0
    %v3225 = vadd.f32 %v3205, %v3224
    %3226 = vdwg.mxu0
    %3227 = vmatpush.msra.mxu0 %v2784
    %3228 = vmatpush.msra.mxu0 %v2780
    %3229 = vmatpush.msra.mxu0 %v2776
    %3230 = vmatpush.msra.mxu0 %v2772
    %3231 = vmatpush.msra.mxu0 %v2768
    %3232 = vmatpush.msra.mxu0 %v2764
    %3233 = vmatpush.msra.mxu0 %v2760
    %3234 = vmatpush.msra.mxu0 %v2756
    %3235 = vmatpush.msra.mxu0 %v2752
    %3236 = vmatpush.msra.mxu0 %v2748
    %3237 = vmatpush.msra.mxu0 %v2744
    %3238 = vmatpush.msra.mxu0 %v2740
    %3239 = vmatpush.msra.mxu0 %v2736
    %3240 = vmatpush.msra.mxu0 %v2732
    %3241 = vmatpush.msra.mxu0 %v2728
    %3242 = vmatpush.msra.mxu0 %v2724
    %3243 = vmatmul.f32.gmra.mxu0 %v2717
    %v3244 = vpop.f32.mrf.mxu0
    %v3245 = vadd.f32 %v2982, %v3244
    %3246 = vdwg.mxu0
    %3247 = vmatpush.msra.mxu0 %v2848
    %3248 = vmatpush.msra.mxu0 %v2844
    %3249 = vmatpush.msra.mxu0 %v2840
    %3250 = vmatpush.msra.mxu0 %v2836
    %3251 = vmatpush.msra.mxu0 %v2832
    %3252 = vmatpush.msra.mxu0 %v2828
    %3253 = vmatpush.msra.mxu0 %v2824
    %3254 = vmatpush.msra.mxu0 %v2820
    %3255 = vmatpush.msra.mxu0 %v2816
    %3256 = vmatpush.msra.mxu0 %v2812
    %3257 = vmatpush.msra.mxu0 %v2808
    %3258 = vmatpush.msra.mxu0 %v2804
    %3259 = vmatpush.msra.mxu0 %v2800
    %3260 = vmatpush.msra.mxu0 %v2796
    %3261 = vmatpush.msra.mxu0 %v2792
    %3262 = vmatpush.msra.mxu0 %v2788
    %3263 = vmatmul.f32.gmra.mxu0 %v2718
    %v3264 = vpop.f32.mrf.mxu0
    %v3265 = vadd.f32 %v3245, %v3264
    %3266 = vdwg.mxu0
    %3267 = vmatpush.msra.mxu0 %v2912
    %3268 = vmatpush.msra.mxu0 %v2908
    %3269 = vmatpush.msra.mxu0 %v2904
    %3270 = vmatpush.msra.mxu0 %v2900
    %3271 = vmatpush.msra.mxu0 %v2896
    %3272 = vmatpush.msra.mxu0 %v2892
    %3273 = vmatpush.msra.mxu0 %v2888
    %3274 = vmatpush.msra.mxu0 %v2884
    %3275 = vmatpush.msra.mxu0 %v2880
    %3276 = vmatpush.msra.mxu0 %v2876
    %3277 = vmatpush.msra.mxu0 %v2872
    %3278 = vmatpush.msra.mxu0 %v2868
    %3279 = vmatpush.msra.mxu0 %v2864
    %3280 = vmatpush.msra.mxu0 %v2860
    %3281 = vmatpush.msra.mxu0 %v2856
    %3282 = vmatpush.msra.mxu0 %v2852
    %3283 = vmatmul.f32.gmra.mxu0 %v2719
    %v3284 = vpop.f32.mrf.mxu0
    %v3285 = vadd.f32 %v3265, %v3284
    %3286 = vdwg.mxu0
    %3287 = vmatpush.msra.mxu0 %v2976
    %3288 = vmatpush.msra.mxu0 %v2972
    %3289 = vmatpush.msra.mxu0 %v2968
    %3290 = vmatpush.msra.mxu0 %v2964
    %3291 = vmatpush.msra.mxu0 %v2960
    %3292 = vmatpush.msra.mxu0 %v2956
    %3293 = vmatpush.msra.mxu0 %v2952
    %3294 = vmatpush.msra.mxu0 %v2948
    %3295 = vmatpush.msra.mxu0 %v2944
    %3296 = vmatpush.msra.mxu0 %v2940
    %3297 = vmatpush.msra.mxu0 %v2936
    %3298 = vmatpush.msra.mxu0 %v2932
    %3299 = vmatpush.msra.mxu0 %v2928
    %3300 = vmatpush.msra.mxu0 %v2924
    %3301 = vmatpush.msra.mxu0 %v2920
    %3302 = vmatpush.msra.mxu0 %v2916
    %3303 = vmatmul.f32.gmra.mxu0 %v2720
    %v3304 = vpop.f32.mrf.mxu0
    %v3305 = vadd.f32 %v3285, %v3304
    %3306 = vdwg.mxu0
    %v3307 = vld [vmem:[%s15] sm:$0x3]
    %v3309 = vperm.slane %v3307, 0
    %v3310 = vperm.slane %v3307, 1
    %v3313 = vmul.f32 %v3225, %v3309
    %v3314 = vmul.f32 %v3305, %v3310
    %v3315 = vld [vmem:[%s16] sm:$0x3]
    %v3317 = vperm.slane %v3315, 0
    %v3318 = vperm.slane %v3315, 1
    %v3321 = vadd.f32 %v3313, %v3317
    %v3322 = vadd.f32 %v3314, %v3318
    %v3323 = vadd.f32 %v3321, %v3065
    %v3324 = vadd.f32 %v3322, %v3145
    %vm3325 = vcmp.gt.f32.partialorder %v3323, 0.0
    %vm3326 = vcmp.gt.f32.partialorder %v3324, 0.0
    %v3327 = vmul.f32 %v3323, 0.1
    %v3328 = vmul.f32 %v3324, 0.1
    %v3329 = vsel %vm3325, %v3323, %v3327
    %v3330 = vsel %vm3326, %v3324, %v3328
    %v3331 = vld [vmem:[%s17] sm:$0xff]
    %v3332 = vld [vmem:[%s17 + $0x8] sm:$0xff]
    %v3333 = vld [vmem:[%s17 + $0x10] sm:$0xff]
    %v3334 = vld [vmem:[%s17 + $0x18] sm:$0xff]
    %v3335 = vld [vmem:[%s17 + $0x20] sm:$0xff]
    %v3336 = vld [vmem:[%s17 + $0x28] sm:$0xff]
    %v3337 = vld [vmem:[%s17 + $0x30] sm:$0xff]
    %v3338 = vld [vmem:[%s17 + $0x38] sm:$0xff]
    %v3339 = vld [vmem:[%s17 + $0x40] sm:$0xff]
    %v3340 = vld [vmem:[%s17 + $0x48] sm:$0xff]
    %v3341 = vld [vmem:[%s17 + $0x50] sm:$0xff]
    %v3342 = vld [vmem:[%s17 + $0x58] sm:$0xff]
    %v3343 = vld [vmem:[%s17 + $0x60] sm:$0xff]
    %v3344 = vld [vmem:[%s17 + $0x68] sm:$0xff]
    %v3345 = vld [vmem:[%s17 + $0x70] sm:$0xff]
    %v3346 = vld [vmem:[%s17 + $0x78] sm:$0xff]
    %v3347 = vld [vmem:[%s17 + $0x80] sm:$0xff]
    %v3348 = vld [vmem:[%s17 + $0x88] sm:$0xff]
    %v3349 = vld [vmem:[%s17 + $0x90] sm:$0xff]
    %v3350 = vld [vmem:[%s17 + $0x98] sm:$0xff]
    %v3351 = vld [vmem:[%s17 + $0xa0] sm:$0xff]
    %v3352 = vld [vmem:[%s17 + $0xa8] sm:$0xff]
    %v3353 = vld [vmem:[%s17 + $0xb0] sm:$0xff]
    %v3354 = vld [vmem:[%s17 + $0xb8] sm:$0xff]
    %v3355 = vld [vmem:[%s17 + $0xc0] sm:$0xff]
    %v3356 = vld [vmem:[%s17 + $0xc8] sm:$0xff]
    %v3357 = vld [vmem:[%s17 + $0xd0] sm:$0xff]
    %v3358 = vld [vmem:[%s17 + $0xd8] sm:$0xff]
    %v3359 = vld [vmem:[%s17 + $0xe0] sm:$0xff]
    %v3360 = vld [vmem:[%s17 + $0xe8] sm:$0xff]
    %v3361 = vld [vmem:[%s17 + $0xf0] sm:$0xff]
    %v3362 = vld [vmem:[%s17 + $0xf8] sm:$0xff]
    %v3363 = vld [vmem:[#allocation9] sm:$0x1]
    %v3365 = vperm.slane %v3363, 0
    %3367 = vmatpush.msra.mxu0 %v3346
    %3368 = vmatpush.msra.mxu0 %v3345
    %3369 = vmatpush.msra.mxu0 %v3344
    %3370 = vmatpush.msra.mxu0 %v3343
    %3371 = vmatpush.msra.mxu0 %v3342
    %3372 = vmatpush.msra.mxu0 %v3341
    %3373 = vmatpush.msra.mxu0 %v3340
    %3374 = vmatpush.msra.mxu0 %v3339
    %3375 = vmatpush.msra.mxu0 %v3338
    %3376 = vmatpush.msra.mxu0 %v3337
    %3377 = vmatpush.msra.mxu0 %v3336
    %3378 = vmatpush.msra.mxu0 %v3335
    %3379 = vmatpush.msra.mxu0 %v3334
    %3380 = vmatpush.msra.mxu0 %v3333
    %3381 = vmatpush.msra.mxu0 %v3332
    %3382 = vmatpush.msra.mxu0 %v3331
    %3383 = vmatmul.f32.gmra.mxu0 %v3329
    %v3384 = vpop.f32.mrf.mxu0
    %v3385 = vadd.f32 %v3365, %v3384
    %3386 = vdwg.mxu0
    %3387 = vmatpush.msra.mxu0 %v3362
    %3388 = vmatpush.msra.mxu0 %v3361
    %3389 = vmatpush.msra.mxu0 %v3360
    %3390 = vmatpush.msra.mxu0 %v3359
    %3391 = vmatpush.msra.mxu0 %v3358
    %3392 = vmatpush.msra.mxu0 %v3357
    %3393 = vmatpush.msra.mxu0 %v3356
    %3394 = vmatpush.msra.mxu0 %v3355
    %3395 = vmatpush.msra.mxu0 %v3354
    %3396 = vmatpush.msra.mxu0 %v3353
    %3397 = vmatpush.msra.mxu0 %v3352
    %3398 = vmatpush.msra.mxu0 %v3351
    %3399 = vmatpush.msra.mxu0 %v3350
    %3400 = vmatpush.msra.mxu0 %v3349
    %3401 = vmatpush.msra.mxu0 %v3348
    %3402 = vmatpush.msra.mxu0 %v3347
    %3403 = vmatmul.f32.gmra.mxu0 %v3330
    %v3404 = vpop.f32.mrf.mxu0
    %v3405 = vadd.f32 %v3385, %v3404
    %3406 = vdwg.mxu0
    %v3407 = vld [vmem:[#allocation10] sm:$0x1]
    %v3409 = vperm.slane %v3407, 0
    %v3411 = vmul.f32 %v3405, %v3409
    %v3412 = vld [vmem:[#allocation12] sm:$0x1]
    %v3414 = vperm.slane %v3412, 0
    %v3416 = vadd.f32 %v3411, %v3414
    %vm3417 = vcmp.gt.f32.partialorder %v3416, 0.0
    %v3418 = vmul.f32 %v3416, 0.1
    %v3419 = vsel %vm3417, %v3416, %v3418
    %v3420 = vld [vmem:[%s21] sm:$0xff]
    %v3421 = vld [vmem:[%s21 + $0x8] sm:$0xff]
    %v3422 = vld [vmem:[%s21 + $0x10] sm:$0xff]
    %v3423 = vld [vmem:[%s21 + $0x18] sm:$0xff]
    %v3424 = vld [vmem:[%s21 + $0x20] sm:$0xff]
    %v3425 = vld [vmem:[%s21 + $0x28] sm:$0xff]
    %v3426 = vld [vmem:[%s21 + $0x30] sm:$0xff]
    %v3427 = vld [vmem:[%s21 + $0x38] sm:$0xff]
    %v3428 = vld [vmem:[%s21 + $0x40] sm:$0xff]
    %v3429 = vld [vmem:[%s21 + $0x48] sm:$0xff]
    %v3430 = vld [vmem:[%s21 + $0x50] sm:$0xff]
    %v3431 = vld [vmem:[%s21 + $0x58] sm:$0xff]
    %v3432 = vld [vmem:[%s21 + $0x60] sm:$0xff]
    %v3433 = vld [vmem:[%s21 + $0x68] sm:$0xff]
    %v3434 = vld [vmem:[%s21 + $0x70] sm:$0xff]
    %v3435 = vld [vmem:[%s21 + $0x78] sm:$0xff]
    %v3436 = vld [vmem:[#allocation13] sm:$0x1]
    %v3438 = vperm.slane %v3436, 0
    %3440 = vmatpush.msra.mxu0 %v3435
    %3441 = vmatpush.msra.mxu0 %v3434
    %3442 = vmatpush.msra.mxu0 %v3433
    %3443 = vmatpush.msra.mxu0 %v3432
    %3444 = vmatpush.msra.mxu0 %v3431
    %3445 = vmatpush.msra.mxu0 %v3430
    %3446 = vmatpush.msra.mxu0 %v3429
    %3447 = vmatpush.msra.mxu0 %v3428
    %3448 = vmatpush.msra.mxu0 %v3427
    %3449 = vmatpush.msra.mxu0 %v3426
    %3450 = vmatpush.msra.mxu0 %v3425
    %3451 = vmatpush.msra.mxu0 %v3424
    %3452 = vmatpush.msra.mxu0 %v3423
    %3453 = vmatpush.msra.mxu0 %v3422
    %3454 = vmatpush.msra.mxu0 %v3421
    %3455 = vmatpush.msra.mxu0 %v3420
    %3456 = vmatmul.f32.gmra.mxu0 %v3419
    %v3457 = vpop.f32.mrf.mxu0
    %v3458 = vadd.f32 %v3438, %v3457
    %3459 = vdwg.mxu0
    %v3460 = vsub.f32 0.0, %v3458
    %v3461 = vmul.f32 %v3460, 1.442695
    %v3462 = vpow.pop %v3461
    %v3463 = vadd.f32 %v3462, 1.0
    %v3464 = vrcp.pop %v3463
    %v3465 = vmul.f32 %v3463, %v3464
    %v3466 = vsub.f32 1.0, %v3465
    %v3467 = vmul.f32 %v3464, %v3466
    %v3468 = vadd.f32 %v3464, %v3467
    %vm3469 = vweird.f32 %v3463
    %vm3470 = vweird.f32 %v3464
    %vm3471 = vmor %vm3469, %vm3470
    %v3472 = vsel %vm3471, %v3464, %v3468
    %v3473 = vand.u32 2147483647, %v3463
    %vm3474 = vcmp.eq.f32.partialorder %v3473, 8.507059e+37
    %v3475 = vand.u32 %v3463, 2147483648
    %v3476 = vor.u32 1.1754944e-38, %v3475
    %v3477 = vsel %vm3474, %v3476, %v3472
    %v3478 = vmul.f32 9.0, %v3477
    %v3479 = vadd.f32 %v3478, 1.0
    %vm3480 = vcmask 7168
    %v3481 = vsel %vm3480, %v3479, %v3458
    %vm3482 = vcmask 17408
    %3483 = vst.msk [vmem:[%s23] sm:$0x3] %vm3482, %v3481
    // Predicated region
    $region126: #{forward.7} parent=1 // pred_check
      _
    $region127: #{forward.7} parent=1 // pred_check_branch
      %3485 = sbr.rel (0) target = $region129
    $region128: #{forward.7} parent=1 // pred_region
      _
    $region129: #{forward.7} parent=1 // pred_fallthru
      _
    // Predicated region
    $region130: #{forward.7} parent=1 // pred_check
      _
    $region131: #{forward.7} parent=1 // pred_check_branch
      %3487 = sbr.rel (0) target = $region133
    $region132: #{forward.7} parent=1 // pred_region
      _
    $region133: #{forward.7} parent=1 // pred_fallthru
      _
    %3488 = vsyncpa [#allocation3], 1
    %3489 = vsyncpa [#allocation5], 1
    %3490 = vsyncpa [#allocation8], 1
    %3491 = vsyncpa [#allocation11], 1
    %3492 = vsyncpa [#allocation14], 1

</llo_original>
